<compile_context>
chip_gen: v6e
topology: v6e:2x2x1
jax: 0.10.0
libtpu: 0.0.40
codegen_flags: <defaults>
</compile_context>

<pallas_src>
import functools

import jax
import jax.numpy as jnp
from jax import lax
from jax.experimental import pallas as pl
from jax.experimental.pallas import tpu as pltpu

# ----------------------------- model config ---------------------------------
IMG_SIZE = 16
PATCH = 4
IN_CHANS = 3
EMBED_DIM = 32
DEPTH = 2
NUM_HEADS = 4
HEAD_DIM = EMBED_DIM // NUM_HEADS
MLP_RATIO = 4.0
MLP_HIDDEN = int(EMBED_DIM * MLP_RATIO)
NUM_PATCHES = (IMG_SIZE // PATCH) ** 2
SEQ = NUM_PATCHES + 1  # +1 cls token
LN_EPS = 1e-6
ATTN_SCALE = HEAD_DIM ** -0.5


# ----------------------------- in-kernel helpers -----------------------------
def _layernorm(x, g, b):
    mu = jnp.mean(x, axis=-1, keepdims=True)
    xc = x - mu
    var = jnp.mean(xc * xc, axis=-1, keepdims=True)
    return xc * lax.rsqrt(var + LN_EPS) * g + b


def _erf(x):
    # Abramowitz & Stegun 7.1.26 rational approximation, |error| <= 1.5e-7.
    # Only needs exp (EUP) + VPU ops, so it is guaranteed to lower on TPU.
    a1, a2, a3, a4, a5 = (0.254829592, -0.284496736, 1.421413741,
                          -1.453152027, 1.061405429)
    p = 0.3275911
    sgn = jnp.where(x >= 0.0, 1.0, -1.0)
    ax = jnp.abs(x)
    t = 1.0 / (1.0 + p * ax)
    poly = ((((a5 * t + a4) * t + a3) * t + a2) * t + a1) * t
    return sgn * (1.0 - poly * jnp.exp(-ax * ax))


def _gelu(x):
    # exact (erf-form) GELU, matching torch.nn.GELU default
    return 0.5 * x * (1.0 + _erf(x * 0.7071067811865476))


# ----------------------------- fused ViT kernel ------------------------------
def _vit_kernel(
    patches_ref, pw_ref, pb_ref, cls_ref, pos_ref,
    ln1_g_ref, ln1_b_ref, qkv_w_ref, qkv_b_ref,
    proj_w_ref, proj_b_ref, ln2_g_ref, ln2_b_ref,
    fc1_w_ref, fc1_b_ref, fc2_w_ref, fc2_b_ref,
    norm_g_ref, norm_b_ref,
    out_ref,
    buf_ref,            # VMEM scratch (B*S, D): token assembly / head reassembly
    *, batch,
):
    B = batch
    S, D, H, Dh, N = SEQ, EMBED_DIM, NUM_HEADS, HEAD_DIM, NUM_PATCHES

    # ---- patch embed (conv-as-matmul) + cls token + pos embed ---------------
    tok = (
        jnp.dot(patches_ref[...], pw_ref[...], preferred_element_type=jnp.float32)
        + pb_ref[...]
    )                                                   # (B*N, D)
    pos = pos_ref[...]                                  # (S, D)
    cls_row = cls_ref[...] + pos[0:1, :]                # (1, D)
    pos_patch = pos[1:S, :]                             # (N, D)
    for b in range(B):                                  # static, B is tiny
        buf_ref[b * S : b * S + 1, :] = cls_row
        buf_ref[b * S + 1 : (b + 1) * S, :] = (
            tok[b * N : (b + 1) * N, :] + pos_patch
        )
    x = buf_ref[...]                                    # (B*S, D)

    # ---- transformer blocks (fully unrolled; everything stays on-chip) ------
    for d in range(DEPTH):
        # ----- attention branch: x = x + proj(attn(norm1(x))) -----
        y = _layernorm(x, ln1_g_ref[d], ln1_b_ref[d])
        qkv = (
            jnp.dot(y, qkv_w_ref[d], preferred_element_type=jnp.float32)
            + qkv_b_ref[d]
        )                                               # (B*S, 3D)
        for b in range(B):
            qkv_b = qkv[b * S : (b + 1) * S, :]         # (S, 3D)
            head_outs = []
            for h in range(H):
                q = qkv_b[:, h * Dh : (h + 1) * Dh] * ATTN_SCALE
                k = qkv_b[:, D + h * Dh : D + (h + 1) * Dh]
                v = qkv_b[:, 2 * D + h * Dh : 2 * D + (h + 1) * Dh]
                s = lax.dot_general(                     # q @ k^T -> (S, S)
                    q, k, (((1,), (1,)), ((), ())),
                    preferred_element_type=jnp.float32,
                )
                s = s - jnp.max(s, axis=-1, keepdims=True)
                p = jnp.exp(s)
                p = p / jnp.sum(p, axis=-1, keepdims=True)
                head_outs.append(
                    jnp.dot(p, v, preferred_element_type=jnp.float32)  # (S, Dh)
                )
            # reassemble heads head-major along the feature (lane) axis
            buf_ref[b * S : (b + 1) * S, :] = jnp.concatenate(head_outs, axis=-1)
        o = (
            jnp.dot(buf_ref[...], proj_w_ref[d], preferred_element_type=jnp.float32)
            + proj_b_ref[d]
        )
        x = x + o

        # ----- MLP branch: x = x + fc2(gelu(fc1(norm2(x)))) -----
        y = _layernorm(x, ln2_g_ref[d], ln2_b_ref[d])
        hdn = _gelu(
            jnp.dot(y, fc1_w_ref[d], preferred_element_type=jnp.float32)
            + fc1_b_ref[d]
        )                                               # (B*S, MLP_HIDDEN)
        m = (
            jnp.dot(hdn, fc2_w_ref[d], preferred_element_type=jnp.float32)
            + fc2_b_ref[d]
        )
        x = x + m

    # ---- final LayerNorm, single HBM write ----------------------------------
    out_ref[...] = _layernorm(x, norm_g_ref[...], norm_b_ref[...])


# ----------------------------- parameters ------------------------------------
def init_params(key):
    ks = iter(jax.random.split(key, 32))

    def w(shape, std=0.02):
        return (jax.random.normal(next(ks), shape, jnp.float32) * std).astype(
            jnp.float32
        )

    D, Dh3, Hm = EMBED_DIM, 3 * EMBED_DIM, MLP_HIDDEN
    # Per-layer weights pre-stacked along a leading DEPTH axis so the forward
    # pass needs zero stacking/transpose XLA ops on the weight path.
    return {
        "patch_w": w((IN_CHANS * PATCH * PATCH, D)),
        "patch_b": jnp.zeros((1, D), jnp.float32),
        "cls_token": w((1, D)),
        "pos_embed": w((SEQ, D)),
        "ln1_g": jnp.ones((DEPTH, 1, D), jnp.float32),
        "ln1_b": jnp.zeros((DEPTH, 1, D), jnp.float32),
        "qkv_w": w((DEPTH, D, Dh3)),
        "qkv_b": jnp.zeros((DEPTH, 1, Dh3), jnp.float32),
        "proj_w": w((DEPTH, D, D)),
        "proj_b": jnp.zeros((DEPTH, 1, D), jnp.float32),
        "ln2_g": jnp.ones((DEPTH, 1, D), jnp.float32),
        "ln2_b": jnp.zeros((DEPTH, 1, D), jnp.float32),
        "fc1_w": w((DEPTH, D, Hm)),
        "fc1_b": jnp.zeros((DEPTH, 1, Hm), jnp.float32),
        "fc2_w": w((DEPTH, Hm, D)),
        "fc2_b": jnp.zeros((DEPTH, 1, D), jnp.float32),
        "norm_g": jnp.ones((1, D), jnp.float32),
        "norm_b": jnp.zeros((1, D), jnp.float32),
    }


# ----------------------------- forward pass ----------------------------------
def vit_forward(params, x):
    # x: (B, C, H, W) float32, NCHW as in PyTorch
    B, C, Himg, Wimg = x.shape
    Hp, Wp = Himg // PATCH, Wimg // PATCH
    N = Hp * Wp

    # PatchEmbed: Conv2d(kernel=patch, stride=patch) == per-patch matmul.
    # (pure layout plumbing in the wrapper; all math happens inside the kernel)
    patches = (
        x.reshape(B, C, Hp, PATCH, Wp, PATCH)
        .transpose(0, 2, 4, 1, 3, 5)          # (B, Hp, Wp, C, p, p) — conv-w order
        .reshape(B * N, C * PATCH * PATCH)
    )

    out2d = pl.pallas_call(
        functools.partial(_vit_kernel, batch=B),
        out_shape=jax.ShapeDtypeStruct((B * SEQ, EMBED_DIM), jnp.float32),
        scratch_shapes=[pltpu.VMEM((B * SEQ, EMBED_DIM), jnp.float32)],
    )(
        patches,
        params["patch_w"], params["patch_b"],
        params["cls_token"], params["pos_embed"],
        params["ln1_g"], params["ln1_b"],
        params["qkv_w"], params["qkv_b"],
        params["proj_w"], params["proj_b"],
        params["ln2_g"], params["ln2_b"],
        params["fc1_w"], params["fc1_b"],
        params["fc2_w"], params["fc2_b"],
        params["norm_g"], params["norm_b"],
    )
    return out2d.reshape(B, SEQ, EMBED_DIM)


# ----------------------------- main -------------------------------------------
if __name__ == "__main__":
    key = jax.random.PRNGKey(0)
    pkey, xkey = jax.random.split(key)
    params = init_params(pkey)
    x = jax.random.normal(xkey, (2, IN_CHANS, IMG_SIZE, IMG_SIZE), jnp.float32)

    fwd = jax.jit(vit_forward)
    out = fwd(params, x)
    out = jax.block_until_ready(out)

    assert out.shape == (2, SEQ, EMBED_DIM), out.shape
    assert bool(jnp.all(jnp.isfinite(out)))
    print("KERNEL_OK")
</pallas_src>

<mosaic_0001>
module attributes {stable_mosaic.version = 11 : i64} {
  func.func @_vit_kernel(%arg0: memref<32x48xf32, #tpu.memory_space<vmem>>, %arg1: memref<48x32xf32, #tpu.memory_space<vmem>>, %arg2: memref<1x32xf32, #tpu.memory_space<vmem>>, %arg3: memref<1x32xf32, #tpu.memory_space<vmem>>, %arg4: memref<17x32xf32, #tpu.memory_space<vmem>>, %arg5: memref<2x1x32xf32, #tpu.memory_space<vmem>>, %arg6: memref<2x1x32xf32, #tpu.memory_space<vmem>>, %arg7: memref<2x32x96xf32, #tpu.memory_space<vmem>>, %arg8: memref<2x1x96xf32, #tpu.memory_space<vmem>>, %arg9: memref<2x32x32xf32, #tpu.memory_space<vmem>>, %arg10: memref<2x1x32xf32, #tpu.memory_space<vmem>>, %arg11: memref<2x1x32xf32, #tpu.memory_space<vmem>>, %arg12: memref<2x1x32xf32, #tpu.memory_space<vmem>>, %arg13: memref<2x32x128xf32, #tpu.memory_space<vmem>>, %arg14: memref<2x1x128xf32, #tpu.memory_space<vmem>>, %arg15: memref<2x128x32xf32, #tpu.memory_space<vmem>>, %arg16: memref<2x1x32xf32, #tpu.memory_space<vmem>>, %arg17: memref<1x32xf32, #tpu.memory_space<vmem>>, %arg18: memref<1x32xf32, #tpu.memory_space<vmem>>, %arg19: memref<34x32xf32, #tpu.memory_space<vmem>>, %arg20: memref<34x32xf32, #tpu.memory_space<vmem>>) attributes {dimension_semantics = [], scalar_prefetch = 0 : i64, scratch_operands = 1 : i64, tpu.core_type = #tpu.core_type<tc>} {
    %c0 = arith.constant 0 : index
    %c0_0 = arith.constant 0 : index
    %0 = vector.load %arg0[%c0, %c0_0] : memref<32x48xf32, #tpu.memory_space<vmem>>, vector<32x48xf32>
    %c0_1 = arith.constant 0 : index
    %c0_2 = arith.constant 0 : index
    %1 = vector.load %arg1[%c0_1, %c0_2] : memref<48x32xf32, #tpu.memory_space<vmem>>, vector<48x32xf32>
    %cst = arith.constant dense<0.000000e+00> : vector<32x32xf32>
    %2 = tpu.matmul %0, %1, %cst {dimension_numbers = #tpu.dot_dimension_numbers<[1], [0], [0], [1], [0, 0, 1, 1], [], []>} : vector<32x48xf32>, vector<48x32xf32>, vector<32x32xf32> -> vector<32x32xf32>
    %c0_3 = arith.constant 0 : index
    %c0_4 = arith.constant 0 : index
    %3 = vector.load %arg2[%c0_3, %c0_4] : memref<1x32xf32, #tpu.memory_space<vmem>>, vector<1x32xf32>
    %4 = vector.broadcast %3 : vector<1x32xf32> to vector<32x32xf32>
    %5 = arith.addf %2, %4 : vector<32x32xf32>
    %c0_5 = arith.constant 0 : index
    %c0_6 = arith.constant 0 : index
    %6 = vector.load %arg4[%c0_5, %c0_6] : memref<17x32xf32, #tpu.memory_space<vmem>>, vector<17x32xf32>
    %c0_7 = arith.constant 0 : index
    %c0_8 = arith.constant 0 : index
    %7 = vector.load %arg3[%c0_7, %c0_8] : memref<1x32xf32, #tpu.memory_space<vmem>>, vector<1x32xf32>
    %8 = vector.extract_strided_slice %6 {offsets = [0, 0], sizes = [1, 32], strides = [1, 1]} : vector<17x32xf32> to vector<1x32xf32>
    %9 = arith.addf %7, %8 : vector<1x32xf32>
    %10 = vector.extract_strided_slice %6 {offsets = [1, 0], sizes = [16, 32], strides = [1, 1]} : vector<17x32xf32> to vector<16x32xf32>
    %c0_9 = arith.constant 0 : index
    %c0_10 = arith.constant 0 : index
    %11 = vector.load %arg20[%c0_9, %c0_10] : memref<34x32xf32, #tpu.memory_space<vmem>>, vector<1x32xf32>
    tpu.vector_store %arg20[%c0_9, %c0_10], %9 {strides = array<i32>} : memref<34x32xf32, #tpu.memory_space<vmem>>, vector<1x32xf32>,
    %12 = vector.extract_strided_slice %5 {offsets = [0, 0], sizes = [16, 32], strides = [1, 1]} : vector<32x32xf32> to vector<16x32xf32>
    %13 = arith.addf %12, %10 : vector<16x32xf32>
    %c1 = arith.constant 1 : index
    %c0_11 = arith.constant 0 : index
    %14 = vector.load %arg20[%c1, %c0_11] : memref<34x32xf32, #tpu.memory_space<vmem>>, vector<16x32xf32>
    tpu.vector_store %arg20[%c1, %c0_11], %13 {strides = array<i32>} : memref<34x32xf32, #tpu.memory_space<vmem>>, vector<16x32xf32>,
    %c17 = arith.constant 17 : index
    %c0_12 = arith.constant 0 : index
    %15 = vector.load %arg20[%c17, %c0_12] : memref<34x32xf32, #tpu.memory_space<vmem>>, vector<1x32xf32>
    tpu.vector_store %arg20[%c17, %c0_12], %9 {strides = array<i32>} : memref<34x32xf32, #tpu.memory_space<vmem>>, vector<1x32xf32>,
    %16 = vector.extract_strided_slice %5 {offsets = [16, 0], sizes = [16, 32], strides = [1, 1]} : vector<32x32xf32> to vector<16x32xf32>
    %17 = arith.addf %16, %10 : vector<16x32xf32>
    %c18 = arith.constant 18 : index
    %c0_13 = arith.constant 0 : index
    %18 = vector.load %arg20[%c18, %c0_13] : memref<34x32xf32, #tpu.memory_space<vmem>>, vector<16x32xf32>
    tpu.vector_store %arg20[%c18, %c0_13], %17 {strides = array<i32>} : memref<34x32xf32, #tpu.memory_space<vmem>>, vector<16x32xf32>,
    %c0_14 = arith.constant 0 : index
    %c0_15 = arith.constant 0 : index
    %19 = vector.load %arg20[%c0_14, %c0_15] : memref<34x32xf32, #tpu.memory_space<vmem>>, vector<34x32xf32>
    %c0_16 = arith.constant 0 : index
    %c0_17 = arith.constant 0 : index
    %c0_18 = arith.constant 0 : index
    %20 = vector.load %arg5[%c0_16, %c0_17, %c0_18] : memref<2x1x32xf32, #tpu.memory_space<vmem>>, vector<1x1x32xf32>
    %21 = vector.shape_cast %20 : vector<1x1x32xf32> to vector<1x32xf32>
    %c0_19 = arith.constant 0 : index
    %c0_20 = arith.constant 0 : index
    %c0_21 = arith.constant 0 : index
    %22 = vector.load %arg6[%c0_19, %c0_20, %c0_21] : memref<2x1x32xf32, #tpu.memory_space<vmem>>, vector<1x1x32xf32>
    %23 = vector.shape_cast %22 : vector<1x1x32xf32> to vector<1x32xf32>
    %cst_22 = arith.constant dense<0.000000e+00> : vector<34xf32>
    %24 = vector.multi_reduction <add>, %19, %cst_22 [1] : vector<34x32xf32> to vector<34xf32>
    %25 = vector.shape_cast %24 : vector<34xf32> to vector<34x1xf32>
    %cst_23 = arith.constant 3.200000e+01 : f32
    %26 = vector.broadcast %cst_23 : f32 to vector<34x1xf32>
    %27 = arith.divf %25, %26 : vector<34x1xf32>
    %28 = vector.broadcast %27 : vector<34x1xf32> to vector<34x32xf32>
    %29 = arith.subf %19, %28 : vector<34x32xf32>
    %30 = arith.mulf %29, %29 : vector<34x32xf32>
    %cst_24 = arith.constant dense<0.000000e+00> : vector<34xf32>
    %31 = vector.multi_reduction <add>, %30, %cst_24 [1] : vector<34x32xf32> to vector<34xf32>
    %32 = vector.shape_cast %31 : vector<34xf32> to vector<34x1xf32>
    %cst_25 = arith.constant 3.200000e+01 : f32
    %33 = vector.broadcast %cst_25 : f32 to vector<34x1xf32>
    %34 = arith.divf %32, %33 : vector<34x1xf32>
    %cst_26 = arith.constant 9.99999997E-7 : f32
    %35 = vector.broadcast %cst_26 : f32 to vector<34x1xf32>
    %36 = arith.addf %34, %35 : vector<34x1xf32>
    %37 = math.rsqrt %36 : vector<34x1xf32>
    %38 = vector.broadcast %37 : vector<34x1xf32> to vector<34x32xf32>
    %39 = arith.mulf %29, %38 : vector<34x32xf32>
    %40 = vector.broadcast %21 : vector<1x32xf32> to vector<34x32xf32>
    %41 = arith.mulf %39, %40 : vector<34x32xf32>
    %42 = vector.broadcast %23 : vector<1x32xf32> to vector<34x32xf32>
    %43 = arith.addf %41, %42 : vector<34x32xf32>
    %c0_27 = arith.constant 0 : index
    %c0_28 = arith.constant 0 : index
    %c0_29 = arith.constant 0 : index
    %44 = vector.load %arg7[%c0_27, %c0_28, %c0_29] : memref<2x32x96xf32, #tpu.memory_space<vmem>>, vector<1x32x96xf32>
    %45 = vector.shape_cast %44 : vector<1x32x96xf32> to vector<32x96xf32>
    %cst_30 = arith.constant dense<0.000000e+00> : vector<34x96xf32>
    %46 = tpu.matmul %43, %45, %cst_30 {dimension_numbers = #tpu.dot_dimension_numbers<[1], [0], [0], [1], [0, 0, 1, 1], [], []>} : vector<34x32xf32>, vector<32x96xf32>, vector<34x96xf32> -> vector<34x96xf32>
    %c0_31 = arith.constant 0 : index
    %c0_32 = arith.constant 0 : index
    %c0_33 = arith.constant 0 : index
    %47 = vector.load %arg8[%c0_31, %c0_32, %c0_33] : memref<2x1x96xf32, #tpu.memory_space<vmem>>, vector<1x1x96xf32>
    %48 = vector.shape_cast %47 : vector<1x1x96xf32> to vector<1x96xf32>
    %49 = vector.broadcast %48 : vector<1x96xf32> to vector<34x96xf32>
    %50 = arith.addf %46, %49 : vector<34x96xf32>
    %51 = vector.extract_strided_slice %50 {offsets = [0, 0], sizes = [17, 96], strides = [1, 1]} : vector<34x96xf32> to vector<17x96xf32>
    %52 = vector.extract_strided_slice %51 {offsets = [0, 0], sizes = [17, 8], strides = [1, 1]} : vector<17x96xf32> to vector<17x8xf32>
    %cst_34 = arith.constant 0.353553385 : f32
    %53 = vector.broadcast %cst_34 : f32 to vector<17x8xf32>
    %54 = arith.mulf %52, %53 : vector<17x8xf32>
    %55 = vector.extract_strided_slice %51 {offsets = [0, 32], sizes = [17, 8], strides = [1, 1]} : vector<17x96xf32> to vector<17x8xf32>
    %56 = vector.extract_strided_slice %51 {offsets = [0, 64], sizes = [17, 8], strides = [1, 1]} : vector<17x96xf32> to vector<17x8xf32>
    %cst_35 = arith.constant dense<0.000000e+00> : vector<17x17xf32>
    %57 = tpu.matmul %54, %55, %cst_35 {dimension_numbers = #tpu.dot_dimension_numbers<[1], [1], [0], [0], [0, 0, 1, 0], [], []>} : vector<17x8xf32>, vector<17x8xf32>, vector<17x17xf32> -> vector<17x17xf32>
    %cst_36 = arith.constant dense<0xFF800000> : vector<17xf32>
    %58 = vector.multi_reduction <maximumf>, %57, %cst_36 [1] : vector<17x17xf32> to vector<17xf32>
    %59 = vector.shape_cast %58 : vector<17xf32> to vector<17x1xf32>
    %60 = vector.broadcast %59 : vector<17x1xf32> to vector<17x17xf32>
    %61 = arith.subf %57, %60 : vector<17x17xf32>
    %62 = math.exp %61 : vector<17x17xf32>
    %cst_37 = arith.constant dense<0.000000e+00> : vector<17xf32>
    %63 = vector.multi_reduction <add>, %62, %cst_37 [1] : vector<17x17xf32> to vector<17xf32>
    %64 = vector.shape_cast %63 : vector<17xf32> to vector<17x1xf32>
    %65 = vector.broadcast %64 : vector<17x1xf32> to vector<17x17xf32>
    %66 = arith.divf %62, %65 : vector<17x17xf32>
    %cst_38 = arith.constant dense<0.000000e+00> : vector<17x8xf32>
    %67 = tpu.matmul %66, %56, %cst_38 {dimension_numbers = #tpu.dot_dimension_numbers<[1], [0], [0], [1], [0, 0, 1, 1], [], []>} : vector<17x17xf32>, vector<17x8xf32>, vector<17x8xf32> -> vector<17x8xf32>
    %68 = vector.extract_strided_slice %51 {offsets = [0, 8], sizes = [17, 8], strides = [1, 1]} : vector<17x96xf32> to vector<17x8xf32>
    %cst_39 = arith.constant 0.353553385 : f32
    %69 = vector.broadcast %cst_39 : f32 to vector<17x8xf32>
    %70 = arith.mulf %68, %69 : vector<17x8xf32>
    %71 = vector.extract_strided_slice %51 {offsets = [0, 40], sizes = [17, 8], strides = [1, 1]} : vector<17x96xf32> to vector<17x8xf32>
    %72 = vector.extract_strided_slice %51 {offsets = [0, 72], sizes = [17, 8], strides = [1, 1]} : vector<17x96xf32> to vector<17x8xf32>
    %cst_40 = arith.constant dense<0.000000e+00> : vector<17x17xf32>
    %73 = tpu.matmul %70, %71, %cst_40 {dimension_numbers = #tpu.dot_dimension_numbers<[1], [1], [0], [0], [0, 0, 1, 0], [], []>} : vector<17x8xf32>, vector<17x8xf32>, vector<17x17xf32> -> vector<17x17xf32>
    %cst_41 = arith.constant dense<0xFF800000> : vector<17xf32>
    %74 = vector.multi_reduction <maximumf>, %73, %cst_41 [1] : vector<17x17xf32> to vector<17xf32>
    %75 = vector.shape_cast %74 : vector<17xf32> to vector<17x1xf32>
    %76 = vector.broadcast %75 : vector<17x1xf32> to vector<17x17xf32>
    %77 = arith.subf %73, %76 : vector<17x17xf32>
    %78 = math.exp %77 : vector<17x17xf32>
    %cst_42 = arith.constant dense<0.000000e+00> : vector<17xf32>
    %79 = vector.multi_reduction <add>, %78, %cst_42 [1] : vector<17x17xf32> to vector<17xf32>
    %80 = vector.shape_cast %79 : vector<17xf32> to vector<17x1xf32>
    %81 = vector.broadcast %80 : vector<17x1xf32> to vector<17x17xf32>
    %82 = arith.divf %78, %81 : vector<17x17xf32>
    %cst_43 = arith.constant dense<0.000000e+00> : vector<17x8xf32>
    %83 = tpu.matmul %82, %72, %cst_43 {dimension_numbers = #tpu.dot_dimension_numbers<[1], [0], [0], [1], [0, 0, 1, 1], [], []>} : vector<17x17xf32>, vector<17x8xf32>, vector<17x8xf32> -> vector<17x8xf32>
    %84 = vector.extract_strided_slice %51 {offsets = [0, 16], sizes = [17, 8], strides = [1, 1]} : vector<17x96xf32> to vector<17x8xf32>
    %cst_44 = arith.constant 0.353553385 : f32
    %85 = vector.broadcast %cst_44 : f32 to vector<17x8xf32>
    %86 = arith.mulf %84, %85 : vector<17x8xf32>
    %87 = vector.extract_strided_slice %51 {offsets = [0, 48], sizes = [17, 8], strides = [1, 1]} : vector<17x96xf32> to vector<17x8xf32>
    %88 = vector.extract_strided_slice %51 {offsets = [0, 80], sizes = [17, 8], strides = [1, 1]} : vector<17x96xf32> to vector<17x8xf32>
    %cst_45 = arith.constant dense<0.000000e+00> : vector<17x17xf32>
    %89 = tpu.matmul %86, %87, %cst_45 {dimension_numbers = #tpu.dot_dimension_numbers<[1], [1], [0], [0], [0, 0, 1, 0], [], []>} : vector<17x8xf32>, vector<17x8xf32>, vector<17x17xf32> -> vector<17x17xf32>
    %cst_46 = arith.constant dense<0xFF800000> : vector<17xf32>
    %90 = vector.multi_reduction <maximumf>, %89, %cst_46 [1] : vector<17x17xf32> to vector<17xf32>
    %91 = vector.shape_cast %90 : vector<17xf32> to vector<17x1xf32>
    %92 = vector.broadcast %91 : vector<17x1xf32> to vector<17x17xf32>
    %93 = arith.subf %89, %92 : vector<17x17xf32>
    %94 = math.exp %93 : vector<17x17xf32>
    %cst_47 = arith.constant dense<0.000000e+00> : vector<17xf32>
    %95 = vector.multi_reduction <add>, %94, %cst_47 [1] : vector<17x17xf32> to vector<17xf32>
    %96 = vector.shape_cast %95 : vector<17xf32> to vector<17x1xf32>
    %97 = vector.broadcast %96 : vector<17x1xf32> to vector<17x17xf32>
    %98 = arith.divf %94, %97 : vector<17x17xf32>
    %cst_48 = arith.constant dense<0.000000e+00> : vector<17x8xf32>
    %99 = tpu.matmul %98, %88, %cst_48 {dimension_numbers = #tpu.dot_dimension_numbers<[1], [0], [0], [1], [0, 0, 1, 1], [], []>} : vector<17x17xf32>, vector<17x8xf32>, vector<17x8xf32> -> vector<17x8xf32>
    %100 = vector.extract_strided_slice %51 {offsets = [0, 24], sizes = [17, 8], strides = [1, 1]} : vector<17x96xf32> to vector<17x8xf32>
    %cst_49 = arith.constant 0.353553385 : f32
    %101 = vector.broadcast %cst_49 : f32 to vector<17x8xf32>
    %102 = arith.mulf %100, %101 : vector<17x8xf32>
    %103 = vector.extract_strided_slice %51 {offsets = [0, 56], sizes = [17, 8], strides = [1, 1]} : vector<17x96xf32> to vector<17x8xf32>
    %104 = vector.extract_strided_slice %51 {offsets = [0, 88], sizes = [17, 8], strides = [1, 1]} : vector<17x96xf32> to vector<17x8xf32>
    %cst_50 = arith.constant dense<0.000000e+00> : vector<17x17xf32>
    %105 = tpu.matmul %102, %103, %cst_50 {dimension_numbers = #tpu.dot_dimension_numbers<[1], [1], [0], [0], [0, 0, 1, 0], [], []>} : vector<17x8xf32>, vector<17x8xf32>, vector<17x17xf32> -> vector<17x17xf32>
    %cst_51 = arith.constant dense<0xFF800000> : vector<17xf32>
    %106 = vector.multi_reduction <maximumf>, %105, %cst_51 [1] : vector<17x17xf32> to vector<17xf32>
    %107 = vector.shape_cast %106 : vector<17xf32> to vector<17x1xf32>
    %108 = vector.broadcast %107 : vector<17x1xf32> to vector<17x17xf32>
    %109 = arith.subf %105, %108 : vector<17x17xf32>
    %110 = math.exp %109 : vector<17x17xf32>
    %cst_52 = arith.constant dense<0.000000e+00> : vector<17xf32>
    %111 = vector.multi_reduction <add>, %110, %cst_52 [1] : vector<17x17xf32> to vector<17xf32>
    %112 = vector.shape_cast %111 : vector<17xf32> to vector<17x1xf32>
    %113 = vector.broadcast %112 : vector<17x1xf32> to vector<17x17xf32>
    %114 = arith.divf %110, %113 : vector<17x17xf32>
    %cst_53 = arith.constant dense<0.000000e+00> : vector<17x8xf32>
    %115 = tpu.matmul %114, %104, %cst_53 {dimension_numbers = #tpu.dot_dimension_numbers<[1], [0], [0], [1], [0, 0, 1, 1], [], []>} : vector<17x17xf32>, vector<17x8xf32>, vector<17x8xf32> -> vector<17x8xf32>
    %116 = tpu.concatenate %67, %83, %99, %115 in 1 : vector<17x8xf32>, vector<17x8xf32>, vector<17x8xf32>, vector<17x8xf32> -> vector<17x32xf32>
    %c0_54 = arith.constant 0 : index
    %c0_55 = arith.constant 0 : index
    %117 = vector.load %arg20[%c0_54, %c0_55] : memref<34x32xf32, #tpu.memory_space<vmem>>, vector<17x32xf32>
    tpu.vector_store %arg20[%c0_54, %c0_55], %116 {strides = array<i32>} : memref<34x32xf32, #tpu.memory_space<vmem>>, vector<17x32xf32>,
    %118 = vector.extract_strided_slice %50 {offsets = [17, 0], sizes = [17, 96], strides = [1, 1]} : vector<34x96xf32> to vector<17x96xf32>
    %119 = vector.extract_strided_slice %118 {offsets = [0, 0], sizes = [17, 8], strides = [1, 1]} : vector<17x96xf32> to vector<17x8xf32>
    %cst_56 = arith.constant 0.353553385 : f32
    %120 = vector.broadcast %cst_56 : f32 to vector<17x8xf32>
    %121 = arith.mulf %119, %120 : vector<17x8xf32>
    %122 = vector.extract_strided_slice %118 {offsets = [0, 32], sizes = [17, 8], strides = [1, 1]} : vector<17x96xf32> to vector<17x8xf32>
    %123 = vector.extract_strided_slice %118 {offsets = [0, 64], sizes = [17, 8], strides = [1, 1]} : vector<17x96xf32> to vector<17x8xf32>
    %cst_57 = arith.constant dense<0.000000e+00> : vector<17x17xf32>
    %124 = tpu.matmul %121, %122, %cst_57 {dimension_numbers = #tpu.dot_dimension_numbers<[1], [1], [0], [0], [0, 0, 1, 0], [], []>} : vector<17x8xf32>, vector<17x8xf32>, vector<17x17xf32> -> vector<17x17xf32>
    %cst_58 = arith.constant dense<0xFF800000> : vector<17xf32>
    %125 = vector.multi_reduction <maximumf>, %124, %cst_58 [1] : vector<17x17xf32> to vector<17xf32>
    %126 = vector.shape_cast %125 : vector<17xf32> to vector<17x1xf32>
    %127 = vector.broadcast %126 : vector<17x1xf32> to vector<17x17xf32>
    %128 = arith.subf %124, %127 : vector<17x17xf32>
    %129 = math.exp %128 : vector<17x17xf32>
    %cst_59 = arith.constant dense<0.000000e+00> : vector<17xf32>
    %130 = vector.multi_reduction <add>, %129, %cst_59 [1] : vector<17x17xf32> to vector<17xf32>
    %131 = vector.shape_cast %130 : vector<17xf32> to vector<17x1xf32>
    %132 = vector.broadcast %131 : vector<17x1xf32> to vector<17x17xf32>
    %133 = arith.divf %129, %132 : vector<17x17xf32>
    %cst_60 = arith.constant dense<0.000000e+00> : vector<17x8xf32>
    %134 = tpu.matmul %133, %123, %cst_60 {dimension_numbers = #tpu.dot_dimension_numbers<[1], [0], [0], [1], [0, 0, 1, 1], [], []>} : vector<17x17xf32>, vector<17x8xf32>, vector<17x8xf32> -> vector<17x8xf32>
    %135 = vector.extract_strided_slice %118 {offsets = [0, 8], sizes = [17, 8], strides = [1, 1]} : vector<17x96xf32> to vector<17x8xf32>
    %cst_61 = arith.constant 0.353553385 : f32
    %136 = vector.broadcast %cst_61 : f32 to vector<17x8xf32>
    %137 = arith.mulf %135, %136 : vector<17x8xf32>
    %138 = vector.extract_strided_slice %118 {offsets = [0, 40], sizes = [17, 8], strides = [1, 1]} : vector<17x96xf32> to vector<17x8xf32>
    %139 = vector.extract_strided_slice %118 {offsets = [0, 72], sizes = [17, 8], strides = [1, 1]} : vector<17x96xf32> to vector<17x8xf32>
    %cst_62 = arith.constant dense<0.000000e+00> : vector<17x17xf32>
    %140 = tpu.matmul %137, %138, %cst_62 {dimension_numbers = #tpu.dot_dimension_numbers<[1], [1], [0], [0], [0, 0, 1, 0], [], []>} : vector<17x8xf32>, vector<17x8xf32>, vector<17x17xf32> -> vector<17x17xf32>
    %cst_63 = arith.constant dense<0xFF800000> : vector<17xf32>
    %141 = vector.multi_reduction <maximumf>, %140, %cst_63 [1] : vector<17x17xf32> to vector<17xf32>
    %142 = vector.shape_cast %141 : vector<17xf32> to vector<17x1xf32>
    %143 = vector.broadcast %142 : vector<17x1xf32> to vector<17x17xf32>
    %144 = arith.subf %140, %143 : vector<17x17xf32>
    %145 = math.exp %144 : vector<17x17xf32>
    %cst_64 = arith.constant dense<0.000000e+00> : vector<17xf32>
    %146 = vector.multi_reduction <add>, %145, %cst_64 [1] : vector<17x17xf32> to vector<17xf32>
    %147 = vector.shape_cast %146 : vector<17xf32> to vector<17x1xf32>
    %148 = vector.broadcast %147 : vector<17x1xf32> to vector<17x17xf32>
    %149 = arith.divf %145, %148 : vector<17x17xf32>
    %cst_65 = arith.constant dense<0.000000e+00> : vector<17x8xf32>
    %150 = tpu.matmul %149, %139, %cst_65 {dimension_numbers = #tpu.dot_dimension_numbers<[1], [0], [0], [1], [0, 0, 1, 1], [], []>} : vector<17x17xf32>, vector<17x8xf32>, vector<17x8xf32> -> vector<17x8xf32>
    %151 = vector.extract_strided_slice %118 {offsets = [0, 16], sizes = [17, 8], strides = [1, 1]} : vector<17x96xf32> to vector<17x8xf32>
    %cst_66 = arith.constant 0.353553385 : f32
    %152 = vector.broadcast %cst_66 : f32 to vector<17x8xf32>
    %153 = arith.mulf %151, %152 : vector<17x8xf32>
    %154 = vector.extract_strided_slice %118 {offsets = [0, 48], sizes = [17, 8], strides = [1, 1]} : vector<17x96xf32> to vector<17x8xf32>
    %155 = vector.extract_strided_slice %118 {offsets = [0, 80], sizes = [17, 8], strides = [1, 1]} : vector<17x96xf32> to vector<17x8xf32>
    %cst_67 = arith.constant dense<0.000000e+00> : vector<17x17xf32>
    %156 = tpu.matmul %153, %154, %cst_67 {dimension_numbers = #tpu.dot_dimension_numbers<[1], [1], [0], [0], [0, 0, 1, 0], [], []>} : vector<17x8xf32>, vector<17x8xf32>, vector<17x17xf32> -> vector<17x17xf32>
    %cst_68 = arith.constant dense<0xFF800000> : vector<17xf32>
    %157 = vector.multi_reduction <maximumf>, %156, %cst_68 [1] : vector<17x17xf32> to vector<17xf32>
    %158 = vector.shape_cast %157 : vector<17xf32> to vector<17x1xf32>
    %159 = vector.broadcast %158 : vector<17x1xf32> to vector<17x17xf32>
    %160 = arith.subf %156, %159 : vector<17x17xf32>
    %161 = math.exp %160 : vector<17x17xf32>
    %cst_69 = arith.constant dense<0.000000e+00> : vector<17xf32>
    %162 = vector.multi_reduction <add>, %161, %cst_69 [1] : vector<17x17xf32> to vector<17xf32>
    %163 = vector.shape_cast %162 : vector<17xf32> to vector<17x1xf32>
    %164 = vector.broadcast %163 : vector<17x1xf32> to vector<17x17xf32>
    %165 = arith.divf %161, %164 : vector<17x17xf32>
    %cst_70 = arith.constant dense<0.000000e+00> : vector<17x8xf32>
    %166 = tpu.matmul %165, %155, %cst_70 {dimension_numbers = #tpu.dot_dimension_numbers<[1], [0], [0], [1], [0, 0, 1, 1], [], []>} : vector<17x17xf32>, vector<17x8xf32>, vector<17x8xf32> -> vector<17x8xf32>
    %167 = vector.extract_strided_slice %118 {offsets = [0, 24], sizes = [17, 8], strides = [1, 1]} : vector<17x96xf32> to vector<17x8xf32>
    %cst_71 = arith.constant 0.353553385 : f32
    %168 = vector.broadcast %cst_71 : f32 to vector<17x8xf32>
    %169 = arith.mulf %167, %168 : vector<17x8xf32>
    %170 = vector.extract_strided_slice %118 {offsets = [0, 56], sizes = [17, 8], strides = [1, 1]} : vector<17x96xf32> to vector<17x8xf32>
    %171 = vector.extract_strided_slice %118 {offsets = [0, 88], sizes = [17, 8], strides = [1, 1]} : vector<17x96xf32> to vector<17x8xf32>
    %cst_72 = arith.constant dense<0.000000e+00> : vector<17x17xf32>
    %172 = tpu.matmul %169, %170, %cst_72 {dimension_numbers = #tpu.dot_dimension_numbers<[1], [1], [0], [0], [0, 0, 1, 0], [], []>} : vector<17x8xf32>, vector<17x8xf32>, vector<17x17xf32> -> vector<17x17xf32>
    %cst_73 = arith.constant dense<0xFF800000> : vector<17xf32>
    %173 = vector.multi_reduction <maximumf>, %172, %cst_73 [1] : vector<17x17xf32> to vector<17xf32>
    %174 = vector.shape_cast %173 : vector<17xf32> to vector<17x1xf32>
    %175 = vector.broadcast %174 : vector<17x1xf32> to vector<17x17xf32>
    %176 = arith.subf %172, %175 : vector<17x17xf32>
    %177 = math.exp %176 : vector<17x17xf32>
    %cst_74 = arith.constant dense<0.000000e+00> : vector<17xf32>
    %178 = vector.multi_reduction <add>, %177, %cst_74 [1] : vector<17x17xf32> to vector<17xf32>
    %179 = vector.shape_cast %178 : vector<17xf32> to vector<17x1xf32>
    %180 = vector.broadcast %179 : vector<17x1xf32> to vector<17x17xf32>
    %181 = arith.divf %177, %180 : vector<17x17xf32>
    %cst_75 = arith.constant dense<0.000000e+00> : vector<17x8xf32>
    %182 = tpu.matmul %181, %171, %cst_75 {dimension_numbers = #tpu.dot_dimension_numbers<[1], [0], [0], [1], [0, 0, 1, 1], [], []>} : vector<17x17xf32>, vector<17x8xf32>, vector<17x8xf32> -> vector<17x8xf32>
    %183 = tpu.concatenate %134, %150, %166, %182 in 1 : vector<17x8xf32>, vector<17x8xf32>, vector<17x8xf32>, vector<17x8xf32> -> vector<17x32xf32>
    %c17_76 = arith.constant 17 : index
    %c0_77 = arith.constant 0 : index
    %184 = vector.load %arg20[%c17_76, %c0_77] : memref<34x32xf32, #tpu.memory_space<vmem>>, vector<17x32xf32>
    tpu.vector_store %arg20[%c17_76, %c0_77], %183 {strides = array<i32>} : memref<34x32xf32, #tpu.memory_space<vmem>>, vector<17x32xf32>,
    %c0_78 = arith.constant 0 : index
    %c0_79 = arith.constant 0 : index
    %185 = vector.load %arg20[%c0_78, %c0_79] : memref<34x32xf32, #tpu.memory_space<vmem>>, vector<34x32xf32>
    %c0_80 = arith.constant 0 : index
    %c0_81 = arith.constant 0 : index
    %c0_82 = arith.constant 0 : index
    %186 = vector.load %arg9[%c0_80, %c0_81, %c0_82] : memref<2x32x32xf32, #tpu.memory_space<vmem>>, vector<1x32x32xf32>
    %187 = vector.shape_cast %186 : vector<1x32x32xf32> to vector<32x32xf32>
    %cst_83 = arith.constant dense<0.000000e+00> : vector<34x32xf32>
    %188 = tpu.matmul %185, %187, %cst_83 {dimension_numbers = #tpu.dot_dimension_numbers<[1], [0], [0], [1], [0, 0, 1, 1], [], []>} : vector<34x32xf32>, vector<32x32xf32>, vector<34x32xf32> -> vector<34x32xf32>
    %c0_84 = arith.constant 0 : index
    %c0_85 = arith.constant 0 : index
    %c0_86 = arith.constant 0 : index
    %189 = vector.load %arg10[%c0_84, %c0_85, %c0_86] : memref<2x1x32xf32, #tpu.memory_space<vmem>>, vector<1x1x32xf32>
    %190 = vector.shape_cast %189 : vector<1x1x32xf32> to vector<1x32xf32>
    %191 = vector.broadcast %190 : vector<1x32xf32> to vector<34x32xf32>
    %192 = arith.addf %188, %191 : vector<34x32xf32>
    %193 = arith.addf %19, %192 : vector<34x32xf32>
    %c0_87 = arith.constant 0 : index
    %c0_88 = arith.constant 0 : index
    %c0_89 = arith.constant 0 : index
    %194 = vector.load %arg11[%c0_87, %c0_88, %c0_89] : memref<2x1x32xf32, #tpu.memory_space<vmem>>, vector<1x1x32xf32>
    %195 = vector.shape_cast %194 : vector<1x1x32xf32> to vector<1x32xf32>
    %c0_90 = arith.constant 0 : index
    %c0_91 = arith.constant 0 : index
    %c0_92 = arith.constant 0 : index
    %196 = vector.load %arg12[%c0_90, %c0_91, %c0_92] : memref<2x1x32xf32, #tpu.memory_space<vmem>>, vector<1x1x32xf32>
    %197 = vector.shape_cast %196 : vector<1x1x32xf32> to vector<1x32xf32>
    %cst_93 = arith.constant dense<0.000000e+00> : vector<34xf32>
    %198 = vector.multi_reduction <add>, %193, %cst_93 [1] : vector<34x32xf32> to vector<34xf32>
    %199 = vector.shape_cast %198 : vector<34xf32> to vector<34x1xf32>
    %cst_94 = arith.constant 3.200000e+01 : f32
    %200 = vector.broadcast %cst_94 : f32 to vector<34x1xf32>
    %201 = arith.divf %199, %200 : vector<34x1xf32>
    %202 = vector.broadcast %201 : vector<34x1xf32> to vector<34x32xf32>
    %203 = arith.subf %193, %202 : vector<34x32xf32>
    %204 = arith.mulf %203, %203 : vector<34x32xf32>
    %cst_95 = arith.constant dense<0.000000e+00> : vector<34xf32>
    %205 = vector.multi_reduction <add>, %204, %cst_95 [1] : vector<34x32xf32> to vector<34xf32>
    %206 = vector.shape_cast %205 : vector<34xf32> to vector<34x1xf32>
    %cst_96 = arith.constant 3.200000e+01 : f32
    %207 = vector.broadcast %cst_96 : f32 to vector<34x1xf32>
    %208 = arith.divf %206, %207 : vector<34x1xf32>
    %cst_97 = arith.constant 9.99999997E-7 : f32
    %209 = vector.broadcast %cst_97 : f32 to vector<34x1xf32>
    %210 = arith.addf %208, %209 : vector<34x1xf32>
    %211 = math.rsqrt %210 : vector<34x1xf32>
    %212 = vector.broadcast %211 : vector<34x1xf32> to vector<34x32xf32>
    %213 = arith.mulf %203, %212 : vector<34x32xf32>
    %214 = vector.broadcast %195 : vector<1x32xf32> to vector<34x32xf32>
    %215 = arith.mulf %213, %214 : vector<34x32xf32>
    %216 = vector.broadcast %197 : vector<1x32xf32> to vector<34x32xf32>
    %217 = arith.addf %215, %216 : vector<34x32xf32>
    %c0_98 = arith.constant 0 : index
    %c0_99 = arith.constant 0 : index
    %c0_100 = arith.constant 0 : index
    %218 = vector.load %arg13[%c0_98, %c0_99, %c0_100] : memref<2x32x128xf32, #tpu.memory_space<vmem>>, vector<1x32x128xf32>
    %219 = vector.shape_cast %218 : vector<1x32x128xf32> to vector<32x128xf32>
    %cst_101 = arith.constant dense<0.000000e+00> : vector<34x128xf32>
    %220 = tpu.matmul %217, %219, %cst_101 {dimension_numbers = #tpu.dot_dimension_numbers<[1], [0], [0], [1], [0, 0, 1, 1], [], []>} : vector<34x32xf32>, vector<32x128xf32>, vector<34x128xf32> -> vector<34x128xf32>
    %c0_102 = arith.constant 0 : index
    %c0_103 = arith.constant 0 : index
    %c0_104 = arith.constant 0 : index
    %221 = vector.load %arg14[%c0_102, %c0_103, %c0_104] : memref<2x1x128xf32, #tpu.memory_space<vmem>>, vector<1x1x128xf32>
    %222 = vector.shape_cast %221 : vector<1x1x128xf32> to vector<1x128xf32>
    %223 = vector.broadcast %222 : vector<1x128xf32> to vector<34x128xf32>
    %224 = arith.addf %220, %223 : vector<34x128xf32>
    %cst_105 = arith.constant 5.000000e-01 : f32
    %225 = vector.broadcast %cst_105 : f32 to vector<34x128xf32>
    %226 = arith.mulf %225, %224 : vector<34x128xf32>
    %cst_106 = arith.constant 0.707106769 : f32
    %227 = vector.broadcast %cst_106 : f32 to vector<34x128xf32>
    %228 = arith.mulf %224, %227 : vector<34x128xf32>
    %cst_107 = arith.constant 0.000000e+00 : f32
    %229 = vector.broadcast %cst_107 : f32 to vector<34x128xf32>
    %230 = arith.cmpf oge, %228, %229 : vector<34x128xf32>
    %cst_108 = arith.constant 1.000000e+00 : f32
    %cst_109 = arith.constant -1.000000e+00 : f32
    %231 = vector.broadcast %cst_108 : f32 to vector<34x128xf32>
    %232 = vector.broadcast %cst_109 : f32 to vector<34x128xf32>
    %233 = arith.select %230, %231, %232 : vector<34x128xi1>, vector<34x128xf32>
    %234 = math.absf %228 : vector<34x128xf32>
    %cst_110 = arith.constant 0.327591091 : f32
    %235 = vector.broadcast %cst_110 : f32 to vector<34x128xf32>
    %236 = arith.mulf %235, %234 : vector<34x128xf32>
    %cst_111 = arith.constant 1.000000e+00 : f32
    %237 = vector.broadcast %cst_111 : f32 to vector<34x128xf32>
    %238 = arith.addf %237, %236 : vector<34x128xf32>
    %cst_112 = arith.constant 1.000000e+00 : f32
    %239 = vector.broadcast %cst_112 : f32 to vector<34x128xf32>
    %240 = arith.divf %239, %238 : vector<34x128xf32>
    %cst_113 = arith.constant 1.06140542 : f32
    %241 = vector.broadcast %cst_113 : f32 to vector<34x128xf32>
    %242 = arith.mulf %241, %240 : vector<34x128xf32>
    %cst_114 = arith.constant -1.45315206 : f32
    %243 = vector.broadcast %cst_114 : f32 to vector<34x128xf32>
    %244 = arith.addf %242, %243 : vector<34x128xf32>
    %245 = arith.mulf %244, %240 : vector<34x128xf32>
    %cst_115 = arith.constant 1.42141378 : f32
    %246 = vector.broadcast %cst_115 : f32 to vector<34x128xf32>
    %247 = arith.addf %245, %246 : vector<34x128xf32>
    %248 = arith.mulf %247, %240 : vector<34x128xf32>
    %cst_116 = arith.constant -0.284496725 : f32
    %249 = vector.broadcast %cst_116 : f32 to vector<34x128xf32>
    %250 = arith.addf %248, %249 : vector<34x128xf32>
    %251 = arith.mulf %250, %240 : vector<34x128xf32>
    %cst_117 = arith.constant 0.254829586 : f32
    %252 = vector.broadcast %cst_117 : f32 to vector<34x128xf32>
    %253 = arith.addf %251, %252 : vector<34x128xf32>
    %254 = arith.mulf %253, %240 : vector<34x128xf32>
    %cst_118 = arith.constant 0.000000e+00 : f32
    %255 = vector.broadcast %cst_118 : f32 to vector<34x128xf32>
    %256 = arith.subf %255, %234 : vector<34x128xf32>
    %257 = arith.mulf %256, %234 : vector<34x128xf32>
    %258 = math.exp %257 : vector<34x128xf32>
    %259 = arith.mulf %254, %258 : vector<34x128xf32>
    %cst_119 = arith.constant 1.000000e+00 : f32
    %260 = vector.broadcast %cst_119 : f32 to vector<34x128xf32>
    %261 = arith.subf %260, %259 : vector<34x128xf32>
    %262 = arith.mulf %233, %261 : vector<34x128xf32>
    %cst_120 = arith.constant 1.000000e+00 : f32
    %263 = vector.broadcast %cst_120 : f32 to vector<34x128xf32>
    %264 = arith.addf %263, %262 : vector<34x128xf32>
    %265 = arith.mulf %226, %264 : vector<34x128xf32>
    %c0_121 = arith.constant 0 : index
    %c0_122 = arith.constant 0 : index
    %c0_123 = arith.constant 0 : index
    %266 = vector.load %arg15[%c0_121, %c0_122, %c0_123] : memref<2x128x32xf32, #tpu.memory_space<vmem>>, vector<1x128x32xf32>
    %267 = vector.shape_cast %266 : vector<1x128x32xf32> to vector<128x32xf32>
    %cst_124 = arith.constant dense<0.000000e+00> : vector<34x32xf32>
    %268 = tpu.matmul %265, %267, %cst_124 {dimension_numbers = #tpu.dot_dimension_numbers<[1], [0], [0], [1], [0, 0, 1, 1], [], []>} : vector<34x128xf32>, vector<128x32xf32>, vector<34x32xf32> -> vector<34x32xf32>
    %c0_125 = arith.constant 0 : index
    %c0_126 = arith.constant 0 : index
    %c0_127 = arith.constant 0 : index
    %269 = vector.load %arg16[%c0_125, %c0_126, %c0_127] : memref<2x1x32xf32, #tpu.memory_space<vmem>>, vector<1x1x32xf32>
    %270 = vector.shape_cast %269 : vector<1x1x32xf32> to vector<1x32xf32>
    %271 = vector.broadcast %270 : vector<1x32xf32> to vector<34x32xf32>
    %272 = arith.addf %268, %271 : vector<34x32xf32>
    %273 = arith.addf %193, %272 : vector<34x32xf32>
    %c1_128 = arith.constant 1 : index
    %c0_129 = arith.constant 0 : index
    %c0_130 = arith.constant 0 : index
    %274 = vector.load %arg5[%c1_128, %c0_129, %c0_130] : memref<2x1x32xf32, #tpu.memory_space<vmem>>, vector<1x1x32xf32>
    %275 = vector.shape_cast %274 : vector<1x1x32xf32> to vector<1x32xf32>
    %c1_131 = arith.constant 1 : index
    %c0_132 = arith.constant 0 : index
    %c0_133 = arith.constant 0 : index
    %276 = vector.load %arg6[%c1_131, %c0_132, %c0_133] : memref<2x1x32xf32, #tpu.memory_space<vmem>>, vector<1x1x32xf32>
    %277 = vector.shape_cast %276 : vector<1x1x32xf32> to vector<1x32xf32>
    %cst_134 = arith.constant dense<0.000000e+00> : vector<34xf32>
    %278 = vector.multi_reduction <add>, %273, %cst_134 [1] : vector<34x32xf32> to vector<34xf32>
    %279 = vector.shape_cast %278 : vector<34xf32> to vector<34x1xf32>
    %cst_135 = arith.constant 3.200000e+01 : f32
    %280 = vector.broadcast %cst_135 : f32 to vector<34x1xf32>
    %281 = arith.divf %279, %280 : vector<34x1xf32>
    %282 = vector.broadcast %281 : vector<34x1xf32> to vector<34x32xf32>
    %283 = arith.subf %273, %282 : vector<34x32xf32>
    %284 = arith.mulf %283, %283 : vector<34x32xf32>
    %cst_136 = arith.constant dense<0.000000e+00> : vector<34xf32>
    %285 = vector.multi_reduction <add>, %284, %cst_136 [1] : vector<34x32xf32> to vector<34xf32>
    %286 = vector.shape_cast %285 : vector<34xf32> to vector<34x1xf32>
    %cst_137 = arith.constant 3.200000e+01 : f32
    %287 = vector.broadcast %cst_137 : f32 to vector<34x1xf32>
    %288 = arith.divf %286, %287 : vector<34x1xf32>
    %cst_138 = arith.constant 9.99999997E-7 : f32
    %289 = vector.broadcast %cst_138 : f32 to vector<34x1xf32>
    %290 = arith.addf %288, %289 : vector<34x1xf32>
    %291 = math.rsqrt %290 : vector<34x1xf32>
    %292 = vector.broadcast %291 : vector<34x1xf32> to vector<34x32xf32>
    %293 = arith.mulf %283, %292 : vector<34x32xf32>
    %294 = vector.broadcast %275 : vector<1x32xf32> to vector<34x32xf32>
    %295 = arith.mulf %293, %294 : vector<34x32xf32>
    %296 = vector.broadcast %277 : vector<1x32xf32> to vector<34x32xf32>
    %297 = arith.addf %295, %296 : vector<34x32xf32>
    %c1_139 = arith.constant 1 : index
    %c0_140 = arith.constant 0 : index
    %c0_141 = arith.constant 0 : index
    %298 = vector.load %arg7[%c1_139, %c0_140, %c0_141] : memref<2x32x96xf32, #tpu.memory_space<vmem>>, vector<1x32x96xf32>
    %299 = vector.shape_cast %298 : vector<1x32x96xf32> to vector<32x96xf32>
    %cst_142 = arith.constant dense<0.000000e+00> : vector<34x96xf32>
    %300 = tpu.matmul %297, %299, %cst_142 {dimension_numbers = #tpu.dot_dimension_numbers<[1], [0], [0], [1], [0, 0, 1, 1], [], []>} : vector<34x32xf32>, vector<32x96xf32>, vector<34x96xf32> -> vector<34x96xf32>
    %c1_143 = arith.constant 1 : index
    %c0_144 = arith.constant 0 : index
    %c0_145 = arith.constant 0 : index
    %301 = vector.load %arg8[%c1_143, %c0_144, %c0_145] : memref<2x1x96xf32, #tpu.memory_space<vmem>>, vector<1x1x96xf32>
    %302 = vector.shape_cast %301 : vector<1x1x96xf32> to vector<1x96xf32>
    %303 = vector.broadcast %302 : vector<1x96xf32> to vector<34x96xf32>
    %304 = arith.addf %300, %303 : vector<34x96xf32>
    %305 = vector.extract_strided_slice %304 {offsets = [0, 0], sizes = [17, 96], strides = [1, 1]} : vector<34x96xf32> to vector<17x96xf32>
    %306 = vector.extract_strided_slice %305 {offsets = [0, 0], sizes = [17, 8], strides = [1, 1]} : vector<17x96xf32> to vector<17x8xf32>
    %cst_146 = arith.constant 0.353553385 : f32
    %307 = vector.broadcast %cst_146 : f32 to vector<17x8xf32>
    %308 = arith.mulf %306, %307 : vector<17x8xf32>
    %309 = vector.extract_strided_slice %305 {offsets = [0, 32], sizes = [17, 8], strides = [1, 1]} : vector<17x96xf32> to vector<17x8xf32>
    %310 = vector.extract_strided_slice %305 {offsets = [0, 64], sizes = [17, 8], strides = [1, 1]} : vector<17x96xf32> to vector<17x8xf32>
    %cst_147 = arith.constant dense<0.000000e+00> : vector<17x17xf32>
    %311 = tpu.matmul %308, %309, %cst_147 {dimension_numbers = #tpu.dot_dimension_numbers<[1], [1], [0], [0], [0, 0, 1, 0], [], []>} : vector<17x8xf32>, vector<17x8xf32>, vector<17x17xf32> -> vector<17x17xf32>
    %cst_148 = arith.constant dense<0xFF800000> : vector<17xf32>
    %312 = vector.multi_reduction <maximumf>, %311, %cst_148 [1] : vector<17x17xf32> to vector<17xf32>
    %313 = vector.shape_cast %312 : vector<17xf32> to vector<17x1xf32>
    %314 = vector.broadcast %313 : vector<17x1xf32> to vector<17x17xf32>
    %315 = arith.subf %311, %314 : vector<17x17xf32>
    %316 = math.exp %315 : vector<17x17xf32>
    %cst_149 = arith.constant dense<0.000000e+00> : vector<17xf32>
    %317 = vector.multi_reduction <add>, %316, %cst_149 [1] : vector<17x17xf32> to vector<17xf32>
    %318 = vector.shape_cast %317 : vector<17xf32> to vector<17x1xf32>
    %319 = vector.broadcast %318 : vector<17x1xf32> to vector<17x17xf32>
    %320 = arith.divf %316, %319 : vector<17x17xf32>
    %cst_150 = arith.constant dense<0.000000e+00> : vector<17x8xf32>
    %321 = tpu.matmul %320, %310, %cst_150 {dimension_numbers = #tpu.dot_dimension_numbers<[1], [0], [0], [1], [0, 0, 1, 1], [], []>} : vector<17x17xf32>, vector<17x8xf32>, vector<17x8xf32> -> vector<17x8xf32>
    %322 = vector.extract_strided_slice %305 {offsets = [0, 8], sizes = [17, 8], strides = [1, 1]} : vector<17x96xf32> to vector<17x8xf32>
    %cst_151 = arith.constant 0.353553385 : f32
    %323 = vector.broadcast %cst_151 : f32 to vector<17x8xf32>
    %324 = arith.mulf %322, %323 : vector<17x8xf32>
    %325 = vector.extract_strided_slice %305 {offsets = [0, 40], sizes = [17, 8], strides = [1, 1]} : vector<17x96xf32> to vector<17x8xf32>
    %326 = vector.extract_strided_slice %305 {offsets = [0, 72], sizes = [17, 8], strides = [1, 1]} : vector<17x96xf32> to vector<17x8xf32>
    %cst_152 = arith.constant dense<0.000000e+00> : vector<17x17xf32>
    %327 = tpu.matmul %324, %325, %cst_152 {dimension_numbers = #tpu.dot_dimension_numbers<[1], [1], [0], [0], [0, 0, 1, 0], [], []>} : vector<17x8xf32>, vector<17x8xf32>, vector<17x17xf32> -> vector<17x17xf32>
    %cst_153 = arith.constant dense<0xFF800000> : vector<17xf32>
    %328 = vector.multi_reduction <maximumf>, %327, %cst_153 [1] : vector<17x17xf32> to vector<17xf32>
    %329 = vector.shape_cast %328 : vector<17xf32> to vector<17x1xf32>
    %330 = vector.broadcast %329 : vector<17x1xf32> to vector<17x17xf32>
    %331 = arith.subf %327, %330 : vector<17x17xf32>
    %332 = math.exp %331 : vector<17x17xf32>
    %cst_154 = arith.constant dense<0.000000e+00> : vector<17xf32>
    %333 = vector.multi_reduction <add>, %332, %cst_154 [1] : vector<17x17xf32> to vector<17xf32>
    %334 = vector.shape_cast %333 : vector<17xf32> to vector<17x1xf32>
    %335 = vector.broadcast %334 : vector<17x1xf32> to vector<17x17xf32>
    %336 = arith.divf %332, %335 : vector<17x17xf32>
    %cst_155 = arith.constant dense<0.000000e+00> : vector<17x8xf32>
    %337 = tpu.matmul %336, %326, %cst_155 {dimension_numbers = #tpu.dot_dimension_numbers<[1], [0], [0], [1], [0, 0, 1, 1], [], []>} : vector<17x17xf32>, vector<17x8xf32>, vector<17x8xf32> -> vector<17x8xf32>
    %338 = vector.extract_strided_slice %305 {offsets = [0, 16], sizes = [17, 8], strides = [1, 1]} : vector<17x96xf32> to vector<17x8xf32>
    %cst_156 = arith.constant 0.353553385 : f32
    %339 = vector.broadcast %cst_156 : f32 to vector<17x8xf32>
    %340 = arith.mulf %338, %339 : vector<17x8xf32>
    %341 = vector.extract_strided_slice %305 {offsets = [0, 48], sizes = [17, 8], strides = [1, 1]} : vector<17x96xf32> to vector<17x8xf32>
    %342 = vector.extract_strided_slice %305 {offsets = [0, 80], sizes = [17, 8], strides = [1, 1]} : vector<17x96xf32> to vector<17x8xf32>
    %cst_157 = arith.constant dense<0.000000e+00> : vector<17x17xf32>
    %343 = tpu.matmul %340, %341, %cst_157 {dimension_numbers = #tpu.dot_dimension_numbers<[1], [1], [0], [0], [0, 0, 1, 0], [], []>} : vector<17x8xf32>, vector<17x8xf32>, vector<17x17xf32> -> vector<17x17xf32>
    %cst_158 = arith.constant dense<0xFF800000> : vector<17xf32>
    %344 = vector.multi_reduction <maximumf>, %343, %cst_158 [1] : vector<17x17xf32> to vector<17xf32>
    %345 = vector.shape_cast %344 : vector<17xf32> to vector<17x1xf32>
    %346 = vector.broadcast %345 : vector<17x1xf32> to vector<17x17xf32>
    %347 = arith.subf %343, %346 : vector<17x17xf32>
    %348 = math.exp %347 : vector<17x17xf32>
    %cst_159 = arith.constant dense<0.000000e+00> : vector<17xf32>
    %349 = vector.multi_reduction <add>, %348, %cst_159 [1] : vector<17x17xf32> to vector<17xf32>
    %350 = vector.shape_cast %349 : vector<17xf32> to vector<17x1xf32>
    %351 = vector.broadcast %350 : vector<17x1xf32> to vector<17x17xf32>
    %352 = arith.divf %348, %351 : vector<17x17xf32>
    %cst_160 = arith.constant dense<0.000000e+00> : vector<17x8xf32>
    %353 = tpu.matmul %352, %342, %cst_160 {dimension_numbers = #tpu.dot_dimension_numbers<[1], [0], [0], [1], [0, 0, 1, 1], [], []>} : vector<17x17xf32>, vector<17x8xf32>, vector<17x8xf32> -> vector<17x8xf32>
    %354 = vector.extract_strided_slice %305 {offsets = [0, 24], sizes = [17, 8], strides = [1, 1]} : vector<17x96xf32> to vector<17x8xf32>
    %cst_161 = arith.constant 0.353553385 : f32
    %355 = vector.broadcast %cst_161 : f32 to vector<17x8xf32>
    %356 = arith.mulf %354, %355 : vector<17x8xf32>
    %357 = vector.extract_strided_slice %305 {offsets = [0, 56], sizes = [17, 8], strides = [1, 1]} : vector<17x96xf32> to vector<17x8xf32>
    %358 = vector.extract_strided_slice %305 {offsets = [0, 88], sizes = [17, 8], strides = [1, 1]} : vector<17x96xf32> to vector<17x8xf32>
    %cst_162 = arith.constant dense<0.000000e+00> : vector<17x17xf32>
    %359 = tpu.matmul %356, %357, %cst_162 {dimension_numbers = #tpu.dot_dimension_numbers<[1], [1], [0], [0], [0, 0, 1, 0], [], []>} : vector<17x8xf32>, vector<17x8xf32>, vector<17x17xf32> -> vector<17x17xf32>
    %cst_163 = arith.constant dense<0xFF800000> : vector<17xf32>
    %360 = vector.multi_reduction <maximumf>, %359, %cst_163 [1] : vector<17x17xf32> to vector<17xf32>
    %361 = vector.shape_cast %360 : vector<17xf32> to vector<17x1xf32>
    %362 = vector.broadcast %361 : vector<17x1xf32> to vector<17x17xf32>
    %363 = arith.subf %359, %362 : vector<17x17xf32>
    %364 = math.exp %363 : vector<17x17xf32>
    %cst_164 = arith.constant dense<0.000000e+00> : vector<17xf32>
    %365 = vector.multi_reduction <add>, %364, %cst_164 [1] : vector<17x17xf32> to vector<17xf32>
    %366 = vector.shape_cast %365 : vector<17xf32> to vector<17x1xf32>
    %367 = vector.broadcast %366 : vector<17x1xf32> to vector<17x17xf32>
    %368 = arith.divf %364, %367 : vector<17x17xf32>
    %cst_165 = arith.constant dense<0.000000e+00> : vector<17x8xf32>
    %369 = tpu.matmul %368, %358, %cst_165 {dimension_numbers = #tpu.dot_dimension_numbers<[1], [0], [0], [1], [0, 0, 1, 1], [], []>} : vector<17x17xf32>, vector<17x8xf32>, vector<17x8xf32> -> vector<17x8xf32>
    %370 = tpu.concatenate %321, %337, %353, %369 in 1 : vector<17x8xf32>, vector<17x8xf32>, vector<17x8xf32>, vector<17x8xf32> -> vector<17x32xf32>
    %c0_166 = arith.constant 0 : index
    %c0_167 = arith.constant 0 : index
    %371 = vector.load %arg20[%c0_166, %c0_167] : memref<34x32xf32, #tpu.memory_space<vmem>>, vector<17x32xf32>
    tpu.vector_store %arg20[%c0_166, %c0_167], %370 {strides = array<i32>} : memref<34x32xf32, #tpu.memory_space<vmem>>, vector<17x32xf32>,
    %372 = vector.extract_strided_slice %304 {offsets = [17, 0], sizes = [17, 96], strides = [1, 1]} : vector<34x96xf32> to vector<17x96xf32>
    %373 = vector.extract_strided_slice %372 {offsets = [0, 0], sizes = [17, 8], strides = [1, 1]} : vector<17x96xf32> to vector<17x8xf32>
    %cst_168 = arith.constant 0.353553385 : f32
    %374 = vector.broadcast %cst_168 : f32 to vector<17x8xf32>
    %375 = arith.mulf %373, %374 : vector<17x8xf32>
    %376 = vector.extract_strided_slice %372 {offsets = [0, 32], sizes = [17, 8], strides = [1, 1]} : vector<17x96xf32> to vector<17x8xf32>
    %377 = vector.extract_strided_slice %372 {offsets = [0, 64], sizes = [17, 8], strides = [1, 1]} : vector<17x96xf32> to vector<17x8xf32>
    %cst_169 = arith.constant dense<0.000000e+00> : vector<17x17xf32>
    %378 = tpu.matmul %375, %376, %cst_169 {dimension_numbers = #tpu.dot_dimension_numbers<[1], [1], [0], [0], [0, 0, 1, 0], [], []>} : vector<17x8xf32>, vector<17x8xf32>, vector<17x17xf32> -> vector<17x17xf32>
    %cst_170 = arith.constant dense<0xFF800000> : vector<17xf32>
    %379 = vector.multi_reduction <maximumf>, %378, %cst_170 [1] : vector<17x17xf32> to vector<17xf32>
    %380 = vector.shape_cast %379 : vector<17xf32> to vector<17x1xf32>
    %381 = vector.broadcast %380 : vector<17x1xf32> to vector<17x17xf32>
    %382 = arith.subf %378, %381 : vector<17x17xf32>
    %383 = math.exp %382 : vector<17x17xf32>
    %cst_171 = arith.constant dense<0.000000e+00> : vector<17xf32>
    %384 = vector.multi_reduction <add>, %383, %cst_171 [1] : vector<17x17xf32> to vector<17xf32>
    %385 = vector.shape_cast %384 : vector<17xf32> to vector<17x1xf32>
    %386 = vector.broadcast %385 : vector<17x1xf32> to vector<17x17xf32>
    %387 = arith.divf %383, %386 : vector<17x17xf32>
    %cst_172 = arith.constant dense<0.000000e+00> : vector<17x8xf32>
    %388 = tpu.matmul %387, %377, %cst_172 {dimension_numbers = #tpu.dot_dimension_numbers<[1], [0], [0], [1], [0, 0, 1, 1], [], []>} : vector<17x17xf32>, vector<17x8xf32>, vector<17x8xf32> -> vector<17x8xf32>
    %389 = vector.extract_strided_slice %372 {offsets = [0, 8], sizes = [17, 8], strides = [1, 1]} : vector<17x96xf32> to vector<17x8xf32>
    %cst_173 = arith.constant 0.353553385 : f32
    %390 = vector.broadcast %cst_173 : f32 to vector<17x8xf32>
    %391 = arith.mulf %389, %390 : vector<17x8xf32>
    %392 = vector.extract_strided_slice %372 {offsets = [0, 40], sizes = [17, 8], strides = [1, 1]} : vector<17x96xf32> to vector<17x8xf32>
    %393 = vector.extract_strided_slice %372 {offsets = [0, 72], sizes = [17, 8], strides = [1, 1]} : vector<17x96xf32> to vector<17x8xf32>
    %cst_174 = arith.constant dense<0.000000e+00> : vector<17x17xf32>
    %394 = tpu.matmul %391, %392, %cst_174 {dimension_numbers = #tpu.dot_dimension_numbers<[1], [1], [0], [0], [0, 0, 1, 0], [], []>} : vector<17x8xf32>, vector<17x8xf32>, vector<17x17xf32> -> vector<17x17xf32>
    %cst_175 = arith.constant dense<0xFF800000> : vector<17xf32>
    %395 = vector.multi_reduction <maximumf>, %394, %cst_175 [1] : vector<17x17xf32> to vector<17xf32>
    %396 = vector.shape_cast %395 : vector<17xf32> to vector<17x1xf32>
    %397 = vector.broadcast %396 : vector<17x1xf32> to vector<17x17xf32>
    %398 = arith.subf %394, %397 : vector<17x17xf32>
    %399 = math.exp %398 : vector<17x17xf32>
    %cst_176 = arith.constant dense<0.000000e+00> : vector<17xf32>
    %400 = vector.multi_reduction <add>, %399, %cst_176 [1] : vector<17x17xf32> to vector<17xf32>
    %401 = vector.shape_cast %400 : vector<17xf32> to vector<17x1xf32>
    %402 = vector.broadcast %401 : vector<17x1xf32> to vector<17x17xf32>
    %403 = arith.divf %399, %402 : vector<17x17xf32>
    %cst_177 = arith.constant dense<0.000000e+00> : vector<17x8xf32>
    %404 = tpu.matmul %403, %393, %cst_177 {dimension_numbers = #tpu.dot_dimension_numbers<[1], [0], [0], [1], [0, 0, 1, 1], [], []>} : vector<17x17xf32>, vector<17x8xf32>, vector<17x8xf32> -> vector<17x8xf32>
    %405 = vector.extract_strided_slice %372 {offsets = [0, 16], sizes = [17, 8], strides = [1, 1]} : vector<17x96xf32> to vector<17x8xf32>
    %cst_178 = arith.constant 0.353553385 : f32
    %406 = vector.broadcast %cst_178 : f32 to vector<17x8xf32>
    %407 = arith.mulf %405, %406 : vector<17x8xf32>
    %408 = vector.extract_strided_slice %372 {offsets = [0, 48], sizes = [17, 8], strides = [1, 1]} : vector<17x96xf32> to vector<17x8xf32>
    %409 = vector.extract_strided_slice %372 {offsets = [0, 80], sizes = [17, 8], strides = [1, 1]} : vector<17x96xf32> to vector<17x8xf32>
    %cst_179 = arith.constant dense<0.000000e+00> : vector<17x17xf32>
    %410 = tpu.matmul %407, %408, %cst_179 {dimension_numbers = #tpu.dot_dimension_numbers<[1], [1], [0], [0], [0, 0, 1, 0], [], []>} : vector<17x8xf32>, vector<17x8xf32>, vector<17x17xf32> -> vector<17x17xf32>
    %cst_180 = arith.constant dense<0xFF800000> : vector<17xf32>
    %411 = vector.multi_reduction <maximumf>, %410, %cst_180 [1] : vector<17x17xf32> to vector<17xf32>
    %412 = vector.shape_cast %411 : vector<17xf32> to vector<17x1xf32>
    %413 = vector.broadcast %412 : vector<17x1xf32> to vector<17x17xf32>
    %414 = arith.subf %410, %413 : vector<17x17xf32>
    %415 = math.exp %414 : vector<17x17xf32>
    %cst_181 = arith.constant dense<0.000000e+00> : vector<17xf32>
    %416 = vector.multi_reduction <add>, %415, %cst_181 [1] : vector<17x17xf32> to vector<17xf32>
    %417 = vector.shape_cast %416 : vector<17xf32> to vector<17x1xf32>
    %418 = vector.broadcast %417 : vector<17x1xf32> to vector<17x17xf32>
    %419 = arith.divf %415, %418 : vector<17x17xf32>
    %cst_182 = arith.constant dense<0.000000e+00> : vector<17x8xf32>
    %420 = tpu.matmul %419, %409, %cst_182 {dimension_numbers = #tpu.dot_dimension_numbers<[1], [0], [0], [1], [0, 0, 1, 1], [], []>} : vector<17x17xf32>, vector<17x8xf32>, vector<17x8xf32> -> vector<17x8xf32>
    %421 = vector.extract_strided_slice %372 {offsets = [0, 24], sizes = [17, 8], strides = [1, 1]} : vector<17x96xf32> to vector<17x8xf32>
    %cst_183 = arith.constant 0.353553385 : f32
    %422 = vector.broadcast %cst_183 : f32 to vector<17x8xf32>
    %423 = arith.mulf %421, %422 : vector<17x8xf32>
    %424 = vector.extract_strided_slice %372 {offsets = [0, 56], sizes = [17, 8], strides = [1, 1]} : vector<17x96xf32> to vector<17x8xf32>
    %425 = vector.extract_strided_slice %372 {offsets = [0, 88], sizes = [17, 8], strides = [1, 1]} : vector<17x96xf32> to vector<17x8xf32>
    %cst_184 = arith.constant dense<0.000000e+00> : vector<17x17xf32>
    %426 = tpu.matmul %423, %424, %cst_184 {dimension_numbers = #tpu.dot_dimension_numbers<[1], [1], [0], [0], [0, 0, 1, 0], [], []>} : vector<17x8xf32>, vector<17x8xf32>, vector<17x17xf32> -> vector<17x17xf32>
    %cst_185 = arith.constant dense<0xFF800000> : vector<17xf32>
    %427 = vector.multi_reduction <maximumf>, %426, %cst_185 [1] : vector<17x17xf32> to vector<17xf32>
    %428 = vector.shape_cast %427 : vector<17xf32> to vector<17x1xf32>
    %429 = vector.broadcast %428 : vector<17x1xf32> to vector<17x17xf32>
    %430 = arith.subf %426, %429 : vector<17x17xf32>
    %431 = math.exp %430 : vector<17x17xf32>
    %cst_186 = arith.constant dense<0.000000e+00> : vector<17xf32>
    %432 = vector.multi_reduction <add>, %431, %cst_186 [1] : vector<17x17xf32> to vector<17xf32>
    %433 = vector.shape_cast %432 : vector<17xf32> to vector<17x1xf32>
    %434 = vector.broadcast %433 : vector<17x1xf32> to vector<17x17xf32>
    %435 = arith.divf %431, %434 : vector<17x17xf32>
    %cst_187 = arith.constant dense<0.000000e+00> : vector<17x8xf32>
    %436 = tpu.matmul %435, %425, %cst_187 {dimension_numbers = #tpu.dot_dimension_numbers<[1], [0], [0], [1], [0, 0, 1, 1], [], []>} : vector<17x17xf32>, vector<17x8xf32>, vector<17x8xf32> -> vector<17x8xf32>
    %437 = tpu.concatenate %388, %404, %420, %436 in 1 : vector<17x8xf32>, vector<17x8xf32>, vector<17x8xf32>, vector<17x8xf32> -> vector<17x32xf32>
    %c17_188 = arith.constant 17 : index
    %c0_189 = arith.constant 0 : index
    %438 = vector.load %arg20[%c17_188, %c0_189] : memref<34x32xf32, #tpu.memory_space<vmem>>, vector<17x32xf32>
    tpu.vector_store %arg20[%c17_188, %c0_189], %437 {strides = array<i32>} : memref<34x32xf32, #tpu.memory_space<vmem>>, vector<17x32xf32>,
    %c0_190 = arith.constant 0 : index
    %c0_191 = arith.constant 0 : index
    %439 = vector.load %arg20[%c0_190, %c0_191] : memref<34x32xf32, #tpu.memory_space<vmem>>, vector<34x32xf32>
    %c1_192 = arith.constant 1 : index
    %c0_193 = arith.constant 0 : index
    %c0_194 = arith.constant 0 : index
    %440 = vector.load %arg9[%c1_192, %c0_193, %c0_194] : memref<2x32x32xf32, #tpu.memory_space<vmem>>, vector<1x32x32xf32>
    %441 = vector.shape_cast %440 : vector<1x32x32xf32> to vector<32x32xf32>
    %cst_195 = arith.constant dense<0.000000e+00> : vector<34x32xf32>
    %442 = tpu.matmul %439, %441, %cst_195 {dimension_numbers = #tpu.dot_dimension_numbers<[1], [0], [0], [1], [0, 0, 1, 1], [], []>} : vector<34x32xf32>, vector<32x32xf32>, vector<34x32xf32> -> vector<34x32xf32>
    %c1_196 = arith.constant 1 : index
    %c0_197 = arith.constant 0 : index
    %c0_198 = arith.constant 0 : index
    %443 = vector.load %arg10[%c1_196, %c0_197, %c0_198] : memref<2x1x32xf32, #tpu.memory_space<vmem>>, vector<1x1x32xf32>
    %444 = vector.shape_cast %443 : vector<1x1x32xf32> to vector<1x32xf32>
    %445 = vector.broadcast %444 : vector<1x32xf32> to vector<34x32xf32>
    %446 = arith.addf %442, %445 : vector<34x32xf32>
    %447 = arith.addf %273, %446 : vector<34x32xf32>
    %c1_199 = arith.constant 1 : index
    %c0_200 = arith.constant 0 : index
    %c0_201 = arith.constant 0 : index
    %448 = vector.load %arg11[%c1_199, %c0_200, %c0_201] : memref<2x1x32xf32, #tpu.memory_space<vmem>>, vector<1x1x32xf32>
    %449 = vector.shape_cast %448 : vector<1x1x32xf32> to vector<1x32xf32>
    %c1_202 = arith.constant 1 : index
    %c0_203 = arith.constant 0 : index
    %c0_204 = arith.constant 0 : index
    %450 = vector.load %arg12[%c1_202, %c0_203, %c0_204] : memref<2x1x32xf32, #tpu.memory_space<vmem>>, vector<1x1x32xf32>
    %451 = vector.shape_cast %450 : vector<1x1x32xf32> to vector<1x32xf32>
    %cst_205 = arith.constant dense<0.000000e+00> : vector<34xf32>
    %452 = vector.multi_reduction <add>, %447, %cst_205 [1] : vector<34x32xf32> to vector<34xf32>
    %453 = vector.shape_cast %452 : vector<34xf32> to vector<34x1xf32>
    %cst_206 = arith.constant 3.200000e+01 : f32
    %454 = vector.broadcast %cst_206 : f32 to vector<34x1xf32>
    %455 = arith.divf %453, %454 : vector<34x1xf32>
    %456 = vector.broadcast %455 : vector<34x1xf32> to vector<34x32xf32>
    %457 = arith.subf %447, %456 : vector<34x32xf32>
    %458 = arith.mulf %457, %457 : vector<34x32xf32>
    %cst_207 = arith.constant dense<0.000000e+00> : vector<34xf32>
    %459 = vector.multi_reduction <add>, %458, %cst_207 [1] : vector<34x32xf32> to vector<34xf32>
    %460 = vector.shape_cast %459 : vector<34xf32> to vector<34x1xf32>
    %cst_208 = arith.constant 3.200000e+01 : f32
    %461 = vector.broadcast %cst_208 : f32 to vector<34x1xf32>
    %462 = arith.divf %460, %461 : vector<34x1xf32>
    %cst_209 = arith.constant 9.99999997E-7 : f32
    %463 = vector.broadcast %cst_209 : f32 to vector<34x1xf32>
    %464 = arith.addf %462, %463 : vector<34x1xf32>
    %465 = math.rsqrt %464 : vector<34x1xf32>
    %466 = vector.broadcast %465 : vector<34x1xf32> to vector<34x32xf32>
    %467 = arith.mulf %457, %466 : vector<34x32xf32>
    %468 = vector.broadcast %449 : vector<1x32xf32> to vector<34x32xf32>
    %469 = arith.mulf %467, %468 : vector<34x32xf32>
    %470 = vector.broadcast %451 : vector<1x32xf32> to vector<34x32xf32>
    %471 = arith.addf %469, %470 : vector<34x32xf32>
    %c1_210 = arith.constant 1 : index
    %c0_211 = arith.constant 0 : index
    %c0_212 = arith.constant 0 : index
    %472 = vector.load %arg13[%c1_210, %c0_211, %c0_212] : memref<2x32x128xf32, #tpu.memory_space<vmem>>, vector<1x32x128xf32>
    %473 = vector.shape_cast %472 : vector<1x32x128xf32> to vector<32x128xf32>
    %cst_213 = arith.constant dense<0.000000e+00> : vector<34x128xf32>
    %474 = tpu.matmul %471, %473, %cst_213 {dimension_numbers = #tpu.dot_dimension_numbers<[1], [0], [0], [1], [0, 0, 1, 1], [], []>} : vector<34x32xf32>, vector<32x128xf32>, vector<34x128xf32> -> vector<34x128xf32>
    %c1_214 = arith.constant 1 : index
    %c0_215 = arith.constant 0 : index
    %c0_216 = arith.constant 0 : index
    %475 = vector.load %arg14[%c1_214, %c0_215, %c0_216] : memref<2x1x128xf32, #tpu.memory_space<vmem>>, vector<1x1x128xf32>
    %476 = vector.shape_cast %475 : vector<1x1x128xf32> to vector<1x128xf32>
    %477 = vector.broadcast %476 : vector<1x128xf32> to vector<34x128xf32>
    %478 = arith.addf %474, %477 : vector<34x128xf32>
    %cst_217 = arith.constant 5.000000e-01 : f32
    %479 = vector.broadcast %cst_217 : f32 to vector<34x128xf32>
    %480 = arith.mulf %479, %478 : vector<34x128xf32>
    %cst_218 = arith.constant 0.707106769 : f32
    %481 = vector.broadcast %cst_218 : f32 to vector<34x128xf32>
    %482 = arith.mulf %478, %481 : vector<34x128xf32>
    %cst_219 = arith.constant 0.000000e+00 : f32
    %483 = vector.broadcast %cst_219 : f32 to vector<34x128xf32>
    %484 = arith.cmpf oge, %482, %483 : vector<34x128xf32>
    %cst_220 = arith.constant 1.000000e+00 : f32
    %cst_221 = arith.constant -1.000000e+00 : f32
    %485 = vector.broadcast %cst_220 : f32 to vector<34x128xf32>
    %486 = vector.broadcast %cst_221 : f32 to vector<34x128xf32>
    %487 = arith.select %484, %485, %486 : vector<34x128xi1>, vector<34x128xf32>
    %488 = math.absf %482 : vector<34x128xf32>
    %cst_222 = arith.constant 0.327591091 : f32
    %489 = vector.broadcast %cst_222 : f32 to vector<34x128xf32>
    %490 = arith.mulf %489, %488 : vector<34x128xf32>
    %cst_223 = arith.constant 1.000000e+00 : f32
    %491 = vector.broadcast %cst_223 : f32 to vector<34x128xf32>
    %492 = arith.addf %491, %490 : vector<34x128xf32>
    %cst_224 = arith.constant 1.000000e+00 : f32
    %493 = vector.broadcast %cst_224 : f32 to vector<34x128xf32>
    %494 = arith.divf %493, %492 : vector<34x128xf32>
    %cst_225 = arith.constant 1.06140542 : f32
    %495 = vector.broadcast %cst_225 : f32 to vector<34x128xf32>
    %496 = arith.mulf %495, %494 : vector<34x128xf32>
    %cst_226 = arith.constant -1.45315206 : f32
    %497 = vector.broadcast %cst_226 : f32 to vector<34x128xf32>
    %498 = arith.addf %496, %497 : vector<34x128xf32>
    %499 = arith.mulf %498, %494 : vector<34x128xf32>
    %cst_227 = arith.constant 1.42141378 : f32
    %500 = vector.broadcast %cst_227 : f32 to vector<34x128xf32>
    %501 = arith.addf %499, %500 : vector<34x128xf32>
    %502 = arith.mulf %501, %494 : vector<34x128xf32>
    %cst_228 = arith.constant -0.284496725 : f32
    %503 = vector.broadcast %cst_228 : f32 to vector<34x128xf32>
    %504 = arith.addf %502, %503 : vector<34x128xf32>
    %505 = arith.mulf %504, %494 : vector<34x128xf32>
    %cst_229 = arith.constant 0.254829586 : f32
    %506 = vector.broadcast %cst_229 : f32 to vector<34x128xf32>
    %507 = arith.addf %505, %506 : vector<34x128xf32>
    %508 = arith.mulf %507, %494 : vector<34x128xf32>
    %cst_230 = arith.constant 0.000000e+00 : f32
    %509 = vector.broadcast %cst_230 : f32 to vector<34x128xf32>
    %510 = arith.subf %509, %488 : vector<34x128xf32>
    %511 = arith.mulf %510, %488 : vector<34x128xf32>
    %512 = math.exp %511 : vector<34x128xf32>
    %513 = arith.mulf %508, %512 : vector<34x128xf32>
    %cst_231 = arith.constant 1.000000e+00 : f32
    %514 = vector.broadcast %cst_231 : f32 to vector<34x128xf32>
    %515 = arith.subf %514, %513 : vector<34x128xf32>
    %516 = arith.mulf %487, %515 : vector<34x128xf32>
    %cst_232 = arith.constant 1.000000e+00 : f32
    %517 = vector.broadcast %cst_232 : f32 to vector<34x128xf32>
    %518 = arith.addf %517, %516 : vector<34x128xf32>
    %519 = arith.mulf %480, %518 : vector<34x128xf32>
    %c1_233 = arith.constant 1 : index
    %c0_234 = arith.constant 0 : index
    %c0_235 = arith.constant 0 : index
    %520 = vector.load %arg15[%c1_233, %c0_234, %c0_235] : memref<2x128x32xf32, #tpu.memory_space<vmem>>, vector<1x128x32xf32>
    %521 = vector.shape_cast %520 : vector<1x128x32xf32> to vector<128x32xf32>
    %cst_236 = arith.constant dense<0.000000e+00> : vector<34x32xf32>
    %522 = tpu.matmul %519, %521, %cst_236 {dimension_numbers = #tpu.dot_dimension_numbers<[1], [0], [0], [1], [0, 0, 1, 1], [], []>} : vector<34x128xf32>, vector<128x32xf32>, vector<34x32xf32> -> vector<34x32xf32>
    %c1_237 = arith.constant 1 : index
    %c0_238 = arith.constant 0 : index
    %c0_239 = arith.constant 0 : index
    %523 = vector.load %arg16[%c1_237, %c0_238, %c0_239] : memref<2x1x32xf32, #tpu.memory_space<vmem>>, vector<1x1x32xf32>
    %524 = vector.shape_cast %523 : vector<1x1x32xf32> to vector<1x32xf32>
    %525 = vector.broadcast %524 : vector<1x32xf32> to vector<34x32xf32>
    %526 = arith.addf %522, %525 : vector<34x32xf32>
    %527 = arith.addf %447, %526 : vector<34x32xf32>
    %c0_240 = arith.constant 0 : index
    %c0_241 = arith.constant 0 : index
    %528 = vector.load %arg17[%c0_240, %c0_241] : memref<1x32xf32, #tpu.memory_space<vmem>>, vector<1x32xf32>
    %c0_242 = arith.constant 0 : index
    %c0_243 = arith.constant 0 : index
    %529 = vector.load %arg18[%c0_242, %c0_243] : memref<1x32xf32, #tpu.memory_space<vmem>>, vector<1x32xf32>
    %cst_244 = arith.constant dense<0.000000e+00> : vector<34xf32>
    %530 = vector.multi_reduction <add>, %527, %cst_244 [1] : vector<34x32xf32> to vector<34xf32>
    %531 = vector.shape_cast %530 : vector<34xf32> to vector<34x1xf32>
    %cst_245 = arith.constant 3.200000e+01 : f32
    %532 = vector.broadcast %cst_245 : f32 to vector<34x1xf32>
    %533 = arith.divf %531, %532 : vector<34x1xf32>
    %534 = vector.broadcast %533 : vector<34x1xf32> to vector<34x32xf32>
    %535 = arith.subf %527, %534 : vector<34x32xf32>
    %536 = arith.mulf %535, %535 : vector<34x32xf32>
    %cst_246 = arith.constant dense<0.000000e+00> : vector<34xf32>
    %537 = vector.multi_reduction <add>, %536, %cst_246 [1] : vector<34x32xf32> to vector<34xf32>
    %538 = vector.shape_cast %537 : vector<34xf32> to vector<34x1xf32>
    %cst_247 = arith.constant 3.200000e+01 : f32
    %539 = vector.broadcast %cst_247 : f32 to vector<34x1xf32>
    %540 = arith.divf %538, %539 : vector<34x1xf32>
    %cst_248 = arith.constant 9.99999997E-7 : f32
    %541 = vector.broadcast %cst_248 : f32 to vector<34x1xf32>
    %542 = arith.addf %540, %541 : vector<34x1xf32>
    %543 = math.rsqrt %542 : vector<34x1xf32>
    %544 = vector.broadcast %543 : vector<34x1xf32> to vector<34x32xf32>
    %545 = arith.mulf %535, %544 : vector<34x32xf32>
    %546 = vector.broadcast %528 : vector<1x32xf32> to vector<34x32xf32>
    %547 = arith.mulf %545, %546 : vector<34x32xf32>
    %548 = vector.broadcast %529 : vector<1x32xf32> to vector<34x32xf32>
    %549 = arith.addf %547, %548 : vector<34x32xf32>
    %c0_249 = arith.constant 0 : index
    %c0_250 = arith.constant 0 : index
    %550 = vector.load %arg19[%c0_249, %c0_250] : memref<34x32xf32, #tpu.memory_space<vmem>>, vector<34x32xf32>
    tpu.vector_store %arg19[%c0_249, %c0_250], %549 {strides = array<i32>} : memref<34x32xf32, #tpu.memory_space<vmem>>, vector<34x32xf32>,
    return
  }
}

</mosaic_0001>

<llo_original>
// kernel: vit_forward.1
$region0: #{vit_forward.1}
  #allocation0 [shape = 'u32[]', space=smem, size = 0x4, offset = 0x4, fixed_abs, tag = 'smem constant byte address 0x4 - core index']
  #allocation1 [shape = 'u32[144,128]{1,0:T(1,128)}', space=vmem, size = 0x12000, scoped, tag = 'internal scratch']
  #allocation2 [shape = 'f32[34,32]{1,0:T(8,128)}', space=vmem, size = 0x5000, scoped, tag = 'scratch operand']
  %s0 = inlined_call_operand.vmem [shape: f32[32,48], index: 0, kind: input, shape index: {}]
  %s1 = inlined_call_operand.vmem [shape: f32[48,32], index: 1, kind: input, shape index: {}]
  %s2 = inlined_call_operand.vmem [shape: f32[1,32], index: 2, kind: input, shape index: {}]
  %s3 = inlined_call_operand.vmem [shape: f32[1,32], index: 3, kind: input, shape index: {}]
  %s4 = inlined_call_operand.vmem [shape: f32[17,32], index: 4, kind: input, shape index: {}]
  %s5 = inlined_call_operand.vmem [shape: f32[2,1,32], index: 5, kind: input, shape index: {}]
  %s6 = inlined_call_operand.vmem [shape: f32[2,1,32], index: 6, kind: input, shape index: {}]
  %s7 = inlined_call_operand.vmem [shape: f32[2,32,96], index: 7, kind: input, shape index: {}]
  %s8 = inlined_call_operand.vmem [shape: f32[2,1,96], index: 8, kind: input, shape index: {}]
  %s9 = inlined_call_operand.vmem [shape: f32[2,32,32], index: 9, kind: input, shape index: {}]
  %s10 = inlined_call_operand.vmem [shape: f32[2,1,32], index: 10, kind: input, shape index: {}]
  %s11 = inlined_call_operand.vmem [shape: f32[2,1,32], index: 11, kind: input, shape index: {}]
  %s12 = inlined_call_operand.vmem [shape: f32[2,1,32], index: 12, kind: input, shape index: {}]
  %s13 = inlined_call_operand.vmem [shape: f32[2,32,128], index: 13, kind: input, shape index: {}]
  %s14 = inlined_call_operand.vmem [shape: f32[2,1,128], index: 14, kind: input, shape index: {}]
  %s15 = inlined_call_operand.vmem [shape: f32[2,128,32], index: 15, kind: input, shape index: {}]
  %s16 = inlined_call_operand.vmem [shape: f32[2,1,32], index: 16, kind: input, shape index: {}]
  %s17 = inlined_call_operand.vmem [shape: f32[1,32], index: 17, kind: input, shape index: {}]
  %s18 = inlined_call_operand.vmem [shape: f32[1,32], index: 18, kind: input, shape index: {}]
  %s19 = inlined_call_operand.vmem [shape: f32[34,32], index: 19, kind: output, shape index: {}]
  %s20 = sld [smem:[#allocation0]]
  $region86: #{vit_forward.1} parent=0
    _
  %s22 = ssub.s32 1, %s20
  %s23 = scalar_select 0, %s22, %s20
  // Predicated region
  $region2: #{vit_forward.1} parent=0 // pred_check
    _
  $region3: #{vit_forward.1} parent=0 // pred_check_branch
    %25 = sbr.rel (0) target = $region5
  $region4: #{vit_forward.1} parent=0 // pred_region
    _
  $region5: #{vit_forward.1} parent=0 // pred_fallthru
    _
  // Predicated region
  $region6: #{vit_forward.1} parent=0 // pred_check
    _
  $region7: #{vit_forward.1} parent=0 // pred_check_branch
    %27 = sbr.rel (0) target = $region9
  $region8: #{vit_forward.1} parent=0 // pred_region
    _
  $region9: #{vit_forward.1} parent=0 // pred_fallthru
    _
  // Predicated region
  $region10: #{vit_forward.1} parent=0 // pred_check
    _
  $region11: #{vit_forward.1} parent=0 // pred_check_branch
    %29 = sbr.rel (0) target = $region13
  $region12: #{vit_forward.1} parent=0 // pred_region
    _
  $region13: #{vit_forward.1} parent=0 // pred_fallthru
    _
  // Predicated region
  $region14: #{vit_forward.1} parent=0 // pred_check
    _
  $region15: #{vit_forward.1} parent=0 // pred_check_branch
    %31 = sbr.rel (0) target = $region17
  $region16: #{vit_forward.1} parent=0 // pred_region
    _
  $region17: #{vit_forward.1} parent=0 // pred_fallthru
    _
  // Predicated region
  $region18: #{vit_forward.1} parent=0 // pred_check
    _
  $region19: #{vit_forward.1} parent=0 // pred_check_branch
    %33 = sbr.rel (0) target = $region21
  $region20: #{vit_forward.1} parent=0 // pred_region
    _
  $region21: #{vit_forward.1} parent=0 // pred_fallthru
    _
  // Predicated region
  $region22: #{vit_forward.1} parent=0 // pred_check
    _
  $region23: #{vit_forward.1} parent=0 // pred_check_branch
    %35 = sbr.rel (0) target = $region25
  $region24: #{vit_forward.1} parent=0 // pred_region
    _
  $region25: #{vit_forward.1} parent=0 // pred_fallthru
    _
  // Predicated region
  $region26: #{vit_forward.1} parent=0 // pred_check
    _
  $region27: #{vit_forward.1} parent=0 // pred_check_branch
    %37 = sbr.rel (0) target = $region29
  $region28: #{vit_forward.1} parent=0 // pred_region
    _
  $region29: #{vit_forward.1} parent=0 // pred_fallthru
    _
  // Predicated region
  $region30: #{vit_forward.1} parent=0 // pred_check
    _
  $region31: #{vit_forward.1} parent=0 // pred_check_branch
    %39 = sbr.rel (0) target = $region33
  $region32: #{vit_forward.1} parent=0 // pred_region
    _
  $region33: #{vit_forward.1} parent=0 // pred_fallthru
    _
  // Predicated region
  $region34: #{vit_forward.1} parent=0 // pred_check
    _
  $region35: #{vit_forward.1} parent=0 // pred_check_branch
    %41 = sbr.rel (0) target = $region37
  $region36: #{vit_forward.1} parent=0 // pred_region
    _
  $region37: #{vit_forward.1} parent=0 // pred_fallthru
    _
  // Predicated region
  $region38: #{vit_forward.1} parent=0 // pred_check
    _
  $region39: #{vit_forward.1} parent=0 // pred_check_branch
    %43 = sbr.rel (0) target = $region41
  $region40: #{vit_forward.1} parent=0 // pred_region
    _
  $region41: #{vit_forward.1} parent=0 // pred_fallthru
    _
  // Predicated region
  $region42: #{vit_forward.1} parent=0 // pred_check
    _
  $region43: #{vit_forward.1} parent=0 // pred_check_branch
    %45 = sbr.rel (0) target = $region45
  $region44: #{vit_forward.1} parent=0 // pred_region
    _
  $region45: #{vit_forward.1} parent=0 // pred_fallthru
    _
  // Predicated region
  $region46: #{vit_forward.1} parent=0 // pred_check
    _
  $region47: #{vit_forward.1} parent=0 // pred_check_branch
    %47 = sbr.rel (0) target = $region49
  $region48: #{vit_forward.1} parent=0 // pred_region
    _
  $region49: #{vit_forward.1} parent=0 // pred_fallthru
    _
  // Predicated region
  $region50: #{vit_forward.1} parent=0 // pred_check
    _
  $region51: #{vit_forward.1} parent=0 // pred_check_branch
    %49 = sbr.rel (0) target = $region53
  $region52: #{vit_forward.1} parent=0 // pred_region
    _
  $region53: #{vit_forward.1} parent=0 // pred_fallthru
    _
  // Predicated region
  $region54: #{vit_forward.1} parent=0 // pred_check
    _
  $region55: #{vit_forward.1} parent=0 // pred_check_branch
    %51 = sbr.rel (0) target = $region57
  $region56: #{vit_forward.1} parent=0 // pred_region
    _
  $region57: #{vit_forward.1} parent=0 // pred_fallthru
    _
  // Predicated region
  $region58: #{vit_forward.1} parent=0 // pred_check
    _
  $region59: #{vit_forward.1} parent=0 // pred_check_branch
    %53 = sbr.rel (0) target = $region61
  $region60: #{vit_forward.1} parent=0 // pred_region
    _
  $region61: #{vit_forward.1} parent=0 // pred_fallthru
    _
  // Predicated region
  $region62: #{vit_forward.1} parent=0 // pred_check
    _
  $region63: #{vit_forward.1} parent=0 // pred_check_branch
    %55 = sbr.rel (0) target = $region65
  $region64: #{vit_forward.1} parent=0 // pred_region
    _
  $region65: #{vit_forward.1} parent=0 // pred_fallthru
    _
  // Predicated region
  $region66: #{vit_forward.1} parent=0 // pred_check
    _
  $region67: #{vit_forward.1} parent=0 // pred_check_branch
    %57 = sbr.rel (0) target = $region69
  $region68: #{vit_forward.1} parent=0 // pred_region
    _
  $region69: #{vit_forward.1} parent=0 // pred_fallthru
    _
  // Predicated region
  $region70: #{vit_forward.1} parent=0 // pred_check
    _
  $region71: #{vit_forward.1} parent=0 // pred_check_branch
    %59 = sbr.rel (0) target = $region73
  $region72: #{vit_forward.1} parent=0 // pred_region
    _
  $region73: #{vit_forward.1} parent=0 // pred_fallthru
    _
  // Predicated region
  $region74: #{vit_forward.1} parent=0 // pred_check
    _
  $region75: #{vit_forward.1} parent=0 // pred_check_branch
    %61 = sbr.rel (0) target = $region77
  $region76: #{vit_forward.1} parent=0 // pred_region
    _
  $region77: #{vit_forward.1} parent=0 // pred_fallthru
    _
  %v62 = vld [vmem:[%s0] sm:$0xff]
  %v63 = vld [vmem:[%s0 + $0x8] sm:$0xff]
  %v64 = vld [vmem:[%s0 + $0x10] sm:$0xff]
  %v65 = vld [vmem:[%s0 + $0x18] sm:$0xff]
  %v66 = vld [vmem:[%s1] sm:$0xff]
  %v67 = vld [vmem:[%s1 + $0x8] sm:$0xff]
  %v68 = vld [vmem:[%s1 + $0x10] sm:$0xff]
  %v69 = vld [vmem:[%s1 + $0x18] sm:$0xff]
  %v70 = vld [vmem:[%s1 + $0x20] sm:$0xff]
  %v71 = vld [vmem:[%s1 + $0x28] sm:$0xff]
  %v72 = vld [vmem:[%s2] sm:$0x1]
  %v74 = vlaneseq
  %v75 = vshrl.u32 %v74, 7
  %v76 = vsub.s32 0, %v75
  %v77 = vrot.slane %v72, %v76
  %vm79 = vcmask 392192
  %v81 = vsel %vm79, %v62, 0
  %v84 = vsel %vm79, %v63, 0
  %v87 = vsel %vm79, %v64, 0
  %v90 = vsel %vm79, %v65, 0
  %92 = vmatprep.subr.mxu0 0.0
  %93 = vmatpush1.msra.mxu0 0.0
  %94 = vmatprep.subr.mxu0 0.0
  %95 = vmatpush1.msra.mxu0 0.0
  %96 = vmatprep.subr.mxu0 0.0
  %97 = vmatpush1.msra.mxu0 0.0
  %98 = vmatprep.subr.mxu0 0.0
  %99 = vmatpush1.msra.mxu0 0.0
  %100 = vmatprep.subr.mxu0 0.0
  %101 = vmatpush1.msra.mxu0 0.0
  %102 = vmatprep.subr.mxu0 0.0
  %103 = vmatpush1.msra.mxu0 0.0
  %104 = vmatprep.subr.mxu0 0.0
  %105 = vmatpush1.msra.mxu0 0.0
  %106 = vmatprep.subr.mxu0 0.0
  %107 = vmatpush1.msra.mxu0 0.0
  %108 = vmatprep.subr.mxu0 0.0
  %109 = vmatpush1.msra.mxu0 0.0
  %110 = vmatprep.subr.mxu0 0.0
  %111 = vmatpush1.msra.mxu0 0.0
  %112 = vmatprep.subr.mxu0 0.0
  %113 = vmatpush1.msra.mxu0 %v71
  %114 = vmatprep.subr.mxu0 0.0
  %115 = vmatpush1.msra.mxu0 %v70
  %116 = vmatprep.subr.mxu0 0.0
  %117 = vmatpush1.msra.mxu0 %v69
  %118 = vmatprep.subr.mxu0 0.0
  %119 = vmatpush1.msra.mxu0 %v68
  %120 = vmatprep.subr.mxu0 0.0
  %121 = vmatpush1.msra.mxu0 %v67
  %122 = vmatprep.subr.mxu0 0.0
  %123 = vmatpush1.msra.mxu0 %v66
  %124 = vmatprep.subr.mxu0 0.0
  %125 = vmatpush2.msra.mxu0 0.0
  %126 = vmatprep.subr.mxu0 0.0
  %127 = vmatpush2.msra.mxu0 0.0
  %128 = vmatprep.subr.mxu0 0.0
  %129 = vmatpush2.msra.mxu0 0.0
  %130 = vmatprep.subr.mxu0 0.0
  %131 = vmatpush2.msra.mxu0 0.0
  %132 = vmatprep.subr.mxu0 0.0
  %133 = vmatpush2.msra.mxu0 0.0
  %134 = vmatprep.subr.mxu0 0.0
  %135 = vmatpush2.msra.mxu0 0.0
  %136 = vmatprep.subr.mxu0 0.0
  %137 = vmatpush2.msra.mxu0 0.0
  %138 = vmatprep.subr.mxu0 0.0
  %139 = vmatpush2.msra.mxu0 0.0
  %140 = vmatprep.subr.mxu0 0.0
  %141 = vmatpush2.msra.mxu0 0.0
  %142 = vmatprep.subr.mxu0 0.0
  %143 = vmatpush2.msra.mxu0 0.0
  %144 = vmatprep.subr.mxu0 0.0
  %145 = vmatpush2.msra.mxu0 0.0
  %146 = vmatprep.subr.mxu0 0.0
  %147 = vmatpush2.msra.mxu0 0.0
  %148 = vmatprep.subr.mxu0 0.0
  %149 = vmatpush2.msra.mxu0 0.0
  %150 = vmatprep.subr.mxu0 0.0
  %151 = vmatpush2.msra.mxu0 0.0
  %152 = vmatprep.subr.mxu0 0.0
  %153 = vmatpush2.msra.mxu0 0.0
  %154 = vmatprep.subr.mxu0 0.0
  %155 = vmatpush2.msra.mxu0 0.0
  %156 = vmatprep.mubr.f32.mxu0 0.0
  %157 = vmatmul.mubr.f32.gmra.mxu0 %v81
  %v158 = vpop.f32.mrf.mxu0
  %v159 = vadd.f32 %v77, %v158
  %v160 = vpop.f32.mrf.mxu0
  %161 = vmatprep.mubr.f32.mxu0 0.0
  %162 = vmatmul.mubr.f32.gmra.mxu0 %v84
  %v163 = vpop.f32.mrf.mxu0
  %v164 = vadd.f32 %v77, %v163
  %v165 = vpop.f32.mrf.mxu0
  %166 = vmatprep.mubr.f32.mxu0 0.0
  %167 = vmatmul.mubr.f32.gmra.mxu0 %v87
  %v168 = vpop.f32.mrf.mxu0
  %v169 = vadd.f32 %v77, %v168
  %v170 = vpop.f32.mrf.mxu0
  %171 = vmatprep.mubr.f32.mxu0 0.0
  %172 = vmatmul.mubr.f32.gmra.mxu0 %v90
  %v173 = vpop.f32.mrf.mxu0
  %v174 = vadd.f32 %v77, %v173
  %v175 = vpop.f32.mrf.mxu0
  %176 = vdwg.mxu0
  %v177 = vld [vmem:[%s4] sm:$0xff]
  %v178 = vld [vmem:[%s4 + $0x8] sm:$0xff]
  %v179 = vld [vmem:[%s4 + $0x10] sm:$0x1]
  %v180 = vld [vmem:[%s3] sm:$0x1]
  %v181 = vadd.f32 %v180, %v177
  %vm182 = vcmask 253952
  %183 = vst.msk [vmem:[#allocation2] sm:$0x1] %vm182, %v181
  %vm187 = vcmask 1046528
  %v188 = vrot.slane %v177, 1
  %v189 = vrot.slane %v178, 1
  %v190 = vsel %vm187, %v188, %v189
  %v191 = vrot.slane %v179, 1
  %v192 = vsel %vm187, %v189, %v191
  %v195 = vadd.f32 %v159, %v190
  %v196 = vadd.f32 %v164, %v192
  %vm197 = vcmask 261120
  %198 = vst.msk [vmem:[#allocation2 + $0x1] sm:$0xff] %vm197, %v195
  %199 = vst.msk [vmem:[#allocation2 + $0x9] sm:$0xff] %vm197, %v196
  %200 = vst.msk [vmem:[#allocation2 + $0x11] sm:$0x1] %vm182, %v181
  %v201 = vadd.f32 %v169, %v190
  %v202 = vadd.f32 %v174, %v192
  %203 = vst.msk [vmem:[#allocation2 + $0x12] sm:$0xff] %vm197, %v201
  %204 = vst.msk [vmem:[#allocation2 + $0x1a] sm:$0xff] %vm197, %v202
  %v205 = vld [vmem:[#allocation2] sm:$0xff]
  %v206 = vld [vmem:[#allocation2 + $0x8] sm:$0xff]
  %v207 = vld [vmem:[#allocation2 + $0x10] sm:$0xff]
  %v208 = vld [vmem:[#allocation2 + $0x18] sm:$0xff]
  %v209 = vld [vmem:[#allocation2 + $0x20] sm:$0x3]
  %v210 = vld [vmem:[%s5] sm:$0x1]
  %v211 = vld [vmem:[%s6] sm:$0x1]
  %v212 = vsel %vm197, %v205, 0.0
  %213 = vadd.xlane.f32.xlu0 %v212
  %v214 = vpop.xlane.xlu0 %213
  %v215 = vsel %vm197, %v206, 0.0
  %216 = vadd.xlane.f32.xlu0 %v215
  %v217 = vpop.xlane.xlu0 %216
  %v218 = vsel %vm197, %v207, 0.0
  %219 = vadd.xlane.f32.xlu0 %v218
  %v220 = vpop.xlane.xlu0 %219
  %v221 = vsel %vm197, %v208, 0.0
  %222 = vadd.xlane.f32.xlu0 %v221
  %v223 = vpop.xlane.xlu0 %222
  %vm224 = vcmask 254976
  %v225 = vsel %vm224, %v209, 0.0
  %226 = vadd.xlane.f32.xlu0 %v225
  %v227 = vpop.xlane.xlu0 %226
  %v228 = vrcp.pop 32.0
  %v229 = vmul.f32 %v214, %v228
  %v230 = vmul.f32 %v217, %v228
  %v231 = vmul.f32 %v220, %v228
  %v232 = vmul.f32 %v223, %v228
  %v233 = vmul.f32 %v227, %v228
  %v234 = vsub.f32 %v205, %v229
  %v235 = vsub.f32 %v206, %v230
  %v236 = vsub.f32 %v207, %v231
  %v237 = vsub.f32 %v208, %v232
  %v238 = vsub.f32 %v209, %v233
  %v239 = vmul.f32 %v234, %v234
  %v240 = vmul.f32 %v235, %v235
  %v241 = vmul.f32 %v236, %v236
  %v242 = vmul.f32 %v237, %v237
  %v243 = vmul.f32 %v238, %v238
  %v244 = vsel %vm197, %v239, 0.0
  %245 = vadd.xlane.f32.xlu0 %v244
  %v246 = vpop.xlane.xlu0 %245
  %v247 = vsel %vm197, %v240, 0.0
  %248 = vadd.xlane.f32.xlu0 %v247
  %v249 = vpop.xlane.xlu0 %248
  %v250 = vsel %vm197, %v241, 0.0
  %251 = vadd.xlane.f32.xlu0 %v250
  %v252 = vpop.xlane.xlu0 %251
  %v253 = vsel %vm197, %v242, 0.0
  %254 = vadd.xlane.f32.xlu0 %v253
  %v255 = vpop.xlane.xlu0 %254
  %v256 = vsel %vm224, %v243, 0.0
  %257 = vadd.xlane.f32.xlu0 %v256
  %v258 = vpop.xlane.xlu0 %257
  %v259 = vmul.f32 %v246, %v228
  %v260 = vmul.f32 %v249, %v228
  %v261 = vmul.f32 %v252, %v228
  %v262 = vmul.f32 %v255, %v228
  %v263 = vmul.f32 %v258, %v228
  %v264 = vadd.f32 %v259, 1e-06
  %v265 = vadd.f32 %v260, 1e-06
  %v266 = vadd.f32 %v261, 1e-06
  %v267 = vadd.f32 %v262, 1e-06
  %v268 = vadd.f32 %v263, 1e-06
  %v269 = vrsqrt.pop %v264
  %v270 = vrsqrt.pop %v265
  %v271 = vrsqrt.pop %v266
  %v272 = vrsqrt.pop %v267
  %v273 = vrsqrt.pop %v268
  %v274 = vmul.f32 %v234, %v269
  %v275 = vmul.f32 %v235, %v270
  %v276 = vmul.f32 %v236, %v271
  %v277 = vmul.f32 %v237, %v272
  %v278 = vmul.f32 %v238, %v273
  %v280 = vlaneseq
  %v281 = vshrl.u32 %v280, 7
  %v282 = vsub.s32 0, %v281
  %v283 = vrot.slane %v210, %v282
  %v285 = vmul.f32 %v274, %v283
  %v286 = vmul.f32 %v275, %v283
  %v287 = vmul.f32 %v276, %v283
  %v288 = vmul.f32 %v277, %v283
  %v289 = vmul.f32 %v278, %v283
  %v291 = vlaneseq
  %v292 = vshrl.u32 %v291, 7
  %v293 = vsub.s32 0, %v292
  %v294 = vrot.slane %v211, %v293
  %v296 = vadd.f32 %v285, %v294
  %v297 = vadd.f32 %v286, %v294
  %v298 = vadd.f32 %v287, %v294
  %v299 = vadd.f32 %v288, %v294
  %v300 = vadd.f32 %v289, %v294
  %v301 = vld [vmem:[%s7] sm:$0xff]
  %v302 = vld [vmem:[%s7 + $0x8] sm:$0xff]
  %v303 = vld [vmem:[%s7 + $0x10] sm:$0xff]
  %v304 = vld [vmem:[%s7 + $0x18] sm:$0xff]
  %v305 = vld [vmem:[%s8] sm:$0x1]
  %v307 = vlaneseq
  %v308 = vshrl.u32 %v307, 7
  %v309 = vsub.s32 0, %v308
  %v310 = vrot.slane %v305, %v309
  %v313 = vsel %vm197, %v296, 0
  %v316 = vsel %vm197, %v297, 0
  %v319 = vsel %vm197, %v298, 0
  %v322 = vsel %vm197, %v299, 0
  %v325 = vsel %vm197, %v300, 0
  %327 = vmatprep.subr.mxu0 0.0
  %328 = vmatpush1.msra.mxu0 0.0
  %329 = vmatprep.subr.mxu0 0.0
  %330 = vmatpush1.msra.mxu0 0.0
  %331 = vmatprep.subr.mxu0 0.0
  %332 = vmatpush1.msra.mxu0 0.0
  %333 = vmatprep.subr.mxu0 0.0
  %334 = vmatpush1.msra.mxu0 0.0
  %335 = vmatprep.subr.mxu0 0.0
  %336 = vmatpush1.msra.mxu0 0.0
  %337 = vmatprep.subr.mxu0 0.0
  %338 = vmatpush1.msra.mxu0 0.0
  %339 = vmatprep.subr.mxu0 0.0
  %340 = vmatpush1.msra.mxu0 0.0
  %341 = vmatprep.subr.mxu0 0.0
  %342 = vmatpush1.msra.mxu0 0.0
  %343 = vmatprep.subr.mxu0 0.0
  %344 = vmatpush1.msra.mxu0 0.0
  %345 = vmatprep.subr.mxu0 0.0
  %346 = vmatpush1.msra.mxu0 0.0
  %347 = vmatprep.subr.mxu0 0.0
  %348 = vmatpush1.msra.mxu0 0.0
  %349 = vmatprep.subr.mxu0 0.0
  %350 = vmatpush1.msra.mxu0 0.0
  %351 = vmatprep.subr.mxu0 0.0
  %352 = vmatpush1.msra.mxu0 %v304
  %353 = vmatprep.subr.mxu0 0.0
  %354 = vmatpush1.msra.mxu0 %v303
  %355 = vmatprep.subr.mxu0 0.0
  %356 = vmatpush1.msra.mxu0 %v302
  %357 = vmatprep.subr.mxu0 0.0
  %358 = vmatpush1.msra.mxu0 %v301
  %359 = vmatprep.subr.mxu0 0.0
  %360 = vmatpush2.msra.mxu0 0.0
  %361 = vmatprep.subr.mxu0 0.0
  %362 = vmatpush2.msra.mxu0 0.0
  %363 = vmatprep.subr.mxu0 0.0
  %364 = vmatpush2.msra.mxu0 0.0
  %365 = vmatprep.subr.mxu0 0.0
  %366 = vmatpush2.msra.mxu0 0.0
  %367 = vmatprep.subr.mxu0 0.0
  %368 = vmatpush2.msra.mxu0 0.0
  %369 = vmatprep.subr.mxu0 0.0
  %370 = vmatpush2.msra.mxu0 0.0
  %371 = vmatprep.subr.mxu0 0.0
  %372 = vmatpush2.msra.mxu0 0.0
  %373 = vmatprep.subr.mxu0 0.0
  %374 = vmatpush2.msra.mxu0 0.0
  %375 = vmatprep.subr.mxu0 0.0
  %376 = vmatpush2.msra.mxu0 0.0
  %377 = vmatprep.subr.mxu0 0.0
  %378 = vmatpush2.msra.mxu0 0.0
  %379 = vmatprep.subr.mxu0 0.0
  %380 = vmatpush2.msra.mxu0 0.0
  %381 = vmatprep.subr.mxu0 0.0
  %382 = vmatpush2.msra.mxu0 0.0
  %383 = vmatprep.subr.mxu0 0.0
  %384 = vmatpush2.msra.mxu0 0.0
  %385 = vmatprep.subr.mxu0 0.0
  %386 = vmatpush2.msra.mxu0 0.0
  %387 = vmatprep.subr.mxu0 0.0
  %388 = vmatpush2.msra.mxu0 0.0
  %389 = vmatprep.subr.mxu0 0.0
  %390 = vmatpush2.msra.mxu0 0.0
  %391 = vmatprep.mubr.f32.mxu0 0.0
  %392 = vmatmul.mubr.f32.gmra.mxu0 %v313
  %v393 = vpop.f32.mrf.mxu0
  %v394 = vadd.f32 %v310, %v393
  %v395 = vpop.f32.mrf.mxu0
  %396 = vmatprep.mubr.f32.mxu0 0.0
  %397 = vmatmul.mubr.f32.gmra.mxu0 %v316
  %v398 = vpop.f32.mrf.mxu0
  %v399 = vadd.f32 %v310, %v398
  %v400 = vpop.f32.mrf.mxu0
  %401 = vmatprep.mubr.f32.mxu0 0.0
  %402 = vmatmul.mubr.f32.gmra.mxu0 %v319
  %v403 = vpop.f32.mrf.mxu0
  %v404 = vadd.f32 %v310, %v403
  %v405 = vpop.f32.mrf.mxu0
  %406 = vmatprep.mubr.f32.mxu0 0.0
  %407 = vmatmul.mubr.f32.gmra.mxu0 %v322
  %v408 = vpop.f32.mrf.mxu0
  %v409 = vadd.f32 %v310, %v408
  %v410 = vpop.f32.mrf.mxu0
  %411 = vmatprep.mubr.f32.mxu0 0.0
  %412 = vmatmul.mubr.f32.gmra.mxu0 %v325
  %v413 = vpop.f32.mrf.mxu0
  %v414 = vadd.f32 %v310, %v413
  %v415 = vpop.f32.mrf.mxu0
  %416 = vdwg.mxu0
  %v417 = vmul.f32 %v394, 0.35355338
  %v418 = vmul.f32 %v399, 0.35355338
  %v419 = vmul.f32 %v404, 0.35355338
  %423 = vrot.lane.b32.xlu0 %v394, 96
  %v424 = vpop.permute.xlu0 %423
  %425 = vrot.lane.b32.xlu0 %v399, 96
  %v426 = vpop.permute.xlu0 %425
  %427 = vrot.lane.b32.xlu0 %v404, 96
  %v428 = vpop.permute.xlu0 %427
  %vm429 = vcmask 64512
  %v431 = vsel %vm429, %v417, 0
  %v434 = vsel %vm429, %v418, 0
  %v437 = vsel %vm429, %v419, 0
  %v439 = vsel %vm429, %v424, 0
  %v441 = vsel %vm429, %v426, 0
  %v443 = vsel %vm429, %v428, 0
  %445 = vmatprep.subr.mxu0 0.0
  %446 = vmatpush1.xpose.msra.mxu0 0.0
  %447 = vmatprep.subr.mxu0 0.0
  %448 = vmatpush1.xpose.msra.mxu0 0.0
  %449 = vmatprep.subr.mxu0 0.0
  %450 = vmatpush1.xpose.msra.mxu0 0.0
  %451 = vmatprep.subr.mxu0 0.0
  %452 = vmatpush1.xpose.msra.mxu0 0.0
  %453 = vmatprep.subr.mxu0 0.0
  %454 = vmatpush1.xpose.msra.mxu0 0.0
  %455 = vmatprep.subr.mxu0 0.0
  %456 = vmatpush1.xpose.msra.mxu0 0.0
  %457 = vmatprep.subr.mxu0 0.0
  %458 = vmatpush1.xpose.msra.mxu0 0.0
  %459 = vmatprep.subr.mxu0 0.0
  %460 = vmatpush1.xpose.msra.mxu0 0.0
  %461 = vmatprep.subr.mxu0 0.0
  %462 = vmatpush1.xpose.msra.mxu0 0.0
  %463 = vmatprep.subr.mxu0 0.0
  %464 = vmatpush1.xpose.msra.mxu0 0.0
  %465 = vmatprep.subr.mxu0 0.0
  %466 = vmatpush1.xpose.msra.mxu0 0.0
  %467 = vmatprep.subr.mxu0 0.0
  %468 = vmatpush1.xpose.msra.mxu0 0.0
  %469 = vmatprep.subr.mxu0 0.0
  %470 = vmatpush1.xpose.msra.mxu0 0.0
  %471 = vmatprep.subr.mxu0 0.0
  %472 = vmatpush1.xpose.msra.mxu0 %v443
  %473 = vmatprep.subr.mxu0 0.0
  %474 = vmatpush1.xpose.msra.mxu0 %v441
  %475 = vmatprep.subr.mxu0 0.0
  %476 = vmatpush1.xpose.msra.mxu0 %v439
  %477 = vmatprep.subr.mxu0 0.0
  %478 = vmatpush2.xpose.msra.mxu0 0.0
  %479 = vmatprep.subr.mxu0 0.0
  %480 = vmatpush2.xpose.msra.mxu0 0.0
  %481 = vmatprep.subr.mxu0 0.0
  %482 = vmatpush2.xpose.msra.mxu0 0.0
  %483 = vmatprep.subr.mxu0 0.0
  %484 = vmatpush2.xpose.msra.mxu0 0.0
  %485 = vmatprep.subr.mxu0 0.0
  %486 = vmatpush2.xpose.msra.mxu0 0.0
  %487 = vmatprep.subr.mxu0 0.0
  %488 = vmatpush2.xpose.msra.mxu0 0.0
  %489 = vmatprep.subr.mxu0 0.0
  %490 = vmatpush2.xpose.msra.mxu0 0.0
  %491 = vmatprep.subr.mxu0 0.0
  %492 = vmatpush2.xpose.msra.mxu0 0.0
  %493 = vmatprep.subr.mxu0 0.0
  %494 = vmatpush2.xpose.msra.mxu0 0.0
  %495 = vmatprep.subr.mxu0 0.0
  %496 = vmatpush2.xpose.msra.mxu0 0.0
  %497 = vmatprep.subr.mxu0 0.0
  %498 = vmatpush2.xpose.msra.mxu0 0.0
  %499 = vmatprep.subr.mxu0 0.0
  %500 = vmatpush2.xpose.msra.mxu0 0.0
  %501 = vmatprep.subr.mxu0 0.0
  %502 = vmatpush2.xpose.msra.mxu0 0.0
  %503 = vmatprep.subr.mxu0 0.0
  %504 = vmatpush2.xpose.msra.mxu0 0.0
  %505 = vmatprep.subr.mxu0 0.0
  %506 = vmatpush2.xpose.msra.mxu0 0.0
  %507 = vmatprep.subr.mxu0 0.0
  %508 = vmatpush2.xpose.msra.mxu0 0.0
  %509 = vmatprep.mubr.f32.mxu0 0.0
  %510 = vmatmul.mubr.f32.gmra.mxu0 %v431
  %v511 = vpop.f32.mrf.mxu0
  %v512 = vadd.f32 0.0, %v511
  %v513 = vpop.f32.mrf.mxu0
  %514 = vmatprep.mubr.f32.mxu0 0.0
  %515 = vmatmul.mubr.f32.gmra.mxu0 %v434
  %v516 = vpop.f32.mrf.mxu0
  %v517 = vadd.f32 0.0, %v516
  %v518 = vpop.f32.mrf.mxu0
  %519 = vmatprep.mubr.f32.mxu0 0.0
  %520 = vmatmul.mubr.f32.gmra.mxu0 %v437
  %v521 = vpop.f32.mrf.mxu0
  %v522 = vadd.f32 0.0, %v521
  %v523 = vpop.f32.mrf.mxu0
  %524 = vdwg.mxu0
  %vm525 = vcmask 138240
  %v526 = vsel %vm525, %v512, -inf
  %527 = vmax.xlane.f32.xlu0 %v526
  %v528 = vpop.xlane.xlu0 %527
  %v529 = vsel %vm525, %v517, -inf
  %530 = vmax.xlane.f32.xlu0 %v529
  %v531 = vpop.xlane.xlu0 %530
  %vm532 = vcmask 131072
  %v533 = vsel %vm532, %v522, -inf
  %534 = vmax.xlane.f32.xlu0 %v533
  %v535 = vpop.xlane.xlu0 %534
  %v536 = vsub.f32 %v512, %v528
  %v537 = vsub.f32 %v517, %v531
  %v538 = vsub.f32 %v522, %v535
  %v539 = vmul.f32 %v536, 1.442695
  %v540 = vpow.pop %v539
  %v541 = vmul.f32 %v537, 1.442695
  %v542 = vpow.pop %v541
  %v543 = vmul.f32 %v538, 1.442695
  %v544 = vpow.pop %v543
  %v545 = vsel %vm525, %v540, 0.0
  %546 = vadd.xlane.f32.xlu0 %v545
  %v547 = vpop.xlane.xlu0 %546
  %v548 = vsel %vm525, %v542, 0.0
  %549 = vadd.xlane.f32.xlu0 %v548
  %v550 = vpop.xlane.xlu0 %549
  %v551 = vsel %vm532, %v544, 0.0
  %552 = vadd.xlane.f32.xlu0 %v551
  %v553 = vpop.xlane.xlu0 %552
  %v554 = vrcp.pop %v547
  %v555 = vmul.f32 %v540, %v554
  %v556 = vrcp.pop %v550
  %v557 = vmul.f32 %v542, %v556
  %v558 = vrcp.pop %v553
  %v559 = vmul.f32 %v544, %v558
  %560 = vrot.lane.b32.xlu0 %v394, 64
  %v561 = vpop.permute.xlu0 %560
  %562 = vrot.lane.b32.xlu0 %v399, 64
  %v563 = vpop.permute.xlu0 %562
  %564 = vrot.lane.b32.xlu0 %v404, 64
  %v565 = vpop.permute.xlu0 %564
  %v569 = vsel %vm525, %v555, 0
  %v572 = vsel %vm525, %v557, 0
  %v575 = vsel %vm525, %v559, 0
  %vm577 = vcmask 1040384
  %v578 = vsel %vm577, %v565, 0
  %580 = vmatprep.subr.mxu0 0.0
  %581 = vmatpush1.msra.mxu0 0.0
  %582 = vmatprep.subr.mxu0 0.0
  %583 = vmatpush1.msra.mxu0 0.0
  %584 = vmatprep.subr.mxu0 0.0
  %585 = vmatpush1.msra.mxu0 0.0
  %586 = vmatprep.subr.mxu0 0.0
  %587 = vmatpush1.msra.mxu0 0.0
  %588 = vmatprep.subr.mxu0 0.0
  %589 = vmatpush1.msra.mxu0 0.0
  %590 = vmatprep.subr.mxu0 0.0
  %591 = vmatpush1.msra.mxu0 0.0
  %592 = vmatprep.subr.mxu0 0.0
  %593 = vmatpush1.msra.mxu0 0.0
  %594 = vmatprep.subr.mxu0 0.0
  %595 = vmatpush1.msra.mxu0 0.0
  %596 = vmatprep.subr.mxu0 0.0
  %597 = vmatpush1.msra.mxu0 0.0
  %598 = vmatprep.subr.mxu0 0.0
  %599 = vmatpush1.msra.mxu0 0.0
  %600 = vmatprep.subr.mxu0 0.0
  %601 = vmatpush1.msra.mxu0 0.0
  %602 = vmatprep.subr.mxu0 0.0
  %603 = vmatpush1.msra.mxu0 0.0
  %604 = vmatprep.subr.mxu0 0.0
  %605 = vmatpush1.msra.mxu0 0.0
  %606 = vmatprep.subr.mxu0 0.0
  %607 = vmatpush1.msra.mxu0 %v578
  %608 = vmatprep.subr.mxu0 0.0
  %609 = vmatpush1.msra.mxu0 %v563
  %610 = vmatprep.subr.mxu0 0.0
  %611 = vmatpush1.msra.mxu0 %v561
  %612 = vmatprep.subr.mxu0 0.0
  %613 = vmatpush2.msra.mxu0 0.0
  %614 = vmatprep.subr.mxu0 0.0
  %615 = vmatpush2.msra.mxu0 0.0
  %616 = vmatprep.subr.mxu0 0.0
  %617 = vmatpush2.msra.mxu0 0.0
  %618 = vmatprep.subr.mxu0 0.0
  %619 = vmatpush2.msra.mxu0 0.0
  %620 = vmatprep.subr.mxu0 0.0
  %621 = vmatpush2.msra.mxu0 0.0
  %622 = vmatprep.subr.mxu0 0.0
  %623 = vmatpush2.msra.mxu0 0.0
  %624 = vmatprep.subr.mxu0 0.0
  %625 = vmatpush2.msra.mxu0 0.0
  %626 = vmatprep.subr.mxu0 0.0
  %627 = vmatpush2.msra.mxu0 0.0
  %628 = vmatprep.subr.mxu0 0.0
  %629 = vmatpush2.msra.mxu0 0.0
  %630 = vmatprep.subr.mxu0 0.0
  %631 = vmatpush2.msra.mxu0 0.0
  %632 = vmatprep.subr.mxu0 0.0
  %633 = vmatpush2.msra.mxu0 0.0
  %634 = vmatprep.subr.mxu0 0.0
  %635 = vmatpush2.msra.mxu0 0.0
  %636 = vmatprep.subr.mxu0 0.0
  %637 = vmatpush2.msra.mxu0 0.0
  %638 = vmatprep.subr.mxu0 0.0
  %639 = vmatpush2.msra.mxu0 0.0
  %640 = vmatprep.subr.mxu0 0.0
  %641 = vmatpush2.msra.mxu0 0.0
  %642 = vmatprep.subr.mxu0 0.0
  %643 = vmatpush2.msra.mxu0 0.0
  %644 = vmatprep.mubr.f32.mxu0 0.0
  %645 = vmatmul.mubr.f32.gmra.mxu0 %v569
  %v646 = vpop.f32.mrf.mxu0
  %v647 = vadd.f32 0.0, %v646
  %v648 = vpop.f32.mrf.mxu0
  %649 = vmatprep.mubr.f32.mxu0 0.0
  %650 = vmatmul.mubr.f32.gmra.mxu0 %v572
  %v651 = vpop.f32.mrf.mxu0
  %v652 = vadd.f32 0.0, %v651
  %v653 = vpop.f32.mrf.mxu0
  %654 = vmatprep.mubr.f32.mxu0 0.0
  %655 = vmatmul.mubr.f32.gmra.mxu0 %v575
  %v656 = vpop.f32.mrf.mxu0
  %v657 = vadd.f32 0.0, %v656
  %v658 = vpop.f32.mrf.mxu0
  %659 = vdwg.mxu0
  %660 = vrot.lane.b32.xlu0 %v417, 120
  %v661 = vpop.permute.xlu0 %660
  %662 = vrot.lane.b32.xlu0 %v418, 120
  %v663 = vpop.permute.xlu0 %662
  %664 = vrot.lane.b32.xlu0 %v419, 120
  %v665 = vpop.permute.xlu0 %664
  %666 = vrot.lane.b32.xlu0 %v394, 88
  %v667 = vpop.permute.xlu0 %666
  %668 = vrot.lane.b32.xlu0 %v399, 88
  %v669 = vpop.permute.xlu0 %668
  %670 = vrot.lane.b32.xlu0 %v404, 88
  %v671 = vpop.permute.xlu0 %670
  %v672 = vsel %vm429, %v661, 0
  %v674 = vsel %vm429, %v663, 0
  %v676 = vsel %vm429, %v665, 0
  %v678 = vsel %vm429, %v667, 0
  %v680 = vsel %vm429, %v669, 0
  %v682 = vsel %vm429, %v671, 0
  %684 = vmatprep.subr.mxu0 0.0
  %685 = vmatpush1.xpose.msra.mxu0 0.0
  %686 = vmatprep.subr.mxu0 0.0
  %687 = vmatpush1.xpose.msra.mxu0 0.0
  %688 = vmatprep.subr.mxu0 0.0
  %689 = vmatpush1.xpose.msra.mxu0 0.0
  %690 = vmatprep.subr.mxu0 0.0
  %691 = vmatpush1.xpose.msra.mxu0 0.0
  %692 = vmatprep.subr.mxu0 0.0
  %693 = vmatpush1.xpose.msra.mxu0 0.0
  %694 = vmatprep.subr.mxu0 0.0
  %695 = vmatpush1.xpose.msra.mxu0 0.0
  %696 = vmatprep.subr.mxu0 0.0
  %697 = vmatpush1.xpose.msra.mxu0 0.0
  %698 = vmatprep.subr.mxu0 0.0
  %699 = vmatpush1.xpose.msra.mxu0 0.0
  %700 = vmatprep.subr.mxu0 0.0
  %701 = vmatpush1.xpose.msra.mxu0 0.0
  %702 = vmatprep.subr.mxu0 0.0
  %703 = vmatpush1.xpose.msra.mxu0 0.0
  %704 = vmatprep.subr.mxu0 0.0
  %705 = vmatpush1.xpose.msra.mxu0 0.0
  %706 = vmatprep.subr.mxu0 0.0
  %707 = vmatpush1.xpose.msra.mxu0 0.0
  %708 = vmatprep.subr.mxu0 0.0
  %709 = vmatpush1.xpose.msra.mxu0 0.0
  %710 = vmatprep.subr.mxu0 0.0
  %711 = vmatpush1.xpose.msra.mxu0 %v682
  %712 = vmatprep.subr.mxu0 0.0
  %713 = vmatpush1.xpose.msra.mxu0 %v680
  %714 = vmatprep.subr.mxu0 0.0
  %715 = vmatpush1.xpose.msra.mxu0 %v678
  %716 = vmatprep.subr.mxu0 0.0
  %717 = vmatpush2.xpose.msra.mxu0 0.0
  %718 = vmatprep.subr.mxu0 0.0
  %719 = vmatpush2.xpose.msra.mxu0 0.0
  %720 = vmatprep.subr.mxu0 0.0
  %721 = vmatpush2.xpose.msra.mxu0 0.0
  %722 = vmatprep.subr.mxu0 0.0
  %723 = vmatpush2.xpose.msra.mxu0 0.0
  %724 = vmatprep.subr.mxu0 0.0
  %725 = vmatpush2.xpose.msra.mxu0 0.0
  %726 = vmatprep.subr.mxu0 0.0
  %727 = vmatpush2.xpose.msra.mxu0 0.0
  %728 = vmatprep.subr.mxu0 0.0
  %729 = vmatpush2.xpose.msra.mxu0 0.0
  %730 = vmatprep.subr.mxu0 0.0
  %731 = vmatpush2.xpose.msra.mxu0 0.0
  %732 = vmatprep.subr.mxu0 0.0
  %733 = vmatpush2.xpose.msra.mxu0 0.0
  %734 = vmatprep.subr.mxu0 0.0
  %735 = vmatpush2.xpose.msra.mxu0 0.0
  %736 = vmatprep.subr.mxu0 0.0
  %737 = vmatpush2.xpose.msra.mxu0 0.0
  %738 = vmatprep.subr.mxu0 0.0
  %739 = vmatpush2.xpose.msra.mxu0 0.0
  %740 = vmatprep.subr.mxu0 0.0
  %741 = vmatpush2.xpose.msra.mxu0 0.0
  %742 = vmatprep.subr.mxu0 0.0
  %743 = vmatpush2.xpose.msra.mxu0 0.0
  %744 = vmatprep.subr.mxu0 0.0
  %745 = vmatpush2.xpose.msra.mxu0 0.0
  %746 = vmatprep.subr.mxu0 0.0
  %747 = vmatpush2.xpose.msra.mxu0 0.0
  %748 = vmatprep.mubr.f32.mxu0 0.0
  %749 = vmatmul.mubr.f32.gmra.mxu0 %v672
  %v750 = vpop.f32.mrf.mxu0
  %v751 = vadd.f32 0.0, %v750
  %v752 = vpop.f32.mrf.mxu0
  %753 = vmatprep.mubr.f32.mxu0 0.0
  %754 = vmatmul.mubr.f32.gmra.mxu0 %v674
  %v755 = vpop.f32.mrf.mxu0
  %v756 = vadd.f32 0.0, %v755
  %v757 = vpop.f32.mrf.mxu0
  %758 = vmatprep.mubr.f32.mxu0 0.0
  %759 = vmatmul.mubr.f32.gmra.mxu0 %v676
  %v760 = vpop.f32.mrf.mxu0
  %v761 = vadd.f32 0.0, %v760
  %v762 = vpop.f32.mrf.mxu0
  %763 = vdwg.mxu0
  %v764 = vsel %vm525, %v751, -inf
  %765 = vmax.xlane.f32.xlu0 %v764
  %v766 = vpop.xlane.xlu0 %765
  %v767 = vsel %vm525, %v756, -inf
  %768 = vmax.xlane.f32.xlu0 %v767
  %v769 = vpop.xlane.xlu0 %768
  %v770 = vsel %vm532, %v761, -inf
  %771 = vmax.xlane.f32.xlu0 %v770
  %v772 = vpop.xlane.xlu0 %771
  %v773 = vsub.f32 %v751, %v766
  %v774 = vsub.f32 %v756, %v769
  %v775 = vsub.f32 %v761, %v772
  %v776 = vmul.f32 %v773, 1.442695
  %v777 = vpow.pop %v776
  %v778 = vmul.f32 %v774, 1.442695
  %v779 = vpow.pop %v778
  %v780 = vmul.f32 %v775, 1.442695
  %v781 = vpow.pop %v780
  %v782 = vsel %vm525, %v777, 0.0
  %783 = vadd.xlane.f32.xlu0 %v782
  %v784 = vpop.xlane.xlu0 %783
  %v785 = vsel %vm525, %v779, 0.0
  %786 = vadd.xlane.f32.xlu0 %v785
  %v787 = vpop.xlane.xlu0 %786
  %v788 = vsel %vm532, %v781, 0.0
  %789 = vadd.xlane.f32.xlu0 %v788
  %v790 = vpop.xlane.xlu0 %789
  %v791 = vrcp.pop %v784
  %v792 = vmul.f32 %v777, %v791
  %v793 = vrcp.pop %v787
  %v794 = vmul.f32 %v779, %v793
  %v795 = vrcp.pop %v790
  %v796 = vmul.f32 %v781, %v795
  %797 = vrot.lane.b32.xlu0 %v394, 56
  %v798 = vpop.permute.xlu0 %797
  %799 = vrot.lane.b32.xlu0 %v399, 56
  %v800 = vpop.permute.xlu0 %799
  %801 = vrot.lane.b32.xlu0 %v404, 56
  %v802 = vpop.permute.xlu0 %801
  %v806 = vsel %vm525, %v792, 0
  %v809 = vsel %vm525, %v794, 0
  %v812 = vsel %vm525, %v796, 0
  %v814 = vsel %vm577, %v802, 0
  %816 = vmatprep.subr.mxu0 0.0
  %817 = vmatpush1.msra.mxu0 0.0
  %818 = vmatprep.subr.mxu0 0.0
  %819 = vmatpush1.msra.mxu0 0.0
  %820 = vmatprep.subr.mxu0 0.0
  %821 = vmatpush1.msra.mxu0 0.0
  %822 = vmatprep.subr.mxu0 0.0
  %823 = vmatpush1.msra.mxu0 0.0
  %824 = vmatprep.subr.mxu0 0.0
  %825 = vmatpush1.msra.mxu0 0.0
  %826 = vmatprep.subr.mxu0 0.0
  %827 = vmatpush1.msra.mxu0 0.0
  %828 = vmatprep.subr.mxu0 0.0
  %829 = vmatpush1.msra.mxu0 0.0
  %830 = vmatprep.subr.mxu0 0.0
  %831 = vmatpush1.msra.mxu0 0.0
  %832 = vmatprep.subr.mxu0 0.0
  %833 = vmatpush1.msra.mxu0 0.0
  %834 = vmatprep.subr.mxu0 0.0
  %835 = vmatpush1.msra.mxu0 0.0
  %836 = vmatprep.subr.mxu0 0.0
  %837 = vmatpush1.msra.mxu0 0.0
  %838 = vmatprep.subr.mxu0 0.0
  %839 = vmatpush1.msra.mxu0 0.0
  %840 = vmatprep.subr.mxu0 0.0
  %841 = vmatpush1.msra.mxu0 0.0
  %842 = vmatprep.subr.mxu0 0.0
  %843 = vmatpush1.msra.mxu0 %v814
  %844 = vmatprep.subr.mxu0 0.0
  %845 = vmatpush1.msra.mxu0 %v800
  %846 = vmatprep.subr.mxu0 0.0
  %847 = vmatpush1.msra.mxu0 %v798
  %848 = vmatprep.subr.mxu0 0.0
  %849 = vmatpush2.msra.mxu0 0.0
  %850 = vmatprep.subr.mxu0 0.0
  %851 = vmatpush2.msra.mxu0 0.0
  %852 = vmatprep.subr.mxu0 0.0
  %853 = vmatpush2.msra.mxu0 0.0
  %854 = vmatprep.subr.mxu0 0.0
  %855 = vmatpush2.msra.mxu0 0.0
  %856 = vmatprep.subr.mxu0 0.0
  %857 = vmatpush2.msra.mxu0 0.0
  %858 = vmatprep.subr.mxu0 0.0
  %859 = vmatpush2.msra.mxu0 0.0
  %860 = vmatprep.subr.mxu0 0.0
  %861 = vmatpush2.msra.mxu0 0.0
  %862 = vmatprep.subr.mxu0 0.0
  %863 = vmatpush2.msra.mxu0 0.0
  %864 = vmatprep.subr.mxu0 0.0
  %865 = vmatpush2.msra.mxu0 0.0
  %866 = vmatprep.subr.mxu0 0.0
  %867 = vmatpush2.msra.mxu0 0.0
  %868 = vmatprep.subr.mxu0 0.0
  %869 = vmatpush2.msra.mxu0 0.0
  %870 = vmatprep.subr.mxu0 0.0
  %871 = vmatpush2.msra.mxu0 0.0
  %872 = vmatprep.subr.mxu0 0.0
  %873 = vmatpush2.msra.mxu0 0.0
  %874 = vmatprep.subr.mxu0 0.0
  %875 = vmatpush2.msra.mxu0 0.0
  %876 = vmatprep.subr.mxu0 0.0
  %877 = vmatpush2.msra.mxu0 0.0
  %878 = vmatprep.subr.mxu0 0.0
  %879 = vmatpush2.msra.mxu0 0.0
  %880 = vmatprep.mubr.f32.mxu0 0.0
  %881 = vmatmul.mubr.f32.gmra.mxu0 %v806
  %v882 = vpop.f32.mrf.mxu0
  %v883 = vadd.f32 0.0, %v882
  %v884 = vpop.f32.mrf.mxu0
  %885 = vmatprep.mubr.f32.mxu0 0.0
  %886 = vmatmul.mubr.f32.gmra.mxu0 %v809
  %v887 = vpop.f32.mrf.mxu0
  %v888 = vadd.f32 0.0, %v887
  %v889 = vpop.f32.mrf.mxu0
  %890 = vmatprep.mubr.f32.mxu0 0.0
  %891 = vmatmul.mubr.f32.gmra.mxu0 %v812
  %v892 = vpop.f32.mrf.mxu0
  %v893 = vadd.f32 0.0, %v892
  %v894 = vpop.f32.mrf.mxu0
  %895 = vdwg.mxu0
  %896 = vrot.lane.b32.xlu0 %v417, 112
  %v897 = vpop.permute.xlu0 %896
  %898 = vrot.lane.b32.xlu0 %v418, 112
  %v899 = vpop.permute.xlu0 %898
  %900 = vrot.lane.b32.xlu0 %v419, 112
  %v901 = vpop.permute.xlu0 %900
  %902 = vrot.lane.b32.xlu0 %v394, 80
  %v903 = vpop.permute.xlu0 %902
  %904 = vrot.lane.b32.xlu0 %v399, 80
  %v905 = vpop.permute.xlu0 %904
  %906 = vrot.lane.b32.xlu0 %v404, 80
  %v907 = vpop.permute.xlu0 %906
  %v908 = vsel %vm429, %v897, 0
  %v910 = vsel %vm429, %v899, 0
  %v912 = vsel %vm429, %v901, 0
  %v914 = vsel %vm429, %v903, 0
  %v916 = vsel %vm429, %v905, 0
  %v918 = vsel %vm429, %v907, 0
  %920 = vmatprep.subr.mxu0 0.0
  %921 = vmatpush1.xpose.msra.mxu0 0.0
  %922 = vmatprep.subr.mxu0 0.0
  %923 = vmatpush1.xpose.msra.mxu0 0.0
  %924 = vmatprep.subr.mxu0 0.0
  %925 = vmatpush1.xpose.msra.mxu0 0.0
  %926 = vmatprep.subr.mxu0 0.0
  %927 = vmatpush1.xpose.msra.mxu0 0.0
  %928 = vmatprep.subr.mxu0 0.0
  %929 = vmatpush1.xpose.msra.mxu0 0.0
  %930 = vmatprep.subr.mxu0 0.0
  %931 = vmatpush1.xpose.msra.mxu0 0.0
  %932 = vmatprep.subr.mxu0 0.0
  %933 = vmatpush1.xpose.msra.mxu0 0.0
  %934 = vmatprep.subr.mxu0 0.0
  %935 = vmatpush1.xpose.msra.mxu0 0.0
  %936 = vmatprep.subr.mxu0 0.0
  %937 = vmatpush1.xpose.msra.mxu0 0.0
  %938 = vmatprep.subr.mxu0 0.0
  %939 = vmatpush1.xpose.msra.mxu0 0.0
  %940 = vmatprep.subr.mxu0 0.0
  %941 = vmatpush1.xpose.msra.mxu0 0.0
  %942 = vmatprep.subr.mxu0 0.0
  %943 = vmatpush1.xpose.msra.mxu0 0.0
  %944 = vmatprep.subr.mxu0 0.0
  %945 = vmatpush1.xpose.msra.mxu0 0.0
  %946 = vmatprep.subr.mxu0 0.0
  %947 = vmatpush1.xpose.msra.mxu0 %v918
  %948 = vmatprep.subr.mxu0 0.0
  %949 = vmatpush1.xpose.msra.mxu0 %v916
  %950 = vmatprep.subr.mxu0 0.0
  %951 = vmatpush1.xpose.msra.mxu0 %v914
  %952 = vmatprep.subr.mxu0 0.0
  %953 = vmatpush2.xpose.msra.mxu0 0.0
  %954 = vmatprep.subr.mxu0 0.0
  %955 = vmatpush2.xpose.msra.mxu0 0.0
  %956 = vmatprep.subr.mxu0 0.0
  %957 = vmatpush2.xpose.msra.mxu0 0.0
  %958 = vmatprep.subr.mxu0 0.0
  %959 = vmatpush2.xpose.msra.mxu0 0.0
  %960 = vmatprep.subr.mxu0 0.0
  %961 = vmatpush2.xpose.msra.mxu0 0.0
  %962 = vmatprep.subr.mxu0 0.0
  %963 = vmatpush2.xpose.msra.mxu0 0.0
  %964 = vmatprep.subr.mxu0 0.0
  %965 = vmatpush2.xpose.msra.mxu0 0.0
  %966 = vmatprep.subr.mxu0 0.0
  %967 = vmatpush2.xpose.msra.mxu0 0.0
  %968 = vmatprep.subr.mxu0 0.0
  %969 = vmatpush2.xpose.msra.mxu0 0.0
  %970 = vmatprep.subr.mxu0 0.0
  %971 = vmatpush2.xpose.msra.mxu0 0.0
  %972 = vmatprep.subr.mxu0 0.0
  %973 = vmatpush2.xpose.msra.mxu0 0.0
  %974 = vmatprep.subr.mxu0 0.0
  %975 = vmatpush2.xpose.msra.mxu0 0.0
  %976 = vmatprep.subr.mxu0 0.0
  %977 = vmatpush2.xpose.msra.mxu0 0.0
  %978 = vmatprep.subr.mxu0 0.0
  %979 = vmatpush2.xpose.msra.mxu0 0.0
  %980 = vmatprep.subr.mxu0 0.0
  %981 = vmatpush2.xpose.msra.mxu0 0.0
  %982 = vmatprep.subr.mxu0 0.0
  %983 = vmatpush2.xpose.msra.mxu0 0.0
  %984 = vmatprep.mubr.f32.mxu0 0.0
  %985 = vmatmul.mubr.f32.gmra.mxu0 %v908
  %v986 = vpop.f32.mrf.mxu0
  %v987 = vadd.f32 0.0, %v986
  %v988 = vpop.f32.mrf.mxu0
  %989 = vmatprep.mubr.f32.mxu0 0.0
  %990 = vmatmul.mubr.f32.gmra.mxu0 %v910
  %v991 = vpop.f32.mrf.mxu0
  %v992 = vadd.f32 0.0, %v991
  %v993 = vpop.f32.mrf.mxu0
  %994 = vmatprep.mubr.f32.mxu0 0.0
  %995 = vmatmul.mubr.f32.gmra.mxu0 %v912
  %v996 = vpop.f32.mrf.mxu0
  %v997 = vadd.f32 0.0, %v996
  %v998 = vpop.f32.mrf.mxu0
  %999 = vdwg.mxu0
  %v1000 = vsel %vm525, %v987, -inf
  %1001 = vmax.xlane.f32.xlu0 %v1000
  %v1002 = vpop.xlane.xlu0 %1001
  %v1003 = vsel %vm525, %v992, -inf
  %1004 = vmax.xlane.f32.xlu0 %v1003
  %v1005 = vpop.xlane.xlu0 %1004
  %v1006 = vsel %vm532, %v997, -inf
  %1007 = vmax.xlane.f32.xlu0 %v1006
  %v1008 = vpop.xlane.xlu0 %1007
  %v1009 = vsub.f32 %v987, %v1002
  %v1010 = vsub.f32 %v992, %v1005
  %v1011 = vsub.f32 %v997, %v1008
  %v1012 = vmul.f32 %v1009, 1.442695
  %v1013 = vpow.pop %v1012
  %v1014 = vmul.f32 %v1010, 1.442695
  %v1015 = vpow.pop %v1014
  %v1016 = vmul.f32 %v1011, 1.442695
  %v1017 = vpow.pop %v1016
  %v1018 = vsel %vm525, %v1013, 0.0
  %1019 = vadd.xlane.f32.xlu0 %v1018
  %v1020 = vpop.xlane.xlu0 %1019
  %v1021 = vsel %vm525, %v1015, 0.0
  %1022 = vadd.xlane.f32.xlu0 %v1021
  %v1023 = vpop.xlane.xlu0 %1022
  %v1024 = vsel %vm532, %v1017, 0.0
  %1025 = vadd.xlane.f32.xlu0 %v1024
  %v1026 = vpop.xlane.xlu0 %1025
  %v1027 = vrcp.pop %v1020
  %v1028 = vmul.f32 %v1013, %v1027
  %v1029 = vrcp.pop %v1023
  %v1030 = vmul.f32 %v1015, %v1029
  %v1031 = vrcp.pop %v1026
  %v1032 = vmul.f32 %v1017, %v1031
  %1033 = vrot.lane.b32.xlu0 %v394, 48
  %v1034 = vpop.permute.xlu0 %1033
  %1035 = vrot.lane.b32.xlu0 %v399, 48
  %v1036 = vpop.permute.xlu0 %1035
  %1037 = vrot.lane.b32.xlu0 %v404, 48
  %v1038 = vpop.permute.xlu0 %1037
  %v1042 = vsel %vm525, %v1028, 0
  %v1045 = vsel %vm525, %v1030, 0
  %v1048 = vsel %vm525, %v1032, 0
  %v1050 = vsel %vm577, %v1038, 0
  %1052 = vmatprep.subr.mxu0 0.0
  %1053 = vmatpush1.msra.mxu0 0.0
  %1054 = vmatprep.subr.mxu0 0.0
  %1055 = vmatpush1.msra.mxu0 0.0
  %1056 = vmatprep.subr.mxu0 0.0
  %1057 = vmatpush1.msra.mxu0 0.0
  %1058 = vmatprep.subr.mxu0 0.0
  %1059 = vmatpush1.msra.mxu0 0.0
  %1060 = vmatprep.subr.mxu0 0.0
  %1061 = vmatpush1.msra.mxu0 0.0
  %1062 = vmatprep.subr.mxu0 0.0
  %1063 = vmatpush1.msra.mxu0 0.0
  %1064 = vmatprep.subr.mxu0 0.0
  %1065 = vmatpush1.msra.mxu0 0.0
  %1066 = vmatprep.subr.mxu0 0.0
  %1067 = vmatpush1.msra.mxu0 0.0
  %1068 = vmatprep.subr.mxu0 0.0
  %1069 = vmatpush1.msra.mxu0 0.0
  %1070 = vmatprep.subr.mxu0 0.0
  %1071 = vmatpush1.msra.mxu0 0.0
  %1072 = vmatprep.subr.mxu0 0.0
  %1073 = vmatpush1.msra.mxu0 0.0
  %1074 = vmatprep.subr.mxu0 0.0
  %1075 = vmatpush1.msra.mxu0 0.0
  %1076 = vmatprep.subr.mxu0 0.0
  %1077 = vmatpush1.msra.mxu0 0.0
  %1078 = vmatprep.subr.mxu0 0.0
  %1079 = vmatpush1.msra.mxu0 %v1050
  %1080 = vmatprep.subr.mxu0 0.0
  %1081 = vmatpush1.msra.mxu0 %v1036
  %1082 = vmatprep.subr.mxu0 0.0
  %1083 = vmatpush1.msra.mxu0 %v1034
  %1084 = vmatprep.subr.mxu0 0.0
  %1085 = vmatpush2.msra.mxu0 0.0
  %1086 = vmatprep.subr.mxu0 0.0
  %1087 = vmatpush2.msra.mxu0 0.0
  %1088 = vmatprep.subr.mxu0 0.0
  %1089 = vmatpush2.msra.mxu0 0.0
  %1090 = vmatprep.subr.mxu0 0.0
  %1091 = vmatpush2.msra.mxu0 0.0
  %1092 = vmatprep.subr.mxu0 0.0
  %1093 = vmatpush2.msra.mxu0 0.0
  %1094 = vmatprep.subr.mxu0 0.0
  %1095 = vmatpush2.msra.mxu0 0.0
  %1096 = vmatprep.subr.mxu0 0.0
  %1097 = vmatpush2.msra.mxu0 0.0
  %1098 = vmatprep.subr.mxu0 0.0
  %1099 = vmatpush2.msra.mxu0 0.0
  %1100 = vmatprep.subr.mxu0 0.0
  %1101 = vmatpush2.msra.mxu0 0.0
  %1102 = vmatprep.subr.mxu0 0.0
  %1103 = vmatpush2.msra.mxu0 0.0
  %1104 = vmatprep.subr.mxu0 0.0
  %1105 = vmatpush2.msra.mxu0 0.0
  %1106 = vmatprep.subr.mxu0 0.0
  %1107 = vmatpush2.msra.mxu0 0.0
  %1108 = vmatprep.subr.mxu0 0.0
  %1109 = vmatpush2.msra.mxu0 0.0
  %1110 = vmatprep.subr.mxu0 0.0
  %1111 = vmatpush2.msra.mxu0 0.0
  %1112 = vmatprep.subr.mxu0 0.0
  %1113 = vmatpush2.msra.mxu0 0.0
  %1114 = vmatprep.subr.mxu0 0.0
  %1115 = vmatpush2.msra.mxu0 0.0
  %1116 = vmatprep.mubr.f32.mxu0 0.0
  %1117 = vmatmul.mubr.f32.gmra.mxu0 %v1042
  %v1118 = vpop.f32.mrf.mxu0
  %v1119 = vadd.f32 0.0, %v1118
  %v1120 = vpop.f32.mrf.mxu0
  %1121 = vmatprep.mubr.f32.mxu0 0.0
  %1122 = vmatmul.mubr.f32.gmra.mxu0 %v1045
  %v1123 = vpop.f32.mrf.mxu0
  %v1124 = vadd.f32 0.0, %v1123
  %v1125 = vpop.f32.mrf.mxu0
  %1126 = vmatprep.mubr.f32.mxu0 0.0
  %1127 = vmatmul.mubr.f32.gmra.mxu0 %v1048
  %v1128 = vpop.f32.mrf.mxu0
  %v1129 = vadd.f32 0.0, %v1128
  %v1130 = vpop.f32.mrf.mxu0
  %1131 = vdwg.mxu0
  %1132 = vrot.lane.b32.xlu0 %v417, 104
  %v1133 = vpop.permute.xlu0 %1132
  %1134 = vrot.lane.b32.xlu0 %v418, 104
  %v1135 = vpop.permute.xlu0 %1134
  %1136 = vrot.lane.b32.xlu0 %v419, 104
  %v1137 = vpop.permute.xlu0 %1136
  %1138 = vrot.lane.b32.xlu0 %v394, 72
  %v1139 = vpop.permute.xlu0 %1138
  %1140 = vrot.lane.b32.xlu0 %v399, 72
  %v1141 = vpop.permute.xlu0 %1140
  %1142 = vrot.lane.b32.xlu0 %v404, 72
  %v1143 = vpop.permute.xlu0 %1142
  %v1144 = vsel %vm429, %v1133, 0
  %v1146 = vsel %vm429, %v1135, 0
  %v1148 = vsel %vm429, %v1137, 0
  %v1150 = vsel %vm429, %v1139, 0
  %v1152 = vsel %vm429, %v1141, 0
  %v1154 = vsel %vm429, %v1143, 0
  %1156 = vmatprep.subr.mxu0 0.0
  %1157 = vmatpush1.xpose.msra.mxu0 0.0
  %1158 = vmatprep.subr.mxu0 0.0
  %1159 = vmatpush1.xpose.msra.mxu0 0.0
  %1160 = vmatprep.subr.mxu0 0.0
  %1161 = vmatpush1.xpose.msra.mxu0 0.0
  %1162 = vmatprep.subr.mxu0 0.0
  %1163 = vmatpush1.xpose.msra.mxu0 0.0
  %1164 = vmatprep.subr.mxu0 0.0
  %1165 = vmatpush1.xpose.msra.mxu0 0.0
  %1166 = vmatprep.subr.mxu0 0.0
  %1167 = vmatpush1.xpose.msra.mxu0 0.0
  %1168 = vmatprep.subr.mxu0 0.0
  %1169 = vmatpush1.xpose.msra.mxu0 0.0
  %1170 = vmatprep.subr.mxu0 0.0
  %1171 = vmatpush1.xpose.msra.mxu0 0.0
  %1172 = vmatprep.subr.mxu0 0.0
  %1173 = vmatpush1.xpose.msra.mxu0 0.0
  %1174 = vmatprep.subr.mxu0 0.0
  %1175 = vmatpush1.xpose.msra.mxu0 0.0
  %1176 = vmatprep.subr.mxu0 0.0
  %1177 = vmatpush1.xpose.msra.mxu0 0.0
  %1178 = vmatprep.subr.mxu0 0.0
  %1179 = vmatpush1.xpose.msra.mxu0 0.0
  %1180 = vmatprep.subr.mxu0 0.0
  %1181 = vmatpush1.xpose.msra.mxu0 0.0
  %1182 = vmatprep.subr.mxu0 0.0
  %1183 = vmatpush1.xpose.msra.mxu0 %v1154
  %1184 = vmatprep.subr.mxu0 0.0
  %1185 = vmatpush1.xpose.msra.mxu0 %v1152
  %1186 = vmatprep.subr.mxu0 0.0
  %1187 = vmatpush1.xpose.msra.mxu0 %v1150
  %1188 = vmatprep.subr.mxu0 0.0
  %1189 = vmatpush2.xpose.msra.mxu0 0.0
  %1190 = vmatprep.subr.mxu0 0.0
  %1191 = vmatpush2.xpose.msra.mxu0 0.0
  %1192 = vmatprep.subr.mxu0 0.0
  %1193 = vmatpush2.xpose.msra.mxu0 0.0
  %1194 = vmatprep.subr.mxu0 0.0
  %1195 = vmatpush2.xpose.msra.mxu0 0.0
  %1196 = vmatprep.subr.mxu0 0.0
  %1197 = vmatpush2.xpose.msra.mxu0 0.0
  %1198 = vmatprep.subr.mxu0 0.0
  %1199 = vmatpush2.xpose.msra.mxu0 0.0
  %1200 = vmatprep.subr.mxu0 0.0
  %1201 = vmatpush2.xpose.msra.mxu0 0.0
  %1202 = vmatprep.subr.mxu0 0.0
  %1203 = vmatpush2.xpose.msra.mxu0 0.0
  %1204 = vmatprep.subr.mxu0 0.0
  %1205 = vmatpush2.xpose.msra.mxu0 0.0
  %1206 = vmatprep.subr.mxu0 0.0
  %1207 = vmatpush2.xpose.msra.mxu0 0.0
  %1208 = vmatprep.subr.mxu0 0.0
  %1209 = vmatpush2.xpose.msra.mxu0 0.0
  %1210 = vmatprep.subr.mxu0 0.0
  %1211 = vmatpush2.xpose.msra.mxu0 0.0
  %1212 = vmatprep.subr.mxu0 0.0
  %1213 = vmatpush2.xpose.msra.mxu0 0.0
  %1214 = vmatprep.subr.mxu0 0.0
  %1215 = vmatpush2.xpose.msra.mxu0 0.0
  %1216 = vmatprep.subr.mxu0 0.0
  %1217 = vmatpush2.xpose.msra.mxu0 0.0
  %1218 = vmatprep.subr.mxu0 0.0
  %1219 = vmatpush2.xpose.msra.mxu0 0.0
  %1220 = vmatprep.mubr.f32.mxu0 0.0
  %1221 = vmatmul.mubr.f32.gmra.mxu0 %v1144
  %v1222 = vpop.f32.mrf.mxu0
  %v1223 = vadd.f32 0.0, %v1222
  %v1224 = vpop.f32.mrf.mxu0
  %1225 = vmatprep.mubr.f32.mxu0 0.0
  %1226 = vmatmul.mubr.f32.gmra.mxu0 %v1146
  %v1227 = vpop.f32.mrf.mxu0
  %v1228 = vadd.f32 0.0, %v1227
  %v1229 = vpop.f32.mrf.mxu0
  %1230 = vmatprep.mubr.f32.mxu0 0.0
  %1231 = vmatmul.mubr.f32.gmra.mxu0 %v1148
  %v1232 = vpop.f32.mrf.mxu0
  %v1233 = vadd.f32 0.0, %v1232
  %v1234 = vpop.f32.mrf.mxu0
  %1235 = vdwg.mxu0
  %v1236 = vsel %vm525, %v1223, -inf
  %1237 = vmax.xlane.f32.xlu0 %v1236
  %v1238 = vpop.xlane.xlu0 %1237
  %v1239 = vsel %vm525, %v1228, -inf
  %1240 = vmax.xlane.f32.xlu0 %v1239
  %v1241 = vpop.xlane.xlu0 %1240
  %v1242 = vsel %vm532, %v1233, -inf
  %1243 = vmax.xlane.f32.xlu0 %v1242
  %v1244 = vpop.xlane.xlu0 %1243
  %v1245 = vsub.f32 %v1223, %v1238
  %v1246 = vsub.f32 %v1228, %v1241
  %v1247 = vsub.f32 %v1233, %v1244
  %v1248 = vmul.f32 %v1245, 1.442695
  %v1249 = vpow.pop %v1248
  %v1250 = vmul.f32 %v1246, 1.442695
  %v1251 = vpow.pop %v1250
  %v1252 = vmul.f32 %v1247, 1.442695
  %v1253 = vpow.pop %v1252
  %v1254 = vsel %vm525, %v1249, 0.0
  %1255 = vadd.xlane.f32.xlu0 %v1254
  %v1256 = vpop.xlane.xlu0 %1255
  %v1257 = vsel %vm525, %v1251, 0.0
  %1258 = vadd.xlane.f32.xlu0 %v1257
  %v1259 = vpop.xlane.xlu0 %1258
  %v1260 = vsel %vm532, %v1253, 0.0
  %1261 = vadd.xlane.f32.xlu0 %v1260
  %v1262 = vpop.xlane.xlu0 %1261
  %v1263 = vrcp.pop %v1256
  %v1264 = vmul.f32 %v1249, %v1263
  %v1265 = vrcp.pop %v1259
  %v1266 = vmul.f32 %v1251, %v1265
  %v1267 = vrcp.pop %v1262
  %v1268 = vmul.f32 %v1253, %v1267
  %1269 = vrot.lane.b32.xlu0 %v394, 40
  %v1270 = vpop.permute.xlu0 %1269
  %1271 = vrot.lane.b32.xlu0 %v399, 40
  %v1272 = vpop.permute.xlu0 %1271
  %1273 = vrot.lane.b32.xlu0 %v404, 40
  %v1274 = vpop.permute.xlu0 %1273
  %v1278 = vsel %vm525, %v1264, 0
  %v1281 = vsel %vm525, %v1266, 0
  %v1284 = vsel %vm525, %v1268, 0
  %v1286 = vsel %vm577, %v1274, 0
  %1288 = vmatprep.subr.mxu0 0.0
  %1289 = vmatpush1.msra.mxu0 0.0
  %1290 = vmatprep.subr.mxu0 0.0
  %1291 = vmatpush1.msra.mxu0 0.0
  %1292 = vmatprep.subr.mxu0 0.0
  %1293 = vmatpush1.msra.mxu0 0.0
  %1294 = vmatprep.subr.mxu0 0.0
  %1295 = vmatpush1.msra.mxu0 0.0
  %1296 = vmatprep.subr.mxu0 0.0
  %1297 = vmatpush1.msra.mxu0 0.0
  %1298 = vmatprep.subr.mxu0 0.0
  %1299 = vmatpush1.msra.mxu0 0.0
  %1300 = vmatprep.subr.mxu0 0.0
  %1301 = vmatpush1.msra.mxu0 0.0
  %1302 = vmatprep.subr.mxu0 0.0
  %1303 = vmatpush1.msra.mxu0 0.0
  %1304 = vmatprep.subr.mxu0 0.0
  %1305 = vmatpush1.msra.mxu0 0.0
  %1306 = vmatprep.subr.mxu0 0.0
  %1307 = vmatpush1.msra.mxu0 0.0
  %1308 = vmatprep.subr.mxu0 0.0
  %1309 = vmatpush1.msra.mxu0 0.0
  %1310 = vmatprep.subr.mxu0 0.0
  %1311 = vmatpush1.msra.mxu0 0.0
  %1312 = vmatprep.subr.mxu0 0.0
  %1313 = vmatpush1.msra.mxu0 0.0
  %1314 = vmatprep.subr.mxu0 0.0
  %1315 = vmatpush1.msra.mxu0 %v1286
  %1316 = vmatprep.subr.mxu0 0.0
  %1317 = vmatpush1.msra.mxu0 %v1272
  %1318 = vmatprep.subr.mxu0 0.0
  %1319 = vmatpush1.msra.mxu0 %v1270
  %1320 = vmatprep.subr.mxu0 0.0
  %1321 = vmatpush2.msra.mxu0 0.0
  %1322 = vmatprep.subr.mxu0 0.0
  %1323 = vmatpush2.msra.mxu0 0.0
  %1324 = vmatprep.subr.mxu0 0.0
  %1325 = vmatpush2.msra.mxu0 0.0
  %1326 = vmatprep.subr.mxu0 0.0
  %1327 = vmatpush2.msra.mxu0 0.0
  %1328 = vmatprep.subr.mxu0 0.0
  %1329 = vmatpush2.msra.mxu0 0.0
  %1330 = vmatprep.subr.mxu0 0.0
  %1331 = vmatpush2.msra.mxu0 0.0
  %1332 = vmatprep.subr.mxu0 0.0
  %1333 = vmatpush2.msra.mxu0 0.0
  %1334 = vmatprep.subr.mxu0 0.0
  %1335 = vmatpush2.msra.mxu0 0.0
  %1336 = vmatprep.subr.mxu0 0.0
  %1337 = vmatpush2.msra.mxu0 0.0
  %1338 = vmatprep.subr.mxu0 0.0
  %1339 = vmatpush2.msra.mxu0 0.0
  %1340 = vmatprep.subr.mxu0 0.0
  %1341 = vmatpush2.msra.mxu0 0.0
  %1342 = vmatprep.subr.mxu0 0.0
  %1343 = vmatpush2.msra.mxu0 0.0
  %1344 = vmatprep.subr.mxu0 0.0
  %1345 = vmatpush2.msra.mxu0 0.0
  %1346 = vmatprep.subr.mxu0 0.0
  %1347 = vmatpush2.msra.mxu0 0.0
  %1348 = vmatprep.subr.mxu0 0.0
  %1349 = vmatpush2.msra.mxu0 0.0
  %1350 = vmatprep.subr.mxu0 0.0
  %1351 = vmatpush2.msra.mxu0 0.0
  %1352 = vmatprep.mubr.f32.mxu0 0.0
  %1353 = vmatmul.mubr.f32.gmra.mxu0 %v1278
  %v1354 = vpop.f32.mrf.mxu0
  %v1355 = vadd.f32 0.0, %v1354
  %v1356 = vpop.f32.mrf.mxu0
  %1357 = vmatprep.mubr.f32.mxu0 0.0
  %1358 = vmatmul.mubr.f32.gmra.mxu0 %v1281
  %v1359 = vpop.f32.mrf.mxu0
  %v1360 = vadd.f32 0.0, %v1359
  %v1361 = vpop.f32.mrf.mxu0
  %1362 = vmatprep.mubr.f32.mxu0 0.0
  %1363 = vmatmul.mubr.f32.gmra.mxu0 %v1284
  %v1364 = vpop.f32.mrf.mxu0
  %v1365 = vadd.f32 0.0, %v1364
  %v1366 = vpop.f32.mrf.mxu0
  %1367 = vdwg.mxu0
  %1371 = vrot.lane.b32.xlu0 %v883, 8
  %v1372 = vpop.permute.xlu0 %1371
  %1373 = vrot.lane.b32.xlu0 %v888, 8
  %v1374 = vpop.permute.xlu0 %1373
  %1375 = vrot.lane.b32.xlu0 %v893, 8
  %v1376 = vpop.permute.xlu0 %1375
  %1383 = vrot.lane.b32.xlu0 %v1119, 16
  %v1384 = vpop.permute.xlu0 %1383
  %1385 = vrot.lane.b32.xlu0 %v1124, 16
  %v1386 = vpop.permute.xlu0 %1385
  %1387 = vrot.lane.b32.xlu0 %v1129, 16
  %v1388 = vpop.permute.xlu0 %1387
  %1395 = vrot.lane.b32.xlu0 %v1355, 24
  %v1396 = vpop.permute.xlu0 %1395
  %1397 = vrot.lane.b32.xlu0 %v1360, 24
  %v1398 = vpop.permute.xlu0 %1397
  %1399 = vrot.lane.b32.xlu0 %v1365, 24
  %v1400 = vpop.permute.xlu0 %1399
  %v1404 = vsel %vm429, %v647, %v1372
  %v1405 = vsel %vm429, %v652, %v1374
  %v1406 = vsel %vm429, %v657, %v1376
  %vm1407 = vcmask 130048
  %v1408 = vsel %vm1407, %v1404, %v1384
  %v1409 = vsel %vm1407, %v1405, %v1386
  %v1410 = vsel %vm1407, %v1406, %v1388
  %vm1411 = vcmask 195584
  %v1412 = vsel %vm1411, %v1408, %v1396
  %v1413 = vsel %vm1411, %v1409, %v1398
  %v1414 = vsel %vm1411, %v1410, %v1400
  %1415 = vst.msk [vmem:[#allocation2] sm:$0xff] %vm197, %v1412
  %1416 = vst.msk [vmem:[#allocation2 + $0x8] sm:$0xff] %vm197, %v1413
  %1417 = vst.msk [vmem:[#allocation2 + $0x10] sm:$0x1] %vm182, %v1414
  %v1418 = vmul.f32 %v409, 0.35355338
  %v1419 = vmul.f32 %v414, 0.35355338
  %v1422 = vrot.slane %v419, 1
  %v1423 = vrot.slane %v1418, 1
  %v1424 = vsel %vm187, %v1422, %v1423
  %v1425 = vrot.slane %v1419, 1
  %v1426 = vsel %vm187, %v1423, %v1425
  %v1429 = vrot.slane %v404, 1
  %v1430 = vrot.slane %v409, 1
  %v1431 = vsel %vm187, %v1429, %v1430
  %v1432 = vrot.slane %v414, 1
  %v1433 = vsel %vm187, %v1430, %v1432
  %1434 = vrot.lane.b32.xlu0 %v1431, 96
  %v1435 = vpop.permute.xlu0 %1434
  %1436 = vrot.lane.b32.xlu0 %v1433, 96
  %v1437 = vpop.permute.xlu0 %1436
  %1438 = vrot.lane.b32.xlu0 %v1432, 96
  %v1439 = vpop.permute.xlu0 %1438
  %v1440 = vsel %vm429, %v1424, 0
  %v1442 = vsel %vm429, %v1426, 0
  %v1444 = vsel %vm429, %v1425, 0
  %v1446 = vsel %vm429, %v1435, 0
  %v1448 = vsel %vm429, %v1437, 0
  %v1450 = vsel %vm429, %v1439, 0
  %1452 = vmatprep.subr.mxu0 0.0
  %1453 = vmatpush1.xpose.msra.mxu0 0.0
  %1454 = vmatprep.subr.mxu0 0.0
  %1455 = vmatpush1.xpose.msra.mxu0 0.0
  %1456 = vmatprep.subr.mxu0 0.0
  %1457 = vmatpush1.xpose.msra.mxu0 0.0
  %1458 = vmatprep.subr.mxu0 0.0
  %1459 = vmatpush1.xpose.msra.mxu0 0.0
  %1460 = vmatprep.subr.mxu0 0.0
  %1461 = vmatpush1.xpose.msra.mxu0 0.0
  %1462 = vmatprep.subr.mxu0 0.0
  %1463 = vmatpush1.xpose.msra.mxu0 0.0
  %1464 = vmatprep.subr.mxu0 0.0
  %1465 = vmatpush1.xpose.msra.mxu0 0.0
  %1466 = vmatprep.subr.mxu0 0.0
  %1467 = vmatpush1.xpose.msra.mxu0 0.0
  %1468 = vmatprep.subr.mxu0 0.0
  %1469 = vmatpush1.xpose.msra.mxu0 0.0
  %1470 = vmatprep.subr.mxu0 0.0
  %1471 = vmatpush1.xpose.msra.mxu0 0.0
  %1472 = vmatprep.subr.mxu0 0.0
  %1473 = vmatpush1.xpose.msra.mxu0 0.0
  %1474 = vmatprep.subr.mxu0 0.0
  %1475 = vmatpush1.xpose.msra.mxu0 0.0
  %1476 = vmatprep.subr.mxu0 0.0
  %1477 = vmatpush1.xpose.msra.mxu0 0.0
  %1478 = vmatprep.subr.mxu0 0.0
  %1479 = vmatpush1.xpose.msra.mxu0 %v1450
  %1480 = vmatprep.subr.mxu0 0.0
  %1481 = vmatpush1.xpose.msra.mxu0 %v1448
  %1482 = vmatprep.subr.mxu0 0.0
  %1483 = vmatpush1.xpose.msra.mxu0 %v1446
  %1484 = vmatprep.subr.mxu0 0.0
  %1485 = vmatpush2.xpose.msra.mxu0 0.0
  %1486 = vmatprep.subr.mxu0 0.0
  %1487 = vmatpush2.xpose.msra.mxu0 0.0
  %1488 = vmatprep.subr.mxu0 0.0
  %1489 = vmatpush2.xpose.msra.mxu0 0.0
  %1490 = vmatprep.subr.mxu0 0.0
  %1491 = vmatpush2.xpose.msra.mxu0 0.0
  %1492 = vmatprep.subr.mxu0 0.0
  %1493 = vmatpush2.xpose.msra.mxu0 0.0
  %1494 = vmatprep.subr.mxu0 0.0
  %1495 = vmatpush2.xpose.msra.mxu0 0.0
  %1496 = vmatprep.subr.mxu0 0.0
  %1497 = vmatpush2.xpose.msra.mxu0 0.0
  %1498 = vmatprep.subr.mxu0 0.0
  %1499 = vmatpush2.xpose.msra.mxu0 0.0
  %1500 = vmatprep.subr.mxu0 0.0
  %1501 = vmatpush2.xpose.msra.mxu0 0.0
  %1502 = vmatprep.subr.mxu0 0.0
  %1503 = vmatpush2.xpose.msra.mxu0 0.0
  %1504 = vmatprep.subr.mxu0 0.0
  %1505 = vmatpush2.xpose.msra.mxu0 0.0
  %1506 = vmatprep.subr.mxu0 0.0
  %1507 = vmatpush2.xpose.msra.mxu0 0.0
  %1508 = vmatprep.subr.mxu0 0.0
  %1509 = vmatpush2.xpose.msra.mxu0 0.0
  %1510 = vmatprep.subr.mxu0 0.0
  %1511 = vmatpush2.xpose.msra.mxu0 0.0
  %1512 = vmatprep.subr.mxu0 0.0
  %1513 = vmatpush2.xpose.msra.mxu0 0.0
  %1514 = vmatprep.subr.mxu0 0.0
  %1515 = vmatpush2.xpose.msra.mxu0 0.0
  %1516 = vmatprep.mubr.f32.mxu0 0.0
  %1517 = vmatmul.mubr.f32.gmra.mxu0 %v1440
  %v1518 = vpop.f32.mrf.mxu0
  %v1519 = vadd.f32 0.0, %v1518
  %v1520 = vpop.f32.mrf.mxu0
  %1521 = vmatprep.mubr.f32.mxu0 0.0
  %1522 = vmatmul.mubr.f32.gmra.mxu0 %v1442
  %v1523 = vpop.f32.mrf.mxu0
  %v1524 = vadd.f32 0.0, %v1523
  %v1525 = vpop.f32.mrf.mxu0
  %1526 = vmatprep.mubr.f32.mxu0 0.0
  %1527 = vmatmul.mubr.f32.gmra.mxu0 %v1444
  %v1528 = vpop.f32.mrf.mxu0
  %v1529 = vadd.f32 0.0, %v1528
  %v1530 = vpop.f32.mrf.mxu0
  %1531 = vdwg.mxu0
  %v1532 = vsel %vm525, %v1519, -inf
  %1533 = vmax.xlane.f32.xlu0 %v1532
  %v1534 = vpop.xlane.xlu0 %1533
  %v1535 = vsel %vm525, %v1524, -inf
  %1536 = vmax.xlane.f32.xlu0 %v1535
  %v1537 = vpop.xlane.xlu0 %1536
  %v1538 = vsel %vm532, %v1529, -inf
  %1539 = vmax.xlane.f32.xlu0 %v1538
  %v1540 = vpop.xlane.xlu0 %1539
  %v1541 = vsub.f32 %v1519, %v1534
  %v1542 = vsub.f32 %v1524, %v1537
  %v1543 = vsub.f32 %v1529, %v1540
  %v1544 = vmul.f32 %v1541, 1.442695
  %v1545 = vpow.pop %v1544
  %v1546 = vmul.f32 %v1542, 1.442695
  %v1547 = vpow.pop %v1546
  %v1548 = vmul.f32 %v1543, 1.442695
  %v1549 = vpow.pop %v1548
  %v1550 = vsel %vm525, %v1545, 0.0
  %1551 = vadd.xlane.f32.xlu0 %v1550
  %v1552 = vpop.xlane.xlu0 %1551
  %v1553 = vsel %vm525, %v1547, 0.0
  %1554 = vadd.xlane.f32.xlu0 %v1553
  %v1555 = vpop.xlane.xlu0 %1554
  %v1556 = vsel %vm532, %v1549, 0.0
  %1557 = vadd.xlane.f32.xlu0 %v1556
  %v1558 = vpop.xlane.xlu0 %1557
  %v1559 = vrcp.pop %v1552
  %v1560 = vmul.f32 %v1545, %v1559
  %v1561 = vrcp.pop %v1555
  %v1562 = vmul.f32 %v1547, %v1561
  %v1563 = vrcp.pop %v1558
  %v1564 = vmul.f32 %v1549, %v1563
  %1565 = vrot.lane.b32.xlu0 %v1431, 64
  %v1566 = vpop.permute.xlu0 %1565
  %1567 = vrot.lane.b32.xlu0 %v1433, 64
  %v1568 = vpop.permute.xlu0 %1567
  %1569 = vrot.lane.b32.xlu0 %v1432, 64
  %v1570 = vpop.permute.xlu0 %1569
  %v1574 = vsel %vm525, %v1560, 0
  %v1577 = vsel %vm525, %v1562, 0
  %v1580 = vsel %vm525, %v1564, 0
  %v1582 = vsel %vm577, %v1570, 0
  %1584 = vmatprep.subr.mxu0 0.0
  %1585 = vmatpush1.msra.mxu0 0.0
  %1586 = vmatprep.subr.mxu0 0.0
  %1587 = vmatpush1.msra.mxu0 0.0
  %1588 = vmatprep.subr.mxu0 0.0
  %1589 = vmatpush1.msra.mxu0 0.0
  %1590 = vmatprep.subr.mxu0 0.0
  %1591 = vmatpush1.msra.mxu0 0.0
  %1592 = vmatprep.subr.mxu0 0.0
  %1593 = vmatpush1.msra.mxu0 0.0
  %1594 = vmatprep.subr.mxu0 0.0
  %1595 = vmatpush1.msra.mxu0 0.0
  %1596 = vmatprep.subr.mxu0 0.0
  %1597 = vmatpush1.msra.mxu0 0.0
  %1598 = vmatprep.subr.mxu0 0.0
  %1599 = vmatpush1.msra.mxu0 0.0
  %1600 = vmatprep.subr.mxu0 0.0
  %1601 = vmatpush1.msra.mxu0 0.0
  %1602 = vmatprep.subr.mxu0 0.0
  %1603 = vmatpush1.msra.mxu0 0.0
  %1604 = vmatprep.subr.mxu0 0.0
  %1605 = vmatpush1.msra.mxu0 0.0
  %1606 = vmatprep.subr.mxu0 0.0
  %1607 = vmatpush1.msra.mxu0 0.0
  %1608 = vmatprep.subr.mxu0 0.0
  %1609 = vmatpush1.msra.mxu0 0.0
  %1610 = vmatprep.subr.mxu0 0.0
  %1611 = vmatpush1.msra.mxu0 %v1582
  %1612 = vmatprep.subr.mxu0 0.0
  %1613 = vmatpush1.msra.mxu0 %v1568
  %1614 = vmatprep.subr.mxu0 0.0
  %1615 = vmatpush1.msra.mxu0 %v1566
  %1616 = vmatprep.subr.mxu0 0.0
  %1617 = vmatpush2.msra.mxu0 0.0
  %1618 = vmatprep.subr.mxu0 0.0
  %1619 = vmatpush2.msra.mxu0 0.0
  %1620 = vmatprep.subr.mxu0 0.0
  %1621 = vmatpush2.msra.mxu0 0.0
  %1622 = vmatprep.subr.mxu0 0.0
  %1623 = vmatpush2.msra.mxu0 0.0
  %1624 = vmatprep.subr.mxu0 0.0
  %1625 = vmatpush2.msra.mxu0 0.0
  %1626 = vmatprep.subr.mxu0 0.0
  %1627 = vmatpush2.msra.mxu0 0.0
  %1628 = vmatprep.subr.mxu0 0.0
  %1629 = vmatpush2.msra.mxu0 0.0
  %1630 = vmatprep.subr.mxu0 0.0
  %1631 = vmatpush2.msra.mxu0 0.0
  %1632 = vmatprep.subr.mxu0 0.0
  %1633 = vmatpush2.msra.mxu0 0.0
  %1634 = vmatprep.subr.mxu0 0.0
  %1635 = vmatpush2.msra.mxu0 0.0
  %1636 = vmatprep.subr.mxu0 0.0
  %1637 = vmatpush2.msra.mxu0 0.0
  %1638 = vmatprep.subr.mxu0 0.0
  %1639 = vmatpush2.msra.mxu0 0.0
  %1640 = vmatprep.subr.mxu0 0.0
  %1641 = vmatpush2.msra.mxu0 0.0
  %1642 = vmatprep.subr.mxu0 0.0
  %1643 = vmatpush2.msra.mxu0 0.0
  %1644 = vmatprep.subr.mxu0 0.0
  %1645 = vmatpush2.msra.mxu0 0.0
  %1646 = vmatprep.subr.mxu0 0.0
  %1647 = vmatpush2.msra.mxu0 0.0
  %1648 = vmatprep.mubr.f32.mxu0 0.0
  %1649 = vmatmul.mubr.f32.gmra.mxu0 %v1574
  %v1650 = vpop.f32.mrf.mxu0
  %v1651 = vadd.f32 0.0, %v1650
  %v1652 = vpop.f32.mrf.mxu0
  %1653 = vmatprep.mubr.f32.mxu0 0.0
  %1654 = vmatmul.mubr.f32.gmra.mxu0 %v1577
  %v1655 = vpop.f32.mrf.mxu0
  %v1656 = vadd.f32 0.0, %v1655
  %v1657 = vpop.f32.mrf.mxu0
  %1658 = vmatprep.mubr.f32.mxu0 0.0
  %1659 = vmatmul.mubr.f32.gmra.mxu0 %v1580
  %v1660 = vpop.f32.mrf.mxu0
  %v1661 = vadd.f32 0.0, %v1660
  %v1662 = vpop.f32.mrf.mxu0
  %1663 = vdwg.mxu0
  %1664 = vrot.lane.b32.xlu0 %v1424, 120
  %v1665 = vpop.permute.xlu0 %1664
  %1666 = vrot.lane.b32.xlu0 %v1426, 120
  %v1667 = vpop.permute.xlu0 %1666
  %1668 = vrot.lane.b32.xlu0 %v1425, 120
  %v1669 = vpop.permute.xlu0 %1668
  %1670 = vrot.lane.b32.xlu0 %v1431, 88
  %v1671 = vpop.permute.xlu0 %1670
  %1672 = vrot.lane.b32.xlu0 %v1433, 88
  %v1673 = vpop.permute.xlu0 %1672
  %1674 = vrot.lane.b32.xlu0 %v1432, 88
  %v1675 = vpop.permute.xlu0 %1674
  %v1676 = vsel %vm429, %v1665, 0
  %v1678 = vsel %vm429, %v1667, 0
  %v1680 = vsel %vm429, %v1669, 0
  %v1682 = vsel %vm429, %v1671, 0
  %v1684 = vsel %vm429, %v1673, 0
  %v1686 = vsel %vm429, %v1675, 0
  %1688 = vmatprep.subr.mxu0 0.0
  %1689 = vmatpush1.xpose.msra.mxu0 0.0
  %1690 = vmatprep.subr.mxu0 0.0
  %1691 = vmatpush1.xpose.msra.mxu0 0.0
  %1692 = vmatprep.subr.mxu0 0.0
  %1693 = vmatpush1.xpose.msra.mxu0 0.0
  %1694 = vmatprep.subr.mxu0 0.0
  %1695 = vmatpush1.xpose.msra.mxu0 0.0
  %1696 = vmatprep.subr.mxu0 0.0
  %1697 = vmatpush1.xpose.msra.mxu0 0.0
  %1698 = vmatprep.subr.mxu0 0.0
  %1699 = vmatpush1.xpose.msra.mxu0 0.0
  %1700 = vmatprep.subr.mxu0 0.0
  %1701 = vmatpush1.xpose.msra.mxu0 0.0
  %1702 = vmatprep.subr.mxu0 0.0
  %1703 = vmatpush1.xpose.msra.mxu0 0.0
  %1704 = vmatprep.subr.mxu0 0.0
  %1705 = vmatpush1.xpose.msra.mxu0 0.0
  %1706 = vmatprep.subr.mxu0 0.0
  %1707 = vmatpush1.xpose.msra.mxu0 0.0
  %1708 = vmatprep.subr.mxu0 0.0
  %1709 = vmatpush1.xpose.msra.mxu0 0.0
  %1710 = vmatprep.subr.mxu0 0.0
  %1711 = vmatpush1.xpose.msra.mxu0 0.0
  %1712 = vmatprep.subr.mxu0 0.0
  %1713 = vmatpush1.xpose.msra.mxu0 0.0
  %1714 = vmatprep.subr.mxu0 0.0
  %1715 = vmatpush1.xpose.msra.mxu0 %v1686
  %1716 = vmatprep.subr.mxu0 0.0
  %1717 = vmatpush1.xpose.msra.mxu0 %v1684
  %1718 = vmatprep.subr.mxu0 0.0
  %1719 = vmatpush1.xpose.msra.mxu0 %v1682
  %1720 = vmatprep.subr.mxu0 0.0
  %1721 = vmatpush2.xpose.msra.mxu0 0.0
  %1722 = vmatprep.subr.mxu0 0.0
  %1723 = vmatpush2.xpose.msra.mxu0 0.0
  %1724 = vmatprep.subr.mxu0 0.0
  %1725 = vmatpush2.xpose.msra.mxu0 0.0
  %1726 = vmatprep.subr.mxu0 0.0
  %1727 = vmatpush2.xpose.msra.mxu0 0.0
  %1728 = vmatprep.subr.mxu0 0.0
  %1729 = vmatpush2.xpose.msra.mxu0 0.0
  %1730 = vmatprep.subr.mxu0 0.0
  %1731 = vmatpush2.xpose.msra.mxu0 0.0
  %1732 = vmatprep.subr.mxu0 0.0
  %1733 = vmatpush2.xpose.msra.mxu0 0.0
  %1734 = vmatprep.subr.mxu0 0.0
  %1735 = vmatpush2.xpose.msra.mxu0 0.0
  %1736 = vmatprep.subr.mxu0 0.0
  %1737 = vmatpush2.xpose.msra.mxu0 0.0
  %1738 = vmatprep.subr.mxu0 0.0
  %1739 = vmatpush2.xpose.msra.mxu0 0.0
  %1740 = vmatprep.subr.mxu0 0.0
  %1741 = vmatpush2.xpose.msra.mxu0 0.0
  %1742 = vmatprep.subr.mxu0 0.0
  %1743 = vmatpush2.xpose.msra.mxu0 0.0
  %1744 = vmatprep.subr.mxu0 0.0
  %1745 = vmatpush2.xpose.msra.mxu0 0.0
  %1746 = vmatprep.subr.mxu0 0.0
  %1747 = vmatpush2.xpose.msra.mxu0 0.0
  %1748 = vmatprep.subr.mxu0 0.0
  %1749 = vmatpush2.xpose.msra.mxu0 0.0
  %1750 = vmatprep.subr.mxu0 0.0
  %1751 = vmatpush2.xpose.msra.mxu0 0.0
  %1752 = vmatprep.mubr.f32.mxu0 0.0
  %1753 = vmatmul.mubr.f32.gmra.mxu0 %v1676
  %v1754 = vpop.f32.mrf.mxu0
  %v1755 = vadd.f32 0.0, %v1754
  %v1756 = vpop.f32.mrf.mxu0
  %1757 = vmatprep.mubr.f32.mxu0 0.0
  %1758 = vmatmul.mubr.f32.gmra.mxu0 %v1678
  %v1759 = vpop.f32.mrf.mxu0
  %v1760 = vadd.f32 0.0, %v1759
  %v1761 = vpop.f32.mrf.mxu0
  %1762 = vmatprep.mubr.f32.mxu0 0.0
  %1763 = vmatmul.mubr.f32.gmra.mxu0 %v1680
  %v1764 = vpop.f32.mrf.mxu0
  %v1765 = vadd.f32 0.0, %v1764
  %v1766 = vpop.f32.mrf.mxu0
  %1767 = vdwg.mxu0
  %v1768 = vsel %vm525, %v1755, -inf
  %1769 = vmax.xlane.f32.xlu0 %v1768
  %v1770 = vpop.xlane.xlu0 %1769
  %v1771 = vsel %vm525, %v1760, -inf
  %1772 = vmax.xlane.f32.xlu0 %v1771
  %v1773 = vpop.xlane.xlu0 %1772
  %v1774 = vsel %vm532, %v1765, -inf
  %1775 = vmax.xlane.f32.xlu0 %v1774
  %v1776 = vpop.xlane.xlu0 %1775
  %v1777 = vsub.f32 %v1755, %v1770
  %v1778 = vsub.f32 %v1760, %v1773
  %v1779 = vsub.f32 %v1765, %v1776
  %v1780 = vmul.f32 %v1777, 1.442695
  %v1781 = vpow.pop %v1780
  %v1782 = vmul.f32 %v1778, 1.442695
  %v1783 = vpow.pop %v1782
  %v1784 = vmul.f32 %v1779, 1.442695
  %v1785 = vpow.pop %v1784
  %v1786 = vsel %vm525, %v1781, 0.0
  %1787 = vadd.xlane.f32.xlu0 %v1786
  %v1788 = vpop.xlane.xlu0 %1787
  %v1789 = vsel %vm525, %v1783, 0.0
  %1790 = vadd.xlane.f32.xlu0 %v1789
  %v1791 = vpop.xlane.xlu0 %1790
  %v1792 = vsel %vm532, %v1785, 0.0
  %1793 = vadd.xlane.f32.xlu0 %v1792
  %v1794 = vpop.xlane.xlu0 %1793
  %v1795 = vrcp.pop %v1788
  %v1796 = vmul.f32 %v1781, %v1795
  %v1797 = vrcp.pop %v1791
  %v1798 = vmul.f32 %v1783, %v1797
  %v1799 = vrcp.pop %v1794
  %v1800 = vmul.f32 %v1785, %v1799
  %1801 = vrot.lane.b32.xlu0 %v1431, 56
  %v1802 = vpop.permute.xlu0 %1801
  %1803 = vrot.lane.b32.xlu0 %v1433, 56
  %v1804 = vpop.permute.xlu0 %1803
  %1805 = vrot.lane.b32.xlu0 %v1432, 56
  %v1806 = vpop.permute.xlu0 %1805
  %v1810 = vsel %vm525, %v1796, 0
  %v1813 = vsel %vm525, %v1798, 0
  %v1816 = vsel %vm525, %v1800, 0
  %v1818 = vsel %vm577, %v1806, 0
  %1820 = vmatprep.subr.mxu0 0.0
  %1821 = vmatpush1.msra.mxu0 0.0
  %1822 = vmatprep.subr.mxu0 0.0
  %1823 = vmatpush1.msra.mxu0 0.0
  %1824 = vmatprep.subr.mxu0 0.0
  %1825 = vmatpush1.msra.mxu0 0.0
  %1826 = vmatprep.subr.mxu0 0.0
  %1827 = vmatpush1.msra.mxu0 0.0
  %1828 = vmatprep.subr.mxu0 0.0
  %1829 = vmatpush1.msra.mxu0 0.0
  %1830 = vmatprep.subr.mxu0 0.0
  %1831 = vmatpush1.msra.mxu0 0.0
  %1832 = vmatprep.subr.mxu0 0.0
  %1833 = vmatpush1.msra.mxu0 0.0
  %1834 = vmatprep.subr.mxu0 0.0
  %1835 = vmatpush1.msra.mxu0 0.0
  %1836 = vmatprep.subr.mxu0 0.0
  %1837 = vmatpush1.msra.mxu0 0.0
  %1838 = vmatprep.subr.mxu0 0.0
  %1839 = vmatpush1.msra.mxu0 0.0
  %1840 = vmatprep.subr.mxu0 0.0
  %1841 = vmatpush1.msra.mxu0 0.0
  %1842 = vmatprep.subr.mxu0 0.0
  %1843 = vmatpush1.msra.mxu0 0.0
  %1844 = vmatprep.subr.mxu0 0.0
  %1845 = vmatpush1.msra.mxu0 0.0
  %1846 = vmatprep.subr.mxu0 0.0
  %1847 = vmatpush1.msra.mxu0 %v1818
  %1848 = vmatprep.subr.mxu0 0.0
  %1849 = vmatpush1.msra.mxu0 %v1804
  %1850 = vmatprep.subr.mxu0 0.0
  %1851 = vmatpush1.msra.mxu0 %v1802
  %1852 = vmatprep.subr.mxu0 0.0
  %1853 = vmatpush2.msra.mxu0 0.0
  %1854 = vmatprep.subr.mxu0 0.0
  %1855 = vmatpush2.msra.mxu0 0.0
  %1856 = vmatprep.subr.mxu0 0.0
  %1857 = vmatpush2.msra.mxu0 0.0
  %1858 = vmatprep.subr.mxu0 0.0
  %1859 = vmatpush2.msra.mxu0 0.0
  %1860 = vmatprep.subr.mxu0 0.0
  %1861 = vmatpush2.msra.mxu0 0.0
  %1862 = vmatprep.subr.mxu0 0.0
  %1863 = vmatpush2.msra.mxu0 0.0
  %1864 = vmatprep.subr.mxu0 0.0
  %1865 = vmatpush2.msra.mxu0 0.0
  %1866 = vmatprep.subr.mxu0 0.0
  %1867 = vmatpush2.msra.mxu0 0.0
  %1868 = vmatprep.subr.mxu0 0.0
  %1869 = vmatpush2.msra.mxu0 0.0
  %1870 = vmatprep.subr.mxu0 0.0
  %1871 = vmatpush2.msra.mxu0 0.0
  %1872 = vmatprep.subr.mxu0 0.0
  %1873 = vmatpush2.msra.mxu0 0.0
  %1874 = vmatprep.subr.mxu0 0.0
  %1875 = vmatpush2.msra.mxu0 0.0
  %1876 = vmatprep.subr.mxu0 0.0
  %1877 = vmatpush2.msra.mxu0 0.0
  %1878 = vmatprep.subr.mxu0 0.0
  %1879 = vmatpush2.msra.mxu0 0.0
  %1880 = vmatprep.subr.mxu0 0.0
  %1881 = vmatpush2.msra.mxu0 0.0
  %1882 = vmatprep.subr.mxu0 0.0
  %1883 = vmatpush2.msra.mxu0 0.0
  %1884 = vmatprep.mubr.f32.mxu0 0.0
  %1885 = vmatmul.mubr.f32.gmra.mxu0 %v1810
  %v1886 = vpop.f32.mrf.mxu0
  %v1887 = vadd.f32 0.0, %v1886
  %v1888 = vpop.f32.mrf.mxu0
  %1889 = vmatprep.mubr.f32.mxu0 0.0
  %1890 = vmatmul.mubr.f32.gmra.mxu0 %v1813
  %v1891 = vpop.f32.mrf.mxu0
  %v1892 = vadd.f32 0.0, %v1891
  %v1893 = vpop.f32.mrf.mxu0
  %1894 = vmatprep.mubr.f32.mxu0 0.0
  %1895 = vmatmul.mubr.f32.gmra.mxu0 %v1816
  %v1896 = vpop.f32.mrf.mxu0
  %v1897 = vadd.f32 0.0, %v1896
  %v1898 = vpop.f32.mrf.mxu0
  %1899 = vdwg.mxu0
  %1900 = vrot.lane.b32.xlu0 %v1424, 112
  %v1901 = vpop.permute.xlu0 %1900
  %1902 = vrot.lane.b32.xlu0 %v1426, 112
  %v1903 = vpop.permute.xlu0 %1902
  %1904 = vrot.lane.b32.xlu0 %v1425, 112
  %v1905 = vpop.permute.xlu0 %1904
  %1906 = vrot.lane.b32.xlu0 %v1431, 80
  %v1907 = vpop.permute.xlu0 %1906
  %1908 = vrot.lane.b32.xlu0 %v1433, 80
  %v1909 = vpop.permute.xlu0 %1908
  %1910 = vrot.lane.b32.xlu0 %v1432, 80
  %v1911 = vpop.permute.xlu0 %1910
  %v1912 = vsel %vm429, %v1901, 0
  %v1914 = vsel %vm429, %v1903, 0
  %v1916 = vsel %vm429, %v1905, 0
  %v1918 = vsel %vm429, %v1907, 0
  %v1920 = vsel %vm429, %v1909, 0
  %v1922 = vsel %vm429, %v1911, 0
  %1924 = vmatprep.subr.mxu0 0.0
  %1925 = vmatpush1.xpose.msra.mxu0 0.0
  %1926 = vmatprep.subr.mxu0 0.0
  %1927 = vmatpush1.xpose.msra.mxu0 0.0
  %1928 = vmatprep.subr.mxu0 0.0
  %1929 = vmatpush1.xpose.msra.mxu0 0.0
  %1930 = vmatprep.subr.mxu0 0.0
  %1931 = vmatpush1.xpose.msra.mxu0 0.0
  %1932 = vmatprep.subr.mxu0 0.0
  %1933 = vmatpush1.xpose.msra.mxu0 0.0
  %1934 = vmatprep.subr.mxu0 0.0
  %1935 = vmatpush1.xpose.msra.mxu0 0.0
  %1936 = vmatprep.subr.mxu0 0.0
  %1937 = vmatpush1.xpose.msra.mxu0 0.0
  %1938 = vmatprep.subr.mxu0 0.0
  %1939 = vmatpush1.xpose.msra.mxu0 0.0
  %1940 = vmatprep.subr.mxu0 0.0
  %1941 = vmatpush1.xpose.msra.mxu0 0.0
  %1942 = vmatprep.subr.mxu0 0.0
  %1943 = vmatpush1.xpose.msra.mxu0 0.0
  %1944 = vmatprep.subr.mxu0 0.0
  %1945 = vmatpush1.xpose.msra.mxu0 0.0
  %1946 = vmatprep.subr.mxu0 0.0
  %1947 = vmatpush1.xpose.msra.mxu0 0.0
  %1948 = vmatprep.subr.mxu0 0.0
  %1949 = vmatpush1.xpose.msra.mxu0 0.0
  %1950 = vmatprep.subr.mxu0 0.0
  %1951 = vmatpush1.xpose.msra.mxu0 %v1922
  %1952 = vmatprep.subr.mxu0 0.0
  %1953 = vmatpush1.xpose.msra.mxu0 %v1920
  %1954 = vmatprep.subr.mxu0 0.0
  %1955 = vmatpush1.xpose.msra.mxu0 %v1918
  %1956 = vmatprep.subr.mxu0 0.0
  %1957 = vmatpush2.xpose.msra.mxu0 0.0
  %1958 = vmatprep.subr.mxu0 0.0
  %1959 = vmatpush2.xpose.msra.mxu0 0.0
  %1960 = vmatprep.subr.mxu0 0.0
  %1961 = vmatpush2.xpose.msra.mxu0 0.0
  %1962 = vmatprep.subr.mxu0 0.0
  %1963 = vmatpush2.xpose.msra.mxu0 0.0
  %1964 = vmatprep.subr.mxu0 0.0
  %1965 = vmatpush2.xpose.msra.mxu0 0.0
  %1966 = vmatprep.subr.mxu0 0.0
  %1967 = vmatpush2.xpose.msra.mxu0 0.0
  %1968 = vmatprep.subr.mxu0 0.0
  %1969 = vmatpush2.xpose.msra.mxu0 0.0
  %1970 = vmatprep.subr.mxu0 0.0
  %1971 = vmatpush2.xpose.msra.mxu0 0.0
  %1972 = vmatprep.subr.mxu0 0.0
  %1973 = vmatpush2.xpose.msra.mxu0 0.0
  %1974 = vmatprep.subr.mxu0 0.0
  %1975 = vmatpush2.xpose.msra.mxu0 0.0
  %1976 = vmatprep.subr.mxu0 0.0
  %1977 = vmatpush2.xpose.msra.mxu0 0.0
  %1978 = vmatprep.subr.mxu0 0.0
  %1979 = vmatpush2.xpose.msra.mxu0 0.0
  %1980 = vmatprep.subr.mxu0 0.0
  %1981 = vmatpush2.xpose.msra.mxu0 0.0
  %1982 = vmatprep.subr.mxu0 0.0
  %1983 = vmatpush2.xpose.msra.mxu0 0.0
  %1984 = vmatprep.subr.mxu0 0.0
  %1985 = vmatpush2.xpose.msra.mxu0 0.0
  %1986 = vmatprep.subr.mxu0 0.0
  %1987 = vmatpush2.xpose.msra.mxu0 0.0
  %1988 = vmatprep.mubr.f32.mxu0 0.0
  %1989 = vmatmul.mubr.f32.gmra.mxu0 %v1912
  %v1990 = vpop.f32.mrf.mxu0
  %v1991 = vadd.f32 0.0, %v1990
  %v1992 = vpop.f32.mrf.mxu0
  %1993 = vmatprep.mubr.f32.mxu0 0.0
  %1994 = vmatmul.mubr.f32.gmra.mxu0 %v1914
  %v1995 = vpop.f32.mrf.mxu0
  %v1996 = vadd.f32 0.0, %v1995
  %v1997 = vpop.f32.mrf.mxu0
  %1998 = vmatprep.mubr.f32.mxu0 0.0
  %1999 = vmatmul.mubr.f32.gmra.mxu0 %v1916
  %v2000 = vpop.f32.mrf.mxu0
  %v2001 = vadd.f32 0.0, %v2000
  %v2002 = vpop.f32.mrf.mxu0
  %2003 = vdwg.mxu0
  %v2004 = vsel %vm525, %v1991, -inf
  %2005 = vmax.xlane.f32.xlu0 %v2004
  %v2006 = vpop.xlane.xlu0 %2005
  %v2007 = vsel %vm525, %v1996, -inf
  %2008 = vmax.xlane.f32.xlu0 %v2007
  %v2009 = vpop.xlane.xlu0 %2008
  %v2010 = vsel %vm532, %v2001, -inf
  %2011 = vmax.xlane.f32.xlu0 %v2010
  %v2012 = vpop.xlane.xlu0 %2011
  %v2013 = vsub.f32 %v1991, %v2006
  %v2014 = vsub.f32 %v1996, %v2009
  %v2015 = vsub.f32 %v2001, %v2012
  %v2016 = vmul.f32 %v2013, 1.442695
  %v2017 = vpow.pop %v2016
  %v2018 = vmul.f32 %v2014, 1.442695
  %v2019 = vpow.pop %v2018
  %v2020 = vmul.f32 %v2015, 1.442695
  %v2021 = vpow.pop %v2020
  %v2022 = vsel %vm525, %v2017, 0.0
  %2023 = vadd.xlane.f32.xlu0 %v2022
  %v2024 = vpop.xlane.xlu0 %2023
  %v2025 = vsel %vm525, %v2019, 0.0
  %2026 = vadd.xlane.f32.xlu0 %v2025
  %v2027 = vpop.xlane.xlu0 %2026
  %v2028 = vsel %vm532, %v2021, 0.0
  %2029 = vadd.xlane.f32.xlu0 %v2028
  %v2030 = vpop.xlane.xlu0 %2029
  %v2031 = vrcp.pop %v2024
  %v2032 = vmul.f32 %v2017, %v2031
  %v2033 = vrcp.pop %v2027
  %v2034 = vmul.f32 %v2019, %v2033
  %v2035 = vrcp.pop %v2030
  %v2036 = vmul.f32 %v2021, %v2035
  %2037 = vrot.lane.b32.xlu0 %v1431, 48
  %v2038 = vpop.permute.xlu0 %2037
  %2039 = vrot.lane.b32.xlu0 %v1433, 48
  %v2040 = vpop.permute.xlu0 %2039
  %2041 = vrot.lane.b32.xlu0 %v1432, 48
  %v2042 = vpop.permute.xlu0 %2041
  %v2046 = vsel %vm525, %v2032, 0
  %v2049 = vsel %vm525, %v2034, 0
  %v2052 = vsel %vm525, %v2036, 0
  %v2054 = vsel %vm577, %v2042, 0
  %2056 = vmatprep.subr.mxu0 0.0
  %2057 = vmatpush1.msra.mxu0 0.0
  %2058 = vmatprep.subr.mxu0 0.0
  %2059 = vmatpush1.msra.mxu0 0.0
  %2060 = vmatprep.subr.mxu0 0.0
  %2061 = vmatpush1.msra.mxu0 0.0
  %2062 = vmatprep.subr.mxu0 0.0
  %2063 = vmatpush1.msra.mxu0 0.0
  %2064 = vmatprep.subr.mxu0 0.0
  %2065 = vmatpush1.msra.mxu0 0.0
  %2066 = vmatprep.subr.mxu0 0.0
  %2067 = vmatpush1.msra.mxu0 0.0
  %2068 = vmatprep.subr.mxu0 0.0
  %2069 = vmatpush1.msra.mxu0 0.0
  %2070 = vmatprep.subr.mxu0 0.0
  %2071 = vmatpush1.msra.mxu0 0.0
  %2072 = vmatprep.subr.mxu0 0.0
  %2073 = vmatpush1.msra.mxu0 0.0
  %2074 = vmatprep.subr.mxu0 0.0
  %2075 = vmatpush1.msra.mxu0 0.0
  %2076 = vmatprep.subr.mxu0 0.0
  %2077 = vmatpush1.msra.mxu0 0.0
  %2078 = vmatprep.subr.mxu0 0.0
  %2079 = vmatpush1.msra.mxu0 0.0
  %2080 = vmatprep.subr.mxu0 0.0
  %2081 = vmatpush1.msra.mxu0 0.0
  %2082 = vmatprep.subr.mxu0 0.0
  %2083 = vmatpush1.msra.mxu0 %v2054
  %2084 = vmatprep.subr.mxu0 0.0
  %2085 = vmatpush1.msra.mxu0 %v2040
  %2086 = vmatprep.subr.mxu0 0.0
  %2087 = vmatpush1.msra.mxu0 %v2038
  %2088 = vmatprep.subr.mxu0 0.0
  %2089 = vmatpush2.msra.mxu0 0.0
  %2090 = vmatprep.subr.mxu0 0.0
  %2091 = vmatpush2.msra.mxu0 0.0
  %2092 = vmatprep.subr.mxu0 0.0
  %2093 = vmatpush2.msra.mxu0 0.0
  %2094 = vmatprep.subr.mxu0 0.0
  %2095 = vmatpush2.msra.mxu0 0.0
  %2096 = vmatprep.subr.mxu0 0.0
  %2097 = vmatpush2.msra.mxu0 0.0
  %2098 = vmatprep.subr.mxu0 0.0
  %2099 = vmatpush2.msra.mxu0 0.0
  %2100 = vmatprep.subr.mxu0 0.0
  %2101 = vmatpush2.msra.mxu0 0.0
  %2102 = vmatprep.subr.mxu0 0.0
  %2103 = vmatpush2.msra.mxu0 0.0
  %2104 = vmatprep.subr.mxu0 0.0
  %2105 = vmatpush2.msra.mxu0 0.0
  %2106 = vmatprep.subr.mxu0 0.0
  %2107 = vmatpush2.msra.mxu0 0.0
  %2108 = vmatprep.subr.mxu0 0.0
  %2109 = vmatpush2.msra.mxu0 0.0
  %2110 = vmatprep.subr.mxu0 0.0
  %2111 = vmatpush2.msra.mxu0 0.0
  %2112 = vmatprep.subr.mxu0 0.0
  %2113 = vmatpush2.msra.mxu0 0.0
  %2114 = vmatprep.subr.mxu0 0.0
  %2115 = vmatpush2.msra.mxu0 0.0
  %2116 = vmatprep.subr.mxu0 0.0
  %2117 = vmatpush2.msra.mxu0 0.0
  %2118 = vmatprep.subr.mxu0 0.0
  %2119 = vmatpush2.msra.mxu0 0.0
  %2120 = vmatprep.mubr.f32.mxu0 0.0
  %2121 = vmatmul.mubr.f32.gmra.mxu0 %v2046
  %v2122 = vpop.f32.mrf.mxu0
  %v2123 = vadd.f32 0.0, %v2122
  %v2124 = vpop.f32.mrf.mxu0
  %2125 = vmatprep.mubr.f32.mxu0 0.0
  %2126 = vmatmul.mubr.f32.gmra.mxu0 %v2049
  %v2127 = vpop.f32.mrf.mxu0
  %v2128 = vadd.f32 0.0, %v2127
  %v2129 = vpop.f32.mrf.mxu0
  %2130 = vmatprep.mubr.f32.mxu0 0.0
  %2131 = vmatmul.mubr.f32.gmra.mxu0 %v2052
  %v2132 = vpop.f32.mrf.mxu0
  %v2133 = vadd.f32 0.0, %v2132
  %v2134 = vpop.f32.mrf.mxu0
  %2135 = vdwg.mxu0
  %2136 = vrot.lane.b32.xlu0 %v1424, 104
  %v2137 = vpop.permute.xlu0 %2136
  %2138 = vrot.lane.b32.xlu0 %v1426, 104
  %v2139 = vpop.permute.xlu0 %2138
  %2140 = vrot.lane.b32.xlu0 %v1425, 104
  %v2141 = vpop.permute.xlu0 %2140
  %2142 = vrot.lane.b32.xlu0 %v1431, 72
  %v2143 = vpop.permute.xlu0 %2142
  %2144 = vrot.lane.b32.xlu0 %v1433, 72
  %v2145 = vpop.permute.xlu0 %2144
  %2146 = vrot.lane.b32.xlu0 %v1432, 72
  %v2147 = vpop.permute.xlu0 %2146
  %v2148 = vsel %vm429, %v2137, 0
  %v2150 = vsel %vm429, %v2139, 0
  %v2152 = vsel %vm429, %v2141, 0
  %v2154 = vsel %vm429, %v2143, 0
  %v2156 = vsel %vm429, %v2145, 0
  %v2158 = vsel %vm429, %v2147, 0
  %2160 = vmatprep.subr.mxu0 0.0
  %2161 = vmatpush1.xpose.msra.mxu0 0.0
  %2162 = vmatprep.subr.mxu0 0.0
  %2163 = vmatpush1.xpose.msra.mxu0 0.0
  %2164 = vmatprep.subr.mxu0 0.0
  %2165 = vmatpush1.xpose.msra.mxu0 0.0
  %2166 = vmatprep.subr.mxu0 0.0
  %2167 = vmatpush1.xpose.msra.mxu0 0.0
  %2168 = vmatprep.subr.mxu0 0.0
  %2169 = vmatpush1.xpose.msra.mxu0 0.0
  %2170 = vmatprep.subr.mxu0 0.0
  %2171 = vmatpush1.xpose.msra.mxu0 0.0
  %2172 = vmatprep.subr.mxu0 0.0
  %2173 = vmatpush1.xpose.msra.mxu0 0.0
  %2174 = vmatprep.subr.mxu0 0.0
  %2175 = vmatpush1.xpose.msra.mxu0 0.0
  %2176 = vmatprep.subr.mxu0 0.0
  %2177 = vmatpush1.xpose.msra.mxu0 0.0
  %2178 = vmatprep.subr.mxu0 0.0
  %2179 = vmatpush1.xpose.msra.mxu0 0.0
  %2180 = vmatprep.subr.mxu0 0.0
  %2181 = vmatpush1.xpose.msra.mxu0 0.0
  %2182 = vmatprep.subr.mxu0 0.0
  %2183 = vmatpush1.xpose.msra.mxu0 0.0
  %2184 = vmatprep.subr.mxu0 0.0
  %2185 = vmatpush1.xpose.msra.mxu0 0.0
  %2186 = vmatprep.subr.mxu0 0.0
  %2187 = vmatpush1.xpose.msra.mxu0 %v2158
  %2188 = vmatprep.subr.mxu0 0.0
  %2189 = vmatpush1.xpose.msra.mxu0 %v2156
  %2190 = vmatprep.subr.mxu0 0.0
  %2191 = vmatpush1.xpose.msra.mxu0 %v2154
  %2192 = vmatprep.subr.mxu0 0.0
  %2193 = vmatpush2.xpose.msra.mxu0 0.0
  %2194 = vmatprep.subr.mxu0 0.0
  %2195 = vmatpush2.xpose.msra.mxu0 0.0
  %2196 = vmatprep.subr.mxu0 0.0
  %2197 = vmatpush2.xpose.msra.mxu0 0.0
  %2198 = vmatprep.subr.mxu0 0.0
  %2199 = vmatpush2.xpose.msra.mxu0 0.0
  %2200 = vmatprep.subr.mxu0 0.0
  %2201 = vmatpush2.xpose.msra.mxu0 0.0
  %2202 = vmatprep.subr.mxu0 0.0
  %2203 = vmatpush2.xpose.msra.mxu0 0.0
  %2204 = vmatprep.subr.mxu0 0.0
  %2205 = vmatpush2.xpose.msra.mxu0 0.0
  %2206 = vmatprep.subr.mxu0 0.0
  %2207 = vmatpush2.xpose.msra.mxu0 0.0
  %2208 = vmatprep.subr.mxu0 0.0
  %2209 = vmatpush2.xpose.msra.mxu0 0.0
  %2210 = vmatprep.subr.mxu0 0.0
  %2211 = vmatpush2.xpose.msra.mxu0 0.0
  %2212 = vmatprep.subr.mxu0 0.0
  %2213 = vmatpush2.xpose.msra.mxu0 0.0
  %2214 = vmatprep.subr.mxu0 0.0
  %2215 = vmatpush2.xpose.msra.mxu0 0.0
  %2216 = vmatprep.subr.mxu0 0.0
  %2217 = vmatpush2.xpose.msra.mxu0 0.0
  %2218 = vmatprep.subr.mxu0 0.0
  %2219 = vmatpush2.xpose.msra.mxu0 0.0
  %2220 = vmatprep.subr.mxu0 0.0
  %2221 = vmatpush2.xpose.msra.mxu0 0.0
  %2222 = vmatprep.subr.mxu0 0.0
  %2223 = vmatpush2.xpose.msra.mxu0 0.0
  %2224 = vmatprep.mubr.f32.mxu0 0.0
  %2225 = vmatmul.mubr.f32.gmra.mxu0 %v2148
  %v2226 = vpop.f32.mrf.mxu0
  %v2227 = vadd.f32 0.0, %v2226
  %v2228 = vpop.f32.mrf.mxu0
  %2229 = vmatprep.mubr.f32.mxu0 0.0
  %2230 = vmatmul.mubr.f32.gmra.mxu0 %v2150
  %v2231 = vpop.f32.mrf.mxu0
  %v2232 = vadd.f32 0.0, %v2231
  %v2233 = vpop.f32.mrf.mxu0
  %2234 = vmatprep.mubr.f32.mxu0 0.0
  %2235 = vmatmul.mubr.f32.gmra.mxu0 %v2152
  %v2236 = vpop.f32.mrf.mxu0
  %v2237 = vadd.f32 0.0, %v2236
  %v2238 = vpop.f32.mrf.mxu0
  %2239 = vdwg.mxu0
  %v2240 = vsel %vm525, %v2227, -inf
  %2241 = vmax.xlane.f32.xlu0 %v2240
  %v2242 = vpop.xlane.xlu0 %2241
  %v2243 = vsel %vm525, %v2232, -inf
  %2244 = vmax.xlane.f32.xlu0 %v2243
  %v2245 = vpop.xlane.xlu0 %2244
  %v2246 = vsel %vm532, %v2237, -inf
  %2247 = vmax.xlane.f32.xlu0 %v2246
  %v2248 = vpop.xlane.xlu0 %2247
  %v2249 = vsub.f32 %v2227, %v2242
  %v2250 = vsub.f32 %v2232, %v2245
  %v2251 = vsub.f32 %v2237, %v2248
  %v2252 = vmul.f32 %v2249, 1.442695
  %v2253 = vpow.pop %v2252
  %v2254 = vmul.f32 %v2250, 1.442695
  %v2255 = vpow.pop %v2254
  %v2256 = vmul.f32 %v2251, 1.442695
  %v2257 = vpow.pop %v2256
  %v2258 = vsel %vm525, %v2253, 0.0
  %2259 = vadd.xlane.f32.xlu0 %v2258
  %v2260 = vpop.xlane.xlu0 %2259
  %v2261 = vsel %vm525, %v2255, 0.0
  %2262 = vadd.xlane.f32.xlu0 %v2261
  %v2263 = vpop.xlane.xlu0 %2262
  %v2264 = vsel %vm532, %v2257, 0.0
  %2265 = vadd.xlane.f32.xlu0 %v2264
  %v2266 = vpop.xlane.xlu0 %2265
  %v2267 = vrcp.pop %v2260
  %v2268 = vmul.f32 %v2253, %v2267
  %v2269 = vrcp.pop %v2263
  %v2270 = vmul.f32 %v2255, %v2269
  %v2271 = vrcp.pop %v2266
  %v2272 = vmul.f32 %v2257, %v2271
  %2273 = vrot.lane.b32.xlu0 %v1431, 40
  %v2274 = vpop.permute.xlu0 %2273
  %2275 = vrot.lane.b32.xlu0 %v1433, 40
  %v2276 = vpop.permute.xlu0 %2275
  %2277 = vrot.lane.b32.xlu0 %v1432, 40
  %v2278 = vpop.permute.xlu0 %2277
  %v2282 = vsel %vm525, %v2268, 0
  %v2285 = vsel %vm525, %v2270, 0
  %v2288 = vsel %vm525, %v2272, 0
  %v2290 = vsel %vm577, %v2278, 0
  %2292 = vmatprep.subr.mxu0 0.0
  %2293 = vmatpush1.msra.mxu0 0.0
  %2294 = vmatprep.subr.mxu0 0.0
  %2295 = vmatpush1.msra.mxu0 0.0
  %2296 = vmatprep.subr.mxu0 0.0
  %2297 = vmatpush1.msra.mxu0 0.0
  %2298 = vmatprep.subr.mxu0 0.0
  %2299 = vmatpush1.msra.mxu0 0.0
  %2300 = vmatprep.subr.mxu0 0.0
  %2301 = vmatpush1.msra.mxu0 0.0
  %2302 = vmatprep.subr.mxu0 0.0
  %2303 = vmatpush1.msra.mxu0 0.0
  %2304 = vmatprep.subr.mxu0 0.0
  %2305 = vmatpush1.msra.mxu0 0.0
  %2306 = vmatprep.subr.mxu0 0.0
  %2307 = vmatpush1.msra.mxu0 0.0
  %2308 = vmatprep.subr.mxu0 0.0
  %2309 = vmatpush1.msra.mxu0 0.0
  %2310 = vmatprep.subr.mxu0 0.0
  %2311 = vmatpush1.msra.mxu0 0.0
  %2312 = vmatprep.subr.mxu0 0.0
  %2313 = vmatpush1.msra.mxu0 0.0
  %2314 = vmatprep.subr.mxu0 0.0
  %2315 = vmatpush1.msra.mxu0 0.0
  %2316 = vmatprep.subr.mxu0 0.0
  %2317 = vmatpush1.msra.mxu0 0.0
  %2318 = vmatprep.subr.mxu0 0.0
  %2319 = vmatpush1.msra.mxu0 %v2290
  %2320 = vmatprep.subr.mxu0 0.0
  %2321 = vmatpush1.msra.mxu0 %v2276
  %2322 = vmatprep.subr.mxu0 0.0
  %2323 = vmatpush1.msra.mxu0 %v2274
  %2324 = vmatprep.subr.mxu0 0.0
  %2325 = vmatpush2.msra.mxu0 0.0
  %2326 = vmatprep.subr.mxu0 0.0
  %2327 = vmatpush2.msra.mxu0 0.0
  %2328 = vmatprep.subr.mxu0 0.0
  %2329 = vmatpush2.msra.mxu0 0.0
  %2330 = vmatprep.subr.mxu0 0.0
  %2331 = vmatpush2.msra.mxu0 0.0
  %2332 = vmatprep.subr.mxu0 0.0
  %2333 = vmatpush2.msra.mxu0 0.0
  %2334 = vmatprep.subr.mxu0 0.0
  %2335 = vmatpush2.msra.mxu0 0.0
  %2336 = vmatprep.subr.mxu0 0.0
  %2337 = vmatpush2.msra.mxu0 0.0
  %2338 = vmatprep.subr.mxu0 0.0
  %2339 = vmatpush2.msra.mxu0 0.0
  %2340 = vmatprep.subr.mxu0 0.0
  %2341 = vmatpush2.msra.mxu0 0.0
  %2342 = vmatprep.subr.mxu0 0.0
  %2343 = vmatpush2.msra.mxu0 0.0
  %2344 = vmatprep.subr.mxu0 0.0
  %2345 = vmatpush2.msra.mxu0 0.0
  %2346 = vmatprep.subr.mxu0 0.0
  %2347 = vmatpush2.msra.mxu0 0.0
  %2348 = vmatprep.subr.mxu0 0.0
  %2349 = vmatpush2.msra.mxu0 0.0
  %2350 = vmatprep.subr.mxu0 0.0
  %2351 = vmatpush2.msra.mxu0 0.0
  %2352 = vmatprep.subr.mxu0 0.0
  %2353 = vmatpush2.msra.mxu0 0.0
  %2354 = vmatprep.subr.mxu0 0.0
  %2355 = vmatpush2.msra.mxu0 0.0
  %2356 = vmatprep.mubr.f32.mxu0 0.0
  %2357 = vmatmul.mubr.f32.gmra.mxu0 %v2282
  %v2358 = vpop.f32.mrf.mxu0
  %v2359 = vadd.f32 0.0, %v2358
  %v2360 = vpop.f32.mrf.mxu0
  %2361 = vmatprep.mubr.f32.mxu0 0.0
  %2362 = vmatmul.mubr.f32.gmra.mxu0 %v2285
  %v2363 = vpop.f32.mrf.mxu0
  %v2364 = vadd.f32 0.0, %v2363
  %v2365 = vpop.f32.mrf.mxu0
  %2366 = vmatprep.mubr.f32.mxu0 0.0
  %2367 = vmatmul.mubr.f32.gmra.mxu0 %v2288
  %v2368 = vpop.f32.mrf.mxu0
  %v2369 = vadd.f32 0.0, %v2368
  %v2370 = vpop.f32.mrf.mxu0
  %2371 = vdwg.mxu0
  %2375 = vrot.lane.b32.xlu0 %v1887, 8
  %v2376 = vpop.permute.xlu0 %2375
  %2377 = vrot.lane.b32.xlu0 %v1892, 8
  %v2378 = vpop.permute.xlu0 %2377
  %2379 = vrot.lane.b32.xlu0 %v1897, 8
  %v2380 = vpop.permute.xlu0 %2379
  %2387 = vrot.lane.b32.xlu0 %v2123, 16
  %v2388 = vpop.permute.xlu0 %2387
  %2389 = vrot.lane.b32.xlu0 %v2128, 16
  %v2390 = vpop.permute.xlu0 %2389
  %2391 = vrot.lane.b32.xlu0 %v2133, 16
  %v2392 = vpop.permute.xlu0 %2391
  %2399 = vrot.lane.b32.xlu0 %v2359, 24
  %v2400 = vpop.permute.xlu0 %2399
  %2401 = vrot.lane.b32.xlu0 %v2364, 24
  %v2402 = vpop.permute.xlu0 %2401
  %2403 = vrot.lane.b32.xlu0 %v2369, 24
  %v2404 = vpop.permute.xlu0 %2403
  %v2408 = vsel %vm429, %v1651, %v2376
  %v2409 = vsel %vm429, %v1656, %v2378
  %v2410 = vsel %vm429, %v1661, %v2380
  %v2411 = vsel %vm1407, %v2408, %v2388
  %v2412 = vsel %vm1407, %v2409, %v2390
  %v2413 = vsel %vm1407, %v2410, %v2392
  %v2414 = vsel %vm1411, %v2411, %v2400
  %v2415 = vsel %vm1411, %v2412, %v2402
  %v2416 = vsel %vm1411, %v2413, %v2404
  %2417 = vst.msk [vmem:[#allocation2 + $0x11] sm:$0xff] %vm197, %v2414
  %2418 = vst.msk [vmem:[#allocation2 + $0x19] sm:$0xff] %vm197, %v2415
  %2419 = vst.msk [vmem:[#allocation2 + $0x21] sm:$0x1] %vm182, %v2416
  %v2420 = vld [vmem:[#allocation2] sm:$0xff]
  %v2421 = vld [vmem:[#allocation2 + $0x8] sm:$0xff]
  %v2422 = vld [vmem:[#allocation2 + $0x10] sm:$0xff]
  %v2423 = vld [vmem:[#allocation2 + $0x18] sm:$0xff]
  %v2424 = vld [vmem:[#allocation2 + $0x20] sm:$0x3]
  %v2425 = vld [vmem:[%s9] sm:$0xff]
  %v2426 = vld [vmem:[%s9 + $0x8] sm:$0xff]
  %v2427 = vld [vmem:[%s9 + $0x10] sm:$0xff]
  %v2428 = vld [vmem:[%s9 + $0x18] sm:$0xff]
  %v2429 = vld [vmem:[%s10] sm:$0x1]
  %v2431 = vlaneseq
  %v2432 = vshrl.u32 %v2431, 7
  %v2433 = vsub.s32 0, %v2432
  %v2434 = vrot.slane %v2429, %v2433
  %v2437 = vsel %vm197, %v2420, 0
  %v2440 = vsel %vm197, %v2421, 0
  %v2443 = vsel %vm197, %v2422, 0
  %v2446 = vsel %vm197, %v2423, 0
  %v2449 = vsel %vm197, %v2424, 0
  %2451 = vmatprep.subr.mxu0 0.0
  %2452 = vmatpush1.msra.mxu0 0.0
  %2453 = vmatprep.subr.mxu0 0.0
  %2454 = vmatpush1.msra.mxu0 0.0
  %2455 = vmatprep.subr.mxu0 0.0
  %2456 = vmatpush1.msra.mxu0 0.0
  %2457 = vmatprep.subr.mxu0 0.0
  %2458 = vmatpush1.msra.mxu0 0.0
  %2459 = vmatprep.subr.mxu0 0.0
  %2460 = vmatpush1.msra.mxu0 0.0
  %2461 = vmatprep.subr.mxu0 0.0
  %2462 = vmatpush1.msra.mxu0 0.0
  %2463 = vmatprep.subr.mxu0 0.0
  %2464 = vmatpush1.msra.mxu0 0.0
  %2465 = vmatprep.subr.mxu0 0.0
  %2466 = vmatpush1.msra.mxu0 0.0
  %2467 = vmatprep.subr.mxu0 0.0
  %2468 = vmatpush1.msra.mxu0 0.0
  %2469 = vmatprep.subr.mxu0 0.0
  %2470 = vmatpush1.msra.mxu0 0.0
  %2471 = vmatprep.subr.mxu0 0.0
  %2472 = vmatpush1.msra.mxu0 0.0
  %2473 = vmatprep.subr.mxu0 0.0
  %2474 = vmatpush1.msra.mxu0 0.0
  %2475 = vmatprep.subr.mxu0 0.0
  %2476 = vmatpush1.msra.mxu0 %v2428
  %2477 = vmatprep.subr.mxu0 0.0
  %2478 = vmatpush1.msra.mxu0 %v2427
  %2479 = vmatprep.subr.mxu0 0.0
  %2480 = vmatpush1.msra.mxu0 %v2426
  %2481 = vmatprep.subr.mxu0 0.0
  %2482 = vmatpush1.msra.mxu0 %v2425
  %2483 = vmatprep.subr.mxu0 0.0
  %2484 = vmatpush2.msra.mxu0 0.0
  %2485 = vmatprep.subr.mxu0 0.0
  %2486 = vmatpush2.msra.mxu0 0.0
  %2487 = vmatprep.subr.mxu0 0.0
  %2488 = vmatpush2.msra.mxu0 0.0
  %2489 = vmatprep.subr.mxu0 0.0
  %2490 = vmatpush2.msra.mxu0 0.0
  %2491 = vmatprep.subr.mxu0 0.0
  %2492 = vmatpush2.msra.mxu0 0.0
  %2493 = vmatprep.subr.mxu0 0.0
  %2494 = vmatpush2.msra.mxu0 0.0
  %2495 = vmatprep.subr.mxu0 0.0
  %2496 = vmatpush2.msra.mxu0 0.0
  %2497 = vmatprep.subr.mxu0 0.0
  %2498 = vmatpush2.msra.mxu0 0.0
  %2499 = vmatprep.subr.mxu0 0.0
  %2500 = vmatpush2.msra.mxu0 0.0
  %2501 = vmatprep.subr.mxu0 0.0
  %2502 = vmatpush2.msra.mxu0 0.0
  %2503 = vmatprep.subr.mxu0 0.0
  %2504 = vmatpush2.msra.mxu0 0.0
  %2505 = vmatprep.subr.mxu0 0.0
  %2506 = vmatpush2.msra.mxu0 0.0
  %2507 = vmatprep.subr.mxu0 0.0
  %2508 = vmatpush2.msra.mxu0 0.0
  %2509 = vmatprep.subr.mxu0 0.0
  %2510 = vmatpush2.msra.mxu0 0.0
  %2511 = vmatprep.subr.mxu0 0.0
  %2512 = vmatpush2.msra.mxu0 0.0
  %2513 = vmatprep.subr.mxu0 0.0
  %2514 = vmatpush2.msra.mxu0 0.0
  %2515 = vmatprep.mubr.f32.mxu0 0.0
  %2516 = vmatmul.mubr.f32.gmra.mxu0 %v2437
  %v2517 = vpop.f32.mrf.mxu0
  %v2518 = vadd.f32 %v2434, %v2517
  %v2519 = vpop.f32.mrf.mxu0
  %2520 = vmatprep.mubr.f32.mxu0 0.0
  %2521 = vmatmul.mubr.f32.gmra.mxu0 %v2440
  %v2522 = vpop.f32.mrf.mxu0
  %v2523 = vadd.f32 %v2434, %v2522
  %v2524 = vpop.f32.mrf.mxu0
  %2525 = vmatprep.mubr.f32.mxu0 0.0
  %2526 = vmatmul.mubr.f32.gmra.mxu0 %v2443
  %v2527 = vpop.f32.mrf.mxu0
  %v2528 = vadd.f32 %v2434, %v2527
  %v2529 = vpop.f32.mrf.mxu0
  %2530 = vmatprep.mubr.f32.mxu0 0.0
  %2531 = vmatmul.mubr.f32.gmra.mxu0 %v2446
  %v2532 = vpop.f32.mrf.mxu0
  %v2533 = vadd.f32 %v2434, %v2532
  %v2534 = vpop.f32.mrf.mxu0
  %2535 = vmatprep.mubr.f32.mxu0 0.0
  %2536 = vmatmul.mubr.f32.gmra.mxu0 %v2449
  %v2537 = vpop.f32.mrf.mxu0
  %v2538 = vadd.f32 %v2434, %v2537
  %v2539 = vpop.f32.mrf.mxu0
  %2540 = vdwg.mxu0
  %v2541 = vadd.f32 %v205, %v2518
  %v2542 = vadd.f32 %v206, %v2523
  %v2543 = vadd.f32 %v207, %v2528
  %v2544 = vadd.f32 %v208, %v2533
  %v2545 = vadd.f32 %v209, %v2538
  %v2546 = vld [vmem:[%s11] sm:$0x1]
  %v2547 = vld [vmem:[%s12] sm:$0x1]
  %v2548 = vsel %vm197, %v2541, 0.0
  %2549 = vadd.xlane.f32.xlu0 %v2548
  %v2550 = vpop.xlane.xlu0 %2549
  %v2551 = vsel %vm197, %v2542, 0.0
  %2552 = vadd.xlane.f32.xlu0 %v2551
  %v2553 = vpop.xlane.xlu0 %2552
  %v2554 = vsel %vm197, %v2543, 0.0
  %2555 = vadd.xlane.f32.xlu0 %v2554
  %v2556 = vpop.xlane.xlu0 %2555
  %v2557 = vsel %vm197, %v2544, 0.0
  %2558 = vadd.xlane.f32.xlu0 %v2557
  %v2559 = vpop.xlane.xlu0 %2558
  %v2560 = vsel %vm224, %v2545, 0.0
  %2561 = vadd.xlane.f32.xlu0 %v2560
  %v2562 = vpop.xlane.xlu0 %2561
  %v2563 = vmul.f32 %v2550, %v228
  %v2564 = vmul.f32 %v2553, %v228
  %v2565 = vmul.f32 %v2556, %v228
  %v2566 = vmul.f32 %v2559, %v228
  %v2567 = vmul.f32 %v2562, %v228
  %v2568 = vsub.f32 %v2541, %v2563
  %v2569 = vsub.f32 %v2542, %v2564
  %v2570 = vsub.f32 %v2543, %v2565
  %v2571 = vsub.f32 %v2544, %v2566
  %v2572 = vsub.f32 %v2545, %v2567
  %v2573 = vmul.f32 %v2568, %v2568
  %v2574 = vmul.f32 %v2569, %v2569
  %v2575 = vmul.f32 %v2570, %v2570
  %v2576 = vmul.f32 %v2571, %v2571
  %v2577 = vmul.f32 %v2572, %v2572
  %v2578 = vsel %vm197, %v2573, 0.0
  %2579 = vadd.xlane.f32.xlu0 %v2578
  %v2580 = vpop.xlane.xlu0 %2579
  %v2581 = vsel %vm197, %v2574, 0.0
  %2582 = vadd.xlane.f32.xlu0 %v2581
  %v2583 = vpop.xlane.xlu0 %2582
  %v2584 = vsel %vm197, %v2575, 0.0
  %2585 = vadd.xlane.f32.xlu0 %v2584
  %v2586 = vpop.xlane.xlu0 %2585
  %v2587 = vsel %vm197, %v2576, 0.0
  %2588 = vadd.xlane.f32.xlu0 %v2587
  %v2589 = vpop.xlane.xlu0 %2588
  %v2590 = vsel %vm224, %v2577, 0.0
  %2591 = vadd.xlane.f32.xlu0 %v2590
  %v2592 = vpop.xlane.xlu0 %2591
  %v2593 = vmul.f32 %v2580, %v228
  %v2594 = vmul.f32 %v2583, %v228
  %v2595 = vmul.f32 %v2586, %v228
  %v2596 = vmul.f32 %v2589, %v228
  %v2597 = vmul.f32 %v2592, %v228
  %v2598 = vadd.f32 %v2593, 1e-06
  %v2599 = vadd.f32 %v2594, 1e-06
  %v2600 = vadd.f32 %v2595, 1e-06
  %v2601 = vadd.f32 %v2596, 1e-06
  %v2602 = vadd.f32 %v2597, 1e-06
  %v2603 = vrsqrt.pop %v2598
  %v2604 = vrsqrt.pop %v2599
  %v2605 = vrsqrt.pop %v2600
  %v2606 = vrsqrt.pop %v2601
  %v2607 = vrsqrt.pop %v2602
  %v2608 = vmul.f32 %v2568, %v2603
  %v2609 = vmul.f32 %v2569, %v2604
  %v2610 = vmul.f32 %v2570, %v2605
  %v2611 = vmul.f32 %v2571, %v2606
  %v2612 = vmul.f32 %v2572, %v2607
  %v2614 = vlaneseq
  %v2615 = vshrl.u32 %v2614, 7
  %v2616 = vsub.s32 0, %v2615
  %v2617 = vrot.slane %v2546, %v2616
  %v2619 = vmul.f32 %v2608, %v2617
  %v2620 = vmul.f32 %v2609, %v2617
  %v2621 = vmul.f32 %v2610, %v2617
  %v2622 = vmul.f32 %v2611, %v2617
  %v2623 = vmul.f32 %v2612, %v2617
  %v2625 = vlaneseq
  %v2626 = vshrl.u32 %v2625, 7
  %v2627 = vsub.s32 0, %v2626
  %v2628 = vrot.slane %v2547, %v2627
  %v2630 = vadd.f32 %v2619, %v2628
  %v2631 = vadd.f32 %v2620, %v2628
  %v2632 = vadd.f32 %v2621, %v2628
  %v2633 = vadd.f32 %v2622, %v2628
  %v2634 = vadd.f32 %v2623, %v2628
  %v2635 = vld [vmem:[%s13] sm:$0xff]
  %v2636 = vld [vmem:[%s13 + $0x8] sm:$0xff]
  %v2637 = vld [vmem:[%s13 + $0x10] sm:$0xff]
  %v2638 = vld [vmem:[%s13 + $0x18] sm:$0xff]
  %v2639 = vld [vmem:[%s14] sm:$0x1]
  %v2641 = vlaneseq
  %v2642 = vshrl.u32 %v2641, 7
  %v2643 = vsub.s32 0, %v2642
  %v2644 = vrot.slane %v2639, %v2643
  %v2647 = vsel %vm197, %v2630, 0
  %v2650 = vsel %vm197, %v2631, 0
  %v2653 = vsel %vm197, %v2632, 0
  %v2656 = vsel %vm197, %v2633, 0
  %v2659 = vsel %vm197, %v2634, 0
  %2661 = vmatprep.subr.mxu0 0.0
  %2662 = vmatpush1.msra.mxu0 0.0
  %2663 = vmatprep.subr.mxu0 0.0
  %2664 = vmatpush1.msra.mxu0 0.0
  %2665 = vmatprep.subr.mxu0 0.0
  %2666 = vmatpush1.msra.mxu0 0.0
  %2667 = vmatprep.subr.mxu0 0.0
  %2668 = vmatpush1.msra.mxu0 0.0
  %2669 = vmatprep.subr.mxu0 0.0
  %2670 = vmatpush1.msra.mxu0 0.0
  %2671 = vmatprep.subr.mxu0 0.0
  %2672 = vmatpush1.msra.mxu0 0.0
  %2673 = vmatprep.subr.mxu0 0.0
  %2674 = vmatpush1.msra.mxu0 0.0
  %2675 = vmatprep.subr.mxu0 0.0
  %2676 = vmatpush1.msra.mxu0 0.0
  %2677 = vmatprep.subr.mxu0 0.0
  %2678 = vmatpush1.msra.mxu0 0.0
  %2679 = vmatprep.subr.mxu0 0.0
  %2680 = vmatpush1.msra.mxu0 0.0
  %2681 = vmatprep.subr.mxu0 0.0
  %2682 = vmatpush1.msra.mxu0 0.0
  %2683 = vmatprep.subr.mxu0 0.0
  %2684 = vmatpush1.msra.mxu0 0.0
  %2685 = vmatprep.subr.mxu0 0.0
  %2686 = vmatpush1.msra.mxu0 %v2638
  %2687 = vmatprep.subr.mxu0 0.0
  %2688 = vmatpush1.msra.mxu0 %v2637
  %2689 = vmatprep.subr.mxu0 0.0
  %2690 = vmatpush1.msra.mxu0 %v2636
  %2691 = vmatprep.subr.mxu0 0.0
  %2692 = vmatpush1.msra.mxu0 %v2635
  %2693 = vmatprep.subr.mxu0 0.0
  %2694 = vmatpush2.msra.mxu0 0.0
  %2695 = vmatprep.subr.mxu0 0.0
  %2696 = vmatpush2.msra.mxu0 0.0
  %2697 = vmatprep.subr.mxu0 0.0
  %2698 = vmatpush2.msra.mxu0 0.0
  %2699 = vmatprep.subr.mxu0 0.0
  %2700 = vmatpush2.msra.mxu0 0.0
  %2701 = vmatprep.subr.mxu0 0.0
  %2702 = vmatpush2.msra.mxu0 0.0
  %2703 = vmatprep.subr.mxu0 0.0
  %2704 = vmatpush2.msra.mxu0 0.0
  %2705 = vmatprep.subr.mxu0 0.0
  %2706 = vmatpush2.msra.mxu0 0.0
  %2707 = vmatprep.subr.mxu0 0.0
  %2708 = vmatpush2.msra.mxu0 0.0
  %2709 = vmatprep.subr.mxu0 0.0
  %2710 = vmatpush2.msra.mxu0 0.0
  %2711 = vmatprep.subr.mxu0 0.0
  %2712 = vmatpush2.msra.mxu0 0.0
  %2713 = vmatprep.subr.mxu0 0.0
  %2714 = vmatpush2.msra.mxu0 0.0
  %2715 = vmatprep.subr.mxu0 0.0
  %2716 = vmatpush2.msra.mxu0 0.0
  %2717 = vmatprep.subr.mxu0 0.0
  %2718 = vmatpush2.msra.mxu0 0.0
  %2719 = vmatprep.subr.mxu0 0.0
  %2720 = vmatpush2.msra.mxu0 0.0
  %2721 = vmatprep.subr.mxu0 0.0
  %2722 = vmatpush2.msra.mxu0 0.0
  %2723 = vmatprep.subr.mxu0 0.0
  %2724 = vmatpush2.msra.mxu0 0.0
  %2725 = vmatprep.mubr.f32.mxu0 0.0
  %2726 = vmatmul.mubr.f32.gmra.mxu0 %v2647
  %v2727 = vpop.f32.mrf.mxu0
  %v2728 = vadd.f32 %v2644, %v2727
  %v2729 = vpop.f32.mrf.mxu0
  %2730 = vmatprep.mubr.f32.mxu0 0.0
  %2731 = vmatmul.mubr.f32.gmra.mxu0 %v2650
  %v2732 = vpop.f32.mrf.mxu0
  %v2733 = vadd.f32 %v2644, %v2732
  %v2734 = vpop.f32.mrf.mxu0
  %2735 = vmatprep.mubr.f32.mxu0 0.0
  %2736 = vmatmul.mubr.f32.gmra.mxu0 %v2653
  %v2737 = vpop.f32.mrf.mxu0
  %v2738 = vadd.f32 %v2644, %v2737
  %v2739 = vpop.f32.mrf.mxu0
  %2740 = vmatprep.mubr.f32.mxu0 0.0
  %2741 = vmatmul.mubr.f32.gmra.mxu0 %v2656
  %v2742 = vpop.f32.mrf.mxu0
  %v2743 = vadd.f32 %v2644, %v2742
  %v2744 = vpop.f32.mrf.mxu0
  %2745 = vmatprep.mubr.f32.mxu0 0.0
  %2746 = vmatmul.mubr.f32.gmra.mxu0 %v2659
  %v2747 = vpop.f32.mrf.mxu0
  %v2748 = vadd.f32 %v2644, %v2747
  %v2749 = vpop.f32.mrf.mxu0
  %2750 = vdwg.mxu0
  %v2751 = vmul.f32 %v2728, 0.5
  %v2752 = vmul.f32 %v2733, 0.5
  %v2753 = vmul.f32 %v2738, 0.5
  %v2754 = vmul.f32 %v2743, 0.5
  %v2755 = vmul.f32 %v2748, 0.5
  %v2756 = vmul.f32 %v2728, 0.70710677
  %v2757 = vmul.f32 %v2733, 0.70710677
  %v2758 = vmul.f32 %v2738, 0.70710677
  %v2759 = vmul.f32 %v2743, 0.70710677
  %v2760 = vmul.f32 %v2748, 0.70710677
  %vm2761 = vcmp.ge.f32.partialorder %v2756, 0.0
  %vm2762 = vcmp.ge.f32.partialorder %v2757, 0.0
  %vm2763 = vcmp.ge.f32.partialorder %v2758, 0.0
  %vm2764 = vcmp.ge.f32.partialorder %v2759, 0.0
  %vm2765 = vcmp.ge.f32.partialorder %v2760, 0.0
  %v2766 = vsel %vm2761, 1.0, -1.0
  %v2767 = vsel %vm2762, 1.0, -1.0
  %v2768 = vsel %vm2763, 1.0, -1.0
  %v2769 = vsel %vm2764, 1.0, -1.0
  %v2770 = vsel %vm2765, 1.0, -1.0
  %v2771 = vand.u32 2147483647, %v2756
  %v2772 = vand.u32 2147483647, %v2757
  %v2773 = vand.u32 2147483647, %v2758
  %v2774 = vand.u32 2147483647, %v2759
  %v2775 = vand.u32 2147483647, %v2760
  %v2776 = vmul.f32 %v2771, 0.3275911
  %v2777 = vmul.f32 %v2772, 0.3275911
  %v2778 = vmul.f32 %v2773, 0.3275911
  %v2779 = vmul.f32 %v2774, 0.3275911
  %v2780 = vmul.f32 %v2775, 0.3275911
  %v2781 = vadd.f32 %v2776, 1.0
  %v2782 = vadd.f32 %v2777, 1.0
  %v2783 = vadd.f32 %v2778, 1.0
  %v2784 = vadd.f32 %v2779, 1.0
  %v2785 = vadd.f32 %v2780, 1.0
  %v2786 = vrcp.pop %v2781
  %v2787 = vmul.f32 1.0, %v2786
  %v2788 = vrcp.pop %v2782
  %v2789 = vmul.f32 1.0, %v2788
  %v2790 = vrcp.pop %v2783
  %v2791 = vmul.f32 1.0, %v2790
  %v2792 = vrcp.pop %v2784
  %v2793 = vmul.f32 1.0, %v2792
  %v2794 = vrcp.pop %v2785
  %v2795 = vmul.f32 1.0, %v2794
  %v2796 = vmul.f32 %v2787, 1.0614054
  %v2797 = vmul.f32 %v2789, 1.0614054
  %v2798 = vmul.f32 %v2791, 1.0614054
  %v2799 = vmul.f32 %v2793, 1.0614054
  %v2800 = vmul.f32 %v2795, 1.0614054
  %v2801 = vadd.f32 %v2796, -1.4531521
  %v2802 = vadd.f32 %v2797, -1.4531521
  %v2803 = vadd.f32 %v2798, -1.4531521
  %v2804 = vadd.f32 %v2799, -1.4531521
  %v2805 = vadd.f32 %v2800, -1.4531521
  %v2806 = vmul.f32 %v2801, %v2787
  %v2807 = vmul.f32 %v2802, %v2789
  %v2808 = vmul.f32 %v2803, %v2791
  %v2809 = vmul.f32 %v2804, %v2793
  %v2810 = vmul.f32 %v2805, %v2795
  %v2811 = vadd.f32 %v2806, 1.4214138
  %v2812 = vadd.f32 %v2807, 1.4214138
  %v2813 = vadd.f32 %v2808, 1.4214138
  %v2814 = vadd.f32 %v2809, 1.4214138
  %v2815 = vadd.f32 %v2810, 1.4214138
  %v2816 = vmul.f32 %v2811, %v2787
  %v2817 = vmul.f32 %v2812, %v2789
  %v2818 = vmul.f32 %v2813, %v2791
  %v2819 = vmul.f32 %v2814, %v2793
  %v2820 = vmul.f32 %v2815, %v2795
  %v2821 = vadd.f32 %v2816, -0.28449672
  %v2822 = vadd.f32 %v2817, -0.28449672
  %v2823 = vadd.f32 %v2818, -0.28449672
  %v2824 = vadd.f32 %v2819, -0.28449672
  %v2825 = vadd.f32 %v2820, -0.28449672
  %v2826 = vmul.f32 %v2821, %v2787
  %v2827 = vmul.f32 %v2822, %v2789
  %v2828 = vmul.f32 %v2823, %v2791
  %v2829 = vmul.f32 %v2824, %v2793
  %v2830 = vmul.f32 %v2825, %v2795
  %v2831 = vadd.f32 %v2826, 0.2548296
  %v2832 = vadd.f32 %v2827, 0.2548296
  %v2833 = vadd.f32 %v2828, 0.2548296
  %v2834 = vadd.f32 %v2829, 0.2548296
  %v2835 = vadd.f32 %v2830, 0.2548296
  %v2836 = vmul.f32 %v2831, %v2787
  %v2837 = vmul.f32 %v2832, %v2789
  %v2838 = vmul.f32 %v2833, %v2791
  %v2839 = vmul.f32 %v2834, %v2793
  %v2840 = vmul.f32 %v2835, %v2795
  %v2841 = vsub.f32 0.0, %v2771
  %v2842 = vsub.f32 0.0, %v2772
  %v2843 = vsub.f32 0.0, %v2773
  %v2844 = vsub.f32 0.0, %v2774
  %v2845 = vsub.f32 0.0, %v2775
  %v2846 = vmul.f32 %v2841, %v2771
  %v2847 = vmul.f32 %v2842, %v2772
  %v2848 = vmul.f32 %v2843, %v2773
  %v2849 = vmul.f32 %v2844, %v2774
  %v2850 = vmul.f32 %v2845, %v2775
  %v2851 = vmul.f32 %v2846, 1.442695
  %v2852 = vpow.pop %v2851
  %v2853 = vmul.f32 %v2847, 1.442695
  %v2854 = vpow.pop %v2853
  %v2855 = vmul.f32 %v2848, 1.442695
  %v2856 = vpow.pop %v2855
  %v2857 = vmul.f32 %v2849, 1.442695
  %v2858 = vpow.pop %v2857
  %v2859 = vmul.f32 %v2850, 1.442695
  %v2860 = vpow.pop %v2859
  %v2861 = vmul.f32 %v2836, %v2852
  %v2862 = vmul.f32 %v2837, %v2854
  %v2863 = vmul.f32 %v2838, %v2856
  %v2864 = vmul.f32 %v2839, %v2858
  %v2865 = vmul.f32 %v2840, %v2860
  %v2866 = vsub.f32 1.0, %v2861
  %v2867 = vsub.f32 1.0, %v2862
  %v2868 = vsub.f32 1.0, %v2863
  %v2869 = vsub.f32 1.0, %v2864
  %v2870 = vsub.f32 1.0, %v2865
  %v2871 = vmul.f32 %v2766, %v2866
  %v2872 = vmul.f32 %v2767, %v2867
  %v2873 = vmul.f32 %v2768, %v2868
  %v2874 = vmul.f32 %v2769, %v2869
  %v2875 = vmul.f32 %v2770, %v2870
  %v2876 = vadd.f32 %v2871, 1.0
  %v2877 = vadd.f32 %v2872, 1.0
  %v2878 = vadd.f32 %v2873, 1.0
  %v2879 = vadd.f32 %v2874, 1.0
  %v2880 = vadd.f32 %v2875, 1.0
  %v2881 = vmul.f32 %v2751, %v2876
  %v2882 = vmul.f32 %v2752, %v2877
  %v2883 = vmul.f32 %v2753, %v2878
  %v2884 = vmul.f32 %v2754, %v2879
  %v2885 = vmul.f32 %v2755, %v2880
  %v2886 = vld [vmem:[%s15] sm:$0xff]
  %v2887 = vld [vmem:[%s15 + $0x8] sm:$0xff]
  %v2888 = vld [vmem:[%s15 + $0x10] sm:$0xff]
  %v2889 = vld [vmem:[%s15 + $0x18] sm:$0xff]
  %v2890 = vld [vmem:[%s15 + $0x20] sm:$0xff]
  %v2891 = vld [vmem:[%s15 + $0x28] sm:$0xff]
  %v2892 = vld [vmem:[%s15 + $0x30] sm:$0xff]
  %v2893 = vld [vmem:[%s15 + $0x38] sm:$0xff]
  %v2894 = vld [vmem:[%s15 + $0x40] sm:$0xff]
  %v2895 = vld [vmem:[%s15 + $0x48] sm:$0xff]
  %v2896 = vld [vmem:[%s15 + $0x50] sm:$0xff]
  %v2897 = vld [vmem:[%s15 + $0x58] sm:$0xff]
  %v2898 = vld [vmem:[%s15 + $0x60] sm:$0xff]
  %v2899 = vld [vmem:[%s15 + $0x68] sm:$0xff]
  %v2900 = vld [vmem:[%s15 + $0x70] sm:$0xff]
  %v2901 = vld [vmem:[%s15 + $0x78] sm:$0xff]
  %v2902 = vld [vmem:[%s16] sm:$0x1]
  %v2904 = vlaneseq
  %v2905 = vshrl.u32 %v2904, 7
  %v2906 = vsub.s32 0, %v2905
  %v2907 = vrot.slane %v2902, %v2906
  %2909 = vmatprep.subr.mxu0 0.0
  %2910 = vmatpush1.msra.mxu0 %v2901
  %2911 = vmatprep.subr.mxu0 0.0
  %2912 = vmatpush1.msra.mxu0 %v2900
  %2913 = vmatprep.subr.mxu0 0.0
  %2914 = vmatpush1.msra.mxu0 %v2899
  %2915 = vmatprep.subr.mxu0 0.0
  %2916 = vmatpush1.msra.mxu0 %v2898
  %2917 = vmatprep.subr.mxu0 0.0
  %2918 = vmatpush1.msra.mxu0 %v2897
  %2919 = vmatprep.subr.mxu0 0.0
  %2920 = vmatpush1.msra.mxu0 %v2896
  %2921 = vmatprep.subr.mxu0 0.0
  %2922 = vmatpush1.msra.mxu0 %v2895
  %2923 = vmatprep.subr.mxu0 0.0
  %2924 = vmatpush1.msra.mxu0 %v2894
  %2925 = vmatprep.subr.mxu0 0.0
  %2926 = vmatpush1.msra.mxu0 %v2893
  %2927 = vmatprep.subr.mxu0 0.0
  %2928 = vmatpush1.msra.mxu0 %v2892
  %2929 = vmatprep.subr.mxu0 0.0
  %2930 = vmatpush1.msra.mxu0 %v2891
  %2931 = vmatprep.subr.mxu0 0.0
  %2932 = vmatpush1.msra.mxu0 %v2890
  %2933 = vmatprep.subr.mxu0 0.0
  %2934 = vmatpush1.msra.mxu0 %v2889
  %2935 = vmatprep.subr.mxu0 0.0
  %2936 = vmatpush1.msra.mxu0 %v2888
  %2937 = vmatprep.subr.mxu0 0.0
  %2938 = vmatpush1.msra.mxu0 %v2887
  %2939 = vmatprep.subr.mxu0 0.0
  %2940 = vmatpush1.msra.mxu0 %v2886
  %2941 = vmatprep.subr.mxu0 0.0
  %2942 = vmatpush2.msra.mxu0 0.0
  %2943 = vmatprep.subr.mxu0 0.0
  %2944 = vmatpush2.msra.mxu0 0.0
  %2945 = vmatprep.subr.mxu0 0.0
  %2946 = vmatpush2.msra.mxu0 0.0
  %2947 = vmatprep.subr.mxu0 0.0
  %2948 = vmatpush2.msra.mxu0 0.0
  %2949 = vmatprep.subr.mxu0 0.0
  %2950 = vmatpush2.msra.mxu0 0.0
  %2951 = vmatprep.subr.mxu0 0.0
  %2952 = vmatpush2.msra.mxu0 0.0
  %2953 = vmatprep.subr.mxu0 0.0
  %2954 = vmatpush2.msra.mxu0 0.0
  %2955 = vmatprep.subr.mxu0 0.0
  %2956 = vmatpush2.msra.mxu0 0.0
  %2957 = vmatprep.subr.mxu0 0.0
  %2958 = vmatpush2.msra.mxu0 0.0
  %2959 = vmatprep.subr.mxu0 0.0
  %2960 = vmatpush2.msra.mxu0 0.0
  %2961 = vmatprep.subr.mxu0 0.0
  %2962 = vmatpush2.msra.mxu0 0.0
  %2963 = vmatprep.subr.mxu0 0.0
  %2964 = vmatpush2.msra.mxu0 0.0
  %2965 = vmatprep.subr.mxu0 0.0
  %2966 = vmatpush2.msra.mxu0 0.0
  %2967 = vmatprep.subr.mxu0 0.0
  %2968 = vmatpush2.msra.mxu0 0.0
  %2969 = vmatprep.subr.mxu0 0.0
  %2970 = vmatpush2.msra.mxu0 0.0
  %2971 = vmatprep.subr.mxu0 0.0
  %2972 = vmatpush2.msra.mxu0 0.0
  %2973 = vmatprep.mubr.f32.mxu0 0.0
  %2974 = vmatmul.mubr.f32.gmra.mxu0 %v2881
  %v2975 = vpop.f32.mrf.mxu0
  %v2976 = vadd.f32 %v2907, %v2975
  %v2977 = vpop.f32.mrf.mxu0
  %2978 = vmatprep.mubr.f32.mxu0 0.0
  %2979 = vmatmul.mubr.f32.gmra.mxu0 %v2882
  %v2980 = vpop.f32.mrf.mxu0
  %v2981 = vadd.f32 %v2907, %v2980
  %v2982 = vpop.f32.mrf.mxu0
  %2983 = vmatprep.mubr.f32.mxu0 0.0
  %2984 = vmatmul.mubr.f32.gmra.mxu0 %v2883
  %v2985 = vpop.f32.mrf.mxu0
  %v2986 = vadd.f32 %v2907, %v2985
  %v2987 = vpop.f32.mrf.mxu0
  %2988 = vmatprep.mubr.f32.mxu0 0.0
  %2989 = vmatmul.mubr.f32.gmra.mxu0 %v2884
  %v2990 = vpop.f32.mrf.mxu0
  %v2991 = vadd.f32 %v2907, %v2990
  %v2992 = vpop.f32.mrf.mxu0
  %2993 = vmatprep.mubr.f32.mxu0 0.0
  %2994 = vmatmul.mubr.f32.gmra.mxu0 %v2885
  %v2995 = vpop.f32.mrf.mxu0
  %v2996 = vadd.f32 %v2907, %v2995
  %v2997 = vpop.f32.mrf.mxu0
  %2998 = vdwg.mxu0
  %v2999 = vadd.f32 %v2541, %v2976
  %v3000 = vadd.f32 %v2542, %v2981
  %v3001 = vadd.f32 %v2543, %v2986
  %v3002 = vadd.f32 %v2544, %v2991
  %v3003 = vadd.f32 %v2545, %v2996
  %s3004 = scalar_lea.vmem %s5, 1
  %v3005 = vld [vmem:[%s3004] sm:$0x1]
  %s3006 = scalar_lea.vmem %s6, 1
  %v3007 = vld [vmem:[%s3006] sm:$0x1]
  %v3008 = vsel %vm197, %v2999, 0.0
  %3009 = vadd.xlane.f32.xlu0 %v3008
  %v3010 = vpop.xlane.xlu0 %3009
  %v3011 = vsel %vm197, %v3000, 0.0
  %3012 = vadd.xlane.f32.xlu0 %v3011
  %v3013 = vpop.xlane.xlu0 %3012
  %v3014 = vsel %vm197, %v3001, 0.0
  %3015 = vadd.xlane.f32.xlu0 %v3014
  %v3016 = vpop.xlane.xlu0 %3015
  %v3017 = vsel %vm197, %v3002, 0.0
  %3018 = vadd.xlane.f32.xlu0 %v3017
  %v3019 = vpop.xlane.xlu0 %3018
  %v3020 = vsel %vm224, %v3003, 0.0
  %3021 = vadd.xlane.f32.xlu0 %v3020
  %v3022 = vpop.xlane.xlu0 %3021
  %v3023 = vmul.f32 %v3010, %v228
  %v3024 = vmul.f32 %v3013, %v228
  %v3025 = vmul.f32 %v3016, %v228
  %v3026 = vmul.f32 %v3019, %v228
  %v3027 = vmul.f32 %v3022, %v228
  %v3028 = vsub.f32 %v2999, %v3023
  %v3029 = vsub.f32 %v3000, %v3024
  %v3030 = vsub.f32 %v3001, %v3025
  %v3031 = vsub.f32 %v3002, %v3026
  %v3032 = vsub.f32 %v3003, %v3027
  %v3033 = vmul.f32 %v3028, %v3028
  %v3034 = vmul.f32 %v3029, %v3029
  %v3035 = vmul.f32 %v3030, %v3030
  %v3036 = vmul.f32 %v3031, %v3031
  %v3037 = vmul.f32 %v3032, %v3032
  %v3038 = vsel %vm197, %v3033, 0.0
  %3039 = vadd.xlane.f32.xlu0 %v3038
  %v3040 = vpop.xlane.xlu0 %3039
  %v3041 = vsel %vm197, %v3034, 0.0
  %3042 = vadd.xlane.f32.xlu0 %v3041
  %v3043 = vpop.xlane.xlu0 %3042
  %v3044 = vsel %vm197, %v3035, 0.0
  %3045 = vadd.xlane.f32.xlu0 %v3044
  %v3046 = vpop.xlane.xlu0 %3045
  %v3047 = vsel %vm197, %v3036, 0.0
  %3048 = vadd.xlane.f32.xlu0 %v3047
  %v3049 = vpop.xlane.xlu0 %3048
  %v3050 = vsel %vm224, %v3037, 0.0
  %3051 = vadd.xlane.f32.xlu0 %v3050
  %v3052 = vpop.xlane.xlu0 %3051
  %v3053 = vmul.f32 %v3040, %v228
  %v3054 = vmul.f32 %v3043, %v228
  %v3055 = vmul.f32 %v3046, %v228
  %v3056 = vmul.f32 %v3049, %v228
  %v3057 = vmul.f32 %v3052, %v228
  %v3058 = vadd.f32 %v3053, 1e-06
  %v3059 = vadd.f32 %v3054, 1e-06
  %v3060 = vadd.f32 %v3055, 1e-06
  %v3061 = vadd.f32 %v3056, 1e-06
  %v3062 = vadd.f32 %v3057, 1e-06
  %v3063 = vrsqrt.pop %v3058
  %v3064 = vrsqrt.pop %v3059
  %v3065 = vrsqrt.pop %v3060
  %v3066 = vrsqrt.pop %v3061
  %v3067 = vrsqrt.pop %v3062
  %v3068 = vmul.f32 %v3028, %v3063
  %v3069 = vmul.f32 %v3029, %v3064
  %v3070 = vmul.f32 %v3030, %v3065
  %v3071 = vmul.f32 %v3031, %v3066
  %v3072 = vmul.f32 %v3032, %v3067
  %v3074 = vlaneseq
  %v3075 = vshrl.u32 %v3074, 7
  %v3076 = vsub.s32 0, %v3075
  %v3077 = vrot.slane %v3005, %v3076
  %v3079 = vmul.f32 %v3068, %v3077
  %v3080 = vmul.f32 %v3069, %v3077
  %v3081 = vmul.f32 %v3070, %v3077
  %v3082 = vmul.f32 %v3071, %v3077
  %v3083 = vmul.f32 %v3072, %v3077
  %v3085 = vlaneseq
  %v3086 = vshrl.u32 %v3085, 7
  %v3087 = vsub.s32 0, %v3086
  %v3088 = vrot.slane %v3007, %v3087
  %v3090 = vadd.f32 %v3079, %v3088
  %v3091 = vadd.f32 %v3080, %v3088
  %v3092 = vadd.f32 %v3081, %v3088
  %v3093 = vadd.f32 %v3082, %v3088
  %v3094 = vadd.f32 %v3083, %v3088
  %s3095 = scalar_lea.vmem %s7, 32
  %v3096 = vld [vmem:[%s3095] sm:$0xff]
  %v3097 = vld [vmem:[%s3095 + $0x8] sm:$0xff]
  %v3098 = vld [vmem:[%s3095 + $0x10] sm:$0xff]
  %v3099 = vld [vmem:[%s3095 + $0x18] sm:$0xff]
  %s3100 = scalar_lea.vmem %s8, 1
  %v3101 = vld [vmem:[%s3100] sm:$0x1]
  %v3103 = vlaneseq
  %v3104 = vshrl.u32 %v3103, 7
  %v3105 = vsub.s32 0, %v3104
  %v3106 = vrot.slane %v3101, %v3105
  %v3109 = vsel %vm197, %v3090, 0
  %v3112 = vsel %vm197, %v3091, 0
  %v3115 = vsel %vm197, %v3092, 0
  %v3118 = vsel %vm197, %v3093, 0
  %v3121 = vsel %vm197, %v3094, 0
  %3123 = vmatprep.subr.mxu0 0.0
  %3124 = vmatpush1.msra.mxu0 0.0
  %3125 = vmatprep.subr.mxu0 0.0
  %3126 = vmatpush1.msra.mxu0 0.0
  %3127 = vmatprep.subr.mxu0 0.0
  %3128 = vmatpush1.msra.mxu0 0.0
  %3129 = vmatprep.subr.mxu0 0.0
  %3130 = vmatpush1.msra.mxu0 0.0
  %3131 = vmatprep.subr.mxu0 0.0
  %3132 = vmatpush1.msra.mxu0 0.0
  %3133 = vmatprep.subr.mxu0 0.0
  %3134 = vmatpush1.msra.mxu0 0.0
  %3135 = vmatprep.subr.mxu0 0.0
  %3136 = vmatpush1.msra.mxu0 0.0
  %3137 = vmatprep.subr.mxu0 0.0
  %3138 = vmatpush1.msra.mxu0 0.0
  %3139 = vmatprep.subr.mxu0 0.0
  %3140 = vmatpush1.msra.mxu0 0.0
  %3141 = vmatprep.subr.mxu0 0.0
  %3142 = vmatpush1.msra.mxu0 0.0
  %3143 = vmatprep.subr.mxu0 0.0
  %3144 = vmatpush1.msra.mxu0 0.0
  %3145 = vmatprep.subr.mxu0 0.0
  %3146 = vmatpush1.msra.mxu0 0.0
  %3147 = vmatprep.subr.mxu0 0.0
  %3148 = vmatpush1.msra.mxu0 %v3099
  %3149 = vmatprep.subr.mxu0 0.0
  %3150 = vmatpush1.msra.mxu0 %v3098
  %3151 = vmatprep.subr.mxu0 0.0
  %3152 = vmatpush1.msra.mxu0 %v3097
  %3153 = vmatprep.subr.mxu0 0.0
  %3154 = vmatpush1.msra.mxu0 %v3096
  %3155 = vmatprep.subr.mxu0 0.0
  %3156 = vmatpush2.msra.mxu0 0.0
  %3157 = vmatprep.subr.mxu0 0.0
  %3158 = vmatpush2.msra.mxu0 0.0
  %3159 = vmatprep.subr.mxu0 0.0
  %3160 = vmatpush2.msra.mxu0 0.0
  %3161 = vmatprep.subr.mxu0 0.0
  %3162 = vmatpush2.msra.mxu0 0.0
  %3163 = vmatprep.subr.mxu0 0.0
  %3164 = vmatpush2.msra.mxu0 0.0
  %3165 = vmatprep.subr.mxu0 0.0
  %3166 = vmatpush2.msra.mxu0 0.0
  %3167 = vmatprep.subr.mxu0 0.0
  %3168 = vmatpush2.msra.mxu0 0.0
  %3169 = vmatprep.subr.mxu0 0.0
  %3170 = vmatpush2.msra.mxu0 0.0
  %3171 = vmatprep.subr.mxu0 0.0
  %3172 = vmatpush2.msra.mxu0 0.0
  %3173 = vmatprep.subr.mxu0 0.0
  %3174 = vmatpush2.msra.mxu0 0.0
  %3175 = vmatprep.subr.mxu0 0.0
  %3176 = vmatpush2.msra.mxu0 0.0
  %3177 = vmatprep.subr.mxu0 0.0
  %3178 = vmatpush2.msra.mxu0 0.0
  %3179 = vmatprep.subr.mxu0 0.0
  %3180 = vmatpush2.msra.mxu0 0.0
  %3181 = vmatprep.subr.mxu0 0.0
  %3182 = vmatpush2.msra.mxu0 0.0
  %3183 = vmatprep.subr.mxu0 0.0
  %3184 = vmatpush2.msra.mxu0 0.0
  %3185 = vmatprep.subr.mxu0 0.0
  %3186 = vmatpush2.msra.mxu0 0.0
  %3187 = vmatprep.mubr.f32.mxu0 0.0
  %3188 = vmatmul.mubr.f32.gmra.mxu0 %v3109
  %v3189 = vpop.f32.mrf.mxu0
  %v3190 = vadd.f32 %v3106, %v3189
  %v3191 = vpop.f32.mrf.mxu0
  %3192 = vmatprep.mubr.f32.mxu0 0.0
  %3193 = vmatmul.mubr.f32.gmra.mxu0 %v3112
  %v3194 = vpop.f32.mrf.mxu0
  %v3195 = vadd.f32 %v3106, %v3194
  %v3196 = vpop.f32.mrf.mxu0
  %3197 = vmatprep.mubr.f32.mxu0 0.0
  %3198 = vmatmul.mubr.f32.gmra.mxu0 %v3115
  %v3199 = vpop.f32.mrf.mxu0
  %v3200 = vadd.f32 %v3106, %v3199
  %v3201 = vpop.f32.mrf.mxu0
  %3202 = vmatprep.mubr.f32.mxu0 0.0
  %3203 = vmatmul.mubr.f32.gmra.mxu0 %v3118
  %v3204 = vpop.f32.mrf.mxu0
  %v3205 = vadd.f32 %v3106, %v3204
  %v3206 = vpop.f32.mrf.mxu0
  %3207 = vmatprep.mubr.f32.mxu0 0.0
  %3208 = vmatmul.mubr.f32.gmra.mxu0 %v3121
  %v3209 = vpop.f32.mrf.mxu0
  %v3210 = vadd.f32 %v3106, %v3209
  %v3211 = vpop.f32.mrf.mxu0
  %3212 = vdwg.mxu0
  %v3213 = vmul.f32 %v3190, 0.35355338
  %v3214 = vmul.f32 %v3195, 0.35355338
  %v3215 = vmul.f32 %v3200, 0.35355338
  %3219 = vrot.lane.b32.xlu0 %v3190, 96
  %v3220 = vpop.permute.xlu0 %3219
  %3221 = vrot.lane.b32.xlu0 %v3195, 96
  %v3222 = vpop.permute.xlu0 %3221
  %3223 = vrot.lane.b32.xlu0 %v3200, 96
  %v3224 = vpop.permute.xlu0 %3223
  %v3226 = vsel %vm429, %v3213, 0
  %v3229 = vsel %vm429, %v3214, 0
  %v3232 = vsel %vm429, %v3215, 0
  %v3234 = vsel %vm429, %v3220, 0
  %v3236 = vsel %vm429, %v3222, 0
  %v3238 = vsel %vm429, %v3224, 0
  %3240 = vmatprep.subr.mxu0 0.0
  %3241 = vmatpush1.xpose.msra.mxu0 0.0
  %3242 = vmatprep.subr.mxu0 0.0
  %3243 = vmatpush1.xpose.msra.mxu0 0.0
  %3244 = vmatprep.subr.mxu0 0.0
  %3245 = vmatpush1.xpose.msra.mxu0 0.0
  %3246 = vmatprep.subr.mxu0 0.0
  %3247 = vmatpush1.xpose.msra.mxu0 0.0
  %3248 = vmatprep.subr.mxu0 0.0
  %3249 = vmatpush1.xpose.msra.mxu0 0.0
  %3250 = vmatprep.subr.mxu0 0.0
  %3251 = vmatpush1.xpose.msra.mxu0 0.0
  %3252 = vmatprep.subr.mxu0 0.0
  %3253 = vmatpush1.xpose.msra.mxu0 0.0
  %3254 = vmatprep.subr.mxu0 0.0
  %3255 = vmatpush1.xpose.msra.mxu0 0.0
  %3256 = vmatprep.subr.mxu0 0.0
  %3257 = vmatpush1.xpose.msra.mxu0 0.0
  %3258 = vmatprep.subr.mxu0 0.0
  %3259 = vmatpush1.xpose.msra.mxu0 0.0
  %3260 = vmatprep.subr.mxu0 0.0
  %3261 = vmatpush1.xpose.msra.mxu0 0.0
  %3262 = vmatprep.subr.mxu0 0.0
  %3263 = vmatpush1.xpose.msra.mxu0 0.0
  %3264 = vmatprep.subr.mxu0 0.0
  %3265 = vmatpush1.xpose.msra.mxu0 0.0
  %3266 = vmatprep.subr.mxu0 0.0
  %3267 = vmatpush1.xpose.msra.mxu0 %v3238
  %3268 = vmatprep.subr.mxu0 0.0
  %3269 = vmatpush1.xpose.msra.mxu0 %v3236
  %3270 = vmatprep.subr.mxu0 0.0
  %3271 = vmatpush1.xpose.msra.mxu0 %v3234
  %3272 = vmatprep.subr.mxu0 0.0
  %3273 = vmatpush2.xpose.msra.mxu0 0.0
  %3274 = vmatprep.subr.mxu0 0.0
  %3275 = vmatpush2.xpose.msra.mxu0 0.0
  %3276 = vmatprep.subr.mxu0 0.0
  %3277 = vmatpush2.xpose.msra.mxu0 0.0
  %3278 = vmatprep.subr.mxu0 0.0
  %3279 = vmatpush2.xpose.msra.mxu0 0.0
  %3280 = vmatprep.subr.mxu0 0.0
  %3281 = vmatpush2.xpose.msra.mxu0 0.0
  %3282 = vmatprep.subr.mxu0 0.0
  %3283 = vmatpush2.xpose.msra.mxu0 0.0
  %3284 = vmatprep.subr.mxu0 0.0
  %3285 = vmatpush2.xpose.msra.mxu0 0.0
  %3286 = vmatprep.subr.mxu0 0.0
  %3287 = vmatpush2.xpose.msra.mxu0 0.0
  %3288 = vmatprep.subr.mxu0 0.0
  %3289 = vmatpush2.xpose.msra.mxu0 0.0
  %3290 = vmatprep.subr.mxu0 0.0
  %3291 = vmatpush2.xpose.msra.mxu0 0.0
  %3292 = vmatprep.subr.mxu0 0.0
  %3293 = vmatpush2.xpose.msra.mxu0 0.0
  %3294 = vmatprep.subr.mxu0 0.0
  %3295 = vmatpush2.xpose.msra.mxu0 0.0
  %3296 = vmatprep.subr.mxu0 0.0
  %3297 = vmatpush2.xpose.msra.mxu0 0.0
  %3298 = vmatprep.subr.mxu0 0.0
  %3299 = vmatpush2.xpose.msra.mxu0 0.0
  %3300 = vmatprep.subr.mxu0 0.0
  %3301 = vmatpush2.xpose.msra.mxu0 0.0
  %3302 = vmatprep.subr.mxu0 0.0
  %3303 = vmatpush2.xpose.msra.mxu0 0.0
  %3304 = vmatprep.mubr.f32.mxu0 0.0
  %3305 = vmatmul.mubr.f32.gmra.mxu0 %v3226
  %v3306 = vpop.f32.mrf.mxu0
  %v3307 = vadd.f32 0.0, %v3306
  %v3308 = vpop.f32.mrf.mxu0
  %3309 = vmatprep.mubr.f32.mxu0 0.0
  %3310 = vmatmul.mubr.f32.gmra.mxu0 %v3229
  %v3311 = vpop.f32.mrf.mxu0
  %v3312 = vadd.f32 0.0, %v3311
  %v3313 = vpop.f32.mrf.mxu0
  %3314 = vmatprep.mubr.f32.mxu0 0.0
  %3315 = vmatmul.mubr.f32.gmra.mxu0 %v3232
  %v3316 = vpop.f32.mrf.mxu0
  %v3317 = vadd.f32 0.0, %v3316
  %v3318 = vpop.f32.mrf.mxu0
  %3319 = vdwg.mxu0
  %v3320 = vsel %vm525, %v3307, -inf
  %3321 = vmax.xlane.f32.xlu0 %v3320
  %v3322 = vpop.xlane.xlu0 %3321
  %v3323 = vsel %vm525, %v3312, -inf
  %3324 = vmax.xlane.f32.xlu0 %v3323
  %v3325 = vpop.xlane.xlu0 %3324
  %v3326 = vsel %vm532, %v3317, -inf
  %3327 = vmax.xlane.f32.xlu0 %v3326
  %v3328 = vpop.xlane.xlu0 %3327
  %v3329 = vsub.f32 %v3307, %v3322
  %v3330 = vsub.f32 %v3312, %v3325
  %v3331 = vsub.f32 %v3317, %v3328
  %v3332 = vmul.f32 %v3329, 1.442695
  %v3333 = vpow.pop %v3332
  %v3334 = vmul.f32 %v3330, 1.442695
  %v3335 = vpow.pop %v3334
  %v3336 = vmul.f32 %v3331, 1.442695
  %v3337 = vpow.pop %v3336
  %v3338 = vsel %vm525, %v3333, 0.0
  %3339 = vadd.xlane.f32.xlu0 %v3338
  %v3340 = vpop.xlane.xlu0 %3339
  %v3341 = vsel %vm525, %v3335, 0.0
  %3342 = vadd.xlane.f32.xlu0 %v3341
  %v3343 = vpop.xlane.xlu0 %3342
  %v3344 = vsel %vm532, %v3337, 0.0
  %3345 = vadd.xlane.f32.xlu0 %v3344
  %v3346 = vpop.xlane.xlu0 %3345
  %v3347 = vrcp.pop %v3340
  %v3348 = vmul.f32 %v3333, %v3347
  %v3349 = vrcp.pop %v3343
  %v3350 = vmul.f32 %v3335, %v3349
  %v3351 = vrcp.pop %v3346
  %v3352 = vmul.f32 %v3337, %v3351
  %3353 = vrot.lane.b32.xlu0 %v3190, 64
  %v3354 = vpop.permute.xlu0 %3353
  %3355 = vrot.lane.b32.xlu0 %v3195, 64
  %v3356 = vpop.permute.xlu0 %3355
  %3357 = vrot.lane.b32.xlu0 %v3200, 64
  %v3358 = vpop.permute.xlu0 %3357
  %v3362 = vsel %vm525, %v3348, 0
  %v3365 = vsel %vm525, %v3350, 0
  %v3368 = vsel %vm525, %v3352, 0
  %v3370 = vsel %vm577, %v3358, 0
  %3372 = vmatprep.subr.mxu0 0.0
  %3373 = vmatpush1.msra.mxu0 0.0
  %3374 = vmatprep.subr.mxu0 0.0
  %3375 = vmatpush1.msra.mxu0 0.0
  %3376 = vmatprep.subr.mxu0 0.0
  %3377 = vmatpush1.msra.mxu0 0.0
  %3378 = vmatprep.subr.mxu0 0.0
  %3379 = vmatpush1.msra.mxu0 0.0
  %3380 = vmatprep.subr.mxu0 0.0
  %3381 = vmatpush1.msra.mxu0 0.0
  %3382 = vmatprep.subr.mxu0 0.0
  %3383 = vmatpush1.msra.mxu0 0.0
  %3384 = vmatprep.subr.mxu0 0.0
  %3385 = vmatpush1.msra.mxu0 0.0
  %3386 = vmatprep.subr.mxu0 0.0
  %3387 = vmatpush1.msra.mxu0 0.0
  %3388 = vmatprep.subr.mxu0 0.0
  %3389 = vmatpush1.msra.mxu0 0.0
  %3390 = vmatprep.subr.mxu0 0.0
  %3391 = vmatpush1.msra.mxu0 0.0
  %3392 = vmatprep.subr.mxu0 0.0
  %3393 = vmatpush1.msra.mxu0 0.0
  %3394 = vmatprep.subr.mxu0 0.0
  %3395 = vmatpush1.msra.mxu0 0.0
  %3396 = vmatprep.subr.mxu0 0.0
  %3397 = vmatpush1.msra.mxu0 0.0
  %3398 = vmatprep.subr.mxu0 0.0
  %3399 = vmatpush1.msra.mxu0 %v3370
  %3400 = vmatprep.subr.mxu0 0.0
  %3401 = vmatpush1.msra.mxu0 %v3356
  %3402 = vmatprep.subr.mxu0 0.0
  %3403 = vmatpush1.msra.mxu0 %v3354
  %3404 = vmatprep.subr.mxu0 0.0
  %3405 = vmatpush2.msra.mxu0 0.0
  %3406 = vmatprep.subr.mxu0 0.0
  %3407 = vmatpush2.msra.mxu0 0.0
  %3408 = vmatprep.subr.mxu0 0.0
  %3409 = vmatpush2.msra.mxu0 0.0
  %3410 = vmatprep.subr.mxu0 0.0
  %3411 = vmatpush2.msra.mxu0 0.0
  %3412 = vmatprep.subr.mxu0 0.0
  %3413 = vmatpush2.msra.mxu0 0.0
  %3414 = vmatprep.subr.mxu0 0.0
  %3415 = vmatpush2.msra.mxu0 0.0
  %3416 = vmatprep.subr.mxu0 0.0
  %3417 = vmatpush2.msra.mxu0 0.0
  %3418 = vmatprep.subr.mxu0 0.0
  %3419 = vmatpush2.msra.mxu0 0.0
  %3420 = vmatprep.subr.mxu0 0.0
  %3421 = vmatpush2.msra.mxu0 0.0
  %3422 = vmatprep.subr.mxu0 0.0
  %3423 = vmatpush2.msra.mxu0 0.0
  %3424 = vmatprep.subr.mxu0 0.0
  %3425 = vmatpush2.msra.mxu0 0.0
  %3426 = vmatprep.subr.mxu0 0.0
  %3427 = vmatpush2.msra.mxu0 0.0
  %3428 = vmatprep.subr.mxu0 0.0
  %3429 = vmatpush2.msra.mxu0 0.0
  %3430 = vmatprep.subr.mxu0 0.0
  %3431 = vmatpush2.msra.mxu0 0.0
  %3432 = vmatprep.subr.mxu0 0.0
  %3433 = vmatpush2.msra.mxu0 0.0
  %3434 = vmatprep.subr.mxu0 0.0
  %3435 = vmatpush2.msra.mxu0 0.0
  %3436 = vmatprep.mubr.f32.mxu0 0.0
  %3437 = vmatmul.mubr.f32.gmra.mxu0 %v3362
  %v3438 = vpop.f32.mrf.mxu0
  %v3439 = vadd.f32 0.0, %v3438
  %v3440 = vpop.f32.mrf.mxu0
  %3441 = vmatprep.mubr.f32.mxu0 0.0
  %3442 = vmatmul.mubr.f32.gmra.mxu0 %v3365
  %v3443 = vpop.f32.mrf.mxu0
  %v3444 = vadd.f32 0.0, %v3443
  %v3445 = vpop.f32.mrf.mxu0
  %3446 = vmatprep.mubr.f32.mxu0 0.0
  %3447 = vmatmul.mubr.f32.gmra.mxu0 %v3368
  %v3448 = vpop.f32.mrf.mxu0
  %v3449 = vadd.f32 0.0, %v3448
  %v3450 = vpop.f32.mrf.mxu0
  %3451 = vdwg.mxu0
  %3452 = vrot.lane.b32.xlu0 %v3213, 120
  %v3453 = vpop.permute.xlu0 %3452
  %3454 = vrot.lane.b32.xlu0 %v3214, 120
  %v3455 = vpop.permute.xlu0 %3454
  %3456 = vrot.lane.b32.xlu0 %v3215, 120
  %v3457 = vpop.permute.xlu0 %3456
  %3458 = vrot.lane.b32.xlu0 %v3190, 88
  %v3459 = vpop.permute.xlu0 %3458
  %3460 = vrot.lane.b32.xlu0 %v3195, 88
  %v3461 = vpop.permute.xlu0 %3460
  %3462 = vrot.lane.b32.xlu0 %v3200, 88
  %v3463 = vpop.permute.xlu0 %3462
  %v3464 = vsel %vm429, %v3453, 0
  %v3466 = vsel %vm429, %v3455, 0
  %v3468 = vsel %vm429, %v3457, 0
  %v3470 = vsel %vm429, %v3459, 0
  %v3472 = vsel %vm429, %v3461, 0
  %v3474 = vsel %vm429, %v3463, 0
  %3476 = vmatprep.subr.mxu0 0.0
  %3477 = vmatpush1.xpose.msra.mxu0 0.0
  %3478 = vmatprep.subr.mxu0 0.0
  %3479 = vmatpush1.xpose.msra.mxu0 0.0
  %3480 = vmatprep.subr.mxu0 0.0
  %3481 = vmatpush1.xpose.msra.mxu0 0.0
  %3482 = vmatprep.subr.mxu0 0.0
  %3483 = vmatpush1.xpose.msra.mxu0 0.0
  %3484 = vmatprep.subr.mxu0 0.0
  %3485 = vmatpush1.xpose.msra.mxu0 0.0
  %3486 = vmatprep.subr.mxu0 0.0
  %3487 = vmatpush1.xpose.msra.mxu0 0.0
  %3488 = vmatprep.subr.mxu0 0.0
  %3489 = vmatpush1.xpose.msra.mxu0 0.0
  %3490 = vmatprep.subr.mxu0 0.0
  %3491 = vmatpush1.xpose.msra.mxu0 0.0
  %3492 = vmatprep.subr.mxu0 0.0
  %3493 = vmatpush1.xpose.msra.mxu0 0.0
  %3494 = vmatprep.subr.mxu0 0.0
  %3495 = vmatpush1.xpose.msra.mxu0 0.0
  %3496 = vmatprep.subr.mxu0 0.0
  %3497 = vmatpush1.xpose.msra.mxu0 0.0
  %3498 = vmatprep.subr.mxu0 0.0
  %3499 = vmatpush1.xpose.msra.mxu0 0.0
  %3500 = vmatprep.subr.mxu0 0.0
  %3501 = vmatpush1.xpose.msra.mxu0 0.0
  %3502 = vmatprep.subr.mxu0 0.0
  %3503 = vmatpush1.xpose.msra.mxu0 %v3474
  %3504 = vmatprep.subr.mxu0 0.0
  %3505 = vmatpush1.xpose.msra.mxu0 %v3472
  %3506 = vmatprep.subr.mxu0 0.0
  %3507 = vmatpush1.xpose.msra.mxu0 %v3470
  %3508 = vmatprep.subr.mxu0 0.0
  %3509 = vmatpush2.xpose.msra.mxu0 0.0
  %3510 = vmatprep.subr.mxu0 0.0
  %3511 = vmatpush2.xpose.msra.mxu0 0.0
  %3512 = vmatprep.subr.mxu0 0.0
  %3513 = vmatpush2.xpose.msra.mxu0 0.0
  %3514 = vmatprep.subr.mxu0 0.0
  %3515 = vmatpush2.xpose.msra.mxu0 0.0
  %3516 = vmatprep.subr.mxu0 0.0
  %3517 = vmatpush2.xpose.msra.mxu0 0.0
  %3518 = vmatprep.subr.mxu0 0.0
  %3519 = vmatpush2.xpose.msra.mxu0 0.0
  %3520 = vmatprep.subr.mxu0 0.0
  %3521 = vmatpush2.xpose.msra.mxu0 0.0
  %3522 = vmatprep.subr.mxu0 0.0
  %3523 = vmatpush2.xpose.msra.mxu0 0.0
  %3524 = vmatprep.subr.mxu0 0.0
  %3525 = vmatpush2.xpose.msra.mxu0 0.0
  %3526 = vmatprep.subr.mxu0 0.0
  %3527 = vmatpush2.xpose.msra.mxu0 0.0
  %3528 = vmatprep.subr.mxu0 0.0
  %3529 = vmatpush2.xpose.msra.mxu0 0.0
  %3530 = vmatprep.subr.mxu0 0.0
  %3531 = vmatpush2.xpose.msra.mxu0 0.0
  %3532 = vmatprep.subr.mxu0 0.0
  %3533 = vmatpush2.xpose.msra.mxu0 0.0
  %3534 = vmatprep.subr.mxu0 0.0
  %3535 = vmatpush2.xpose.msra.mxu0 0.0
  %3536 = vmatprep.subr.mxu0 0.0
  %3537 = vmatpush2.xpose.msra.mxu0 0.0
  %3538 = vmatprep.subr.mxu0 0.0
  %3539 = vmatpush2.xpose.msra.mxu0 0.0
  %3540 = vmatprep.mubr.f32.mxu0 0.0
  %3541 = vmatmul.mubr.f32.gmra.mxu0 %v3464
  %v3542 = vpop.f32.mrf.mxu0
  %v3543 = vadd.f32 0.0, %v3542
  %v3544 = vpop.f32.mrf.mxu0
  %3545 = vmatprep.mubr.f32.mxu0 0.0
  %3546 = vmatmul.mubr.f32.gmra.mxu0 %v3466
  %v3547 = vpop.f32.mrf.mxu0
  %v3548 = vadd.f32 0.0, %v3547
  %v3549 = vpop.f32.mrf.mxu0
  %3550 = vmatprep.mubr.f32.mxu0 0.0
  %3551 = vmatmul.mubr.f32.gmra.mxu0 %v3468
  %v3552 = vpop.f32.mrf.mxu0
  %v3553 = vadd.f32 0.0, %v3552
  %v3554 = vpop.f32.mrf.mxu0
  %3555 = vdwg.mxu0
  %v3556 = vsel %vm525, %v3543, -inf
  %3557 = vmax.xlane.f32.xlu0 %v3556
  %v3558 = vpop.xlane.xlu0 %3557
  %v3559 = vsel %vm525, %v3548, -inf
  %3560 = vmax.xlane.f32.xlu0 %v3559
  %v3561 = vpop.xlane.xlu0 %3560
  %v3562 = vsel %vm532, %v3553, -inf
  %3563 = vmax.xlane.f32.xlu0 %v3562
  %v3564 = vpop.xlane.xlu0 %3563
  %v3565 = vsub.f32 %v3543, %v3558
  %v3566 = vsub.f32 %v3548, %v3561
  %v3567 = vsub.f32 %v3553, %v3564
  %v3568 = vmul.f32 %v3565, 1.442695
  %v3569 = vpow.pop %v3568
  %v3570 = vmul.f32 %v3566, 1.442695
  %v3571 = vpow.pop %v3570
  %v3572 = vmul.f32 %v3567, 1.442695
  %v3573 = vpow.pop %v3572
  %v3574 = vsel %vm525, %v3569, 0.0
  %3575 = vadd.xlane.f32.xlu0 %v3574
  %v3576 = vpop.xlane.xlu0 %3575
  %v3577 = vsel %vm525, %v3571, 0.0
  %3578 = vadd.xlane.f32.xlu0 %v3577
  %v3579 = vpop.xlane.xlu0 %3578
  %v3580 = vsel %vm532, %v3573, 0.0
  %3581 = vadd.xlane.f32.xlu0 %v3580
  %v3582 = vpop.xlane.xlu0 %3581
  %v3583 = vrcp.pop %v3576
  %v3584 = vmul.f32 %v3569, %v3583
  %v3585 = vrcp.pop %v3579
  %v3586 = vmul.f32 %v3571, %v3585
  %v3587 = vrcp.pop %v3582
  %v3588 = vmul.f32 %v3573, %v3587
  %3589 = vrot.lane.b32.xlu0 %v3190, 56
  %v3590 = vpop.permute.xlu0 %3589
  %3591 = vrot.lane.b32.xlu0 %v3195, 56
  %v3592 = vpop.permute.xlu0 %3591
  %3593 = vrot.lane.b32.xlu0 %v3200, 56
  %v3594 = vpop.permute.xlu0 %3593
  %v3598 = vsel %vm525, %v3584, 0
  %v3601 = vsel %vm525, %v3586, 0
  %v3604 = vsel %vm525, %v3588, 0
  %v3606 = vsel %vm577, %v3594, 0
  %3608 = vmatprep.subr.mxu0 0.0
  %3609 = vmatpush1.msra.mxu0 0.0
  %3610 = vmatprep.subr.mxu0 0.0
  %3611 = vmatpush1.msra.mxu0 0.0
  %3612 = vmatprep.subr.mxu0 0.0
  %3613 = vmatpush1.msra.mxu0 0.0
  %3614 = vmatprep.subr.mxu0 0.0
  %3615 = vmatpush1.msra.mxu0 0.0
  %3616 = vmatprep.subr.mxu0 0.0
  %3617 = vmatpush1.msra.mxu0 0.0
  %3618 = vmatprep.subr.mxu0 0.0
  %3619 = vmatpush1.msra.mxu0 0.0
  %3620 = vmatprep.subr.mxu0 0.0
  %3621 = vmatpush1.msra.mxu0 0.0
  %3622 = vmatprep.subr.mxu0 0.0
  %3623 = vmatpush1.msra.mxu0 0.0
  %3624 = vmatprep.subr.mxu0 0.0
  %3625 = vmatpush1.msra.mxu0 0.0
  %3626 = vmatprep.subr.mxu0 0.0
  %3627 = vmatpush1.msra.mxu0 0.0
  %3628 = vmatprep.subr.mxu0 0.0
  %3629 = vmatpush1.msra.mxu0 0.0
  %3630 = vmatprep.subr.mxu0 0.0
  %3631 = vmatpush1.msra.mxu0 0.0
  %3632 = vmatprep.subr.mxu0 0.0
  %3633 = vmatpush1.msra.mxu0 0.0
  %3634 = vmatprep.subr.mxu0 0.0
  %3635 = vmatpush1.msra.mxu0 %v3606
  %3636 = vmatprep.subr.mxu0 0.0
  %3637 = vmatpush1.msra.mxu0 %v3592
  %3638 = vmatprep.subr.mxu0 0.0
  %3639 = vmatpush1.msra.mxu0 %v3590
  %3640 = vmatprep.subr.mxu0 0.0
  %3641 = vmatpush2.msra.mxu0 0.0
  %3642 = vmatprep.subr.mxu0 0.0
  %3643 = vmatpush2.msra.mxu0 0.0
  %3644 = vmatprep.subr.mxu0 0.0
  %3645 = vmatpush2.msra.mxu0 0.0
  %3646 = vmatprep.subr.mxu0 0.0
  %3647 = vmatpush2.msra.mxu0 0.0
  %3648 = vmatprep.subr.mxu0 0.0
  %3649 = vmatpush2.msra.mxu0 0.0
  %3650 = vmatprep.subr.mxu0 0.0
  %3651 = vmatpush2.msra.mxu0 0.0
  %3652 = vmatprep.subr.mxu0 0.0
  %3653 = vmatpush2.msra.mxu0 0.0
  %3654 = vmatprep.subr.mxu0 0.0
  %3655 = vmatpush2.msra.mxu0 0.0
  %3656 = vmatprep.subr.mxu0 0.0
  %3657 = vmatpush2.msra.mxu0 0.0
  %3658 = vmatprep.subr.mxu0 0.0
  %3659 = vmatpush2.msra.mxu0 0.0
  %3660 = vmatprep.subr.mxu0 0.0
  %3661 = vmatpush2.msra.mxu0 0.0
  %3662 = vmatprep.subr.mxu0 0.0
  %3663 = vmatpush2.msra.mxu0 0.0
  %3664 = vmatprep.subr.mxu0 0.0
  %3665 = vmatpush2.msra.mxu0 0.0
  %3666 = vmatprep.subr.mxu0 0.0
  %3667 = vmatpush2.msra.mxu0 0.0
  %3668 = vmatprep.subr.mxu0 0.0
  %3669 = vmatpush2.msra.mxu0 0.0
  %3670 = vmatprep.subr.mxu0 0.0
  %3671 = vmatpush2.msra.mxu0 0.0
  %3672 = vmatprep.mubr.f32.mxu0 0.0
  %3673 = vmatmul.mubr.f32.gmra.mxu0 %v3598
  %v3674 = vpop.f32.mrf.mxu0
  %v3675 = vadd.f32 0.0, %v3674
  %v3676 = vpop.f32.mrf.mxu0
  %3677 = vmatprep.mubr.f32.mxu0 0.0
  %3678 = vmatmul.mubr.f32.gmra.mxu0 %v3601
  %v3679 = vpop.f32.mrf.mxu0
  %v3680 = vadd.f32 0.0, %v3679
  %v3681 = vpop.f32.mrf.mxu0
  %3682 = vmatprep.mubr.f32.mxu0 0.0
  %3683 = vmatmul.mubr.f32.gmra.mxu0 %v3604
  %v3684 = vpop.f32.mrf.mxu0
  %v3685 = vadd.f32 0.0, %v3684
  %v3686 = vpop.f32.mrf.mxu0
  %3687 = vdwg.mxu0
  %3688 = vrot.lane.b32.xlu0 %v3213, 112
  %v3689 = vpop.permute.xlu0 %3688
  %3690 = vrot.lane.b32.xlu0 %v3214, 112
  %v3691 = vpop.permute.xlu0 %3690
  %3692 = vrot.lane.b32.xlu0 %v3215, 112
  %v3693 = vpop.permute.xlu0 %3692
  %3694 = vrot.lane.b32.xlu0 %v3190, 80
  %v3695 = vpop.permute.xlu0 %3694
  %3696 = vrot.lane.b32.xlu0 %v3195, 80
  %v3697 = vpop.permute.xlu0 %3696
  %3698 = vrot.lane.b32.xlu0 %v3200, 80
  %v3699 = vpop.permute.xlu0 %3698
  %v3700 = vsel %vm429, %v3689, 0
  %v3702 = vsel %vm429, %v3691, 0
  %v3704 = vsel %vm429, %v3693, 0
  %v3706 = vsel %vm429, %v3695, 0
  %v3708 = vsel %vm429, %v3697, 0
  %v3710 = vsel %vm429, %v3699, 0
  %3712 = vmatprep.subr.mxu0 0.0
  %3713 = vmatpush1.xpose.msra.mxu0 0.0
  %3714 = vmatprep.subr.mxu0 0.0
  %3715 = vmatpush1.xpose.msra.mxu0 0.0
  %3716 = vmatprep.subr.mxu0 0.0
  %3717 = vmatpush1.xpose.msra.mxu0 0.0
  %3718 = vmatprep.subr.mxu0 0.0
  %3719 = vmatpush1.xpose.msra.mxu0 0.0
  %3720 = vmatprep.subr.mxu0 0.0
  %3721 = vmatpush1.xpose.msra.mxu0 0.0
  %3722 = vmatprep.subr.mxu0 0.0
  %3723 = vmatpush1.xpose.msra.mxu0 0.0
  %3724 = vmatprep.subr.mxu0 0.0
  %3725 = vmatpush1.xpose.msra.mxu0 0.0
  %3726 = vmatprep.subr.mxu0 0.0
  %3727 = vmatpush1.xpose.msra.mxu0 0.0
  %3728 = vmatprep.subr.mxu0 0.0
  %3729 = vmatpush1.xpose.msra.mxu0 0.0
  %3730 = vmatprep.subr.mxu0 0.0
  %3731 = vmatpush1.xpose.msra.mxu0 0.0
  %3732 = vmatprep.subr.mxu0 0.0
  %3733 = vmatpush1.xpose.msra.mxu0 0.0
  %3734 = vmatprep.subr.mxu0 0.0
  %3735 = vmatpush1.xpose.msra.mxu0 0.0
  %3736 = vmatprep.subr.mxu0 0.0
  %3737 = vmatpush1.xpose.msra.mxu0 0.0
  %3738 = vmatprep.subr.mxu0 0.0
  %3739 = vmatpush1.xpose.msra.mxu0 %v3710
  %3740 = vmatprep.subr.mxu0 0.0
  %3741 = vmatpush1.xpose.msra.mxu0 %v3708
  %3742 = vmatprep.subr.mxu0 0.0
  %3743 = vmatpush1.xpose.msra.mxu0 %v3706
  %3744 = vmatprep.subr.mxu0 0.0
  %3745 = vmatpush2.xpose.msra.mxu0 0.0
  %3746 = vmatprep.subr.mxu0 0.0
  %3747 = vmatpush2.xpose.msra.mxu0 0.0
  %3748 = vmatprep.subr.mxu0 0.0
  %3749 = vmatpush2.xpose.msra.mxu0 0.0
  %3750 = vmatprep.subr.mxu0 0.0
  %3751 = vmatpush2.xpose.msra.mxu0 0.0
  %3752 = vmatprep.subr.mxu0 0.0
  %3753 = vmatpush2.xpose.msra.mxu0 0.0
  %3754 = vmatprep.subr.mxu0 0.0
  %3755 = vmatpush2.xpose.msra.mxu0 0.0
  %3756 = vmatprep.subr.mxu0 0.0
  %3757 = vmatpush2.xpose.msra.mxu0 0.0
  %3758 = vmatprep.subr.mxu0 0.0
  %3759 = vmatpush2.xpose.msra.mxu0 0.0
  %3760 = vmatprep.subr.mxu0 0.0
  %3761 = vmatpush2.xpose.msra.mxu0 0.0
  %3762 = vmatprep.subr.mxu0 0.0
  %3763 = vmatpush2.xpose.msra.mxu0 0.0
  %3764 = vmatprep.subr.mxu0 0.0
  %3765 = vmatpush2.xpose.msra.mxu0 0.0
  %3766 = vmatprep.subr.mxu0 0.0
  %3767 = vmatpush2.xpose.msra.mxu0 0.0
  %3768 = vmatprep.subr.mxu0 0.0
  %3769 = vmatpush2.xpose.msra.mxu0 0.0
  %3770 = vmatprep.subr.mxu0 0.0
  %3771 = vmatpush2.xpose.msra.mxu0 0.0
  %3772 = vmatprep.subr.mxu0 0.0
  %3773 = vmatpush2.xpose.msra.mxu0 0.0
  %3774 = vmatprep.subr.mxu0 0.0
  %3775 = vmatpush2.xpose.msra.mxu0 0.0
  %3776 = vmatprep.mubr.f32.mxu0 0.0
  %3777 = vmatmul.mubr.f32.gmra.mxu0 %v3700
  %v3778 = vpop.f32.mrf.mxu0
  %v3779 = vadd.f32 0.0, %v3778
  %v3780 = vpop.f32.mrf.mxu0
  %3781 = vmatprep.mubr.f32.mxu0 0.0
  %3782 = vmatmul.mubr.f32.gmra.mxu0 %v3702
  %v3783 = vpop.f32.mrf.mxu0
  %v3784 = vadd.f32 0.0, %v3783
  %v3785 = vpop.f32.mrf.mxu0
  %3786 = vmatprep.mubr.f32.mxu0 0.0
  %3787 = vmatmul.mubr.f32.gmra.mxu0 %v3704
  %v3788 = vpop.f32.mrf.mxu0
  %v3789 = vadd.f32 0.0, %v3788
  %v3790 = vpop.f32.mrf.mxu0
  %3791 = vdwg.mxu0
  %v3792 = vsel %vm525, %v3779, -inf
  %3793 = vmax.xlane.f32.xlu0 %v3792
  %v3794 = vpop.xlane.xlu0 %3793
  %v3795 = vsel %vm525, %v3784, -inf
  %3796 = vmax.xlane.f32.xlu0 %v3795
  %v3797 = vpop.xlane.xlu0 %3796
  %v3798 = vsel %vm532, %v3789, -inf
  %3799 = vmax.xlane.f32.xlu0 %v3798
  %v3800 = vpop.xlane.xlu0 %3799
  %v3801 = vsub.f32 %v3779, %v3794
  %v3802 = vsub.f32 %v3784, %v3797
  %v3803 = vsub.f32 %v3789, %v3800
  %v3804 = vmul.f32 %v3801, 1.442695
  %v3805 = vpow.pop %v3804
  %v3806 = vmul.f32 %v3802, 1.442695
  %v3807 = vpow.pop %v3806
  %v3808 = vmul.f32 %v3803, 1.442695
  %v3809 = vpow.pop %v3808
  %v3810 = vsel %vm525, %v3805, 0.0
  %3811 = vadd.xlane.f32.xlu0 %v3810
  %v3812 = vpop.xlane.xlu0 %3811
  %v3813 = vsel %vm525, %v3807, 0.0
  %3814 = vadd.xlane.f32.xlu0 %v3813
  %v3815 = vpop.xlane.xlu0 %3814
  %v3816 = vsel %vm532, %v3809, 0.0
  %3817 = vadd.xlane.f32.xlu0 %v3816
  %v3818 = vpop.xlane.xlu0 %3817
  %v3819 = vrcp.pop %v3812
  %v3820 = vmul.f32 %v3805, %v3819
  %v3821 = vrcp.pop %v3815
  %v3822 = vmul.f32 %v3807, %v3821
  %v3823 = vrcp.pop %v3818
  %v3824 = vmul.f32 %v3809, %v3823
  %3825 = vrot.lane.b32.xlu0 %v3190, 48
  %v3826 = vpop.permute.xlu0 %3825
  %3827 = vrot.lane.b32.xlu0 %v3195, 48
  %v3828 = vpop.permute.xlu0 %3827
  %3829 = vrot.lane.b32.xlu0 %v3200, 48
  %v3830 = vpop.permute.xlu0 %3829
  %v3834 = vsel %vm525, %v3820, 0
  %v3837 = vsel %vm525, %v3822, 0
  %v3840 = vsel %vm525, %v3824, 0
  %v3842 = vsel %vm577, %v3830, 0
  %3844 = vmatprep.subr.mxu0 0.0
  %3845 = vmatpush1.msra.mxu0 0.0
  %3846 = vmatprep.subr.mxu0 0.0
  %3847 = vmatpush1.msra.mxu0 0.0
  %3848 = vmatprep.subr.mxu0 0.0
  %3849 = vmatpush1.msra.mxu0 0.0
  %3850 = vmatprep.subr.mxu0 0.0
  %3851 = vmatpush1.msra.mxu0 0.0
  %3852 = vmatprep.subr.mxu0 0.0
  %3853 = vmatpush1.msra.mxu0 0.0
  %3854 = vmatprep.subr.mxu0 0.0
  %3855 = vmatpush1.msra.mxu0 0.0
  %3856 = vmatprep.subr.mxu0 0.0
  %3857 = vmatpush1.msra.mxu0 0.0
  %3858 = vmatprep.subr.mxu0 0.0
  %3859 = vmatpush1.msra.mxu0 0.0
  %3860 = vmatprep.subr.mxu0 0.0
  %3861 = vmatpush1.msra.mxu0 0.0
  %3862 = vmatprep.subr.mxu0 0.0
  %3863 = vmatpush1.msra.mxu0 0.0
  %3864 = vmatprep.subr.mxu0 0.0
  %3865 = vmatpush1.msra.mxu0 0.0
  %3866 = vmatprep.subr.mxu0 0.0
  %3867 = vmatpush1.msra.mxu0 0.0
  %3868 = vmatprep.subr.mxu0 0.0
  %3869 = vmatpush1.msra.mxu0 0.0
  %3870 = vmatprep.subr.mxu0 0.0
  %3871 = vmatpush1.msra.mxu0 %v3842
  %3872 = vmatprep.subr.mxu0 0.0
  %3873 = vmatpush1.msra.mxu0 %v3828
  %3874 = vmatprep.subr.mxu0 0.0
  %3875 = vmatpush1.msra.mxu0 %v3826
  %3876 = vmatprep.subr.mxu0 0.0
  %3877 = vmatpush2.msra.mxu0 0.0
  %3878 = vmatprep.subr.mxu0 0.0
  %3879 = vmatpush2.msra.mxu0 0.0
  %3880 = vmatprep.subr.mxu0 0.0
  %3881 = vmatpush2.msra.mxu0 0.0
  %3882 = vmatprep.subr.mxu0 0.0
  %3883 = vmatpush2.msra.mxu0 0.0
  %3884 = vmatprep.subr.mxu0 0.0
  %3885 = vmatpush2.msra.mxu0 0.0
  %3886 = vmatprep.subr.mxu0 0.0
  %3887 = vmatpush2.msra.mxu0 0.0
  %3888 = vmatprep.subr.mxu0 0.0
  %3889 = vmatpush2.msra.mxu0 0.0
  %3890 = vmatprep.subr.mxu0 0.0
  %3891 = vmatpush2.msra.mxu0 0.0
  %3892 = vmatprep.subr.mxu0 0.0
  %3893 = vmatpush2.msra.mxu0 0.0
  %3894 = vmatprep.subr.mxu0 0.0
  %3895 = vmatpush2.msra.mxu0 0.0
  %3896 = vmatprep.subr.mxu0 0.0
  %3897 = vmatpush2.msra.mxu0 0.0
  %3898 = vmatprep.subr.mxu0 0.0
  %3899 = vmatpush2.msra.mxu0 0.0
  %3900 = vmatprep.subr.mxu0 0.0
  %3901 = vmatpush2.msra.mxu0 0.0
  %3902 = vmatprep.subr.mxu0 0.0
  %3903 = vmatpush2.msra.mxu0 0.0
  %3904 = vmatprep.subr.mxu0 0.0
  %3905 = vmatpush2.msra.mxu0 0.0
  %3906 = vmatprep.subr.mxu0 0.0
  %3907 = vmatpush2.msra.mxu0 0.0
  %3908 = vmatprep.mubr.f32.mxu0 0.0
  %3909 = vmatmul.mubr.f32.gmra.mxu0 %v3834
  %v3910 = vpop.f32.mrf.mxu0
  %v3911 = vadd.f32 0.0, %v3910
  %v3912 = vpop.f32.mrf.mxu0
  %3913 = vmatprep.mubr.f32.mxu0 0.0
  %3914 = vmatmul.mubr.f32.gmra.mxu0 %v3837
  %v3915 = vpop.f32.mrf.mxu0
  %v3916 = vadd.f32 0.0, %v3915
  %v3917 = vpop.f32.mrf.mxu0
  %3918 = vmatprep.mubr.f32.mxu0 0.0
  %3919 = vmatmul.mubr.f32.gmra.mxu0 %v3840
  %v3920 = vpop.f32.mrf.mxu0
  %v3921 = vadd.f32 0.0, %v3920
  %v3922 = vpop.f32.mrf.mxu0
  %3923 = vdwg.mxu0
  %3924 = vrot.lane.b32.xlu0 %v3213, 104
  %v3925 = vpop.permute.xlu0 %3924
  %3926 = vrot.lane.b32.xlu0 %v3214, 104
  %v3927 = vpop.permute.xlu0 %3926
  %3928 = vrot.lane.b32.xlu0 %v3215, 104
  %v3929 = vpop.permute.xlu0 %3928
  %3930 = vrot.lane.b32.xlu0 %v3190, 72
  %v3931 = vpop.permute.xlu0 %3930
  %3932 = vrot.lane.b32.xlu0 %v3195, 72
  %v3933 = vpop.permute.xlu0 %3932
  %3934 = vrot.lane.b32.xlu0 %v3200, 72
  %v3935 = vpop.permute.xlu0 %3934
  %v3936 = vsel %vm429, %v3925, 0
  %v3938 = vsel %vm429, %v3927, 0
  %v3940 = vsel %vm429, %v3929, 0
  %v3942 = vsel %vm429, %v3931, 0
  %v3944 = vsel %vm429, %v3933, 0
  %v3946 = vsel %vm429, %v3935, 0
  %3948 = vmatprep.subr.mxu0 0.0
  %3949 = vmatpush1.xpose.msra.mxu0 0.0
  %3950 = vmatprep.subr.mxu0 0.0
  %3951 = vmatpush1.xpose.msra.mxu0 0.0
  %3952 = vmatprep.subr.mxu0 0.0
  %3953 = vmatpush1.xpose.msra.mxu0 0.0
  %3954 = vmatprep.subr.mxu0 0.0
  %3955 = vmatpush1.xpose.msra.mxu0 0.0
  %3956 = vmatprep.subr.mxu0 0.0
  %3957 = vmatpush1.xpose.msra.mxu0 0.0
  %3958 = vmatprep.subr.mxu0 0.0
  %3959 = vmatpush1.xpose.msra.mxu0 0.0
  %3960 = vmatprep.subr.mxu0 0.0
  %3961 = vmatpush1.xpose.msra.mxu0 0.0
  %3962 = vmatprep.subr.mxu0 0.0
  %3963 = vmatpush1.xpose.msra.mxu0 0.0
  %3964 = vmatprep.subr.mxu0 0.0
  %3965 = vmatpush1.xpose.msra.mxu0 0.0
  %3966 = vmatprep.subr.mxu0 0.0
  %3967 = vmatpush1.xpose.msra.mxu0 0.0
  %3968 = vmatprep.subr.mxu0 0.0
  %3969 = vmatpush1.xpose.msra.mxu0 0.0
  %3970 = vmatprep.subr.mxu0 0.0
  %3971 = vmatpush1.xpose.msra.mxu0 0.0
  %3972 = vmatprep.subr.mxu0 0.0
  %3973 = vmatpush1.xpose.msra.mxu0 0.0
  %3974 = vmatprep.subr.mxu0 0.0
  %3975 = vmatpush1.xpose.msra.mxu0 %v3946
  %3976 = vmatprep.subr.mxu0 0.0
  %3977 = vmatpush1.xpose.msra.mxu0 %v3944
  %3978 = vmatprep.subr.mxu0 0.0
  %3979 = vmatpush1.xpose.msra.mxu0 %v3942
  %3980 = vmatprep.subr.mxu0 0.0
  %3981 = vmatpush2.xpose.msra.mxu0 0.0
  %3982 = vmatprep.subr.mxu0 0.0
  %3983 = vmatpush2.xpose.msra.mxu0 0.0
  %3984 = vmatprep.subr.mxu0 0.0
  %3985 = vmatpush2.xpose.msra.mxu0 0.0
  %3986 = vmatprep.subr.mxu0 0.0
  %3987 = vmatpush2.xpose.msra.mxu0 0.0
  %3988 = vmatprep.subr.mxu0 0.0
  %3989 = vmatpush2.xpose.msra.mxu0 0.0
  %3990 = vmatprep.subr.mxu0 0.0
  %3991 = vmatpush2.xpose.msra.mxu0 0.0
  %3992 = vmatprep.subr.mxu0 0.0
  %3993 = vmatpush2.xpose.msra.mxu0 0.0
  %3994 = vmatprep.subr.mxu0 0.0
  %3995 = vmatpush2.xpose.msra.mxu0 0.0
  %3996 = vmatprep.subr.mxu0 0.0
  %3997 = vmatpush2.xpose.msra.mxu0 0.0
  %3998 = vmatprep.subr.mxu0 0.0
  %3999 = vmatpush2.xpose.msra.mxu0 0.0
  %4000 = vmatprep.subr.mxu0 0.0
  %4001 = vmatpush2.xpose.msra.mxu0 0.0
  %4002 = vmatprep.subr.mxu0 0.0
  %4003 = vmatpush2.xpose.msra.mxu0 0.0
  %4004 = vmatprep.subr.mxu0 0.0
  %4005 = vmatpush2.xpose.msra.mxu0 0.0
  %4006 = vmatprep.subr.mxu0 0.0
  %4007 = vmatpush2.xpose.msra.mxu0 0.0
  %4008 = vmatprep.subr.mxu0 0.0
  %4009 = vmatpush2.xpose.msra.mxu0 0.0
  %4010 = vmatprep.subr.mxu0 0.0
  %4011 = vmatpush2.xpose.msra.mxu0 0.0
  %4012 = vmatprep.mubr.f32.mxu0 0.0
  %4013 = vmatmul.mubr.f32.gmra.mxu0 %v3936
  %v4014 = vpop.f32.mrf.mxu0
  %v4015 = vadd.f32 0.0, %v4014
  %v4016 = vpop.f32.mrf.mxu0
  %4017 = vmatprep.mubr.f32.mxu0 0.0
  %4018 = vmatmul.mubr.f32.gmra.mxu0 %v3938
  %v4019 = vpop.f32.mrf.mxu0
  %v4020 = vadd.f32 0.0, %v4019
  %v4021 = vpop.f32.mrf.mxu0
  %4022 = vmatprep.mubr.f32.mxu0 0.0
  %4023 = vmatmul.mubr.f32.gmra.mxu0 %v3940
  %v4024 = vpop.f32.mrf.mxu0
  %v4025 = vadd.f32 0.0, %v4024
  %v4026 = vpop.f32.mrf.mxu0
  %4027 = vdwg.mxu0
  %v4028 = vsel %vm525, %v4015, -inf
  %4029 = vmax.xlane.f32.xlu0 %v4028
  %v4030 = vpop.xlane.xlu0 %4029
  %v4031 = vsel %vm525, %v4020, -inf
  %4032 = vmax.xlane.f32.xlu0 %v4031
  %v4033 = vpop.xlane.xlu0 %4032
  %v4034 = vsel %vm532, %v4025, -inf
  %4035 = vmax.xlane.f32.xlu0 %v4034
  %v4036 = vpop.xlane.xlu0 %4035
  %v4037 = vsub.f32 %v4015, %v4030
  %v4038 = vsub.f32 %v4020, %v4033
  %v4039 = vsub.f32 %v4025, %v4036
  %v4040 = vmul.f32 %v4037, 1.442695
  %v4041 = vpow.pop %v4040
  %v4042 = vmul.f32 %v4038, 1.442695
  %v4043 = vpow.pop %v4042
  %v4044 = vmul.f32 %v4039, 1.442695
  %v4045 = vpow.pop %v4044
  %v4046 = vsel %vm525, %v4041, 0.0
  %4047 = vadd.xlane.f32.xlu0 %v4046
  %v4048 = vpop.xlane.xlu0 %4047
  %v4049 = vsel %vm525, %v4043, 0.0
  %4050 = vadd.xlane.f32.xlu0 %v4049
  %v4051 = vpop.xlane.xlu0 %4050
  %v4052 = vsel %vm532, %v4045, 0.0
  %4053 = vadd.xlane.f32.xlu0 %v4052
  %v4054 = vpop.xlane.xlu0 %4053
  %v4055 = vrcp.pop %v4048
  %v4056 = vmul.f32 %v4041, %v4055
  %v4057 = vrcp.pop %v4051
  %v4058 = vmul.f32 %v4043, %v4057
  %v4059 = vrcp.pop %v4054
  %v4060 = vmul.f32 %v4045, %v4059
  %4061 = vrot.lane.b32.xlu0 %v3190, 40
  %v4062 = vpop.permute.xlu0 %4061
  %4063 = vrot.lane.b32.xlu0 %v3195, 40
  %v4064 = vpop.permute.xlu0 %4063
  %4065 = vrot.lane.b32.xlu0 %v3200, 40
  %v4066 = vpop.permute.xlu0 %4065
  %v4070 = vsel %vm525, %v4056, 0
  %v4073 = vsel %vm525, %v4058, 0
  %v4076 = vsel %vm525, %v4060, 0
  %v4078 = vsel %vm577, %v4066, 0
  %4080 = vmatprep.subr.mxu0 0.0
  %4081 = vmatpush1.msra.mxu0 0.0
  %4082 = vmatprep.subr.mxu0 0.0
  %4083 = vmatpush1.msra.mxu0 0.0
  %4084 = vmatprep.subr.mxu0 0.0
  %4085 = vmatpush1.msra.mxu0 0.0
  %4086 = vmatprep.subr.mxu0 0.0
  %4087 = vmatpush1.msra.mxu0 0.0
  %4088 = vmatprep.subr.mxu0 0.0
  %4089 = vmatpush1.msra.mxu0 0.0
  %4090 = vmatprep.subr.mxu0 0.0
  %4091 = vmatpush1.msra.mxu0 0.0
  %4092 = vmatprep.subr.mxu0 0.0
  %4093 = vmatpush1.msra.mxu0 0.0
  %4094 = vmatprep.subr.mxu0 0.0
  %4095 = vmatpush1.msra.mxu0 0.0
  %4096 = vmatprep.subr.mxu0 0.0
  %4097 = vmatpush1.msra.mxu0 0.0
  %4098 = vmatprep.subr.mxu0 0.0
  %4099 = vmatpush1.msra.mxu0 0.0
  %4100 = vmatprep.subr.mxu0 0.0
  %4101 = vmatpush1.msra.mxu0 0.0
  %4102 = vmatprep.subr.mxu0 0.0
  %4103 = vmatpush1.msra.mxu0 0.0
  %4104 = vmatprep.subr.mxu0 0.0
  %4105 = vmatpush1.msra.mxu0 0.0
  %4106 = vmatprep.subr.mxu0 0.0
  %4107 = vmatpush1.msra.mxu0 %v4078
  %4108 = vmatprep.subr.mxu0 0.0
  %4109 = vmatpush1.msra.mxu0 %v4064
  %4110 = vmatprep.subr.mxu0 0.0
  %4111 = vmatpush1.msra.mxu0 %v4062
  %4112 = vmatprep.subr.mxu0 0.0
  %4113 = vmatpush2.msra.mxu0 0.0
  %4114 = vmatprep.subr.mxu0 0.0
  %4115 = vmatpush2.msra.mxu0 0.0
  %4116 = vmatprep.subr.mxu0 0.0
  %4117 = vmatpush2.msra.mxu0 0.0
  %4118 = vmatprep.subr.mxu0 0.0
  %4119 = vmatpush2.msra.mxu0 0.0
  %4120 = vmatprep.subr.mxu0 0.0
  %4121 = vmatpush2.msra.mxu0 0.0
  %4122 = vmatprep.subr.mxu0 0.0
  %4123 = vmatpush2.msra.mxu0 0.0
  %4124 = vmatprep.subr.mxu0 0.0
  %4125 = vmatpush2.msra.mxu0 0.0
  %4126 = vmatprep.subr.mxu0 0.0
  %4127 = vmatpush2.msra.mxu0 0.0
  %4128 = vmatprep.subr.mxu0 0.0
  %4129 = vmatpush2.msra.mxu0 0.0
  %4130 = vmatprep.subr.mxu0 0.0
  %4131 = vmatpush2.msra.mxu0 0.0
  %4132 = vmatprep.subr.mxu0 0.0
  %4133 = vmatpush2.msra.mxu0 0.0
  %4134 = vmatprep.subr.mxu0 0.0
  %4135 = vmatpush2.msra.mxu0 0.0
  %4136 = vmatprep.subr.mxu0 0.0
  %4137 = vmatpush2.msra.mxu0 0.0
  %4138 = vmatprep.subr.mxu0 0.0
  %4139 = vmatpush2.msra.mxu0 0.0
  %4140 = vmatprep.subr.mxu0 0.0
  %4141 = vmatpush2.msra.mxu0 0.0
  %4142 = vmatprep.subr.mxu0 0.0
  %4143 = vmatpush2.msra.mxu0 0.0
  %4144 = vmatprep.mubr.f32.mxu0 0.0
  %4145 = vmatmul.mubr.f32.gmra.mxu0 %v4070
  %v4146 = vpop.f32.mrf.mxu0
  %v4147 = vadd.f32 0.0, %v4146
  %v4148 = vpop.f32.mrf.mxu0
  %4149 = vmatprep.mubr.f32.mxu0 0.0
  %4150 = vmatmul.mubr.f32.gmra.mxu0 %v4073
  %v4151 = vpop.f32.mrf.mxu0
  %v4152 = vadd.f32 0.0, %v4151
  %v4153 = vpop.f32.mrf.mxu0
  %4154 = vmatprep.mubr.f32.mxu0 0.0
  %4155 = vmatmul.mubr.f32.gmra.mxu0 %v4076
  %v4156 = vpop.f32.mrf.mxu0
  %v4157 = vadd.f32 0.0, %v4156
  %v4158 = vpop.f32.mrf.mxu0
  %4159 = vdwg.mxu0
  %4163 = vrot.lane.b32.xlu0 %v3675, 8
  %v4164 = vpop.permute.xlu0 %4163
  %4165 = vrot.lane.b32.xlu0 %v3680, 8
  %v4166 = vpop.permute.xlu0 %4165
  %4167 = vrot.lane.b32.xlu0 %v3685, 8
  %v4168 = vpop.permute.xlu0 %4167
  %4175 = vrot.lane.b32.xlu0 %v3911, 16
  %v4176 = vpop.permute.xlu0 %4175
  %4177 = vrot.lane.b32.xlu0 %v3916, 16
  %v4178 = vpop.permute.xlu0 %4177
  %4179 = vrot.lane.b32.xlu0 %v3921, 16
  %v4180 = vpop.permute.xlu0 %4179
  %4187 = vrot.lane.b32.xlu0 %v4147, 24
  %v4188 = vpop.permute.xlu0 %4187
  %4189 = vrot.lane.b32.xlu0 %v4152, 24
  %v4190 = vpop.permute.xlu0 %4189
  %4191 = vrot.lane.b32.xlu0 %v4157, 24
  %v4192 = vpop.permute.xlu0 %4191
  %v4196 = vsel %vm429, %v3439, %v4164
  %v4197 = vsel %vm429, %v3444, %v4166
  %v4198 = vsel %vm429, %v3449, %v4168
  %v4199 = vsel %vm1407, %v4196, %v4176
  %v4200 = vsel %vm1407, %v4197, %v4178
  %v4201 = vsel %vm1407, %v4198, %v4180
  %v4202 = vsel %vm1411, %v4199, %v4188
  %v4203 = vsel %vm1411, %v4200, %v4190
  %v4204 = vsel %vm1411, %v4201, %v4192
  %4205 = vst.msk [vmem:[#allocation2] sm:$0xff] %vm197, %v4202
  %4206 = vst.msk [vmem:[#allocation2 + $0x8] sm:$0xff] %vm197, %v4203
  %4207 = vst.msk [vmem:[#allocation2 + $0x10] sm:$0x1] %vm182, %v4204
  %v4208 = vmul.f32 %v3205, 0.35355338
  %v4209 = vmul.f32 %v3210, 0.35355338
  %v4212 = vrot.slane %v3215, 1
  %v4213 = vrot.slane %v4208, 1
  %v4214 = vsel %vm187, %v4212, %v4213
  %v4215 = vrot.slane %v4209, 1
  %v4216 = vsel %vm187, %v4213, %v4215
  %v4219 = vrot.slane %v3200, 1
  %v4220 = vrot.slane %v3205, 1
  %v4221 = vsel %vm187, %v4219, %v4220
  %v4222 = vrot.slane %v3210, 1
  %v4223 = vsel %vm187, %v4220, %v4222
  %4224 = vrot.lane.b32.xlu0 %v4221, 96
  %v4225 = vpop.permute.xlu0 %4224
  %4226 = vrot.lane.b32.xlu0 %v4223, 96
  %v4227 = vpop.permute.xlu0 %4226
  %4228 = vrot.lane.b32.xlu0 %v4222, 96
  %v4229 = vpop.permute.xlu0 %4228
  %v4230 = vsel %vm429, %v4214, 0
  %v4232 = vsel %vm429, %v4216, 0
  %v4234 = vsel %vm429, %v4215, 0
  %v4236 = vsel %vm429, %v4225, 0
  %v4238 = vsel %vm429, %v4227, 0
  %v4240 = vsel %vm429, %v4229, 0
  %4242 = vmatprep.subr.mxu0 0.0
  %4243 = vmatpush1.xpose.msra.mxu0 0.0
  %4244 = vmatprep.subr.mxu0 0.0
  %4245 = vmatpush1.xpose.msra.mxu0 0.0
  %4246 = vmatprep.subr.mxu0 0.0
  %4247 = vmatpush1.xpose.msra.mxu0 0.0
  %4248 = vmatprep.subr.mxu0 0.0
  %4249 = vmatpush1.xpose.msra.mxu0 0.0
  %4250 = vmatprep.subr.mxu0 0.0
  %4251 = vmatpush1.xpose.msra.mxu0 0.0
  %4252 = vmatprep.subr.mxu0 0.0
  %4253 = vmatpush1.xpose.msra.mxu0 0.0
  %4254 = vmatprep.subr.mxu0 0.0
  %4255 = vmatpush1.xpose.msra.mxu0 0.0
  %4256 = vmatprep.subr.mxu0 0.0
  %4257 = vmatpush1.xpose.msra.mxu0 0.0
  %4258 = vmatprep.subr.mxu0 0.0
  %4259 = vmatpush1.xpose.msra.mxu0 0.0
  %4260 = vmatprep.subr.mxu0 0.0
  %4261 = vmatpush1.xpose.msra.mxu0 0.0
  %4262 = vmatprep.subr.mxu0 0.0
  %4263 = vmatpush1.xpose.msra.mxu0 0.0
  %4264 = vmatprep.subr.mxu0 0.0
  %4265 = vmatpush1.xpose.msra.mxu0 0.0
  %4266 = vmatprep.subr.mxu0 0.0
  %4267 = vmatpush1.xpose.msra.mxu0 0.0
  %4268 = vmatprep.subr.mxu0 0.0
  %4269 = vmatpush1.xpose.msra.mxu0 %v4240
  %4270 = vmatprep.subr.mxu0 0.0
  %4271 = vmatpush1.xpose.msra.mxu0 %v4238
  %4272 = vmatprep.subr.mxu0 0.0
  %4273 = vmatpush1.xpose.msra.mxu0 %v4236
  %4274 = vmatprep.subr.mxu0 0.0
  %4275 = vmatpush2.xpose.msra.mxu0 0.0
  %4276 = vmatprep.subr.mxu0 0.0
  %4277 = vmatpush2.xpose.msra.mxu0 0.0
  %4278 = vmatprep.subr.mxu0 0.0
  %4279 = vmatpush2.xpose.msra.mxu0 0.0
  %4280 = vmatprep.subr.mxu0 0.0
  %4281 = vmatpush2.xpose.msra.mxu0 0.0
  %4282 = vmatprep.subr.mxu0 0.0
  %4283 = vmatpush2.xpose.msra.mxu0 0.0
  %4284 = vmatprep.subr.mxu0 0.0
  %4285 = vmatpush2.xpose.msra.mxu0 0.0
  %4286 = vmatprep.subr.mxu0 0.0
  %4287 = vmatpush2.xpose.msra.mxu0 0.0
  %4288 = vmatprep.subr.mxu0 0.0
  %4289 = vmatpush2.xpose.msra.mxu0 0.0
  %4290 = vmatprep.subr.mxu0 0.0
  %4291 = vmatpush2.xpose.msra.mxu0 0.0
  %4292 = vmatprep.subr.mxu0 0.0
  %4293 = vmatpush2.xpose.msra.mxu0 0.0
  %4294 = vmatprep.subr.mxu0 0.0
  %4295 = vmatpush2.xpose.msra.mxu0 0.0
  %4296 = vmatprep.subr.mxu0 0.0
  %4297 = vmatpush2.xpose.msra.mxu0 0.0
  %4298 = vmatprep.subr.mxu0 0.0
  %4299 = vmatpush2.xpose.msra.mxu0 0.0
  %4300 = vmatprep.subr.mxu0 0.0
  %4301 = vmatpush2.xpose.msra.mxu0 0.0
  %4302 = vmatprep.subr.mxu0 0.0
  %4303 = vmatpush2.xpose.msra.mxu0 0.0
  %4304 = vmatprep.subr.mxu0 0.0
  %4305 = vmatpush2.xpose.msra.mxu0 0.0
  %4306 = vmatprep.mubr.f32.mxu0 0.0
  %4307 = vmatmul.mubr.f32.gmra.mxu0 %v4230
  %v4308 = vpop.f32.mrf.mxu0
  %v4309 = vadd.f32 0.0, %v4308
  %v4310 = vpop.f32.mrf.mxu0
  %4311 = vmatprep.mubr.f32.mxu0 0.0
  %4312 = vmatmul.mubr.f32.gmra.mxu0 %v4232
  %v4313 = vpop.f32.mrf.mxu0
  %v4314 = vadd.f32 0.0, %v4313
  %v4315 = vpop.f32.mrf.mxu0
  %4316 = vmatprep.mubr.f32.mxu0 0.0
  %4317 = vmatmul.mubr.f32.gmra.mxu0 %v4234
  %v4318 = vpop.f32.mrf.mxu0
  %v4319 = vadd.f32 0.0, %v4318
  %v4320 = vpop.f32.mrf.mxu0
  %4321 = vdwg.mxu0
  %v4322 = vsel %vm525, %v4309, -inf
  %4323 = vmax.xlane.f32.xlu0 %v4322
  %v4324 = vpop.xlane.xlu0 %4323
  %v4325 = vsel %vm525, %v4314, -inf
  %4326 = vmax.xlane.f32.xlu0 %v4325
  %v4327 = vpop.xlane.xlu0 %4326
  %v4328 = vsel %vm532, %v4319, -inf
  %4329 = vmax.xlane.f32.xlu0 %v4328
  %v4330 = vpop.xlane.xlu0 %4329
  %v4331 = vsub.f32 %v4309, %v4324
  %v4332 = vsub.f32 %v4314, %v4327
  %v4333 = vsub.f32 %v4319, %v4330
  %v4334 = vmul.f32 %v4331, 1.442695
  %v4335 = vpow.pop %v4334
  %v4336 = vmul.f32 %v4332, 1.442695
  %v4337 = vpow.pop %v4336
  %v4338 = vmul.f32 %v4333, 1.442695
  %v4339 = vpow.pop %v4338
  %v4340 = vsel %vm525, %v4335, 0.0
  %4341 = vadd.xlane.f32.xlu0 %v4340
  %v4342 = vpop.xlane.xlu0 %4341
  %v4343 = vsel %vm525, %v4337, 0.0
  %4344 = vadd.xlane.f32.xlu0 %v4343
  %v4345 = vpop.xlane.xlu0 %4344
  %v4346 = vsel %vm532, %v4339, 0.0
  %4347 = vadd.xlane.f32.xlu0 %v4346
  %v4348 = vpop.xlane.xlu0 %4347
  %v4349 = vrcp.pop %v4342
  %v4350 = vmul.f32 %v4335, %v4349
  %v4351 = vrcp.pop %v4345
  %v4352 = vmul.f32 %v4337, %v4351
  %v4353 = vrcp.pop %v4348
  %v4354 = vmul.f32 %v4339, %v4353
  %4355 = vrot.lane.b32.xlu0 %v4221, 64
  %v4356 = vpop.permute.xlu0 %4355
  %4357 = vrot.lane.b32.xlu0 %v4223, 64
  %v4358 = vpop.permute.xlu0 %4357
  %4359 = vrot.lane.b32.xlu0 %v4222, 64
  %v4360 = vpop.permute.xlu0 %4359
  %v4364 = vsel %vm525, %v4350, 0
  %v4367 = vsel %vm525, %v4352, 0
  %v4370 = vsel %vm525, %v4354, 0
  %v4372 = vsel %vm577, %v4360, 0
  %4374 = vmatprep.subr.mxu0 0.0
  %4375 = vmatpush1.msra.mxu0 0.0
  %4376 = vmatprep.subr.mxu0 0.0
  %4377 = vmatpush1.msra.mxu0 0.0
  %4378 = vmatprep.subr.mxu0 0.0
  %4379 = vmatpush1.msra.mxu0 0.0
  %4380 = vmatprep.subr.mxu0 0.0
  %4381 = vmatpush1.msra.mxu0 0.0
  %4382 = vmatprep.subr.mxu0 0.0
  %4383 = vmatpush1.msra.mxu0 0.0
  %4384 = vmatprep.subr.mxu0 0.0
  %4385 = vmatpush1.msra.mxu0 0.0
  %4386 = vmatprep.subr.mxu0 0.0
  %4387 = vmatpush1.msra.mxu0 0.0
  %4388 = vmatprep.subr.mxu0 0.0
  %4389 = vmatpush1.msra.mxu0 0.0
  %4390 = vmatprep.subr.mxu0 0.0
  %4391 = vmatpush1.msra.mxu0 0.0
  %4392 = vmatprep.subr.mxu0 0.0
  %4393 = vmatpush1.msra.mxu0 0.0
  %4394 = vmatprep.subr.mxu0 0.0
  %4395 = vmatpush1.msra.mxu0 0.0
  %4396 = vmatprep.subr.mxu0 0.0
  %4397 = vmatpush1.msra.mxu0 0.0
  %4398 = vmatprep.subr.mxu0 0.0
  %4399 = vmatpush1.msra.mxu0 0.0
  %4400 = vmatprep.subr.mxu0 0.0
  %4401 = vmatpush1.msra.mxu0 %v4372
  %4402 = vmatprep.subr.mxu0 0.0
  %4403 = vmatpush1.msra.mxu0 %v4358
  %4404 = vmatprep.subr.mxu0 0.0
  %4405 = vmatpush1.msra.mxu0 %v4356
  %4406 = vmatprep.subr.mxu0 0.0
  %4407 = vmatpush2.msra.mxu0 0.0
  %4408 = vmatprep.subr.mxu0 0.0
  %4409 = vmatpush2.msra.mxu0 0.0
  %4410 = vmatprep.subr.mxu0 0.0
  %4411 = vmatpush2.msra.mxu0 0.0
  %4412 = vmatprep.subr.mxu0 0.0
  %4413 = vmatpush2.msra.mxu0 0.0
  %4414 = vmatprep.subr.mxu0 0.0
  %4415 = vmatpush2.msra.mxu0 0.0
  %4416 = vmatprep.subr.mxu0 0.0
  %4417 = vmatpush2.msra.mxu0 0.0
  %4418 = vmatprep.subr.mxu0 0.0
  %4419 = vmatpush2.msra.mxu0 0.0
  %4420 = vmatprep.subr.mxu0 0.0
  %4421 = vmatpush2.msra.mxu0 0.0
  %4422 = vmatprep.subr.mxu0 0.0
  %4423 = vmatpush2.msra.mxu0 0.0
  %4424 = vmatprep.subr.mxu0 0.0
  %4425 = vmatpush2.msra.mxu0 0.0
  %4426 = vmatprep.subr.mxu0 0.0
  %4427 = vmatpush2.msra.mxu0 0.0
  %4428 = vmatprep.subr.mxu0 0.0
  %4429 = vmatpush2.msra.mxu0 0.0
  %4430 = vmatprep.subr.mxu0 0.0
  %4431 = vmatpush2.msra.mxu0 0.0
  %4432 = vmatprep.subr.mxu0 0.0
  %4433 = vmatpush2.msra.mxu0 0.0
  %4434 = vmatprep.subr.mxu0 0.0
  %4435 = vmatpush2.msra.mxu0 0.0
  %4436 = vmatprep.subr.mxu0 0.0
  %4437 = vmatpush2.msra.mxu0 0.0
  %4438 = vmatprep.mubr.f32.mxu0 0.0
  %4439 = vmatmul.mubr.f32.gmra.mxu0 %v4364
  %v4440 = vpop.f32.mrf.mxu0
  %v4441 = vadd.f32 0.0, %v4440
  %v4442 = vpop.f32.mrf.mxu0
  %4443 = vmatprep.mubr.f32.mxu0 0.0
  %4444 = vmatmul.mubr.f32.gmra.mxu0 %v4367
  %v4445 = vpop.f32.mrf.mxu0
  %v4446 = vadd.f32 0.0, %v4445
  %v4447 = vpop.f32.mrf.mxu0
  %4448 = vmatprep.mubr.f32.mxu0 0.0
  %4449 = vmatmul.mubr.f32.gmra.mxu0 %v4370
  %v4450 = vpop.f32.mrf.mxu0
  %v4451 = vadd.f32 0.0, %v4450
  %v4452 = vpop.f32.mrf.mxu0
  %4453 = vdwg.mxu0
  %4454 = vrot.lane.b32.xlu0 %v4214, 120
  %v4455 = vpop.permute.xlu0 %4454
  %4456 = vrot.lane.b32.xlu0 %v4216, 120
  %v4457 = vpop.permute.xlu0 %4456
  %4458 = vrot.lane.b32.xlu0 %v4215, 120
  %v4459 = vpop.permute.xlu0 %4458
  %4460 = vrot.lane.b32.xlu0 %v4221, 88
  %v4461 = vpop.permute.xlu0 %4460
  %4462 = vrot.lane.b32.xlu0 %v4223, 88
  %v4463 = vpop.permute.xlu0 %4462
  %4464 = vrot.lane.b32.xlu0 %v4222, 88
  %v4465 = vpop.permute.xlu0 %4464
  %v4466 = vsel %vm429, %v4455, 0
  %v4468 = vsel %vm429, %v4457, 0
  %v4470 = vsel %vm429, %v4459, 0
  %v4472 = vsel %vm429, %v4461, 0
  %v4474 = vsel %vm429, %v4463, 0
  %v4476 = vsel %vm429, %v4465, 0
  %4478 = vmatprep.subr.mxu0 0.0
  %4479 = vmatpush1.xpose.msra.mxu0 0.0
  %4480 = vmatprep.subr.mxu0 0.0
  %4481 = vmatpush1.xpose.msra.mxu0 0.0
  %4482 = vmatprep.subr.mxu0 0.0
  %4483 = vmatpush1.xpose.msra.mxu0 0.0
  %4484 = vmatprep.subr.mxu0 0.0
  %4485 = vmatpush1.xpose.msra.mxu0 0.0
  %4486 = vmatprep.subr.mxu0 0.0
  %4487 = vmatpush1.xpose.msra.mxu0 0.0
  %4488 = vmatprep.subr.mxu0 0.0
  %4489 = vmatpush1.xpose.msra.mxu0 0.0
  %4490 = vmatprep.subr.mxu0 0.0
  %4491 = vmatpush1.xpose.msra.mxu0 0.0
  %4492 = vmatprep.subr.mxu0 0.0
  %4493 = vmatpush1.xpose.msra.mxu0 0.0
  %4494 = vmatprep.subr.mxu0 0.0
  %4495 = vmatpush1.xpose.msra.mxu0 0.0
  %4496 = vmatprep.subr.mxu0 0.0
  %4497 = vmatpush1.xpose.msra.mxu0 0.0
  %4498 = vmatprep.subr.mxu0 0.0
  %4499 = vmatpush1.xpose.msra.mxu0 0.0
  %4500 = vmatprep.subr.mxu0 0.0
  %4501 = vmatpush1.xpose.msra.mxu0 0.0
  %4502 = vmatprep.subr.mxu0 0.0
  %4503 = vmatpush1.xpose.msra.mxu0 0.0
  %4504 = vmatprep.subr.mxu0 0.0
  %4505 = vmatpush1.xpose.msra.mxu0 %v4476
  %4506 = vmatprep.subr.mxu0 0.0
  %4507 = vmatpush1.xpose.msra.mxu0 %v4474
  %4508 = vmatprep.subr.mxu0 0.0
  %4509 = vmatpush1.xpose.msra.mxu0 %v4472
  %4510 = vmatprep.subr.mxu0 0.0
  %4511 = vmatpush2.xpose.msra.mxu0 0.0
  %4512 = vmatprep.subr.mxu0 0.0
  %4513 = vmatpush2.xpose.msra.mxu0 0.0
  %4514 = vmatprep.subr.mxu0 0.0
  %4515 = vmatpush2.xpose.msra.mxu0 0.0
  %4516 = vmatprep.subr.mxu0 0.0
  %4517 = vmatpush2.xpose.msra.mxu0 0.0
  %4518 = vmatprep.subr.mxu0 0.0
  %4519 = vmatpush2.xpose.msra.mxu0 0.0
  %4520 = vmatprep.subr.mxu0 0.0
  %4521 = vmatpush2.xpose.msra.mxu0 0.0
  %4522 = vmatprep.subr.mxu0 0.0
  %4523 = vmatpush2.xpose.msra.mxu0 0.0
  %4524 = vmatprep.subr.mxu0 0.0
  %4525 = vmatpush2.xpose.msra.mxu0 0.0
  %4526 = vmatprep.subr.mxu0 0.0
  %4527 = vmatpush2.xpose.msra.mxu0 0.0
  %4528 = vmatprep.subr.mxu0 0.0
  %4529 = vmatpush2.xpose.msra.mxu0 0.0
  %4530 = vmatprep.subr.mxu0 0.0
  %4531 = vmatpush2.xpose.msra.mxu0 0.0
  %4532 = vmatprep.subr.mxu0 0.0
  %4533 = vmatpush2.xpose.msra.mxu0 0.0
  %4534 = vmatprep.subr.mxu0 0.0
  %4535 = vmatpush2.xpose.msra.mxu0 0.0
  %4536 = vmatprep.subr.mxu0 0.0
  %4537 = vmatpush2.xpose.msra.mxu0 0.0
  %4538 = vmatprep.subr.mxu0 0.0
  %4539 = vmatpush2.xpose.msra.mxu0 0.0
  %4540 = vmatprep.subr.mxu0 0.0
  %4541 = vmatpush2.xpose.msra.mxu0 0.0
  %4542 = vmatprep.mubr.f32.mxu0 0.0
  %4543 = vmatmul.mubr.f32.gmra.mxu0 %v4466
  %v4544 = vpop.f32.mrf.mxu0
  %v4545 = vadd.f32 0.0, %v4544
  %v4546 = vpop.f32.mrf.mxu0
  %4547 = vmatprep.mubr.f32.mxu0 0.0
  %4548 = vmatmul.mubr.f32.gmra.mxu0 %v4468
  %v4549 = vpop.f32.mrf.mxu0
  %v4550 = vadd.f32 0.0, %v4549
  %v4551 = vpop.f32.mrf.mxu0
  %4552 = vmatprep.mubr.f32.mxu0 0.0
  %4553 = vmatmul.mubr.f32.gmra.mxu0 %v4470
  %v4554 = vpop.f32.mrf.mxu0
  %v4555 = vadd.f32 0.0, %v4554
  %v4556 = vpop.f32.mrf.mxu0
  %4557 = vdwg.mxu0
  %v4558 = vsel %vm525, %v4545, -inf
  %4559 = vmax.xlane.f32.xlu0 %v4558
  %v4560 = vpop.xlane.xlu0 %4559
  %v4561 = vsel %vm525, %v4550, -inf
  %4562 = vmax.xlane.f32.xlu0 %v4561
  %v4563 = vpop.xlane.xlu0 %4562
  %v4564 = vsel %vm532, %v4555, -inf
  %4565 = vmax.xlane.f32.xlu0 %v4564
  %v4566 = vpop.xlane.xlu0 %4565
  %v4567 = vsub.f32 %v4545, %v4560
  %v4568 = vsub.f32 %v4550, %v4563
  %v4569 = vsub.f32 %v4555, %v4566
  %v4570 = vmul.f32 %v4567, 1.442695
  %v4571 = vpow.pop %v4570
  %v4572 = vmul.f32 %v4568, 1.442695
  %v4573 = vpow.pop %v4572
  %v4574 = vmul.f32 %v4569, 1.442695
  %v4575 = vpow.pop %v4574
  %v4576 = vsel %vm525, %v4571, 0.0
  %4577 = vadd.xlane.f32.xlu0 %v4576
  %v4578 = vpop.xlane.xlu0 %4577
  %v4579 = vsel %vm525, %v4573, 0.0
  %4580 = vadd.xlane.f32.xlu0 %v4579
  %v4581 = vpop.xlane.xlu0 %4580
  %v4582 = vsel %vm532, %v4575, 0.0
  %4583 = vadd.xlane.f32.xlu0 %v4582
  %v4584 = vpop.xlane.xlu0 %4583
  %v4585 = vrcp.pop %v4578
  %v4586 = vmul.f32 %v4571, %v4585
  %v4587 = vrcp.pop %v4581
  %v4588 = vmul.f32 %v4573, %v4587
  %v4589 = vrcp.pop %v4584
  %v4590 = vmul.f32 %v4575, %v4589
  %4591 = vrot.lane.b32.xlu0 %v4221, 56
  %v4592 = vpop.permute.xlu0 %4591
  %4593 = vrot.lane.b32.xlu0 %v4223, 56
  %v4594 = vpop.permute.xlu0 %4593
  %4595 = vrot.lane.b32.xlu0 %v4222, 56
  %v4596 = vpop.permute.xlu0 %4595
  %v4600 = vsel %vm525, %v4586, 0
  %v4603 = vsel %vm525, %v4588, 0
  %v4606 = vsel %vm525, %v4590, 0
  %v4608 = vsel %vm577, %v4596, 0
  %4610 = vmatprep.subr.mxu0 0.0
  %4611 = vmatpush1.msra.mxu0 0.0
  %4612 = vmatprep.subr.mxu0 0.0
  %4613 = vmatpush1.msra.mxu0 0.0
  %4614 = vmatprep.subr.mxu0 0.0
  %4615 = vmatpush1.msra.mxu0 0.0
  %4616 = vmatprep.subr.mxu0 0.0
  %4617 = vmatpush1.msra.mxu0 0.0
  %4618 = vmatprep.subr.mxu0 0.0
  %4619 = vmatpush1.msra.mxu0 0.0
  %4620 = vmatprep.subr.mxu0 0.0
  %4621 = vmatpush1.msra.mxu0 0.0
  %4622 = vmatprep.subr.mxu0 0.0
  %4623 = vmatpush1.msra.mxu0 0.0
  %4624 = vmatprep.subr.mxu0 0.0
  %4625 = vmatpush1.msra.mxu0 0.0
  %4626 = vmatprep.subr.mxu0 0.0
  %4627 = vmatpush1.msra.mxu0 0.0
  %4628 = vmatprep.subr.mxu0 0.0
  %4629 = vmatpush1.msra.mxu0 0.0
  %4630 = vmatprep.subr.mxu0 0.0
  %4631 = vmatpush1.msra.mxu0 0.0
  %4632 = vmatprep.subr.mxu0 0.0
  %4633 = vmatpush1.msra.mxu0 0.0
  %4634 = vmatprep.subr.mxu0 0.0
  %4635 = vmatpush1.msra.mxu0 0.0
  %4636 = vmatprep.subr.mxu0 0.0
  %4637 = vmatpush1.msra.mxu0 %v4608
  %4638 = vmatprep.subr.mxu0 0.0
  %4639 = vmatpush1.msra.mxu0 %v4594
  %4640 = vmatprep.subr.mxu0 0.0
  %4641 = vmatpush1.msra.mxu0 %v4592
  %4642 = vmatprep.subr.mxu0 0.0
  %4643 = vmatpush2.msra.mxu0 0.0
  %4644 = vmatprep.subr.mxu0 0.0
  %4645 = vmatpush2.msra.mxu0 0.0
  %4646 = vmatprep.subr.mxu0 0.0
  %4647 = vmatpush2.msra.mxu0 0.0
  %4648 = vmatprep.subr.mxu0 0.0
  %4649 = vmatpush2.msra.mxu0 0.0
  %4650 = vmatprep.subr.mxu0 0.0
  %4651 = vmatpush2.msra.mxu0 0.0
  %4652 = vmatprep.subr.mxu0 0.0
  %4653 = vmatpush2.msra.mxu0 0.0
  %4654 = vmatprep.subr.mxu0 0.0
  %4655 = vmatpush2.msra.mxu0 0.0
  %4656 = vmatprep.subr.mxu0 0.0
  %4657 = vmatpush2.msra.mxu0 0.0
  %4658 = vmatprep.subr.mxu0 0.0
  %4659 = vmatpush2.msra.mxu0 0.0
  %4660 = vmatprep.subr.mxu0 0.0
  %4661 = vmatpush2.msra.mxu0 0.0
  %4662 = vmatprep.subr.mxu0 0.0
  %4663 = vmatpush2.msra.mxu0 0.0
  %4664 = vmatprep.subr.mxu0 0.0
  %4665 = vmatpush2.msra.mxu0 0.0
  %4666 = vmatprep.subr.mxu0 0.0
  %4667 = vmatpush2.msra.mxu0 0.0
  %4668 = vmatprep.subr.mxu0 0.0
  %4669 = vmatpush2.msra.mxu0 0.0
  %4670 = vmatprep.subr.mxu0 0.0
  %4671 = vmatpush2.msra.mxu0 0.0
  %4672 = vmatprep.subr.mxu0 0.0
  %4673 = vmatpush2.msra.mxu0 0.0
  %4674 = vmatprep.mubr.f32.mxu0 0.0
  %4675 = vmatmul.mubr.f32.gmra.mxu0 %v4600
  %v4676 = vpop.f32.mrf.mxu0
  %v4677 = vadd.f32 0.0, %v4676
  %v4678 = vpop.f32.mrf.mxu0
  %4679 = vmatprep.mubr.f32.mxu0 0.0
  %4680 = vmatmul.mubr.f32.gmra.mxu0 %v4603
  %v4681 = vpop.f32.mrf.mxu0
  %v4682 = vadd.f32 0.0, %v4681
  %v4683 = vpop.f32.mrf.mxu0
  %4684 = vmatprep.mubr.f32.mxu0 0.0
  %4685 = vmatmul.mubr.f32.gmra.mxu0 %v4606
  %v4686 = vpop.f32.mrf.mxu0
  %v4687 = vadd.f32 0.0, %v4686
  %v4688 = vpop.f32.mrf.mxu0
  %4689 = vdwg.mxu0
  %4690 = vrot.lane.b32.xlu0 %v4214, 112
  %v4691 = vpop.permute.xlu0 %4690
  %4692 = vrot.lane.b32.xlu0 %v4216, 112
  %v4693 = vpop.permute.xlu0 %4692
  %4694 = vrot.lane.b32.xlu0 %v4215, 112
  %v4695 = vpop.permute.xlu0 %4694
  %4696 = vrot.lane.b32.xlu0 %v4221, 80
  %v4697 = vpop.permute.xlu0 %4696
  %4698 = vrot.lane.b32.xlu0 %v4223, 80
  %v4699 = vpop.permute.xlu0 %4698
  %4700 = vrot.lane.b32.xlu0 %v4222, 80
  %v4701 = vpop.permute.xlu0 %4700
  %v4702 = vsel %vm429, %v4691, 0
  %v4704 = vsel %vm429, %v4693, 0
  %v4706 = vsel %vm429, %v4695, 0
  %v4708 = vsel %vm429, %v4697, 0
  %v4710 = vsel %vm429, %v4699, 0
  %v4712 = vsel %vm429, %v4701, 0
  %4714 = vmatprep.subr.mxu0 0.0
  %4715 = vmatpush1.xpose.msra.mxu0 0.0
  %4716 = vmatprep.subr.mxu0 0.0
  %4717 = vmatpush1.xpose.msra.mxu0 0.0
  %4718 = vmatprep.subr.mxu0 0.0
  %4719 = vmatpush1.xpose.msra.mxu0 0.0
  %4720 = vmatprep.subr.mxu0 0.0
  %4721 = vmatpush1.xpose.msra.mxu0 0.0
  %4722 = vmatprep.subr.mxu0 0.0
  %4723 = vmatpush1.xpose.msra.mxu0 0.0
  %4724 = vmatprep.subr.mxu0 0.0
  %4725 = vmatpush1.xpose.msra.mxu0 0.0
  %4726 = vmatprep.subr.mxu0 0.0
  %4727 = vmatpush1.xpose.msra.mxu0 0.0
  %4728 = vmatprep.subr.mxu0 0.0
  %4729 = vmatpush1.xpose.msra.mxu0 0.0
  %4730 = vmatprep.subr.mxu0 0.0
  %4731 = vmatpush1.xpose.msra.mxu0 0.0
  %4732 = vmatprep.subr.mxu0 0.0
  %4733 = vmatpush1.xpose.msra.mxu0 0.0
  %4734 = vmatprep.subr.mxu0 0.0
  %4735 = vmatpush1.xpose.msra.mxu0 0.0
  %4736 = vmatprep.subr.mxu0 0.0
  %4737 = vmatpush1.xpose.msra.mxu0 0.0
  %4738 = vmatprep.subr.mxu0 0.0
  %4739 = vmatpush1.xpose.msra.mxu0 0.0
  %4740 = vmatprep.subr.mxu0 0.0
  %4741 = vmatpush1.xpose.msra.mxu0 %v4712
  %4742 = vmatprep.subr.mxu0 0.0
  %4743 = vmatpush1.xpose.msra.mxu0 %v4710
  %4744 = vmatprep.subr.mxu0 0.0
  %4745 = vmatpush1.xpose.msra.mxu0 %v4708
  %4746 = vmatprep.subr.mxu0 0.0
  %4747 = vmatpush2.xpose.msra.mxu0 0.0
  %4748 = vmatprep.subr.mxu0 0.0
  %4749 = vmatpush2.xpose.msra.mxu0 0.0
  %4750 = vmatprep.subr.mxu0 0.0
  %4751 = vmatpush2.xpose.msra.mxu0 0.0
  %4752 = vmatprep.subr.mxu0 0.0
  %4753 = vmatpush2.xpose.msra.mxu0 0.0
  %4754 = vmatprep.subr.mxu0 0.0
  %4755 = vmatpush2.xpose.msra.mxu0 0.0
  %4756 = vmatprep.subr.mxu0 0.0
  %4757 = vmatpush2.xpose.msra.mxu0 0.0
  %4758 = vmatprep.subr.mxu0 0.0
  %4759 = vmatpush2.xpose.msra.mxu0 0.0
  %4760 = vmatprep.subr.mxu0 0.0
  %4761 = vmatpush2.xpose.msra.mxu0 0.0
  %4762 = vmatprep.subr.mxu0 0.0
  %4763 = vmatpush2.xpose.msra.mxu0 0.0
  %4764 = vmatprep.subr.mxu0 0.0
  %4765 = vmatpush2.xpose.msra.mxu0 0.0
  %4766 = vmatprep.subr.mxu0 0.0
  %4767 = vmatpush2.xpose.msra.mxu0 0.0
  %4768 = vmatprep.subr.mxu0 0.0
  %4769 = vmatpush2.xpose.msra.mxu0 0.0
  %4770 = vmatprep.subr.mxu0 0.0
  %4771 = vmatpush2.xpose.msra.mxu0 0.0
  %4772 = vmatprep.subr.mxu0 0.0
  %4773 = vmatpush2.xpose.msra.mxu0 0.0
  %4774 = vmatprep.subr.mxu0 0.0
  %4775 = vmatpush2.xpose.msra.mxu0 0.0
  %4776 = vmatprep.subr.mxu0 0.0
  %4777 = vmatpush2.xpose.msra.mxu0 0.0
  %4778 = vmatprep.mubr.f32.mxu0 0.0
  %4779 = vmatmul.mubr.f32.gmra.mxu0 %v4702
  %v4780 = vpop.f32.mrf.mxu0
  %v4781 = vadd.f32 0.0, %v4780
  %v4782 = vpop.f32.mrf.mxu0
  %4783 = vmatprep.mubr.f32.mxu0 0.0
  %4784 = vmatmul.mubr.f32.gmra.mxu0 %v4704
  %v4785 = vpop.f32.mrf.mxu0
  %v4786 = vadd.f32 0.0, %v4785
  %v4787 = vpop.f32.mrf.mxu0
  %4788 = vmatprep.mubr.f32.mxu0 0.0
  %4789 = vmatmul.mubr.f32.gmra.mxu0 %v4706
  %v4790 = vpop.f32.mrf.mxu0
  %v4791 = vadd.f32 0.0, %v4790
  %v4792 = vpop.f32.mrf.mxu0
  %4793 = vdwg.mxu0
  %v4794 = vsel %vm525, %v4781, -inf
  %4795 = vmax.xlane.f32.xlu0 %v4794
  %v4796 = vpop.xlane.xlu0 %4795
  %v4797 = vsel %vm525, %v4786, -inf
  %4798 = vmax.xlane.f32.xlu0 %v4797
  %v4799 = vpop.xlane.xlu0 %4798
  %v4800 = vsel %vm532, %v4791, -inf
  %4801 = vmax.xlane.f32.xlu0 %v4800
  %v4802 = vpop.xlane.xlu0 %4801
  %v4803 = vsub.f32 %v4781, %v4796
  %v4804 = vsub.f32 %v4786, %v4799
  %v4805 = vsub.f32 %v4791, %v4802
  %v4806 = vmul.f32 %v4803, 1.442695
  %v4807 = vpow.pop %v4806
  %v4808 = vmul.f32 %v4804, 1.442695
  %v4809 = vpow.pop %v4808
  %v4810 = vmul.f32 %v4805, 1.442695
  %v4811 = vpow.pop %v4810
  %v4812 = vsel %vm525, %v4807, 0.0
  %4813 = vadd.xlane.f32.xlu0 %v4812
  %v4814 = vpop.xlane.xlu0 %4813
  %v4815 = vsel %vm525, %v4809, 0.0
  %4816 = vadd.xlane.f32.xlu0 %v4815
  %v4817 = vpop.xlane.xlu0 %4816
  %v4818 = vsel %vm532, %v4811, 0.0
  %4819 = vadd.xlane.f32.xlu0 %v4818
  %v4820 = vpop.xlane.xlu0 %4819
  %v4821 = vrcp.pop %v4814
  %v4822 = vmul.f32 %v4807, %v4821
  %v4823 = vrcp.pop %v4817
  %v4824 = vmul.f32 %v4809, %v4823
  %v4825 = vrcp.pop %v4820
  %v4826 = vmul.f32 %v4811, %v4825
  %4827 = vrot.lane.b32.xlu0 %v4221, 48
  %v4828 = vpop.permute.xlu0 %4827
  %4829 = vrot.lane.b32.xlu0 %v4223, 48
  %v4830 = vpop.permute.xlu0 %4829
  %4831 = vrot.lane.b32.xlu0 %v4222, 48
  %v4832 = vpop.permute.xlu0 %4831
  %v4836 = vsel %vm525, %v4822, 0
  %v4839 = vsel %vm525, %v4824, 0
  %v4842 = vsel %vm525, %v4826, 0
  %v4844 = vsel %vm577, %v4832, 0
  %4846 = vmatprep.subr.mxu0 0.0
  %4847 = vmatpush1.msra.mxu0 0.0
  %4848 = vmatprep.subr.mxu0 0.0
  %4849 = vmatpush1.msra.mxu0 0.0
  %4850 = vmatprep.subr.mxu0 0.0
  %4851 = vmatpush1.msra.mxu0 0.0
  %4852 = vmatprep.subr.mxu0 0.0
  %4853 = vmatpush1.msra.mxu0 0.0
  %4854 = vmatprep.subr.mxu0 0.0
  %4855 = vmatpush1.msra.mxu0 0.0
  %4856 = vmatprep.subr.mxu0 0.0
  %4857 = vmatpush1.msra.mxu0 0.0
  %4858 = vmatprep.subr.mxu0 0.0
  %4859 = vmatpush1.msra.mxu0 0.0
  %4860 = vmatprep.subr.mxu0 0.0
  %4861 = vmatpush1.msra.mxu0 0.0
  %4862 = vmatprep.subr.mxu0 0.0
  %4863 = vmatpush1.msra.mxu0 0.0
  %4864 = vmatprep.subr.mxu0 0.0
  %4865 = vmatpush1.msra.mxu0 0.0
  %4866 = vmatprep.subr.mxu0 0.0
  %4867 = vmatpush1.msra.mxu0 0.0
  %4868 = vmatprep.subr.mxu0 0.0
  %4869 = vmatpush1.msra.mxu0 0.0
  %4870 = vmatprep.subr.mxu0 0.0
  %4871 = vmatpush1.msra.mxu0 0.0
  %4872 = vmatprep.subr.mxu0 0.0
  %4873 = vmatpush1.msra.mxu0 %v4844
  %4874 = vmatprep.subr.mxu0 0.0
  %4875 = vmatpush1.msra.mxu0 %v4830
  %4876 = vmatprep.subr.mxu0 0.0
  %4877 = vmatpush1.msra.mxu0 %v4828
  %4878 = vmatprep.subr.mxu0 0.0
  %4879 = vmatpush2.msra.mxu0 0.0
  %4880 = vmatprep.subr.mxu0 0.0
  %4881 = vmatpush2.msra.mxu0 0.0
  %4882 = vmatprep.subr.mxu0 0.0
  %4883 = vmatpush2.msra.mxu0 0.0
  %4884 = vmatprep.subr.mxu0 0.0
  %4885 = vmatpush2.msra.mxu0 0.0
  %4886 = vmatprep.subr.mxu0 0.0
  %4887 = vmatpush2.msra.mxu0 0.0
  %4888 = vmatprep.subr.mxu0 0.0
  %4889 = vmatpush2.msra.mxu0 0.0
  %4890 = vmatprep.subr.mxu0 0.0
  %4891 = vmatpush2.msra.mxu0 0.0
  %4892 = vmatprep.subr.mxu0 0.0
  %4893 = vmatpush2.msra.mxu0 0.0
  %4894 = vmatprep.subr.mxu0 0.0
  %4895 = vmatpush2.msra.mxu0 0.0
  %4896 = vmatprep.subr.mxu0 0.0
  %4897 = vmatpush2.msra.mxu0 0.0
  %4898 = vmatprep.subr.mxu0 0.0
  %4899 = vmatpush2.msra.mxu0 0.0
  %4900 = vmatprep.subr.mxu0 0.0
  %4901 = vmatpush2.msra.mxu0 0.0
  %4902 = vmatprep.subr.mxu0 0.0
  %4903 = vmatpush2.msra.mxu0 0.0
  %4904 = vmatprep.subr.mxu0 0.0
  %4905 = vmatpush2.msra.mxu0 0.0
  %4906 = vmatprep.subr.mxu0 0.0
  %4907 = vmatpush2.msra.mxu0 0.0
  %4908 = vmatprep.subr.mxu0 0.0
  %4909 = vmatpush2.msra.mxu0 0.0
  %4910 = vmatprep.mubr.f32.mxu0 0.0
  %4911 = vmatmul.mubr.f32.gmra.mxu0 %v4836
  %v4912 = vpop.f32.mrf.mxu0
  %v4913 = vadd.f32 0.0, %v4912
  %v4914 = vpop.f32.mrf.mxu0
  %4915 = vmatprep.mubr.f32.mxu0 0.0
  %4916 = vmatmul.mubr.f32.gmra.mxu0 %v4839
  %v4917 = vpop.f32.mrf.mxu0
  %v4918 = vadd.f32 0.0, %v4917
  %v4919 = vpop.f32.mrf.mxu0
  %4920 = vmatprep.mubr.f32.mxu0 0.0
  %4921 = vmatmul.mubr.f32.gmra.mxu0 %v4842
  %v4922 = vpop.f32.mrf.mxu0
  %v4923 = vadd.f32 0.0, %v4922
  %v4924 = vpop.f32.mrf.mxu0
  %4925 = vdwg.mxu0
  %4926 = vrot.lane.b32.xlu0 %v4214, 104
  %v4927 = vpop.permute.xlu0 %4926
  %4928 = vrot.lane.b32.xlu0 %v4216, 104
  %v4929 = vpop.permute.xlu0 %4928
  %4930 = vrot.lane.b32.xlu0 %v4215, 104
  %v4931 = vpop.permute.xlu0 %4930
  %4932 = vrot.lane.b32.xlu0 %v4221, 72
  %v4933 = vpop.permute.xlu0 %4932
  %4934 = vrot.lane.b32.xlu0 %v4223, 72
  %v4935 = vpop.permute.xlu0 %4934
  %4936 = vrot.lane.b32.xlu0 %v4222, 72
  %v4937 = vpop.permute.xlu0 %4936
  %v4938 = vsel %vm429, %v4927, 0
  %v4940 = vsel %vm429, %v4929, 0
  %v4942 = vsel %vm429, %v4931, 0
  %v4944 = vsel %vm429, %v4933, 0
  %v4946 = vsel %vm429, %v4935, 0
  %v4948 = vsel %vm429, %v4937, 0
  %4950 = vmatprep.subr.mxu0 0.0
  %4951 = vmatpush1.xpose.msra.mxu0 0.0
  %4952 = vmatprep.subr.mxu0 0.0
  %4953 = vmatpush1.xpose.msra.mxu0 0.0
  %4954 = vmatprep.subr.mxu0 0.0
  %4955 = vmatpush1.xpose.msra.mxu0 0.0
  %4956 = vmatprep.subr.mxu0 0.0
  %4957 = vmatpush1.xpose.msra.mxu0 0.0
  %4958 = vmatprep.subr.mxu0 0.0
  %4959 = vmatpush1.xpose.msra.mxu0 0.0
  %4960 = vmatprep.subr.mxu0 0.0
  %4961 = vmatpush1.xpose.msra.mxu0 0.0
  %4962 = vmatprep.subr.mxu0 0.0
  %4963 = vmatpush1.xpose.msra.mxu0 0.0
  %4964 = vmatprep.subr.mxu0 0.0
  %4965 = vmatpush1.xpose.msra.mxu0 0.0
  %4966 = vmatprep.subr.mxu0 0.0
  %4967 = vmatpush1.xpose.msra.mxu0 0.0
  %4968 = vmatprep.subr.mxu0 0.0
  %4969 = vmatpush1.xpose.msra.mxu0 0.0
  %4970 = vmatprep.subr.mxu0 0.0
  %4971 = vmatpush1.xpose.msra.mxu0 0.0
  %4972 = vmatprep.subr.mxu0 0.0
  %4973 = vmatpush1.xpose.msra.mxu0 0.0
  %4974 = vmatprep.subr.mxu0 0.0
  %4975 = vmatpush1.xpose.msra.mxu0 0.0
  %4976 = vmatprep.subr.mxu0 0.0
  %4977 = vmatpush1.xpose.msra.mxu0 %v4948
  %4978 = vmatprep.subr.mxu0 0.0
  %4979 = vmatpush1.xpose.msra.mxu0 %v4946
  %4980 = vmatprep.subr.mxu0 0.0
  %4981 = vmatpush1.xpose.msra.mxu0 %v4944
  %4982 = vmatprep.subr.mxu0 0.0
  %4983 = vmatpush2.xpose.msra.mxu0 0.0
  %4984 = vmatprep.subr.mxu0 0.0
  %4985 = vmatpush2.xpose.msra.mxu0 0.0
  %4986 = vmatprep.subr.mxu0 0.0
  %4987 = vmatpush2.xpose.msra.mxu0 0.0
  %4988 = vmatprep.subr.mxu0 0.0
  %4989 = vmatpush2.xpose.msra.mxu0 0.0
  %4990 = vmatprep.subr.mxu0 0.0
  %4991 = vmatpush2.xpose.msra.mxu0 0.0
  %4992 = vmatprep.subr.mxu0 0.0
  %4993 = vmatpush2.xpose.msra.mxu0 0.0
  %4994 = vmatprep.subr.mxu0 0.0
  %4995 = vmatpush2.xpose.msra.mxu0 0.0
  %4996 = vmatprep.subr.mxu0 0.0
  %4997 = vmatpush2.xpose.msra.mxu0 0.0
  %4998 = vmatprep.subr.mxu0 0.0
  %4999 = vmatpush2.xpose.msra.mxu0 0.0
  %5000 = vmatprep.subr.mxu0 0.0
  %5001 = vmatpush2.xpose.msra.mxu0 0.0
  %5002 = vmatprep.subr.mxu0 0.0
  %5003 = vmatpush2.xpose.msra.mxu0 0.0
  %5004 = vmatprep.subr.mxu0 0.0
  %5005 = vmatpush2.xpose.msra.mxu0 0.0
  %5006 = vmatprep.subr.mxu0 0.0
  %5007 = vmatpush2.xpose.msra.mxu0 0.0
  %5008 = vmatprep.subr.mxu0 0.0
  %5009 = vmatpush2.xpose.msra.mxu0 0.0
  %5010 = vmatprep.subr.mxu0 0.0
  %5011 = vmatpush2.xpose.msra.mxu0 0.0
  %5012 = vmatprep.subr.mxu0 0.0
  %5013 = vmatpush2.xpose.msra.mxu0 0.0
  %5014 = vmatprep.mubr.f32.mxu0 0.0
  %5015 = vmatmul.mubr.f32.gmra.mxu0 %v4938
  %v5016 = vpop.f32.mrf.mxu0
  %v5017 = vadd.f32 0.0, %v5016
  %v5018 = vpop.f32.mrf.mxu0
  %5019 = vmatprep.mubr.f32.mxu0 0.0
  %5020 = vmatmul.mubr.f32.gmra.mxu0 %v4940
  %v5021 = vpop.f32.mrf.mxu0
  %v5022 = vadd.f32 0.0, %v5021
  %v5023 = vpop.f32.mrf.mxu0
  %5024 = vmatprep.mubr.f32.mxu0 0.0
  %5025 = vmatmul.mubr.f32.gmra.mxu0 %v4942
  %v5026 = vpop.f32.mrf.mxu0
  %v5027 = vadd.f32 0.0, %v5026
  %v5028 = vpop.f32.mrf.mxu0
  %5029 = vdwg.mxu0
  %v5030 = vsel %vm525, %v5017, -inf
  %5031 = vmax.xlane.f32.xlu0 %v5030
  %v5032 = vpop.xlane.xlu0 %5031
  %v5033 = vsel %vm525, %v5022, -inf
  %5034 = vmax.xlane.f32.xlu0 %v5033
  %v5035 = vpop.xlane.xlu0 %5034
  %v5036 = vsel %vm532, %v5027, -inf
  %5037 = vmax.xlane.f32.xlu0 %v5036
  %v5038 = vpop.xlane.xlu0 %5037
  %v5039 = vsub.f32 %v5017, %v5032
  %v5040 = vsub.f32 %v5022, %v5035
  %v5041 = vsub.f32 %v5027, %v5038
  %v5042 = vmul.f32 %v5039, 1.442695
  %v5043 = vpow.pop %v5042
  %v5044 = vmul.f32 %v5040, 1.442695
  %v5045 = vpow.pop %v5044
  %v5046 = vmul.f32 %v5041, 1.442695
  %v5047 = vpow.pop %v5046
  %v5048 = vsel %vm525, %v5043, 0.0
  %5049 = vadd.xlane.f32.xlu0 %v5048
  %v5050 = vpop.xlane.xlu0 %5049
  %v5051 = vsel %vm525, %v5045, 0.0
  %5052 = vadd.xlane.f32.xlu0 %v5051
  %v5053 = vpop.xlane.xlu0 %5052
  %v5054 = vsel %vm532, %v5047, 0.0
  %5055 = vadd.xlane.f32.xlu0 %v5054
  %v5056 = vpop.xlane.xlu0 %5055
  %v5057 = vrcp.pop %v5050
  %v5058 = vmul.f32 %v5043, %v5057
  %v5059 = vrcp.pop %v5053
  %v5060 = vmul.f32 %v5045, %v5059
  %v5061 = vrcp.pop %v5056
  %v5062 = vmul.f32 %v5047, %v5061
  %5063 = vrot.lane.b32.xlu0 %v4221, 40
  %v5064 = vpop.permute.xlu0 %5063
  %5065 = vrot.lane.b32.xlu0 %v4223, 40
  %v5066 = vpop.permute.xlu0 %5065
  %5067 = vrot.lane.b32.xlu0 %v4222, 40
  %v5068 = vpop.permute.xlu0 %5067
  %v5072 = vsel %vm525, %v5058, 0
  %v5075 = vsel %vm525, %v5060, 0
  %v5078 = vsel %vm525, %v5062, 0
  %v5080 = vsel %vm577, %v5068, 0
  %5082 = vmatprep.subr.mxu0 0.0
  %5083 = vmatpush1.msra.mxu0 0.0
  %5084 = vmatprep.subr.mxu0 0.0
  %5085 = vmatpush1.msra.mxu0 0.0
  %5086 = vmatprep.subr.mxu0 0.0
  %5087 = vmatpush1.msra.mxu0 0.0
  %5088 = vmatprep.subr.mxu0 0.0
  %5089 = vmatpush1.msra.mxu0 0.0
  %5090 = vmatprep.subr.mxu0 0.0
  %5091 = vmatpush1.msra.mxu0 0.0
  %5092 = vmatprep.subr.mxu0 0.0
  %5093 = vmatpush1.msra.mxu0 0.0
  %5094 = vmatprep.subr.mxu0 0.0
  %5095 = vmatpush1.msra.mxu0 0.0
  %5096 = vmatprep.subr.mxu0 0.0
  %5097 = vmatpush1.msra.mxu0 0.0
  %5098 = vmatprep.subr.mxu0 0.0
  %5099 = vmatpush1.msra.mxu0 0.0
  %5100 = vmatprep.subr.mxu0 0.0
  %5101 = vmatpush1.msra.mxu0 0.0
  %5102 = vmatprep.subr.mxu0 0.0
  %5103 = vmatpush1.msra.mxu0 0.0
  %5104 = vmatprep.subr.mxu0 0.0
  %5105 = vmatpush1.msra.mxu0 0.0
  %5106 = vmatprep.subr.mxu0 0.0
  %5107 = vmatpush1.msra.mxu0 0.0
  %5108 = vmatprep.subr.mxu0 0.0
  %5109 = vmatpush1.msra.mxu0 %v5080
  %5110 = vmatprep.subr.mxu0 0.0
  %5111 = vmatpush1.msra.mxu0 %v5066
  %5112 = vmatprep.subr.mxu0 0.0
  %5113 = vmatpush1.msra.mxu0 %v5064
  %5114 = vmatprep.subr.mxu0 0.0
  %5115 = vmatpush2.msra.mxu0 0.0
  %5116 = vmatprep.subr.mxu0 0.0
  %5117 = vmatpush2.msra.mxu0 0.0
  %5118 = vmatprep.subr.mxu0 0.0
  %5119 = vmatpush2.msra.mxu0 0.0
  %5120 = vmatprep.subr.mxu0 0.0
  %5121 = vmatpush2.msra.mxu0 0.0
  %5122 = vmatprep.subr.mxu0 0.0
  %5123 = vmatpush2.msra.mxu0 0.0
  %5124 = vmatprep.subr.mxu0 0.0
  %5125 = vmatpush2.msra.mxu0 0.0
  %5126 = vmatprep.subr.mxu0 0.0
  %5127 = vmatpush2.msra.mxu0 0.0
  %5128 = vmatprep.subr.mxu0 0.0
  %5129 = vmatpush2.msra.mxu0 0.0
  %5130 = vmatprep.subr.mxu0 0.0
  %5131 = vmatpush2.msra.mxu0 0.0
  %5132 = vmatprep.subr.mxu0 0.0
  %5133 = vmatpush2.msra.mxu0 0.0
  %5134 = vmatprep.subr.mxu0 0.0
  %5135 = vmatpush2.msra.mxu0 0.0
  %5136 = vmatprep.subr.mxu0 0.0
  %5137 = vmatpush2.msra.mxu0 0.0
  %5138 = vmatprep.subr.mxu0 0.0
  %5139 = vmatpush2.msra.mxu0 0.0
  %5140 = vmatprep.subr.mxu0 0.0
  %5141 = vmatpush2.msra.mxu0 0.0
  %5142 = vmatprep.subr.mxu0 0.0
  %5143 = vmatpush2.msra.mxu0 0.0
  %5144 = vmatprep.subr.mxu0 0.0
  %5145 = vmatpush2.msra.mxu0 0.0
  %5146 = vmatprep.mubr.f32.mxu0 0.0
  %5147 = vmatmul.mubr.f32.gmra.mxu0 %v5072
  %v5148 = vpop.f32.mrf.mxu0
  %v5149 = vadd.f32 0.0, %v5148
  %v5150 = vpop.f32.mrf.mxu0
  %5151 = vmatprep.mubr.f32.mxu0 0.0
  %5152 = vmatmul.mubr.f32.gmra.mxu0 %v5075
  %v5153 = vpop.f32.mrf.mxu0
  %v5154 = vadd.f32 0.0, %v5153
  %v5155 = vpop.f32.mrf.mxu0
  %5156 = vmatprep.mubr.f32.mxu0 0.0
  %5157 = vmatmul.mubr.f32.gmra.mxu0 %v5078
  %v5158 = vpop.f32.mrf.mxu0
  %v5159 = vadd.f32 0.0, %v5158
  %v5160 = vpop.f32.mrf.mxu0
  %5161 = vdwg.mxu0
  %5165 = vrot.lane.b32.xlu0 %v4677, 8
  %v5166 = vpop.permute.xlu0 %5165
  %5167 = vrot.lane.b32.xlu0 %v4682, 8
  %v5168 = vpop.permute.xlu0 %5167
  %5169 = vrot.lane.b32.xlu0 %v4687, 8
  %v5170 = vpop.permute.xlu0 %5169
  %5177 = vrot.lane.b32.xlu0 %v4913, 16
  %v5178 = vpop.permute.xlu0 %5177
  %5179 = vrot.lane.b32.xlu0 %v4918, 16
  %v5180 = vpop.permute.xlu0 %5179
  %5181 = vrot.lane.b32.xlu0 %v4923, 16
  %v5182 = vpop.permute.xlu0 %5181
  %5189 = vrot.lane.b32.xlu0 %v5149, 24
  %v5190 = vpop.permute.xlu0 %5189
  %5191 = vrot.lane.b32.xlu0 %v5154, 24
  %v5192 = vpop.permute.xlu0 %5191
  %5193 = vrot.lane.b32.xlu0 %v5159, 24
  %v5194 = vpop.permute.xlu0 %5193
  %v5198 = vsel %vm429, %v4441, %v5166
  %v5199 = vsel %vm429, %v4446, %v5168
  %v5200 = vsel %vm429, %v4451, %v5170
  %v5201 = vsel %vm1407, %v5198, %v5178
  %v5202 = vsel %vm1407, %v5199, %v5180
  %v5203 = vsel %vm1407, %v5200, %v5182
  %v5204 = vsel %vm1411, %v5201, %v5190
  %v5205 = vsel %vm1411, %v5202, %v5192
  %v5206 = vsel %vm1411, %v5203, %v5194
  %5207 = vst.msk [vmem:[#allocation2 + $0x11] sm:$0xff] %vm197, %v5204
  %5208 = vst.msk [vmem:[#allocation2 + $0x19] sm:$0xff] %vm197, %v5205
  %5209 = vst.msk [vmem:[#allocation2 + $0x21] sm:$0x1] %vm182, %v5206
  %v5210 = vld [vmem:[#allocation2] sm:$0xff]
  %v5211 = vld [vmem:[#allocation2 + $0x8] sm:$0xff]
  %v5212 = vld [vmem:[#allocation2 + $0x10] sm:$0xff]
  %v5213 = vld [vmem:[#allocation2 + $0x18] sm:$0xff]
  %v5214 = vld [vmem:[#allocation2 + $0x20] sm:$0x3]
  %s5215 = scalar_lea.vmem %s9, 32
  %v5216 = vld [vmem:[%s5215] sm:$0xff]
  %v5217 = vld [vmem:[%s5215 + $0x8] sm:$0xff]
  %v5218 = vld [vmem:[%s5215 + $0x10] sm:$0xff]
  %v5219 = vld [vmem:[%s5215 + $0x18] sm:$0xff]
  %s5220 = scalar_lea.vmem %s10, 1
  %v5221 = vld [vmem:[%s5220] sm:$0x1]
  %v5223 = vlaneseq
  %v5224 = vshrl.u32 %v5223, 7
  %v5225 = vsub.s32 0, %v5224
  %v5226 = vrot.slane %v5221, %v5225
  %v5229 = vsel %vm197, %v5210, 0
  %v5232 = vsel %vm197, %v5211, 0
  %v5235 = vsel %vm197, %v5212, 0
  %v5238 = vsel %vm197, %v5213, 0
  %v5241 = vsel %vm197, %v5214, 0
  %5243 = vmatprep.subr.mxu0 0.0
  %5244 = vmatpush1.msra.mxu0 0.0
  %5245 = vmatprep.subr.mxu0 0.0
  %5246 = vmatpush1.msra.mxu0 0.0
  %5247 = vmatprep.subr.mxu0 0.0
  %5248 = vmatpush1.msra.mxu0 0.0
  %5249 = vmatprep.subr.mxu0 0.0
  %5250 = vmatpush1.msra.mxu0 0.0
  %5251 = vmatprep.subr.mxu0 0.0
  %5252 = vmatpush1.msra.mxu0 0.0
  %5253 = vmatprep.subr.mxu0 0.0
  %5254 = vmatpush1.msra.mxu0 0.0
  %5255 = vmatprep.subr.mxu0 0.0
  %5256 = vmatpush1.msra.mxu0 0.0
  %5257 = vmatprep.subr.mxu0 0.0
  %5258 = vmatpush1.msra.mxu0 0.0
  %5259 = vmatprep.subr.mxu0 0.0
  %5260 = vmatpush1.msra.mxu0 0.0
  %5261 = vmatprep.subr.mxu0 0.0
  %5262 = vmatpush1.msra.mxu0 0.0
  %5263 = vmatprep.subr.mxu0 0.0
  %5264 = vmatpush1.msra.mxu0 0.0
  %5265 = vmatprep.subr.mxu0 0.0
  %5266 = vmatpush1.msra.mxu0 0.0
  %5267 = vmatprep.subr.mxu0 0.0
  %5268 = vmatpush1.msra.mxu0 %v5219
  %5269 = vmatprep.subr.mxu0 0.0
  %5270 = vmatpush1.msra.mxu0 %v5218
  %5271 = vmatprep.subr.mxu0 0.0
  %5272 = vmatpush1.msra.mxu0 %v5217
  %5273 = vmatprep.subr.mxu0 0.0
  %5274 = vmatpush1.msra.mxu0 %v5216
  %5275 = vmatprep.subr.mxu0 0.0
  %5276 = vmatpush2.msra.mxu0 0.0
  %5277 = vmatprep.subr.mxu0 0.0
  %5278 = vmatpush2.msra.mxu0 0.0
  %5279 = vmatprep.subr.mxu0 0.0
  %5280 = vmatpush2.msra.mxu0 0.0
  %5281 = vmatprep.subr.mxu0 0.0
  %5282 = vmatpush2.msra.mxu0 0.0
  %5283 = vmatprep.subr.mxu0 0.0
  %5284 = vmatpush2.msra.mxu0 0.0
  %5285 = vmatprep.subr.mxu0 0.0
  %5286 = vmatpush2.msra.mxu0 0.0
  %5287 = vmatprep.subr.mxu0 0.0
  %5288 = vmatpush2.msra.mxu0 0.0
  %5289 = vmatprep.subr.mxu0 0.0
  %5290 = vmatpush2.msra.mxu0 0.0
  %5291 = vmatprep.subr.mxu0 0.0
  %5292 = vmatpush2.msra.mxu0 0.0
  %5293 = vmatprep.subr.mxu0 0.0
  %5294 = vmatpush2.msra.mxu0 0.0
  %5295 = vmatprep.subr.mxu0 0.0
  %5296 = vmatpush2.msra.mxu0 0.0
  %5297 = vmatprep.subr.mxu0 0.0
  %5298 = vmatpush2.msra.mxu0 0.0
  %5299 = vmatprep.subr.mxu0 0.0
  %5300 = vmatpush2.msra.mxu0 0.0
  %5301 = vmatprep.subr.mxu0 0.0
  %5302 = vmatpush2.msra.mxu0 0.0
  %5303 = vmatprep.subr.mxu0 0.0
  %5304 = vmatpush2.msra.mxu0 0.0
  %5305 = vmatprep.subr.mxu0 0.0
  %5306 = vmatpush2.msra.mxu0 0.0
  %5307 = vmatprep.mubr.f32.mxu0 0.0
  %5308 = vmatmul.mubr.f32.gmra.mxu0 %v5229
  %v5309 = vpop.f32.mrf.mxu0
  %v5310 = vadd.f32 %v5226, %v5309
  %v5311 = vpop.f32.mrf.mxu0
  %5312 = vmatprep.mubr.f32.mxu0 0.0
  %5313 = vmatmul.mubr.f32.gmra.mxu0 %v5232
  %v5314 = vpop.f32.mrf.mxu0
  %v5315 = vadd.f32 %v5226, %v5314
  %v5316 = vpop.f32.mrf.mxu0
  %5317 = vmatprep.mubr.f32.mxu0 0.0
  %5318 = vmatmul.mubr.f32.gmra.mxu0 %v5235
  %v5319 = vpop.f32.mrf.mxu0
  %v5320 = vadd.f32 %v5226, %v5319
  %v5321 = vpop.f32.mrf.mxu0
  %5322 = vmatprep.mubr.f32.mxu0 0.0
  %5323 = vmatmul.mubr.f32.gmra.mxu0 %v5238
  %v5324 = vpop.f32.mrf.mxu0
  %v5325 = vadd.f32 %v5226, %v5324
  %v5326 = vpop.f32.mrf.mxu0
  %5327 = vmatprep.mubr.f32.mxu0 0.0
  %5328 = vmatmul.mubr.f32.gmra.mxu0 %v5241
  %v5329 = vpop.f32.mrf.mxu0
  %v5330 = vadd.f32 %v5226, %v5329
  %v5331 = vpop.f32.mrf.mxu0
  %5332 = vdwg.mxu0
  %v5333 = vadd.f32 %v2999, %v5310
  %v5334 = vadd.f32 %v3000, %v5315
  %v5335 = vadd.f32 %v3001, %v5320
  %v5336 = vadd.f32 %v3002, %v5325
  %v5337 = vadd.f32 %v3003, %v5330
  %s5338 = scalar_lea.vmem %s11, 1
  %v5339 = vld [vmem:[%s5338] sm:$0x1]
  %s5340 = scalar_lea.vmem %s12, 1
  %v5341 = vld [vmem:[%s5340] sm:$0x1]
  %v5342 = vsel %vm197, %v5333, 0.0
  %5343 = vadd.xlane.f32.xlu0 %v5342
  %v5344 = vpop.xlane.xlu0 %5343
  %v5345 = vsel %vm197, %v5334, 0.0
  %5346 = vadd.xlane.f32.xlu0 %v5345
  %v5347 = vpop.xlane.xlu0 %5346
  %v5348 = vsel %vm197, %v5335, 0.0
  %5349 = vadd.xlane.f32.xlu0 %v5348
  %v5350 = vpop.xlane.xlu0 %5349
  %v5351 = vsel %vm197, %v5336, 0.0
  %5352 = vadd.xlane.f32.xlu0 %v5351
  %v5353 = vpop.xlane.xlu0 %5352
  %v5354 = vsel %vm224, %v5337, 0.0
  %5355 = vadd.xlane.f32.xlu0 %v5354
  %v5356 = vpop.xlane.xlu0 %5355
  %v5357 = vmul.f32 %v5344, %v228
  %v5358 = vmul.f32 %v5347, %v228
  %v5359 = vmul.f32 %v5350, %v228
  %v5360 = vmul.f32 %v5353, %v228
  %v5361 = vmul.f32 %v5356, %v228
  %v5362 = vsub.f32 %v5333, %v5357
  %v5363 = vsub.f32 %v5334, %v5358
  %v5364 = vsub.f32 %v5335, %v5359
  %v5365 = vsub.f32 %v5336, %v5360
  %v5366 = vsub.f32 %v5337, %v5361
  %v5367 = vmul.f32 %v5362, %v5362
  %v5368 = vmul.f32 %v5363, %v5363
  %v5369 = vmul.f32 %v5364, %v5364
  %v5370 = vmul.f32 %v5365, %v5365
  %v5371 = vmul.f32 %v5366, %v5366
  %v5372 = vsel %vm197, %v5367, 0.0
  %5373 = vadd.xlane.f32.xlu0 %v5372
  %v5374 = vpop.xlane.xlu0 %5373
  %v5375 = vsel %vm197, %v5368, 0.0
  %5376 = vadd.xlane.f32.xlu0 %v5375
  %v5377 = vpop.xlane.xlu0 %5376
  %v5378 = vsel %vm197, %v5369, 0.0
  %5379 = vadd.xlane.f32.xlu0 %v5378
  %v5380 = vpop.xlane.xlu0 %5379
  %v5381 = vsel %vm197, %v5370, 0.0
  %5382 = vadd.xlane.f32.xlu0 %v5381
  %v5383 = vpop.xlane.xlu0 %5382
  %v5384 = vsel %vm224, %v5371, 0.0
  %5385 = vadd.xlane.f32.xlu0 %v5384
  %v5386 = vpop.xlane.xlu0 %5385
  %v5387 = vmul.f32 %v5374, %v228
  %v5388 = vmul.f32 %v5377, %v228
  %v5389 = vmul.f32 %v5380, %v228
  %v5390 = vmul.f32 %v5383, %v228
  %v5391 = vmul.f32 %v5386, %v228
  %v5392 = vadd.f32 %v5387, 1e-06
  %v5393 = vadd.f32 %v5388, 1e-06
  %v5394 = vadd.f32 %v5389, 1e-06
  %v5395 = vadd.f32 %v5390, 1e-06
  %v5396 = vadd.f32 %v5391, 1e-06
  %v5397 = vrsqrt.pop %v5392
  %v5398 = vrsqrt.pop %v5393
  %v5399 = vrsqrt.pop %v5394
  %v5400 = vrsqrt.pop %v5395
  %v5401 = vrsqrt.pop %v5396
  %v5402 = vmul.f32 %v5362, %v5397
  %v5403 = vmul.f32 %v5363, %v5398
  %v5404 = vmul.f32 %v5364, %v5399
  %v5405 = vmul.f32 %v5365, %v5400
  %v5406 = vmul.f32 %v5366, %v5401
  %v5408 = vlaneseq
  %v5409 = vshrl.u32 %v5408, 7
  %v5410 = vsub.s32 0, %v5409
  %v5411 = vrot.slane %v5339, %v5410
  %v5413 = vmul.f32 %v5402, %v5411
  %v5414 = vmul.f32 %v5403, %v5411
  %v5415 = vmul.f32 %v5404, %v5411
  %v5416 = vmul.f32 %v5405, %v5411
  %v5417 = vmul.f32 %v5406, %v5411
  %v5419 = vlaneseq
  %v5420 = vshrl.u32 %v5419, 7
  %v5421 = vsub.s32 0, %v5420
  %v5422 = vrot.slane %v5341, %v5421
  %v5424 = vadd.f32 %v5413, %v5422
  %v5425 = vadd.f32 %v5414, %v5422
  %v5426 = vadd.f32 %v5415, %v5422
  %v5427 = vadd.f32 %v5416, %v5422
  %v5428 = vadd.f32 %v5417, %v5422
  %s5429 = scalar_lea.vmem %s13, 32
  %v5430 = vld [vmem:[%s5429] sm:$0xff]
  %v5431 = vld [vmem:[%s5429 + $0x8] sm:$0xff]
  %v5432 = vld [vmem:[%s5429 + $0x10] sm:$0xff]
  %v5433 = vld [vmem:[%s5429 + $0x18] sm:$0xff]
  %s5434 = scalar_lea.vmem %s14, 1
  %v5435 = vld [vmem:[%s5434] sm:$0x1]
  %v5437 = vlaneseq
  %v5438 = vshrl.u32 %v5437, 7
  %v5439 = vsub.s32 0, %v5438
  %v5440 = vrot.slane %v5435, %v5439
  %v5443 = vsel %vm197, %v5424, 0
  %v5446 = vsel %vm197, %v5425, 0
  %v5449 = vsel %vm197, %v5426, 0
  %v5452 = vsel %vm197, %v5427, 0
  %v5455 = vsel %vm197, %v5428, 0
  %5457 = vmatprep.subr.mxu0 0.0
  %5458 = vmatpush1.msra.mxu0 0.0
  %5459 = vmatprep.subr.mxu0 0.0
  %5460 = vmatpush1.msra.mxu0 0.0
  %5461 = vmatprep.subr.mxu0 0.0
  %5462 = vmatpush1.msra.mxu0 0.0
  %5463 = vmatprep.subr.mxu0 0.0
  %5464 = vmatpush1.msra.mxu0 0.0
  %5465 = vmatprep.subr.mxu0 0.0
  %5466 = vmatpush1.msra.mxu0 0.0
  %5467 = vmatprep.subr.mxu0 0.0
  %5468 = vmatpush1.msra.mxu0 0.0
  %5469 = vmatprep.subr.mxu0 0.0
  %5470 = vmatpush1.msra.mxu0 0.0
  %5471 = vmatprep.subr.mxu0 0.0
  %5472 = vmatpush1.msra.mxu0 0.0
  %5473 = vmatprep.subr.mxu0 0.0
  %5474 = vmatpush1.msra.mxu0 0.0
  %5475 = vmatprep.subr.mxu0 0.0
  %5476 = vmatpush1.msra.mxu0 0.0
  %5477 = vmatprep.subr.mxu0 0.0
  %5478 = vmatpush1.msra.mxu0 0.0
  %5479 = vmatprep.subr.mxu0 0.0
  %5480 = vmatpush1.msra.mxu0 0.0
  %5481 = vmatprep.subr.mxu0 0.0
  %5482 = vmatpush1.msra.mxu0 %v5433
  %5483 = vmatprep.subr.mxu0 0.0
  %5484 = vmatpush1.msra.mxu0 %v5432
  %5485 = vmatprep.subr.mxu0 0.0
  %5486 = vmatpush1.msra.mxu0 %v5431
  %5487 = vmatprep.subr.mxu0 0.0
  %5488 = vmatpush1.msra.mxu0 %v5430
  %5489 = vmatprep.subr.mxu0 0.0
  %5490 = vmatpush2.msra.mxu0 0.0
  %5491 = vmatprep.subr.mxu0 0.0
  %5492 = vmatpush2.msra.mxu0 0.0
  %5493 = vmatprep.subr.mxu0 0.0
  %5494 = vmatpush2.msra.mxu0 0.0
  %5495 = vmatprep.subr.mxu0 0.0
  %5496 = vmatpush2.msra.mxu0 0.0
  %5497 = vmatprep.subr.mxu0 0.0
  %5498 = vmatpush2.msra.mxu0 0.0
  %5499 = vmatprep.subr.mxu0 0.0
  %5500 = vmatpush2.msra.mxu0 0.0
  %5501 = vmatprep.subr.mxu0 0.0
  %5502 = vmatpush2.msra.mxu0 0.0
  %5503 = vmatprep.subr.mxu0 0.0
  %5504 = vmatpush2.msra.mxu0 0.0
  %5505 = vmatprep.subr.mxu0 0.0
  %5506 = vmatpush2.msra.mxu0 0.0
  %5507 = vmatprep.subr.mxu0 0.0
  %5508 = vmatpush2.msra.mxu0 0.0
  %5509 = vmatprep.subr.mxu0 0.0
  %5510 = vmatpush2.msra.mxu0 0.0
  %5511 = vmatprep.subr.mxu0 0.0
  %5512 = vmatpush2.msra.mxu0 0.0
  %5513 = vmatprep.subr.mxu0 0.0
  %5514 = vmatpush2.msra.mxu0 0.0
  %5515 = vmatprep.subr.mxu0 0.0
  %5516 = vmatpush2.msra.mxu0 0.0
  %5517 = vmatprep.subr.mxu0 0.0
  %5518 = vmatpush2.msra.mxu0 0.0
  %5519 = vmatprep.subr.mxu0 0.0
  %5520 = vmatpush2.msra.mxu0 0.0
  %5521 = vmatprep.mubr.f32.mxu0 0.0
  %5522 = vmatmul.mubr.f32.gmra.mxu0 %v5443
  %v5523 = vpop.f32.mrf.mxu0
  %v5524 = vadd.f32 %v5440, %v5523
  %v5525 = vpop.f32.mrf.mxu0
  %5526 = vmatprep.mubr.f32.mxu0 0.0
  %5527 = vmatmul.mubr.f32.gmra.mxu0 %v5446
  %v5528 = vpop.f32.mrf.mxu0
  %v5529 = vadd.f32 %v5440, %v5528
  %v5530 = vpop.f32.mrf.mxu0
  %5531 = vmatprep.mubr.f32.mxu0 0.0
  %5532 = vmatmul.mubr.f32.gmra.mxu0 %v5449
  %v5533 = vpop.f32.mrf.mxu0
  %v5534 = vadd.f32 %v5440, %v5533
  %v5535 = vpop.f32.mrf.mxu0
  %5536 = vmatprep.mubr.f32.mxu0 0.0
  %5537 = vmatmul.mubr.f32.gmra.mxu0 %v5452
  %v5538 = vpop.f32.mrf.mxu0
  %v5539 = vadd.f32 %v5440, %v5538
  %v5540 = vpop.f32.mrf.mxu0
  %5541 = vmatprep.mubr.f32.mxu0 0.0
  %5542 = vmatmul.mubr.f32.gmra.mxu0 %v5455
  %v5543 = vpop.f32.mrf.mxu0
  %v5544 = vadd.f32 %v5440, %v5543
  %v5545 = vpop.f32.mrf.mxu0
  %5546 = vdwg.mxu0
  %v5547 = vmul.f32 %v5524, 0.5
  %v5548 = vmul.f32 %v5529, 0.5
  %v5549 = vmul.f32 %v5534, 0.5
  %v5550 = vmul.f32 %v5539, 0.5
  %v5551 = vmul.f32 %v5544, 0.5
  %v5552 = vmul.f32 %v5524, 0.70710677
  %v5553 = vmul.f32 %v5529, 0.70710677
  %v5554 = vmul.f32 %v5534, 0.70710677
  %v5555 = vmul.f32 %v5539, 0.70710677
  %v5556 = vmul.f32 %v5544, 0.70710677
  %vm5557 = vcmp.ge.f32.partialorder %v5552, 0.0
  %vm5558 = vcmp.ge.f32.partialorder %v5553, 0.0
  %vm5559 = vcmp.ge.f32.partialorder %v5554, 0.0
  %vm5560 = vcmp.ge.f32.partialorder %v5555, 0.0
  %vm5561 = vcmp.ge.f32.partialorder %v5556, 0.0
  %v5562 = vsel %vm5557, 1.0, -1.0
  %v5563 = vsel %vm5558, 1.0, -1.0
  %v5564 = vsel %vm5559, 1.0, -1.0
  %v5565 = vsel %vm5560, 1.0, -1.0
  %v5566 = vsel %vm5561, 1.0, -1.0
  %v5567 = vand.u32 2147483647, %v5552
  %v5568 = vand.u32 2147483647, %v5553
  %v5569 = vand.u32 2147483647, %v5554
  %v5570 = vand.u32 2147483647, %v5555
  %v5571 = vand.u32 2147483647, %v5556
  %v5572 = vmul.f32 %v5567, 0.3275911
  %v5573 = vmul.f32 %v5568, 0.3275911
  %v5574 = vmul.f32 %v5569, 0.3275911
  %v5575 = vmul.f32 %v5570, 0.3275911
  %v5576 = vmul.f32 %v5571, 0.3275911
  %v5577 = vadd.f32 %v5572, 1.0
  %v5578 = vadd.f32 %v5573, 1.0
  %v5579 = vadd.f32 %v5574, 1.0
  %v5580 = vadd.f32 %v5575, 1.0
  %v5581 = vadd.f32 %v5576, 1.0
  %v5582 = vrcp.pop %v5577
  %v5583 = vmul.f32 1.0, %v5582
  %v5584 = vrcp.pop %v5578
  %v5585 = vmul.f32 1.0, %v5584
  %v5586 = vrcp.pop %v5579
  %v5587 = vmul.f32 1.0, %v5586
  %v5588 = vrcp.pop %v5580
  %v5589 = vmul.f32 1.0, %v5588
  %v5590 = vrcp.pop %v5581
  %v5591 = vmul.f32 1.0, %v5590
  %v5592 = vmul.f32 %v5583, 1.0614054
  %v5593 = vmul.f32 %v5585, 1.0614054
  %v5594 = vmul.f32 %v5587, 1.0614054
  %v5595 = vmul.f32 %v5589, 1.0614054
  %v5596 = vmul.f32 %v5591, 1.0614054
  %v5597 = vadd.f32 %v5592, -1.4531521
  %v5598 = vadd.f32 %v5593, -1.4531521
  %v5599 = vadd.f32 %v5594, -1.4531521
  %v5600 = vadd.f32 %v5595, -1.4531521
  %v5601 = vadd.f32 %v5596, -1.4531521
  %v5602 = vmul.f32 %v5597, %v5583
  %v5603 = vmul.f32 %v5598, %v5585
  %v5604 = vmul.f32 %v5599, %v5587
  %v5605 = vmul.f32 %v5600, %v5589
  %v5606 = vmul.f32 %v5601, %v5591
  %v5607 = vadd.f32 %v5602, 1.4214138
  %v5608 = vadd.f32 %v5603, 1.4214138
  %v5609 = vadd.f32 %v5604, 1.4214138
  %v5610 = vadd.f32 %v5605, 1.4214138
  %v5611 = vadd.f32 %v5606, 1.4214138
  %v5612 = vmul.f32 %v5607, %v5583
  %v5613 = vmul.f32 %v5608, %v5585
  %v5614 = vmul.f32 %v5609, %v5587
  %v5615 = vmul.f32 %v5610, %v5589
  %v5616 = vmul.f32 %v5611, %v5591
  %v5617 = vadd.f32 %v5612, -0.28449672
  %v5618 = vadd.f32 %v5613, -0.28449672
  %v5619 = vadd.f32 %v5614, -0.28449672
  %v5620 = vadd.f32 %v5615, -0.28449672
  %v5621 = vadd.f32 %v5616, -0.28449672
  %v5622 = vmul.f32 %v5617, %v5583
  %v5623 = vmul.f32 %v5618, %v5585
  %v5624 = vmul.f32 %v5619, %v5587
  %v5625 = vmul.f32 %v5620, %v5589
  %v5626 = vmul.f32 %v5621, %v5591
  %v5627 = vadd.f32 %v5622, 0.2548296
  %v5628 = vadd.f32 %v5623, 0.2548296
  %v5629 = vadd.f32 %v5624, 0.2548296
  %v5630 = vadd.f32 %v5625, 0.2548296
  %v5631 = vadd.f32 %v5626, 0.2548296
  %v5632 = vmul.f32 %v5627, %v5583
  %v5633 = vmul.f32 %v5628, %v5585
  %v5634 = vmul.f32 %v5629, %v5587
  %v5635 = vmul.f32 %v5630, %v5589
  %v5636 = vmul.f32 %v5631, %v5591
  %v5637 = vsub.f32 0.0, %v5567
  %v5638 = vsub.f32 0.0, %v5568
  %v5639 = vsub.f32 0.0, %v5569
  %v5640 = vsub.f32 0.0, %v5570
  %v5641 = vsub.f32 0.0, %v5571
  %v5642 = vmul.f32 %v5637, %v5567
  %v5643 = vmul.f32 %v5638, %v5568
  %v5644 = vmul.f32 %v5639, %v5569
  %v5645 = vmul.f32 %v5640, %v5570
  %v5646 = vmul.f32 %v5641, %v5571
  %v5647 = vmul.f32 %v5642, 1.442695
  %v5648 = vpow.pop %v5647
  %v5649 = vmul.f32 %v5643, 1.442695
  %v5650 = vpow.pop %v5649
  %v5651 = vmul.f32 %v5644, 1.442695
  %v5652 = vpow.pop %v5651
  %v5653 = vmul.f32 %v5645, 1.442695
  %v5654 = vpow.pop %v5653
  %v5655 = vmul.f32 %v5646, 1.442695
  %v5656 = vpow.pop %v5655
  %v5657 = vmul.f32 %v5632, %v5648
  %v5658 = vmul.f32 %v5633, %v5650
  %v5659 = vmul.f32 %v5634, %v5652
  %v5660 = vmul.f32 %v5635, %v5654
  %v5661 = vmul.f32 %v5636, %v5656
  %v5662 = vsub.f32 1.0, %v5657
  %v5663 = vsub.f32 1.0, %v5658
  %v5664 = vsub.f32 1.0, %v5659
  %v5665 = vsub.f32 1.0, %v5660
  %v5666 = vsub.f32 1.0, %v5661
  %v5667 = vmul.f32 %v5562, %v5662
  %v5668 = vmul.f32 %v5563, %v5663
  %v5669 = vmul.f32 %v5564, %v5664
  %v5670 = vmul.f32 %v5565, %v5665
  %v5671 = vmul.f32 %v5566, %v5666
  %v5672 = vadd.f32 %v5667, 1.0
  %v5673 = vadd.f32 %v5668, 1.0
  %v5674 = vadd.f32 %v5669, 1.0
  %v5675 = vadd.f32 %v5670, 1.0
  %v5676 = vadd.f32 %v5671, 1.0
  %v5677 = vmul.f32 %v5547, %v5672
  %v5678 = vmul.f32 %v5548, %v5673
  %v5679 = vmul.f32 %v5549, %v5674
  %v5680 = vmul.f32 %v5550, %v5675
  %v5681 = vmul.f32 %v5551, %v5676
  %s5682 = scalar_lea.vmem %s15, 128
  %v5683 = vld [vmem:[%s5682] sm:$0xff]
  %v5684 = vld [vmem:[%s5682 + $0x8] sm:$0xff]
  %v5685 = vld [vmem:[%s5682 + $0x10] sm:$0xff]
  %v5686 = vld [vmem:[%s5682 + $0x18] sm:$0xff]
  %v5687 = vld [vmem:[%s5682 + $0x20] sm:$0xff]
  %v5688 = vld [vmem:[%s5682 + $0x28] sm:$0xff]
  %v5689 = vld [vmem:[%s5682 + $0x30] sm:$0xff]
  %v5690 = vld [vmem:[%s5682 + $0x38] sm:$0xff]
  %v5691 = vld [vmem:[%s5682 + $0x40] sm:$0xff]
  %v5692 = vld [vmem:[%s5682 + $0x48] sm:$0xff]
  %v5693 = vld [vmem:[%s5682 + $0x50] sm:$0xff]
  %v5694 = vld [vmem:[%s5682 + $0x58] sm:$0xff]
  %v5695 = vld [vmem:[%s5682 + $0x60] sm:$0xff]
  %v5696 = vld [vmem:[%s5682 + $0x68] sm:$0xff]
  %v5697 = vld [vmem:[%s5682 + $0x70] sm:$0xff]
  %v5698 = vld [vmem:[%s5682 + $0x78] sm:$0xff]
  %s5699 = scalar_lea.vmem %s16, 1
  %v5700 = vld [vmem:[%s5699] sm:$0x1]
  %v5702 = vlaneseq
  %v5703 = vshrl.u32 %v5702, 7
  %v5704 = vsub.s32 0, %v5703
  %v5705 = vrot.slane %v5700, %v5704
  %5707 = vmatprep.subr.mxu0 0.0
  %5708 = vmatpush1.msra.mxu0 %v5698
  %5709 = vmatprep.subr.mxu0 0.0
  %5710 = vmatpush1.msra.mxu0 %v5697
  %5711 = vmatprep.subr.mxu0 0.0
  %5712 = vmatpush1.msra.mxu0 %v5696
  %5713 = vmatprep.subr.mxu0 0.0
  %5714 = vmatpush1.msra.mxu0 %v5695
  %5715 = vmatprep.subr.mxu0 0.0
  %5716 = vmatpush1.msra.mxu0 %v5694
  %5717 = vmatprep.subr.mxu0 0.0
  %5718 = vmatpush1.msra.mxu0 %v5693
  %5719 = vmatprep.subr.mxu0 0.0
  %5720 = vmatpush1.msra.mxu0 %v5692
  %5721 = vmatprep.subr.mxu0 0.0
  %5722 = vmatpush1.msra.mxu0 %v5691
  %5723 = vmatprep.subr.mxu0 0.0
  %5724 = vmatpush1.msra.mxu0 %v5690
  %5725 = vmatprep.subr.mxu0 0.0
  %5726 = vmatpush1.msra.mxu0 %v5689
  %5727 = vmatprep.subr.mxu0 0.0
  %5728 = vmatpush1.msra.mxu0 %v5688
  %5729 = vmatprep.subr.mxu0 0.0
  %5730 = vmatpush1.msra.mxu0 %v5687
  %5731 = vmatprep.subr.mxu0 0.0
  %5732 = vmatpush1.msra.mxu0 %v5686
  %5733 = vmatprep.subr.mxu0 0.0
  %5734 = vmatpush1.msra.mxu0 %v5685
  %5735 = vmatprep.subr.mxu0 0.0
  %5736 = vmatpush1.msra.mxu0 %v5684
  %5737 = vmatprep.subr.mxu0 0.0
  %5738 = vmatpush1.msra.mxu0 %v5683
  %5739 = vmatprep.subr.mxu0 0.0
  %5740 = vmatpush2.msra.mxu0 0.0
  %5741 = vmatprep.subr.mxu0 0.0
  %5742 = vmatpush2.msra.mxu0 0.0
  %5743 = vmatprep.subr.mxu0 0.0
  %5744 = vmatpush2.msra.mxu0 0.0
  %5745 = vmatprep.subr.mxu0 0.0
  %5746 = vmatpush2.msra.mxu0 0.0
  %5747 = vmatprep.subr.mxu0 0.0
  %5748 = vmatpush2.msra.mxu0 0.0
  %5749 = vmatprep.subr.mxu0 0.0
  %5750 = vmatpush2.msra.mxu0 0.0
  %5751 = vmatprep.subr.mxu0 0.0
  %5752 = vmatpush2.msra.mxu0 0.0
  %5753 = vmatprep.subr.mxu0 0.0
  %5754 = vmatpush2.msra.mxu0 0.0
  %5755 = vmatprep.subr.mxu0 0.0
  %5756 = vmatpush2.msra.mxu0 0.0
  %5757 = vmatprep.subr.mxu0 0.0
  %5758 = vmatpush2.msra.mxu0 0.0
  %5759 = vmatprep.subr.mxu0 0.0
  %5760 = vmatpush2.msra.mxu0 0.0
  %5761 = vmatprep.subr.mxu0 0.0
  %5762 = vmatpush2.msra.mxu0 0.0
  %5763 = vmatprep.subr.mxu0 0.0
  %5764 = vmatpush2.msra.mxu0 0.0
  %5765 = vmatprep.subr.mxu0 0.0
  %5766 = vmatpush2.msra.mxu0 0.0
  %5767 = vmatprep.subr.mxu0 0.0
  %5768 = vmatpush2.msra.mxu0 0.0
  %5769 = vmatprep.subr.mxu0 0.0
  %5770 = vmatpush2.msra.mxu0 0.0
  %5771 = vmatprep.mubr.f32.mxu0 0.0
  %5772 = vmatmul.mubr.f32.gmra.mxu0 %v5677
  %v5773 = vpop.f32.mrf.mxu0
  %v5774 = vadd.f32 %v5705, %v5773
  %v5775 = vpop.f32.mrf.mxu0
  %5776 = vmatprep.mubr.f32.mxu0 0.0
  %5777 = vmatmul.mubr.f32.gmra.mxu0 %v5678
  %v5778 = vpop.f32.mrf.mxu0
  %v5779 = vadd.f32 %v5705, %v5778
  %v5780 = vpop.f32.mrf.mxu0
  %5781 = vmatprep.mubr.f32.mxu0 0.0
  %5782 = vmatmul.mubr.f32.gmra.mxu0 %v5679
  %v5783 = vpop.f32.mrf.mxu0
  %v5784 = vadd.f32 %v5705, %v5783
  %v5785 = vpop.f32.mrf.mxu0
  %5786 = vmatprep.mubr.f32.mxu0 0.0
  %5787 = vmatmul.mubr.f32.gmra.mxu0 %v5680
  %v5788 = vpop.f32.mrf.mxu0
  %v5789 = vadd.f32 %v5705, %v5788
  %v5790 = vpop.f32.mrf.mxu0
  %5791 = vmatprep.mubr.f32.mxu0 0.0
  %5792 = vmatmul.mubr.f32.gmra.mxu0 %v5681
  %v5793 = vpop.f32.mrf.mxu0
  %v5794 = vadd.f32 %v5705, %v5793
  %v5795 = vpop.f32.mrf.mxu0
  %5796 = vdwg.mxu0
  %v5797 = vadd.f32 %v5333, %v5774
  %v5798 = vadd.f32 %v5334, %v5779
  %v5799 = vadd.f32 %v5335, %v5784
  %v5800 = vadd.f32 %v5336, %v5789
  %v5801 = vadd.f32 %v5337, %v5794
  %v5802 = vld [vmem:[%s17] sm:$0x1]
  %v5803 = vld [vmem:[%s18] sm:$0x1]
  %v5804 = vsel %vm197, %v5797, 0.0
  %5805 = vadd.xlane.f32.xlu0 %v5804
  %v5806 = vpop.xlane.xlu0 %5805
  %v5807 = vsel %vm197, %v5798, 0.0
  %5808 = vadd.xlane.f32.xlu0 %v5807
  %v5809 = vpop.xlane.xlu0 %5808
  %v5810 = vsel %vm197, %v5799, 0.0
  %5811 = vadd.xlane.f32.xlu0 %v5810
  %v5812 = vpop.xlane.xlu0 %5811
  %v5813 = vsel %vm197, %v5800, 0.0
  %5814 = vadd.xlane.f32.xlu0 %v5813
  %v5815 = vpop.xlane.xlu0 %5814
  %v5816 = vsel %vm224, %v5801, 0.0
  %5817 = vadd.xlane.f32.xlu0 %v5816
  %v5818 = vpop.xlane.xlu0 %5817
  %v5819 = vmul.f32 %v5806, %v228
  %v5820 = vmul.f32 %v5809, %v228
  %v5821 = vmul.f32 %v5812, %v228
  %v5822 = vmul.f32 %v5815, %v228
  %v5823 = vmul.f32 %v5818, %v228
  %v5824 = vsub.f32 %v5797, %v5819
  %v5825 = vsub.f32 %v5798, %v5820
  %v5826 = vsub.f32 %v5799, %v5821
  %v5827 = vsub.f32 %v5800, %v5822
  %v5828 = vsub.f32 %v5801, %v5823
  %v5829 = vmul.f32 %v5824, %v5824
  %v5830 = vmul.f32 %v5825, %v5825
  %v5831 = vmul.f32 %v5826, %v5826
  %v5832 = vmul.f32 %v5827, %v5827
  %v5833 = vmul.f32 %v5828, %v5828
  %v5834 = vsel %vm197, %v5829, 0.0
  %5835 = vadd.xlane.f32.xlu0 %v5834
  %v5836 = vpop.xlane.xlu0 %5835
  %v5837 = vsel %vm197, %v5830, 0.0
  %5838 = vadd.xlane.f32.xlu0 %v5837
  %v5839 = vpop.xlane.xlu0 %5838
  %v5840 = vsel %vm197, %v5831, 0.0
  %5841 = vadd.xlane.f32.xlu0 %v5840
  %v5842 = vpop.xlane.xlu0 %5841
  %v5843 = vsel %vm197, %v5832, 0.0
  %5844 = vadd.xlane.f32.xlu0 %v5843
  %v5845 = vpop.xlane.xlu0 %5844
  %v5846 = vsel %vm224, %v5833, 0.0
  %5847 = vadd.xlane.f32.xlu0 %v5846
  %v5848 = vpop.xlane.xlu0 %5847
  %v5849 = vmul.f32 %v5836, %v228
  %v5850 = vmul.f32 %v5839, %v228
  %v5851 = vmul.f32 %v5842, %v228
  %v5852 = vmul.f32 %v5845, %v228
  %v5853 = vmul.f32 %v5848, %v228
  %v5854 = vadd.f32 %v5849, 1e-06
  %v5855 = vadd.f32 %v5850, 1e-06
  %v5856 = vadd.f32 %v5851, 1e-06
  %v5857 = vadd.f32 %v5852, 1e-06
  %v5858 = vadd.f32 %v5853, 1e-06
  %v5859 = vrsqrt.pop %v5854
  %v5860 = vrsqrt.pop %v5855
  %v5861 = vrsqrt.pop %v5856
  %v5862 = vrsqrt.pop %v5857
  %v5863 = vrsqrt.pop %v5858
  %v5864 = vmul.f32 %v5824, %v5859
  %v5865 = vmul.f32 %v5825, %v5860
  %v5866 = vmul.f32 %v5826, %v5861
  %v5867 = vmul.f32 %v5827, %v5862
  %v5868 = vmul.f32 %v5828, %v5863
  %v5870 = vlaneseq
  %v5871 = vshrl.u32 %v5870, 7
  %v5872 = vsub.s32 0, %v5871
  %v5873 = vrot.slane %v5802, %v5872
  %v5875 = vmul.f32 %v5864, %v5873
  %v5876 = vmul.f32 %v5865, %v5873
  %v5877 = vmul.f32 %v5866, %v5873
  %v5878 = vmul.f32 %v5867, %v5873
  %v5879 = vmul.f32 %v5868, %v5873
  %v5881 = vlaneseq
  %v5882 = vshrl.u32 %v5881, 7
  %v5883 = vsub.s32 0, %v5882
  %v5884 = vrot.slane %v5803, %v5883
  %v5886 = vadd.f32 %v5875, %v5884
  %v5887 = vadd.f32 %v5876, %v5884
  %v5888 = vadd.f32 %v5877, %v5884
  %v5889 = vadd.f32 %v5878, %v5884
  %v5890 = vadd.f32 %v5879, %v5884
  %5891 = vst.msk [vmem:[%s19] sm:$0xff] %vm197, %v5886
  %5892 = vst.msk [vmem:[%s19 + $0x8] sm:$0xff] %vm197, %v5887
  %5893 = vst.msk [vmem:[%s19 + $0x10] sm:$0xff] %vm197, %v5888
  %5894 = vst.msk [vmem:[%s19 + $0x18] sm:$0xff] %vm197, %v5889
  %5895 = vst.msk [vmem:[%s19 + $0x20] sm:$0x3] %vm224, %v5890
  // Predicated region
  $region78: #{vit_forward.1} parent=0 // pred_check
    _
  $region79: #{vit_forward.1} parent=0 // pred_check_branch
    %5897 = sbr.rel (0) target = $region81
  $region80: #{vit_forward.1} parent=0 // pred_region
    _
  $region81: #{vit_forward.1} parent=0 // pred_fallthru
    _
  // Predicated region
  $region82: #{vit_forward.1} parent=0 // pred_check
    _
  $region83: #{vit_forward.1} parent=0 // pred_check_branch
    %5899 = sbr.rel (0) target = $region85
  $region84: #{vit_forward.1} parent=0 // pred_region
    _
  $region85: #{vit_forward.1} parent=0 // pred_fallthru
    _

</llo_original>
